<compile_context>
chip_gen: v6e
topology: v6e:2x2x1
jax: 0.10.0
libtpu: 0.0.40
codegen_flags: <defaults>
</compile_context>

<pallas_src>
import functools

import jax
import jax.numpy as jnp
from jax.experimental import pallas as pl
from jax.experimental.pallas import tpu as pltpu

EPS = 1e-5  # nn.BatchNorm2d default


def _round_up(x, m):
    return ((x + m - 1) // m) * m


def _conv_bn_relu_kernel(x_ref, w_ref, gamma_ref, beta_ref, out_ref,
                         xs_ref, sum_ref, sumsq_ref, scale_ref, shift_ref,
                         *, inv_m):
    """One grid step of fused 3x3 conv + training-mode BatchNorm + ReLU.

    grid = (2, num_tiles):
      phase 0: conv tile -> accumulate per-channel sum / sumsq in VMEM scratch.
      phase 1: recompute conv tile -> y = conv * scale + shift -> ReLU -> store.
    """
    p = pl.program_id(0)   # phase
    i = pl.program_id(1)   # image tile

    h, w, c_out = out_ref.shape[1], out_ref.shape[2], out_ref.shape[3]
    c_in_p = x_ref.shape[3]

    # ---- materialize the 3 dx-shifted halo windows once (lane-blocked) ------
    # Only 3 sublane-strided reads per grid step (vs 9 per-tap slices); the
    # destination writes are aligned, full-width 128-lane blocks.
    for dx in range(3):
        xs_ref[:, :, dx * c_in_p:(dx + 1) * c_in_p] = x_ref[0, :, dx:dx + w, :]

    # ---- 3x3 conv: 3 MXU matmuls, dx folded into the contraction dim --------
    # Each operand is explicitly (H*W, 3*Cin_p): one big M >= 256 matmul per dy
    # instead of per-row M = W matmuls.  bf16 operands, f32 accumulation.
    acc = jnp.zeros((h * w, c_out), jnp.float32)
    for dy in range(3):
        a = xs_ref[dy:dy + h].reshape(h * w, 3 * c_in_p)       # dy slice = cheap
        acc = acc + jnp.dot(a, w_ref[dy], preferred_element_type=jnp.float32)

    # ---- phase 0: accumulate batch statistics across all tiles --------------
    @pl.when(jnp.logical_and(p == 0, i == 0))
    def _init_stats():
        sum_ref[...] = jnp.zeros_like(sum_ref)
        sumsq_ref[...] = jnp.zeros_like(sumsq_ref)

    @pl.when(p == 0)
    def _accumulate_stats():
        sum_ref[...] += jnp.sum(acc, axis=0)[None, :]
        sumsq_ref[...] += jnp.sum(acc * acc, axis=0)[None, :]

    # ---- phase 1: fold stats once, then normalize + ReLU + store ------------
    @pl.when(jnp.logical_and(p == 1, i == 0))
    def _fold_stats():
        mean = sum_ref[...] * inv_m
        var = sumsq_ref[...] * inv_m - mean * mean        # biased variance
        inv_std = jax.lax.rsqrt(var + EPS)                # EUP, off the VALU path
        scale = gamma_ref[...] * inv_std
        scale_ref[...] = scale
        shift_ref[...] = beta_ref[...] - mean * scale

    @pl.when(p == 1)
    def _normalize_store():
        y = acc * scale_ref[...] + shift_ref[...]          # single FMA per element
        y = jnp.maximum(y, 0.0)
        out_ref[0] = y.reshape(h, w, c_out).astype(out_ref.dtype)


def _conv_bn_relu(x_pad, w_taps, gamma, beta, out_dtype):
    """x_pad: (N, H+2, W+2, Cin_p) bf16; w_taps: (3, 3*Cin_p, Cout_p) bf16;
    gamma/beta: (1, Cout_p) f32.  Returns (N, H, W, Cout_p) in `out_dtype`."""
    n, hp, wp, c_in_p = x_pad.shape
    h, w = hp - 2, wp - 2
    c_out_p = w_taps.shape[-1]

    kernel = functools.partial(_conv_bn_relu_kernel, inv_m=1.0 / float(n * h * w))

    return pl.pallas_call(
        kernel,
        out_shape=jax.ShapeDtypeStruct((n, h, w, c_out_p), out_dtype),
        grid_spec=pltpu.PrefetchScalarGridSpec(
            num_scalar_prefetch=0,
            grid=(2, n),                                   # (phase, image tile)
            in_specs=[
                pl.BlockSpec((1, hp, wp, c_in_p), lambda p, i: (i, 0, 0, 0)),
                pl.BlockSpec((3, 3 * c_in_p, c_out_p), lambda p, i: (0, 0, 0)),
                pl.BlockSpec((1, c_out_p), lambda p, i: (0, 0)),
                pl.BlockSpec((1, c_out_p), lambda p, i: (0, 0)),
            ],
            # Phase 0 never writes the output; pin all its steps onto block 0 so
            # the pipeline does not flush untouched tiles.  Phase 1 fully
            # rewrites every block, so the final HBM contents are correct.
            out_specs=pl.BlockSpec((1, h, w, c_out_p),
                                   lambda p, i: (i * p, 0, 0, 0)),
            scratch_shapes=[
                pltpu.VMEM((hp, w, 3 * c_in_p), jnp.bfloat16),  # dx-shifted windows
                pltpu.VMEM((1, c_out_p), jnp.float32),     # per-channel sum
                pltpu.VMEM((1, c_out_p), jnp.float32),     # per-channel sum of squares
                pltpu.VMEM((1, c_out_p), jnp.float32),     # folded BN scale
                pltpu.VMEM((1, c_out_p), jnp.float32),     # folded BN shift
            ],
        ),
        compiler_params=pltpu.CompilerParams(
            # Both axes carry state (phase ordering + stats accumulation).
            dimension_semantics=("arbitrary", "arbitrary"),
            vmem_limit_bytes=32 * 1024 * 1024,
        ),
    )(x_pad, w_taps, gamma, beta)


# ----------------------------- host-side glue -------------------------------

def _prep_activation(x_nhwc, c_pad):
    """Zero-pad channels to c_pad, add 1-px spatial halo, cast MXU operand to bf16."""
    c = x_nhwc.shape[-1]
    x = jnp.pad(x_nhwc, ((0, 0), (1, 1), (1, 1), (0, c_pad - c)))
    return x.astype(jnp.bfloat16)


def _prep_weight(w_oihw, c_in_p, c_out_p):
    """(Cout, Cin, 3, 3) -> (3, 3*Cin_p, Cout_p) bf16.

    Row block dy stacks its three dx taps along the contraction dim in the same
    order the kernel lays the dx-shifted windows out: row = dx * Cin_p + cin.
    """
    c_out, c_in, kh, kw = w_oihw.shape
    w = jnp.transpose(w_oihw, (2, 3, 1, 0))                 # (kh, kw, Cin, Cout)
    w = jnp.pad(w, ((0, 0), (0, 0), (0, c_in_p - c_in), (0, c_out_p - c_out)))
    return w.reshape(kh, kw * c_in_p, c_out_p).astype(jnp.bfloat16)


def _prep_affine(v, c_pad):
    return jnp.pad(v.astype(jnp.float32), (0, c_pad - v.shape[0])).reshape(1, c_pad)


@jax.jit
def double_conv_block(x_nchw, w1, b1, g1, be1, w2, b2, g2, be2):
    """Forward pass of DoubleConvBlock. Input/output are NCHW like PyTorch.

    b1/b2 are accepted for interface parity but unused: under training-mode
    BatchNorm the conv bias is exactly cancelled by the mean subtraction.
    """
    del b1, b2
    n, c_in, h, w = x_nchw.shape
    c_out = w1.shape[0]
    c_in_p = _round_up(c_in, 128)
    c_out_p = _round_up(c_out, 128)

    x_nhwc = jnp.transpose(x_nchw, (0, 2, 3, 1))

    # --- conv1 + bn1 + relu : y1 emitted directly as bf16 --------------------
    y1 = _conv_bn_relu(
        _prep_activation(x_nhwc, c_in_p),
        _prep_weight(w1, c_in_p, c_out_p),
        _prep_affine(g1, c_out_p),
        _prep_affine(be1, c_out_p),
        jnp.bfloat16)

    # --- conv2 + bn2 + relu (only a cheap bf16 1-px halo pad in between) -----
    y2 = _conv_bn_relu(
        jnp.pad(y1, ((0, 0), (1, 1), (1, 1), (0, 0))),
        _prep_weight(w2, c_out_p, c_out_p),
        _prep_affine(g2, c_out_p),
        _prep_affine(be2, c_out_p),
        jnp.float32)

    return jnp.transpose(y2[..., :c_out], (0, 3, 1, 2))   # back to NCHW


def _reference(x, w1, b1, g1, be1, w2, b2, g2, be2):
    """Pure-JAX f32 reference (XLA conv + batch-stat BN + relu), NCHW."""
    def conv(x, w, b):
        y = jax.lax.conv_general_dilated(
            x, w, window_strides=(1, 1), padding=((1, 1), (1, 1)),
            dimension_numbers=("NCHW", "OIHW", "NCHW"))
        return y + b[None, :, None, None]

    def bn_relu(y, g, be):
        mean = jnp.mean(y, axis=(0, 2, 3), keepdims=True)
        var = jnp.mean((y - mean) ** 2, axis=(0, 2, 3), keepdims=True)
        z = (y - mean) * jax.lax.rsqrt(var + EPS)
        z = z * g[None, :, None, None] + be[None, :, None, None]
        return jnp.maximum(z, 0.0)

    y = bn_relu(conv(x, w1, b1), g1, be1)
    return bn_relu(conv(y, w2, b2), g2, be2)


if __name__ == "__main__":
    N, C_IN, C_OUT, H, W = 2, 4, 8, 16, 16

    key = jax.random.PRNGKey(0)
    kx, kw1, kb1, kw2, kb2 = jax.random.split(key, 5)

    # Deterministic synthetic parameters (shapes follow nn.Conv2d / nn.BatchNorm2d).
    x = jax.random.normal(kx, (N, C_IN, H, W), jnp.float32)
    w1 = jax.random.normal(kw1, (C_OUT, C_IN, 3, 3), jnp.float32) * 0.1
    b1 = jax.random.normal(kb1, (C_OUT,), jnp.float32) * 0.1
    w2 = jax.random.normal(kw2, (C_OUT, C_OUT, 3, 3), jnp.float32) * 0.1
    b2 = jax.random.normal(kb2, (C_OUT,), jnp.float32) * 0.1
    # BatchNorm affine params at PyTorch defaults (weight=1, bias=0).
    g1 = jnp.ones((C_OUT,), jnp.float32)
    be1 = jnp.zeros((C_OUT,), jnp.float32)
    g2 = jnp.ones((C_OUT,), jnp.float32)
    be2 = jnp.zeros((C_OUT,), jnp.float32)

    out = double_conv_block(x, w1, b1, g1, be1, w2, b2, g2, be2)
    out = jax.block_until_ready(out)
    assert out.shape == (N, C_OUT, H, W) and out.dtype == jnp.float32

    ref = _reference(x, w1, b1, g1, be1, w2, b2, g2, be2)
    # bf16 MXU operands + bf16 intermediate -> looser tolerance than pure f32.
    assert jnp.allclose(out, ref, atol=3e-2, rtol=3e-2), (
        float(jnp.max(jnp.abs(out - ref))))

    print("KERNEL_OK")
</pallas_src>

<mosaic_0001>
module attributes {stable_mosaic.version = 11 : i64} {
  func.func @_conv_bn_relu_kernel(%arg0: i32, %arg1: i32, %arg2: memref<1x18x18x128xbf16, #tpu.memory_space<vmem>>, %arg3: memref<3x384x128xbf16, #tpu.memory_space<vmem>>, %arg4: memref<1x128xf32, #tpu.memory_space<vmem>>, %arg5: memref<1x128xf32, #tpu.memory_space<vmem>>, %arg6: memref<1x16x16x128xbf16, #tpu.memory_space<vmem>>, %arg7: memref<18x16x384xbf16, #tpu.memory_space<vmem>>, %arg8: memref<1x128xf32, #tpu.memory_space<vmem>>, %arg9: memref<1x128xf32, #tpu.memory_space<vmem>>, %arg10: memref<1x128xf32, #tpu.memory_space<vmem>>, %arg11: memref<1x128xf32, #tpu.memory_space<vmem>>) attributes {dimension_semantics = [#tpu.dimension_semantics<arbitrary>, #tpu.dimension_semantics<arbitrary>], iteration_bounds = array<i64: 2, 2>, scalar_prefetch = 0 : i64, scratch_operands = 5 : i64, tpu.core_type = #tpu.core_type<tc>, window_params = [{transform_indices = @transform_0, window_bounds = array<i64: 1, 18, 18, 128>}, {pipeline_mode = #tpu.pipeline_mode<synchronous>, transform_indices = @transform_1, window_bounds = array<i64: 3, 384, 128>}, {pipeline_mode = #tpu.pipeline_mode<synchronous>, transform_indices = @transform_2, window_bounds = array<i64: 1, 128>}, {pipeline_mode = #tpu.pipeline_mode<synchronous>, transform_indices = @transform_3, window_bounds = array<i64: 1, 128>}, {transform_indices = @transform_4, window_bounds = array<i64: 1, 16, 16, 128>}]} {
    %c0 = arith.constant 0 : index
    %c0_0 = arith.constant 0 : index
    %c0_1 = arith.constant 0 : index
    %c0_2 = arith.constant 0 : index
    %0 = vector.load %arg2[%c0, %c0_0, %c0_1, %c0_2] : memref<1x18x18x128xbf16, #tpu.memory_space<vmem>>, vector<1x18x16x128xbf16>
    %1 = vector.shape_cast %0 : vector<1x18x16x128xbf16> to vector<18x16x128xbf16>
    %c0_3 = arith.constant 0 : index
    %c0_4 = arith.constant 0 : index
    %c0_5 = arith.constant 0 : index
    %2 = vector.load %arg7[%c0_3, %c0_4, %c0_5] : memref<18x16x384xbf16, #tpu.memory_space<vmem>>, vector<18x16x128xbf16>
    tpu.vector_store %arg7[%c0_3, %c0_4, %c0_5], %1 {strides = array<i32>} : memref<18x16x384xbf16, #tpu.memory_space<vmem>>, vector<18x16x128xbf16>,
    %c0_6 = arith.constant 0 : index
    %c0_7 = arith.constant 0 : index
    %c1 = arith.constant 1 : index
    %c0_8 = arith.constant 0 : index
    %3 = vector.load %arg2[%c0_6, %c0_7, %c1, %c0_8] : memref<1x18x18x128xbf16, #tpu.memory_space<vmem>>, vector<1x18x16x128xbf16>
    %4 = vector.shape_cast %3 : vector<1x18x16x128xbf16> to vector<18x16x128xbf16>
    %c0_9 = arith.constant 0 : index
    %c0_10 = arith.constant 0 : index
    %c128 = arith.constant 128 : index
    %5 = vector.load %arg7[%c0_9, %c0_10, %c128] : memref<18x16x384xbf16, #tpu.memory_space<vmem>>, vector<18x16x128xbf16>
    tpu.vector_store %arg7[%c0_9, %c0_10, %c128], %4 {strides = array<i32>} : memref<18x16x384xbf16, #tpu.memory_space<vmem>>, vector<18x16x128xbf16>,
    %c0_11 = arith.constant 0 : index
    %c0_12 = arith.constant 0 : index
    %c2 = arith.constant 2 : index
    %c0_13 = arith.constant 0 : index
    %6 = vector.load %arg2[%c0_11, %c0_12, %c2, %c0_13] : memref<1x18x18x128xbf16, #tpu.memory_space<vmem>>, vector<1x18x16x128xbf16>
    %7 = vector.shape_cast %6 : vector<1x18x16x128xbf16> to vector<18x16x128xbf16>
    %c0_14 = arith.constant 0 : index
    %c0_15 = arith.constant 0 : index
    %c256 = arith.constant 256 : index
    %8 = vector.load %arg7[%c0_14, %c0_15, %c256] : memref<18x16x384xbf16, #tpu.memory_space<vmem>>, vector<18x16x128xbf16>
    tpu.vector_store %arg7[%c0_14, %c0_15, %c256], %7 {strides = array<i32>} : memref<18x16x384xbf16, #tpu.memory_space<vmem>>, vector<18x16x128xbf16>,
    %cst = arith.constant 0.000000e+00 : f32
    %9 = vector.broadcast %cst : f32 to vector<256x128xf32>
    %c0_16 = arith.constant 0 : index
    %c0_17 = arith.constant 0 : index
    %c0_18 = arith.constant 0 : index
    %10 = vector.load %arg7[%c0_16, %c0_17, %c0_18] : memref<18x16x384xbf16, #tpu.memory_space<vmem>>, vector<16x16x384xbf16>
    %11 = vector.shape_cast %10 : vector<16x16x384xbf16> to vector<256x384xbf16>
    %c0_19 = arith.constant 0 : index
    %c0_20 = arith.constant 0 : index
    %c0_21 = arith.constant 0 : index
    %12 = vector.load %arg3[%c0_19, %c0_20, %c0_21] : memref<3x384x128xbf16, #tpu.memory_space<vmem>>, vector<1x384x128xbf16>
    %13 = vector.shape_cast %12 : vector<1x384x128xbf16> to vector<384x128xbf16>
    %cst_22 = arith.constant dense<0.000000e+00> : vector<256x128xf32>
    %14 = tpu.matmul %11, %13, %cst_22 {dimension_numbers = #tpu.dot_dimension_numbers<[1], [0], [0], [1], [0, 0, 1, 1], [], []>} : vector<256x384xbf16>, vector<384x128xbf16>, vector<256x128xf32> -> vector<256x128xf32>
    %15 = arith.addf %9, %14 : vector<256x128xf32>
    %c1_23 = arith.constant 1 : index
    %c0_24 = arith.constant 0 : index
    %c0_25 = arith.constant 0 : index
    %16 = vector.load %arg7[%c1_23, %c0_24, %c0_25] : memref<18x16x384xbf16, #tpu.memory_space<vmem>>, vector<16x16x384xbf16>
    %17 = vector.shape_cast %16 : vector<16x16x384xbf16> to vector<256x384xbf16>
    %c1_26 = arith.constant 1 : index
    %c0_27 = arith.constant 0 : index
    %c0_28 = arith.constant 0 : index
    %18 = vector.load %arg3[%c1_26, %c0_27, %c0_28] : memref<3x384x128xbf16, #tpu.memory_space<vmem>>, vector<1x384x128xbf16>
    %19 = vector.shape_cast %18 : vector<1x384x128xbf16> to vector<384x128xbf16>
    %cst_29 = arith.constant dense<0.000000e+00> : vector<256x128xf32>
    %20 = tpu.matmul %17, %19, %cst_29 {dimension_numbers = #tpu.dot_dimension_numbers<[1], [0], [0], [1], [0, 0, 1, 1], [], []>} : vector<256x384xbf16>, vector<384x128xbf16>, vector<256x128xf32> -> vector<256x128xf32>
    %21 = arith.addf %15, %20 : vector<256x128xf32>
    %c2_30 = arith.constant 2 : index
    %c0_31 = arith.constant 0 : index
    %c0_32 = arith.constant 0 : index
    %22 = vector.load %arg7[%c2_30, %c0_31, %c0_32] : memref<18x16x384xbf16, #tpu.memory_space<vmem>>, vector<16x16x384xbf16>
    %23 = vector.shape_cast %22 : vector<16x16x384xbf16> to vector<256x384xbf16>
    %c2_33 = arith.constant 2 : index
    %c0_34 = arith.constant 0 : index
    %c0_35 = arith.constant 0 : index
    %24 = vector.load %arg3[%c2_33, %c0_34, %c0_35] : memref<3x384x128xbf16, #tpu.memory_space<vmem>>, vector<1x384x128xbf16>
    %25 = vector.shape_cast %24 : vector<1x384x128xbf16> to vector<384x128xbf16>
    %cst_36 = arith.constant dense<0.000000e+00> : vector<256x128xf32>
    %26 = tpu.matmul %23, %25, %cst_36 {dimension_numbers = #tpu.dot_dimension_numbers<[1], [0], [0], [1], [0, 0, 1, 1], [], []>} : vector<256x384xbf16>, vector<384x128xbf16>, vector<256x128xf32> -> vector<256x128xf32>
    %27 = arith.addf %21, %26 : vector<256x128xf32>
    %c0_i32 = arith.constant 0 : i32
    %28 = arith.cmpi eq, %arg0, %c0_i32 : i32
    %c0_i32_37 = arith.constant 0 : i32
    %29 = arith.cmpi eq, %arg1, %c0_i32_37 : i32
    %30 = arith.andi %28, %29 : i1
    %31 = arith.extui %30 : i1 to i32
    %c0_i32_38 = arith.constant 0 : i32
    %32 = arith.cmpi ne, %31, %c0_i32_38 : i32
    scf.if %32 {
      %cst_45 = arith.constant 0.000000e+00 : f32
      %44 = vector.broadcast %cst_45 : f32 to vector<1x128xf32>
      %c0_46 = arith.constant 0 : index
      %c0_47 = arith.constant 0 : index
      %45 = vector.load %arg8[%c0_46, %c0_47] : memref<1x128xf32, #tpu.memory_space<vmem>>, vector<1x128xf32>
      tpu.vector_store %arg8[%c0_46, %c0_47], %44 {strides = array<i32>} : memref<1x128xf32, #tpu.memory_space<vmem>>, vector<1x128xf32>,
      %cst_48 = arith.constant 0.000000e+00 : f32
      %46 = vector.broadcast %cst_48 : f32 to vector<1x128xf32>
      %c0_49 = arith.constant 0 : index
      %c0_50 = arith.constant 0 : index
      %47 = vector.load %arg9[%c0_49, %c0_50] : memref<1x128xf32, #tpu.memory_space<vmem>>, vector<1x128xf32>
      tpu.vector_store %arg9[%c0_49, %c0_50], %46 {strides = array<i32>} : memref<1x128xf32, #tpu.memory_space<vmem>>, vector<1x128xf32>,
    } else {
    }
    %c0_i32_39 = arith.constant 0 : i32
    %33 = arith.cmpi eq, %arg0, %c0_i32_39 : i32
    %34 = arith.extui %33 : i1 to i32
    %c0_i32_40 = arith.constant 0 : i32
    %35 = arith.cmpi ne, %34, %c0_i32_40 : i32
    scf.if %35 {
      %c0_45 = arith.constant 0 : index
      %c0_46 = arith.constant 0 : index
      %44 = vector.load %arg8[%c0_45, %c0_46] : memref<1x128xf32, #tpu.memory_space<vmem>>, vector<1x128xf32>
      %cst_47 = arith.constant dense<0.000000e+00> : vector<128xf32>
      %45 = vector.multi_reduction <add>, %27, %cst_47 [0] : vector<256x128xf32> to vector<128xf32>
      %46 = vector.shape_cast %45 : vector<128xf32> to vector<1x128xf32>
      %47 = arith.addf %44, %46 : vector<1x128xf32>
      %c0_48 = arith.constant 0 : index
      %c0_49 = arith.constant 0 : index
      %48 = vector.load %arg8[%c0_48, %c0_49] : memref<1x128xf32, #tpu.memory_space<vmem>>, vector<1x128xf32>
      tpu.vector_store %arg8[%c0_48, %c0_49], %47 {strides = array<i32>} : memref<1x128xf32, #tpu.memory_space<vmem>>, vector<1x128xf32>,
      %c0_50 = arith.constant 0 : index
      %c0_51 = arith.constant 0 : index
      %49 = vector.load %arg9[%c0_50, %c0_51] : memref<1x128xf32, #tpu.memory_space<vmem>>, vector<1x128xf32>
      %50 = arith.mulf %27, %27 : vector<256x128xf32>
      %cst_52 = arith.constant dense<0.000000e+00> : vector<128xf32>
      %51 = vector.multi_reduction <add>, %50, %cst_52 [0] : vector<256x128xf32> to vector<128xf32>
      %52 = vector.shape_cast %51 : vector<128xf32> to vector<1x128xf32>
      %53 = arith.addf %49, %52 : vector<1x128xf32>
      %c0_53 = arith.constant 0 : index
      %c0_54 = arith.constant 0 : index
      %54 = vector.load %arg9[%c0_53, %c0_54] : memref<1x128xf32, #tpu.memory_space<vmem>>, vector<1x128xf32>
      tpu.vector_store %arg9[%c0_53, %c0_54], %53 {strides = array<i32>} : memref<1x128xf32, #tpu.memory_space<vmem>>, vector<1x128xf32>,
    } else {
    }
    %c1_i32 = arith.constant 1 : i32
    %36 = arith.cmpi eq, %arg0, %c1_i32 : i32
    %c0_i32_41 = arith.constant 0 : i32
    %37 = arith.cmpi eq, %arg1, %c0_i32_41 : i32
    %38 = arith.andi %36, %37 : i1
    %39 = arith.extui %38 : i1 to i32
    %c0_i32_42 = arith.constant 0 : i32
    %40 = arith.cmpi ne, %39, %c0_i32_42 : i32
    scf.if %40 {
      %c0_45 = arith.constant 0 : index
      %c0_46 = arith.constant 0 : index
      %44 = vector.load %arg8[%c0_45, %c0_46] : memref<1x128xf32, #tpu.memory_space<vmem>>, vector<1x128xf32>
      %cst_47 = arith.constant 0.001953125 : f32
      %45 = vector.broadcast %cst_47 : f32 to vector<1x128xf32>
      %46 = arith.mulf %44, %45 : vector<1x128xf32>
      %c0_48 = arith.constant 0 : index
      %c0_49 = arith.constant 0 : index
      %47 = vector.load %arg9[%c0_48, %c0_49] : memref<1x128xf32, #tpu.memory_space<vmem>>, vector<1x128xf32>
      %cst_50 = arith.constant 0.001953125 : f32
      %48 = vector.broadcast %cst_50 : f32 to vector<1x128xf32>
      %49 = arith.mulf %47, %48 : vector<1x128xf32>
      %50 = arith.mulf %46, %46 : vector<1x128xf32>
      %51 = arith.subf %49, %50 : vector<1x128xf32>
      %cst_51 = arith.constant 9.99999974E-6 : f32
      %52 = vector.broadcast %cst_51 : f32 to vector<1x128xf32>
      %53 = arith.addf %51, %52 : vector<1x128xf32>
      %54 = math.rsqrt %53 : vector<1x128xf32>
      %c0_52 = arith.constant 0 : index
      %c0_53 = arith.constant 0 : index
      %55 = vector.load %arg4[%c0_52, %c0_53] : memref<1x128xf32, #tpu.memory_space<vmem>>, vector<1x128xf32>
      %56 = arith.mulf %55, %54 : vector<1x128xf32>
      %c0_54 = arith.constant 0 : index
      %c0_55 = arith.constant 0 : index
      %57 = vector.load %arg10[%c0_54, %c0_55] : memref<1x128xf32, #tpu.memory_space<vmem>>, vector<1x128xf32>
      tpu.vector_store %arg10[%c0_54, %c0_55], %56 {strides = array<i32>} : memref<1x128xf32, #tpu.memory_space<vmem>>, vector<1x128xf32>,
      %c0_56 = arith.constant 0 : index
      %c0_57 = arith.constant 0 : index
      %58 = vector.load %arg5[%c0_56, %c0_57] : memref<1x128xf32, #tpu.memory_space<vmem>>, vector<1x128xf32>
      %59 = arith.mulf %46, %56 : vector<1x128xf32>
      %60 = arith.subf %58, %59 : vector<1x128xf32>
      %c0_58 = arith.constant 0 : index
      %c0_59 = arith.constant 0 : index
      %61 = vector.load %arg11[%c0_58, %c0_59] : memref<1x128xf32, #tpu.memory_space<vmem>>, vector<1x128xf32>
      tpu.vector_store %arg11[%c0_58, %c0_59], %60 {strides = array<i32>} : memref<1x128xf32, #tpu.memory_space<vmem>>, vector<1x128xf32>,
    } else {
    }
    %c1_i32_43 = arith.constant 1 : i32
    %41 = arith.cmpi eq, %arg0, %c1_i32_43 : i32
    %42 = arith.extui %41 : i1 to i32
    %c0_i32_44 = arith.constant 0 : i32
    %43 = arith.cmpi ne, %42, %c0_i32_44 : i32
    scf.if %43 {
      %c0_45 = arith.constant 0 : index
      %c0_46 = arith.constant 0 : index
      %44 = vector.load %arg10[%c0_45, %c0_46] : memref<1x128xf32, #tpu.memory_space<vmem>>, vector<1x128xf32>
      %45 = vector.broadcast %44 : vector<1x128xf32> to vector<256x128xf32>
      %46 = arith.mulf %27, %45 : vector<256x128xf32>
      %c0_47 = arith.constant 0 : index
      %c0_48 = arith.constant 0 : index
      %47 = vector.load %arg11[%c0_47, %c0_48] : memref<1x128xf32, #tpu.memory_space<vmem>>, vector<1x128xf32>
      %48 = vector.broadcast %47 : vector<1x128xf32> to vector<256x128xf32>
      %49 = arith.addf %46, %48 : vector<256x128xf32>
      %cst_49 = arith.constant 0.000000e+00 : f32
      %50 = vector.broadcast %cst_49 : f32 to vector<256x128xf32>
      %51 = arith.maximumf %49, %50 : vector<256x128xf32>
      %52 = vector.shape_cast %51 : vector<256x128xf32> to vector<16x16x128xf32>
      %53 = arith.truncf %52 : vector<16x16x128xf32> to vector<16x16x128xbf16>
      %c0_50 = arith.constant 0 : index
      %c0_51 = arith.constant 0 : index
      %c0_52 = arith.constant 0 : index
      %c0_53 = arith.constant 0 : index
      %54 = vector.load %arg6[%c0_50, %c0_51, %c0_52, %c0_53] : memref<1x16x16x128xbf16, #tpu.memory_space<vmem>>, vector<1x16x16x128xbf16>
      %55 = vector.shape_cast %54 : vector<1x16x16x128xbf16> to vector<16x16x128xbf16>
      %56 = vector.shape_cast %53 : vector<16x16x128xbf16> to vector<1x16x16x128xbf16>
      tpu.vector_store %arg6[%c0_50, %c0_51, %c0_52, %c0_53], %56 {strides = array<i32>} : memref<1x16x16x128xbf16, #tpu.memory_space<vmem>>, vector<1x16x16x128xbf16>,
    } else {
    }
    return
  }
  func.func @transform_0(%arg0: i32, %arg1: i32) -> (i32, i32, i32, i32) {
    %c0_i32 = arith.constant 0 : i32
    %c0_i32_0 = arith.constant 0 : i32
    %c0_i32_1 = arith.constant 0 : i32
    %c0_i32_2 = arith.constant 0 : i32
    return %arg1, %c0_i32, %c0_i32_0, %c0_i32_1 : i32, i32, i32, i32
  }
  func.func @transform_1(%arg0: i32, %arg1: i32) -> (i32, i32, i32) {
    %c0_i32 = arith.constant 0 : i32
    %c0_i32_0 = arith.constant 0 : i32
    %c0_i32_1 = arith.constant 0 : i32
    %c0_i32_2 = arith.constant 0 : i32
    return %c0_i32, %c0_i32_0, %c0_i32_1 : i32, i32, i32
  }
  func.func @transform_2(%arg0: i32, %arg1: i32) -> (i32, i32) {
    %c0_i32 = arith.constant 0 : i32
    %c0_i32_0 = arith.constant 0 : i32
    %c0_i32_1 = arith.constant 0 : i32
    return %c0_i32, %c0_i32_0 : i32, i32
  }
  func.func @transform_3(%arg0: i32, %arg1: i32) -> (i32, i32) {
    %c0_i32 = arith.constant 0 : i32
    %c0_i32_0 = arith.constant 0 : i32
    %c0_i32_1 = arith.constant 0 : i32
    return %c0_i32, %c0_i32_0 : i32, i32
  }
  func.func @transform_4(%arg0: i32, %arg1: i32) -> (i32, i32, i32, i32) {
    %0 = arith.muli %arg1, %arg0 : i32
    %c0_i32 = arith.constant 0 : i32
    %c0_i32_0 = arith.constant 0 : i32
    %c0_i32_1 = arith.constant 0 : i32
    %c0_i32_2 = arith.constant 0 : i32
    return %0, %c0_i32, %c0_i32_0, %c0_i32_1 : i32, i32, i32, i32
  }
}

module attributes {stable_mosaic.version = 11 : i64} {
  func.func @_conv_bn_relu_kernel(%arg0: i32, %arg1: i32, %arg2: memref<1x18x18x128xbf16, #tpu.memory_space<vmem>>, %arg3: memref<3x384x128xbf16, #tpu.memory_space<vmem>>, %arg4: memref<1x128xf32, #tpu.memory_space<vmem>>, %arg5: memref<1x128xf32, #tpu.memory_space<vmem>>, %arg6: memref<1x16x16x128xf32, #tpu.memory_space<vmem>>, %arg7: memref<18x16x384xbf16, #tpu.memory_space<vmem>>, %arg8: memref<1x128xf32, #tpu.memory_space<vmem>>, %arg9: memref<1x128xf32, #tpu.memory_space<vmem>>, %arg10: memref<1x128xf32, #tpu.memory_space<vmem>>, %arg11: memref<1x128xf32, #tpu.memory_space<vmem>>) attributes {dimension_semantics = [#tpu.dimension_semantics<arbitrary>, #tpu.dimension_semantics<arbitrary>], iteration_bounds = array<i64: 2, 2>, scalar_prefetch = 0 : i64, scratch_operands = 5 : i64, tpu.core_type = #tpu.core_type<tc>, window_params = [{transform_indices = @transform_0, window_bounds = array<i64: 1, 18, 18, 128>}, {pipeline_mode = #tpu.pipeline_mode<synchronous>, transform_indices = @transform_1, window_bounds = array<i64: 3, 384, 128>}, {pipeline_mode = #tpu.pipeline_mode<synchronous>, transform_indices = @transform_2, window_bounds = array<i64: 1, 128>}, {pipeline_mode = #tpu.pipeline_mode<synchronous>, transform_indices = @transform_3, window_bounds = array<i64: 1, 128>}, {transform_indices = @transform_4, window_bounds = array<i64: 1, 16, 16, 128>}]} {
    %c0 = arith.constant 0 : index
    %c0_0 = arith.constant 0 : index
    %c0_1 = arith.constant 0 : index
    %c0_2 = arith.constant 0 : index
    %0 = vector.load %arg2[%c0, %c0_0, %c0_1, %c0_2] : memref<1x18x18x128xbf16, #tpu.memory_space<vmem>>, vector<1x18x16x128xbf16>
    %1 = vector.shape_cast %0 : vector<1x18x16x128xbf16> to vector<18x16x128xbf16>
    %c0_3 = arith.constant 0 : index
    %c0_4 = arith.constant 0 : index
    %c0_5 = arith.constant 0 : index
    %2 = vector.load %arg7[%c0_3, %c0_4, %c0_5] : memref<18x16x384xbf16, #tpu.memory_space<vmem>>, vector<18x16x128xbf16>
    tpu.vector_store %arg7[%c0_3, %c0_4, %c0_5], %1 {strides = array<i32>} : memref<18x16x384xbf16, #tpu.memory_space<vmem>>, vector<18x16x128xbf16>,
    %c0_6 = arith.constant 0 : index
    %c0_7 = arith.constant 0 : index
    %c1 = arith.constant 1 : index
    %c0_8 = arith.constant 0 : index
    %3 = vector.load %arg2[%c0_6, %c0_7, %c1, %c0_8] : memref<1x18x18x128xbf16, #tpu.memory_space<vmem>>, vector<1x18x16x128xbf16>
    %4 = vector.shape_cast %3 : vector<1x18x16x128xbf16> to vector<18x16x128xbf16>
    %c0_9 = arith.constant 0 : index
    %c0_10 = arith.constant 0 : index
    %c128 = arith.constant 128 : index
    %5 = vector.load %arg7[%c0_9, %c0_10, %c128] : memref<18x16x384xbf16, #tpu.memory_space<vmem>>, vector<18x16x128xbf16>
    tpu.vector_store %arg7[%c0_9, %c0_10, %c128], %4 {strides = array<i32>} : memref<18x16x384xbf16, #tpu.memory_space<vmem>>, vector<18x16x128xbf16>,
    %c0_11 = arith.constant 0 : index
    %c0_12 = arith.constant 0 : index
    %c2 = arith.constant 2 : index
    %c0_13 = arith.constant 0 : index
    %6 = vector.load %arg2[%c0_11, %c0_12, %c2, %c0_13] : memref<1x18x18x128xbf16, #tpu.memory_space<vmem>>, vector<1x18x16x128xbf16>
    %7 = vector.shape_cast %6 : vector<1x18x16x128xbf16> to vector<18x16x128xbf16>
    %c0_14 = arith.constant 0 : index
    %c0_15 = arith.constant 0 : index
    %c256 = arith.constant 256 : index
    %8 = vector.load %arg7[%c0_14, %c0_15, %c256] : memref<18x16x384xbf16, #tpu.memory_space<vmem>>, vector<18x16x128xbf16>
    tpu.vector_store %arg7[%c0_14, %c0_15, %c256], %7 {strides = array<i32>} : memref<18x16x384xbf16, #tpu.memory_space<vmem>>, vector<18x16x128xbf16>,
    %cst = arith.constant 0.000000e+00 : f32
    %9 = vector.broadcast %cst : f32 to vector<256x128xf32>
    %c0_16 = arith.constant 0 : index
    %c0_17 = arith.constant 0 : index
    %c0_18 = arith.constant 0 : index
    %10 = vector.load %arg7[%c0_16, %c0_17, %c0_18] : memref<18x16x384xbf16, #tpu.memory_space<vmem>>, vector<16x16x384xbf16>
    %11 = vector.shape_cast %10 : vector<16x16x384xbf16> to vector<256x384xbf16>
    %c0_19 = arith.constant 0 : index
    %c0_20 = arith.constant 0 : index
    %c0_21 = arith.constant 0 : index
    %12 = vector.load %arg3[%c0_19, %c0_20, %c0_21] : memref<3x384x128xbf16, #tpu.memory_space<vmem>>, vector<1x384x128xbf16>
    %13 = vector.shape_cast %12 : vector<1x384x128xbf16> to vector<384x128xbf16>
    %cst_22 = arith.constant dense<0.000000e+00> : vector<256x128xf32>
    %14 = tpu.matmul %11, %13, %cst_22 {dimension_numbers = #tpu.dot_dimension_numbers<[1], [0], [0], [1], [0, 0, 1, 1], [], []>} : vector<256x384xbf16>, vector<384x128xbf16>, vector<256x128xf32> -> vector<256x128xf32>
    %15 = arith.addf %9, %14 : vector<256x128xf32>
    %c1_23 = arith.constant 1 : index
    %c0_24 = arith.constant 0 : index
    %c0_25 = arith.constant 0 : index
    %16 = vector.load %arg7[%c1_23, %c0_24, %c0_25] : memref<18x16x384xbf16, #tpu.memory_space<vmem>>, vector<16x16x384xbf16>
    %17 = vector.shape_cast %16 : vector<16x16x384xbf16> to vector<256x384xbf16>
    %c1_26 = arith.constant 1 : index
    %c0_27 = arith.constant 0 : index
    %c0_28 = arith.constant 0 : index
    %18 = vector.load %arg3[%c1_26, %c0_27, %c0_28] : memref<3x384x128xbf16, #tpu.memory_space<vmem>>, vector<1x384x128xbf16>
    %19 = vector.shape_cast %18 : vector<1x384x128xbf16> to vector<384x128xbf16>
    %cst_29 = arith.constant dense<0.000000e+00> : vector<256x128xf32>
    %20 = tpu.matmul %17, %19, %cst_29 {dimension_numbers = #tpu.dot_dimension_numbers<[1], [0], [0], [1], [0, 0, 1, 1], [], []>} : vector<256x384xbf16>, vector<384x128xbf16>, vector<256x128xf32> -> vector<256x128xf32>
    %21 = arith.addf %15, %20 : vector<256x128xf32>
    %c2_30 = arith.constant 2 : index
    %c0_31 = arith.constant 0 : index
    %c0_32 = arith.constant 0 : index
    %22 = vector.load %arg7[%c2_30, %c0_31, %c0_32] : memref<18x16x384xbf16, #tpu.memory_space<vmem>>, vector<16x16x384xbf16>
    %23 = vector.shape_cast %22 : vector<16x16x384xbf16> to vector<256x384xbf16>
    %c2_33 = arith.constant 2 : index
    %c0_34 = arith.constant 0 : index
    %c0_35 = arith.constant 0 : index
    %24 = vector.load %arg3[%c2_33, %c0_34, %c0_35] : memref<3x384x128xbf16, #tpu.memory_space<vmem>>, vector<1x384x128xbf16>
    %25 = vector.shape_cast %24 : vector<1x384x128xbf16> to vector<384x128xbf16>
    %cst_36 = arith.constant dense<0.000000e+00> : vector<256x128xf32>
    %26 = tpu.matmul %23, %25, %cst_36 {dimension_numbers = #tpu.dot_dimension_numbers<[1], [0], [0], [1], [0, 0, 1, 1], [], []>} : vector<256x384xbf16>, vector<384x128xbf16>, vector<256x128xf32> -> vector<256x128xf32>
    %27 = arith.addf %21, %26 : vector<256x128xf32>
    %c0_i32 = arith.constant 0 : i32
    %28 = arith.cmpi eq, %arg0, %c0_i32 : i32
    %c0_i32_37 = arith.constant 0 : i32
    %29 = arith.cmpi eq, %arg1, %c0_i32_37 : i32
    %30 = arith.andi %28, %29 : i1
    %31 = arith.extui %30 : i1 to i32
    %c0_i32_38 = arith.constant 0 : i32
    %32 = arith.cmpi ne, %31, %c0_i32_38 : i32
    scf.if %32 {
      %cst_45 = arith.constant 0.000000e+00 : f32
      %44 = vector.broadcast %cst_45 : f32 to vector<1x128xf32>
      %c0_46 = arith.constant 0 : index
      %c0_47 = arith.constant 0 : index
      %45 = vector.load %arg8[%c0_46, %c0_47] : memref<1x128xf32, #tpu.memory_space<vmem>>, vector<1x128xf32>
      tpu.vector_store %arg8[%c0_46, %c0_47], %44 {strides = array<i32>} : memref<1x128xf32, #tpu.memory_space<vmem>>, vector<1x128xf32>,
      %cst_48 = arith.constant 0.000000e+00 : f32
      %46 = vector.broadcast %cst_48 : f32 to vector<1x128xf32>
      %c0_49 = arith.constant 0 : index
      %c0_50 = arith.constant 0 : index
      %47 = vector.load %arg9[%c0_49, %c0_50] : memref<1x128xf32, #tpu.memory_space<vmem>>, vector<1x128xf32>
      tpu.vector_store %arg9[%c0_49, %c0_50], %46 {strides = array<i32>} : memref<1x128xf32, #tpu.memory_space<vmem>>, vector<1x128xf32>,
    } else {
    }
    %c0_i32_39 = arith.constant 0 : i32
    %33 = arith.cmpi eq, %arg0, %c0_i32_39 : i32
    %34 = arith.extui %33 : i1 to i32
    %c0_i32_40 = arith.constant 0 : i32
    %35 = arith.cmpi ne, %34, %c0_i32_40 : i32
    scf.if %35 {
      %c0_45 = arith.constant 0 : index
      %c0_46 = arith.constant 0 : index
      %44 = vector.load %arg8[%c0_45, %c0_46] : memref<1x128xf32, #tpu.memory_space<vmem>>, vector<1x128xf32>
      %cst_47 = arith.constant dense<0.000000e+00> : vector<128xf32>
      %45 = vector.multi_reduction <add>, %27, %cst_47 [0] : vector<256x128xf32> to vector<128xf32>
      %46 = vector.shape_cast %45 : vector<128xf32> to vector<1x128xf32>
      %47 = arith.addf %44, %46 : vector<1x128xf32>
      %c0_48 = arith.constant 0 : index
      %c0_49 = arith.constant 0 : index
      %48 = vector.load %arg8[%c0_48, %c0_49] : memref<1x128xf32, #tpu.memory_space<vmem>>, vector<1x128xf32>
      tpu.vector_store %arg8[%c0_48, %c0_49], %47 {strides = array<i32>} : memref<1x128xf32, #tpu.memory_space<vmem>>, vector<1x128xf32>,
      %c0_50 = arith.constant 0 : index
      %c0_51 = arith.constant 0 : index
      %49 = vector.load %arg9[%c0_50, %c0_51] : memref<1x128xf32, #tpu.memory_space<vmem>>, vector<1x128xf32>
      %50 = arith.mulf %27, %27 : vector<256x128xf32>
      %cst_52 = arith.constant dense<0.000000e+00> : vector<128xf32>
      %51 = vector.multi_reduction <add>, %50, %cst_52 [0] : vector<256x128xf32> to vector<128xf32>
      %52 = vector.shape_cast %51 : vector<128xf32> to vector<1x128xf32>
      %53 = arith.addf %49, %52 : vector<1x128xf32>
      %c0_53 = arith.constant 0 : index
      %c0_54 = arith.constant 0 : index
      %54 = vector.load %arg9[%c0_53, %c0_54] : memref<1x128xf32, #tpu.memory_space<vmem>>, vector<1x128xf32>
      tpu.vector_store %arg9[%c0_53, %c0_54], %53 {strides = array<i32>} : memref<1x128xf32, #tpu.memory_space<vmem>>, vector<1x128xf32>,
    } else {
    }
    %c1_i32 = arith.constant 1 : i32
    %36 = arith.cmpi eq, %arg0, %c1_i32 : i32
    %c0_i32_41 = arith.constant 0 : i32
    %37 = arith.cmpi eq, %arg1, %c0_i32_41 : i32
    %38 = arith.andi %36, %37 : i1
    %39 = arith.extui %38 : i1 to i32
    %c0_i32_42 = arith.constant 0 : i32
    %40 = arith.cmpi ne, %39, %c0_i32_42 : i32
    scf.if %40 {
      %c0_45 = arith.constant 0 : index
      %c0_46 = arith.constant 0 : index
      %44 = vector.load %arg8[%c0_45, %c0_46] : memref<1x128xf32, #tpu.memory_space<vmem>>, vector<1x128xf32>
      %cst_47 = arith.constant 0.001953125 : f32
      %45 = vector.broadcast %cst_47 : f32 to vector<1x128xf32>
      %46 = arith.mulf %44, %45 : vector<1x128xf32>
      %c0_48 = arith.constant 0 : index
      %c0_49 = arith.constant 0 : index
      %47 = vector.load %arg9[%c0_48, %c0_49] : memref<1x128xf32, #tpu.memory_space<vmem>>, vector<1x128xf32>
      %cst_50 = arith.constant 0.001953125 : f32
      %48 = vector.broadcast %cst_50 : f32 to vector<1x128xf32>
      %49 = arith.mulf %47, %48 : vector<1x128xf32>
      %50 = arith.mulf %46, %46 : vector<1x128xf32>
      %51 = arith.subf %49, %50 : vector<1x128xf32>
      %cst_51 = arith.constant 9.99999974E-6 : f32
      %52 = vector.broadcast %cst_51 : f32 to vector<1x128xf32>
      %53 = arith.addf %51, %52 : vector<1x128xf32>
      %54 = math.rsqrt %53 : vector<1x128xf32>
      %c0_52 = arith.constant 0 : index
      %c0_53 = arith.constant 0 : index
      %55 = vector.load %arg4[%c0_52, %c0_53] : memref<1x128xf32, #tpu.memory_space<vmem>>, vector<1x128xf32>
      %56 = arith.mulf %55, %54 : vector<1x128xf32>
      %c0_54 = arith.constant 0 : index
      %c0_55 = arith.constant 0 : index
      %57 = vector.load %arg10[%c0_54, %c0_55] : memref<1x128xf32, #tpu.memory_space<vmem>>, vector<1x128xf32>
      tpu.vector_store %arg10[%c0_54, %c0_55], %56 {strides = array<i32>} : memref<1x128xf32, #tpu.memory_space<vmem>>, vector<1x128xf32>,
      %c0_56 = arith.constant 0 : index
      %c0_57 = arith.constant 0 : index
      %58 = vector.load %arg5[%c0_56, %c0_57] : memref<1x128xf32, #tpu.memory_space<vmem>>, vector<1x128xf32>
      %59 = arith.mulf %46, %56 : vector<1x128xf32>
      %60 = arith.subf %58, %59 : vector<1x128xf32>
      %c0_58 = arith.constant 0 : index
      %c0_59 = arith.constant 0 : index
      %61 = vector.load %arg11[%c0_58, %c0_59] : memref<1x128xf32, #tpu.memory_space<vmem>>, vector<1x128xf32>
      tpu.vector_store %arg11[%c0_58, %c0_59], %60 {strides = array<i32>} : memref<1x128xf32, #tpu.memory_space<vmem>>, vector<1x128xf32>,
    } else {
    }
    %c1_i32_43 = arith.constant 1 : i32
    %41 = arith.cmpi eq, %arg0, %c1_i32_43 : i32
    %42 = arith.extui %41 : i1 to i32
    %c0_i32_44 = arith.constant 0 : i32
    %43 = arith.cmpi ne, %42, %c0_i32_44 : i32
    scf.if %43 {
      %c0_45 = arith.constant 0 : index
      %c0_46 = arith.constant 0 : index
      %44 = vector.load %arg10[%c0_45, %c0_46] : memref<1x128xf32, #tpu.memory_space<vmem>>, vector<1x128xf32>
      %45 = vector.broadcast %44 : vector<1x128xf32> to vector<256x128xf32>
      %46 = arith.mulf %27, %45 : vector<256x128xf32>
      %c0_47 = arith.constant 0 : index
      %c0_48 = arith.constant 0 : index
      %47 = vector.load %arg11[%c0_47, %c0_48] : memref<1x128xf32, #tpu.memory_space<vmem>>, vector<1x128xf32>
      %48 = vector.broadcast %47 : vector<1x128xf32> to vector<256x128xf32>
      %49 = arith.addf %46, %48 : vector<256x128xf32>
      %cst_49 = arith.constant 0.000000e+00 : f32
      %50 = vector.broadcast %cst_49 : f32 to vector<256x128xf32>
      %51 = arith.maximumf %49, %50 : vector<256x128xf32>
      %52 = vector.shape_cast %51 : vector<256x128xf32> to vector<16x16x128xf32>
      %c0_50 = arith.constant 0 : index
      %c0_51 = arith.constant 0 : index
      %c0_52 = arith.constant 0 : index
      %c0_53 = arith.constant 0 : index
      %53 = vector.load %arg6[%c0_50, %c0_51, %c0_52, %c0_53] : memref<1x16x16x128xf32, #tpu.memory_space<vmem>>, vector<1x16x16x128xf32>
      %54 = vector.shape_cast %53 : vector<1x16x16x128xf32> to vector<16x16x128xf32>
      %55 = vector.shape_cast %52 : vector<16x16x128xf32> to vector<1x16x16x128xf32>
      tpu.vector_store %arg6[%c0_50, %c0_51, %c0_52, %c0_53], %55 {strides = array<i32>} : memref<1x16x16x128xf32, #tpu.memory_space<vmem>>, vector<1x16x16x128xf32>,
    } else {
    }
    return
  }
  func.func @transform_0(%arg0: i32, %arg1: i32) -> (i32, i32, i32, i32) {
    %c0_i32 = arith.constant 0 : i32
    %c0_i32_0 = arith.constant 0 : i32
    %c0_i32_1 = arith.constant 0 : i32
    %c0_i32_2 = arith.constant 0 : i32
    return %arg1, %c0_i32, %c0_i32_0, %c0_i32_1 : i32, i32, i32, i32
  }
  func.func @transform_1(%arg0: i32, %arg1: i32) -> (i32, i32, i32) {
    %c0_i32 = arith.constant 0 : i32
    %c0_i32_0 = arith.constant 0 : i32
    %c0_i32_1 = arith.constant 0 : i32
    %c0_i32_2 = arith.constant 0 : i32
    return %c0_i32, %c0_i32_0, %c0_i32_1 : i32, i32, i32
  }
  func.func @transform_2(%arg0: i32, %arg1: i32) -> (i32, i32) {
    %c0_i32 = arith.constant 0 : i32
    %c0_i32_0 = arith.constant 0 : i32
    %c0_i32_1 = arith.constant 0 : i32
    return %c0_i32, %c0_i32_0 : i32, i32
  }
  func.func @transform_3(%arg0: i32, %arg1: i32) -> (i32, i32) {
    %c0_i32 = arith.constant 0 : i32
    %c0_i32_0 = arith.constant 0 : i32
    %c0_i32_1 = arith.constant 0 : i32
    return %c0_i32, %c0_i32_0 : i32, i32
  }
  func.func @transform_4(%arg0: i32, %arg1: i32) -> (i32, i32, i32, i32) {
    %0 = arith.muli %arg1, %arg0 : i32
    %c0_i32 = arith.constant 0 : i32
    %c0_i32_0 = arith.constant 0 : i32
    %c0_i32_1 = arith.constant 0 : i32
    %c0_i32_2 = arith.constant 0 : i32
    return %0, %c0_i32, %c0_i32_0, %c0_i32_1 : i32, i32, i32, i32
  }
}

</mosaic_0001>

<llo_original>
// kernel: double_conv_block.3
$region0: #{double_conv_block.3}
  #allocation0 [shape = 'u32[]', space=smem, size = 0x4, offset = 0x4, fixed_abs, tag = 'smem constant byte address 0x4 - core index']
  #allocation1 [shape = 'u32[144,128]{1,0:T(1,128)}', space=vmem, size = 0x12000, scoped, tag = 'internal scratch']
  #allocation2 [shape = 'bf16[18,16,384]{2,1,0:T(8,128)(2,1)}', space=vmem, size = 0x36000, scoped, tag = 'scratch operand']
  #allocation3 [shape = 'f32[1,128]{1,0:T(1,128)}', space=vmem, size = 0x200, scoped, tag = 'scratch operand']
  #allocation4 [shape = 'f32[1,128]{1,0:T(1,128)}', space=vmem, size = 0x200, scoped, tag = 'scratch operand']
  #allocation5 [shape = 'f32[1,128]{1,0:T(1,128)}', space=vmem, size = 0x200, scoped, tag = 'scratch operand']
  #allocation6 [shape = 'f32[1,128]{1,0:T(1,128)}', space=vmem, size = 0x200, scoped, tag = 'scratch operand']
  %s0 = inlined_call_operand.vmem [shape: bf16[2,18,18,128], index: 0, kind: input, shape index: {}]
  %s1 = inlined_call_operand.vmem [shape: bf16[3,384,128], index: 1, kind: input, shape index: {}]
  %s2 = inlined_call_operand.vmem [shape: f32[1,128], index: 2, kind: input, shape index: {}]
  %s3 = inlined_call_operand.vmem [shape: f32[1,128], index: 3, kind: input, shape index: {}]
  %s4 = inlined_call_operand.vmem [shape: f32[2,16,16,128], index: 4, kind: output, shape index: {}]
  %s5 = sld [smem:[#allocation0]]
  $region65: #{double_conv_block.3} parent=0
    _
  %s7 = ssub.s32 1, %s5
  %s8 = scalar_select 0, %s7, %s5
  loop: start=0, step=1, limit=6
  $region2: #{double_conv_block.3} parent=0 // loop_pre_header
    _
  $region3: #{double_conv_block.3} parent=0 // loop_header
    %s10 = sphi 0, %s14
    %p11 = scmp.ge.s32.totalorder %s10, 6
    %s17 = sphi 0, %s29
    %s18 = sphi 0, %s25
    %s19 = sphi 0, %s17
    %s20 = sphi 0, %s18
    %s21 = sphi 0, %s19
    %s22 = sphi 0, %s20
    %s32 = sphi 0, %s34
    %s35 = sphi 0, %s32
    %s36 = sphi 0, %s35
    %s52 = sphi 0, %s36
    %s56 = sphi 0, %s56
    %s58 = sphi 0, %s56
    %s59 = sphi 0, %s58
    %s73 = sphi 0, %s59
    %s77 = sphi 0, %s77
    %s79 = sphi 0, %s77
    %s80 = sphi 0, %s79
    %s94 = sphi 0, %s80
    %s98 = sphi 0, %s98
    %s100 = sphi 0, %s98
    %s101 = sphi 0, %s100
    %s115 = sphi 0, %s101
    %s123 = sphi 0, %s125
    %s126 = sphi 0, %s123
    %s127 = sphi 0, %s126
    %s143 = sphi 0, %s127
  $region4: #{double_conv_block.3} parent=0 // loop_header_branch
    %13 = sbr.rel (%p11) target = $region8
  $region5: #{double_conv_block.3} parent=0 // loop_body
    %s15 = ssub.s32 %s10, 1
    %s16 = ssub.s32 %s10, 2
    %s23 = sadd.s32 1, %s18
    %p24 = scmp.ge.s32.totalorder %s23, 2
    %s25 = scalar_select %p24, 0, %s23
    %s26 = sadd.s32 1, %s17
    %s27 = scalar_select %p24, %s26, %s17
    %p28 = scmp.ge.s32.totalorder %s27, 2
    %s29 = scalar_select %p28, 0, %s27
    %s30 = ssub.s32 %s18, %s25
    %p31 = scmp.eq.s32.totalorder %s30, 0
    %s33 = sadd.s32 %s32, 1
    %s34 = scalar_select %p31, %s32, %s33
    %p37 = pneg %p31
    %p38 = scmp.eq.s32.totalorder %s10, 3
    %p39 = por %p37, %p38
    %p40 = scmp.ne.s32.totalorder %s32, %s35
    %p41 = scmp.eq.s32.totalorder %s10, 0
    %p42 = por %p40, %p41
    %p43 = scmp.ne.s32.totalorder %s32, %s35
    %p44 = scmp.eq.s32.totalorder %s15, 3
    %p45 = por %p43, %p44
    %p46 = scmp.ne.s32.totalorder %s35, %s36
    %p47 = scmp.eq.s32.totalorder %s15, 0
    %p48 = por %p46, %p47
    %p49 = scmp.ne.s32.totalorder %s35, %s36
    %p50 = scmp.eq.s32.totalorder %s16, 3
    %p51 = por %p49, %p50
    %p53 = scmp.ne.s32.totalorder %s36, %s52
    %p54 = scmp.eq.s32.totalorder %s16, 0
    %p55 = por %p53, %p54
    %s57 = sadd.s32 %s56, 1
    %p60 = scmp.eq.s32.totalorder %s10, 3
    %p61 = scmp.ne.s32.totalorder %s56, %s58
    %p62 = scmp.eq.s32.totalorder %s10, 0
    %p63 = por %p61, %p62
    %p64 = scmp.ne.s32.totalorder %s56, %s58
    %p65 = scmp.eq.s32.totalorder %s15, 3
    %p66 = por %p64, %p65
    %p67 = scmp.ne.s32.totalorder %s58, %s59
    %p68 = scmp.eq.s32.totalorder %s15, 0
    %p69 = por %p67, %p68
    %p70 = scmp.ne.s32.totalorder %s58, %s59
    %p71 = scmp.eq.s32.totalorder %s16, 3
    %p72 = por %p70, %p71
    %p74 = scmp.ne.s32.totalorder %s59, %s73
    %p75 = scmp.eq.s32.totalorder %s16, 0
    %p76 = por %p74, %p75
    %s78 = sadd.s32 %s77, 1
    %p81 = scmp.eq.s32.totalorder %s10, 3
    %p82 = scmp.ne.s32.totalorder %s77, %s79
    %p83 = scmp.eq.s32.totalorder %s10, 0
    %p84 = por %p82, %p83
    %p85 = scmp.ne.s32.totalorder %s77, %s79
    %p86 = scmp.eq.s32.totalorder %s15, 3
    %p87 = por %p85, %p86
    %p88 = scmp.ne.s32.totalorder %s79, %s80
    %p89 = scmp.eq.s32.totalorder %s15, 0
    %p90 = por %p88, %p89
    %p91 = scmp.ne.s32.totalorder %s79, %s80
    %p92 = scmp.eq.s32.totalorder %s16, 3
    %p93 = por %p91, %p92
    %p95 = scmp.ne.s32.totalorder %s80, %s94
    %p96 = scmp.eq.s32.totalorder %s16, 0
    %p97 = por %p95, %p96
    %s99 = sadd.s32 %s98, 1
    %p102 = scmp.eq.s32.totalorder %s10, 3
    %p103 = scmp.ne.s32.totalorder %s98, %s100
    %p104 = scmp.eq.s32.totalorder %s10, 0
    %p105 = por %p103, %p104
    %p106 = scmp.ne.s32.totalorder %s98, %s100
    %p107 = scmp.eq.s32.totalorder %s15, 3
    %p108 = por %p106, %p107
    %p109 = scmp.ne.s32.totalorder %s100, %s101
    %p110 = scmp.eq.s32.totalorder %s15, 0
    %p111 = por %p109, %p110
    %p112 = scmp.ne.s32.totalorder %s100, %s101
    %p113 = scmp.eq.s32.totalorder %s16, 3
    %p114 = por %p112, %p113
    %p116 = scmp.ne.s32.totalorder %s101, %s115
    %p117 = scmp.eq.s32.totalorder %s16, 0
    %p118 = por %p116, %p117
    %s119 = smul.u32 %s18, %s17
    %s120 = smul.u32 %s25, %s29
    %s121 = ssub.s32 %s119, %s120
    %p122 = scmp.eq.s32.totalorder %s121, 0
    %s124 = sadd.s32 %s123, 1
    %s125 = scalar_select %p122, %s123, %s124
    %p128 = pneg %p122
    %p129 = scmp.eq.s32.totalorder %s10, 3
    %p130 = por %p128, %p129
    %p131 = scmp.ne.s32.totalorder %s123, %s126
    %p132 = scmp.eq.s32.totalorder %s10, 0
    %p133 = por %p131, %p132
    %p134 = scmp.ne.s32.totalorder %s123, %s126
    %p135 = scmp.eq.s32.totalorder %s15, 3
    %p136 = por %p134, %p135
    %p137 = scmp.ne.s32.totalorder %s126, %s127
    %p138 = scmp.eq.s32.totalorder %s15, 0
    %p139 = por %p137, %p138
    %p140 = scmp.ne.s32.totalorder %s126, %s127
    %p141 = scmp.eq.s32.totalorder %s16, 3
    %p142 = por %p140, %p141
    %p144 = scmp.ne.s32.totalorder %s127, %s143
    %p145 = scmp.eq.s32.totalorder %s16, 0
    %p146 = por %p144, %p145
    %p147 = scmp.le.s32.totalorder 1, %s10
    %p148 = scmp.lt.s32.totalorder %s10, 5
    %p149 = pnand %p147, %p148
    %p150 = pneg %p149
    // Predicated region
    $region9: #{double_conv_block.3} parent=5 // pred_check
      _
    $region10: #{double_conv_block.3} parent=5 // pred_check_branch
      %152 = sbr.rel (%p149) target = $region12
    $region11: #{double_conv_block.3} parent=5 // pred_region
      %s153 = ssub.s32 %s10, 1
      // Predicated region
      $region13: #{double_conv_block.3} parent=11 // pred_check
        %p154 = pneg %p69
      $region14: #{double_conv_block.3} parent=11 // pred_check_branch
        %156 = sbr.rel (%p154) target = $region16
      $region15: #{double_conv_block.3} parent=11 // pred_region
        _
      $region16: #{double_conv_block.3} parent=11 // pred_fallthru
        _
      // Predicated region
      $region17: #{double_conv_block.3} parent=11 // pred_check
        %p157 = pneg %p90
      $region18: #{double_conv_block.3} parent=11 // pred_check_branch
        %159 = sbr.rel (%p157) target = $region20
      $region19: #{double_conv_block.3} parent=11 // pred_region
        _
      $region20: #{double_conv_block.3} parent=11 // pred_fallthru
        _
      // Predicated region
      $region21: #{double_conv_block.3} parent=11 // pred_check
        %p160 = pneg %p111
      $region22: #{double_conv_block.3} parent=11 // pred_check_branch
        %162 = sbr.rel (%p160) target = $region24
      $region23: #{double_conv_block.3} parent=11 // pred_region
        _
      $region24: #{double_conv_block.3} parent=11 // pred_fallthru
        _
    $region12: #{double_conv_block.3} parent=5 // pred_fallthru
      _
    %p163 = scmp.lt.s32.totalorder %s10, 4
    // Predicated region
    $region25: #{double_conv_block.3} parent=5 // pred_check
      %p164 = pneg %p163
    $region26: #{double_conv_block.3} parent=5 // pred_check_branch
      %166 = sbr.rel (%p164) target = $region28
    $region27: #{double_conv_block.3} parent=5 // pred_region
      // Predicated region
      $region29: #{double_conv_block.3} parent=27 // pred_check
        %p167 = pneg %p42
      $region30: #{double_conv_block.3} parent=27 // pred_check_branch
        %169 = sbr.rel (%p167) target = $region32
      $region31: #{double_conv_block.3} parent=27 // pred_region
        %p170 = scmp.lt.s32.totalorder %s18, 1
        %s171 = scalar_select %p170, %s18, 1
        %s172 = smul.addr %s171, 54
        %s173 = smul.addr %s172, 4
        %s174 = scalar_lea.vmem %s0, %s173
      $region32: #{double_conv_block.3} parent=27 // pred_fallthru
        _
    $region28: #{double_conv_block.3} parent=5 // pred_fallthru
      _
    %p175 = scmp.le.s32.totalorder 1, %s10
    %p176 = scmp.lt.s32.totalorder %s10, 5
    %p177 = pnand %p175, %p176
    %p178 = pneg %p177
    // Predicated region
    $region33: #{double_conv_block.3} parent=5 // pred_check
      _
    $region34: #{double_conv_block.3} parent=5 // pred_check_branch
      %180 = sbr.rel (%p177) target = $region36
    $region35: #{double_conv_block.3} parent=5 // pred_region
      %s181 = ssub.s32 %s10, 1
      %p182 = scmp.lt.s32.totalorder %s20, 1
      %s183 = scalar_select %p182, %s20, 1
      %s184 = smul.addr %s183, 54
      %s185 = smul.addr %s184, 4
      %s186 = scalar_lea.vmem %s0, %s185
      %p187 = pneg %p48
      %p188 = pneg %p45
      %p189 = pneg %p69
      %p190 = pneg %p66
      %p191 = pneg %p90
      %p192 = pneg %p87
      %p193 = pneg %p111
      %p194 = pneg %p108
      %p195 = pneg %p139
      %p196 = pneg %p136
      %s197 = smul.u32 %s20, %s19
      %p198 = scmp.lt.s32.totalorder %s197, 1
      %s199 = scalar_select %p198, %s197, 1
      %s200 = smul.addr %s199, 32
      %s201 = smul.addr %s200, 8
      %s202 = scalar_lea.vmem %s4, %s201
      %p203 = scmp.lt.s32.totalorder %s20, 1
      %s204 = scalar_select %p203, %s20, 1
      %s205 = smul.addr %s204, 54
      %s206 = smul.addr %s205, 4
      %s207 = scalar_lea.vmem %s0, %s206
      %s208 = smul.u32 %s20, %s19
      %p209 = scmp.lt.s32.totalorder %s208, 1
      %s210 = scalar_select %p209, %s208, 1
      %s211 = smul.addr %s210, 32
      %s212 = smul.addr %s211, 8
      %s213 = scalar_lea.vmem %s4, %s212
      %s214 = smul.u32 %s20, %s19
      %v216 = vld [vmem:[%s207] sm:$0xf]
      %v217 = vld [vmem:[%s207 + $0x4] sm:$0xf]
      %v218 = vld [vmem:[%s207 + $0xc] sm:$0xf]
      %v219 = vld [vmem:[%s207 + $0x10] sm:$0xf]
      %v220 = vld [vmem:[%s207 + $0x18] sm:$0xf]
      %v221 = vld [vmem:[%s207 + $0x1c] sm:$0xf]
      %v222 = vld [vmem:[%s207 + $0x24] sm:$0xf]
      %v223 = vld [vmem:[%s207 + $0x28] sm:$0xf]
      %v224 = vld [vmem:[%s207 + $0x30] sm:$0xf]
      %v225 = vld [vmem:[%s207 + $0x34] sm:$0xf]
      %v226 = vld [vmem:[%s207 + $0x3c] sm:$0xf]
      %v227 = vld [vmem:[%s207 + $0x40] sm:$0xf]
      %v228 = vld [vmem:[%s207 + $0x48] sm:$0xf]
      %v229 = vld [vmem:[%s207 + $0x4c] sm:$0xf]
      %v230 = vld [vmem:[%s207 + $0x54] sm:$0xf]
      %v231 = vld [vmem:[%s207 + $0x58] sm:$0xf]
      %v232 = vld [vmem:[%s207 + $0x60] sm:$0xf]
      %v233 = vld [vmem:[%s207 + $0x64] sm:$0xf]
      %v234 = vld [vmem:[%s207 + $0x6c] sm:$0xf]
      %v235 = vld [vmem:[%s207 + $0x70] sm:$0xf]
      %v236 = vld [vmem:[%s207 + $0x78] sm:$0xf]
      %v237 = vld [vmem:[%s207 + $0x7c] sm:$0xf]
      %v238 = vld [vmem:[%s207 + $0x84] sm:$0xf]
      %v239 = vld [vmem:[%s207 + $0x88] sm:$0xf]
      %v240 = vld [vmem:[%s207 + $0x90] sm:$0xf]
      %v241 = vld [vmem:[%s207 + $0x94] sm:$0xf]
      %v242 = vld [vmem:[%s207 + $0x9c] sm:$0xf]
      %v243 = vld [vmem:[%s207 + $0xa0] sm:$0xf]
      %v244 = vld [vmem:[%s207 + $0xa8] sm:$0xf]
      %v245 = vld [vmem:[%s207 + $0xac] sm:$0xf]
      %v246 = vld [vmem:[%s207 + $0xb4] sm:$0xf]
      %v247 = vld [vmem:[%s207 + $0xb8] sm:$0xf]
      %v248 = vld [vmem:[%s207 + $0xc0] sm:$0xf]
      %v249 = vld [vmem:[%s207 + $0xc4] sm:$0xf]
      %v250 = vld [vmem:[%s207 + $0xcc] sm:$0xf]
      %v251 = vld [vmem:[%s207 + $0xd0] sm:$0xf]
      %252 = vst [vmem:[#allocation2] sm:$0xf] %v216
      %253 = vst [vmem:[#allocation2 + $0xc] sm:$0xf] %v217
      %254 = vst [vmem:[#allocation2 + $0x18] sm:$0xf] %v218
      %255 = vst [vmem:[#allocation2 + $0x24] sm:$0xf] %v219
      %256 = vst [vmem:[#allocation2 + $0x30] sm:$0xf] %v220
      %257 = vst [vmem:[#allocation2 + $0x3c] sm:$0xf] %v221
      %258 = vst [vmem:[#allocation2 + $0x48] sm:$0xf] %v222
      %259 = vst [vmem:[#allocation2 + $0x54] sm:$0xf] %v223
      %260 = vst [vmem:[#allocation2 + $0x60] sm:$0xf] %v224
      %261 = vst [vmem:[#allocation2 + $0x6c] sm:$0xf] %v225
      %262 = vst [vmem:[#allocation2 + $0x78] sm:$0xf] %v226
      %263 = vst [vmem:[#allocation2 + $0x84] sm:$0xf] %v227
      %264 = vst [vmem:[#allocation2 + $0x90] sm:$0xf] %v228
      %265 = vst [vmem:[#allocation2 + $0x9c] sm:$0xf] %v229
      %266 = vst [vmem:[#allocation2 + $0xa8] sm:$0xf] %v230
      %267 = vst [vmem:[#allocation2 + $0xb4] sm:$0xf] %v231
      %268 = vst [vmem:[#allocation2 + $0xc0] sm:$0xf] %v232
      %269 = vst [vmem:[#allocation2 + $0xcc] sm:$0xf] %v233
      %270 = vst [vmem:[#allocation2 + $0xd8] sm:$0xf] %v234
      %271 = vst [vmem:[#allocation2 + $0xe4] sm:$0xf] %v235
      %272 = vst [vmem:[#allocation2 + $0xf0] sm:$0xf] %v236
      %273 = vst [vmem:[#allocation2 + $0xfc] sm:$0xf] %v237
      %274 = vst [vmem:[#allocation2 + $0x108] sm:$0xf] %v238
      %275 = vst [vmem:[#allocation2 + $0x114] sm:$0xf] %v239
      %276 = vst [vmem:[#allocation2 + $0x120] sm:$0xf] %v240
      %277 = vst [vmem:[#allocation2 + $0x12c] sm:$0xf] %v241
      %278 = vst [vmem:[#allocation2 + $0x138] sm:$0xf] %v242
      %279 = vst [vmem:[#allocation2 + $0x144] sm:$0xf] %v243
      %280 = vst [vmem:[#allocation2 + $0x150] sm:$0xf] %v244
      %281 = vst [vmem:[#allocation2 + $0x15c] sm:$0xf] %v245
      %282 = vst [vmem:[#allocation2 + $0x168] sm:$0xf] %v246
      %283 = vst [vmem:[#allocation2 + $0x174] sm:$0xf] %v247
      %284 = vst [vmem:[#allocation2 + $0x180] sm:$0xf] %v248
      %285 = vst [vmem:[#allocation2 + $0x18c] sm:$0xf] %v249
      %286 = vst [vmem:[#allocation2 + $0x198] sm:$0xf] %v250
      %287 = vst [vmem:[#allocation2 + $0x1a4] sm:$0xf] %v251
      %v288 = vld [vmem:[%s207] sm:$0xf]
      %v289 = vld [vmem:[%s207 + $0x4] sm:$0xf]
      %v290 = vld [vmem:[%s207 + $0x8] sm:$0x1]
      %v291 = vld [vmem:[%s207 + $0xc] sm:$0xf]
      %v292 = vld [vmem:[%s207 + $0x10] sm:$0xf]
      %v293 = vld [vmem:[%s207 + $0x14] sm:$0x1]
      %v294 = vld [vmem:[%s207 + $0x18] sm:$0xf]
      %v295 = vld [vmem:[%s207 + $0x1c] sm:$0xf]
      %v296 = vld [vmem:[%s207 + $0x20] sm:$0x1]
      %v297 = vld [vmem:[%s207 + $0x24] sm:$0xf]
      %v298 = vld [vmem:[%s207 + $0x28] sm:$0xf]
      %v299 = vld [vmem:[%s207 + $0x2c] sm:$0x1]
      %v300 = vld [vmem:[%s207 + $0x30] sm:$0xf]
      %v301 = vld [vmem:[%s207 + $0x34] sm:$0xf]
      %v302 = vld [vmem:[%s207 + $0x38] sm:$0x1]
      %v303 = vld [vmem:[%s207 + $0x3c] sm:$0xf]
      %v304 = vld [vmem:[%s207 + $0x40] sm:$0xf]
      %v305 = vld [vmem:[%s207 + $0x44] sm:$0x1]
      %v306 = vld [vmem:[%s207 + $0x48] sm:$0xf]
      %v307 = vld [vmem:[%s207 + $0x4c] sm:$0xf]
      %v308 = vld [vmem:[%s207 + $0x50] sm:$0x1]
      %v309 = vld [vmem:[%s207 + $0x54] sm:$0xf]
      %v310 = vld [vmem:[%s207 + $0x58] sm:$0xf]
      %v311 = vld [vmem:[%s207 + $0x5c] sm:$0x1]
      %v312 = vld [vmem:[%s207 + $0x60] sm:$0xf]
      %v313 = vld [vmem:[%s207 + $0x64] sm:$0xf]
      %v314 = vld [vmem:[%s207 + $0x68] sm:$0x1]
      %v315 = vld [vmem:[%s207 + $0x6c] sm:$0xf]
      %v316 = vld [vmem:[%s207 + $0x70] sm:$0xf]
      %v317 = vld [vmem:[%s207 + $0x74] sm:$0x1]
      %v318 = vld [vmem:[%s207 + $0x78] sm:$0xf]
      %v319 = vld [vmem:[%s207 + $0x7c] sm:$0xf]
      %v320 = vld [vmem:[%s207 + $0x80] sm:$0x1]
      %v321 = vld [vmem:[%s207 + $0x84] sm:$0xf]
      %v322 = vld [vmem:[%s207 + $0x88] sm:$0xf]
      %v323 = vld [vmem:[%s207 + $0x8c] sm:$0x1]
      %v324 = vld [vmem:[%s207 + $0x90] sm:$0xf]
      %v325 = vld [vmem:[%s207 + $0x94] sm:$0xf]
      %v326 = vld [vmem:[%s207 + $0x98] sm:$0x1]
      %v327 = vld [vmem:[%s207 + $0x9c] sm:$0xf]
      %v328 = vld [vmem:[%s207 + $0xa0] sm:$0xf]
      %v329 = vld [vmem:[%s207 + $0xa4] sm:$0x1]
      %v330 = vld [vmem:[%s207 + $0xa8] sm:$0xf]
      %v331 = vld [vmem:[%s207 + $0xac] sm:$0xf]
      %v332 = vld [vmem:[%s207 + $0xb0] sm:$0x1]
      %v333 = vld [vmem:[%s207 + $0xb4] sm:$0xf]
      %v334 = vld [vmem:[%s207 + $0xb8] sm:$0xf]
      %v335 = vld [vmem:[%s207 + $0xbc] sm:$0x1]
      %v336 = vld [vmem:[%s207 + $0xc0] sm:$0xf]
      %v337 = vld [vmem:[%s207 + $0xc4] sm:$0xf]
      %v338 = vld [vmem:[%s207 + $0xc8] sm:$0x1]
      %v339 = vld [vmem:[%s207 + $0xcc] sm:$0xf]
      %v340 = vld [vmem:[%s207 + $0xd0] sm:$0xf]
      %v341 = vld [vmem:[%s207 + $0xd4] sm:$0x1]
      %vm342 = vsmask.f32 3328
      %vm343 = vsmask.f32 7440
      %vm344 = vmor %vm342, %vm343
      %v346 = vshrl.u32 %v288, 16
      %v348 = vrot.slane %v346, 4
      %v349 = vshll.u32 %v288, 16
      %v351 = vrot.slane %v349, 5
      %v352 = vor.u32 %v348, %v351
      %v353 = vrot.slane %v352, 4
      %v355 = vshll.u32 %v289, 16
      %v357 = vrot.slane %v355, 5
      %v358 = vsel %vm344, %v353, %v357
      %v359 = vshrl.u32 %v289, 16
      %v361 = vrot.slane %v359, 4
      %v362 = vor.u32 %v361, %v357
      %v363 = vrot.slane %v362, 4
      %v365 = vshll.u32 %v290, 16
      %v367 = vrot.slane %v365, 5
      %v368 = vsel %vm344, %v363, %v367
      %v370 = vshrl.u32 %v291, 16
      %v372 = vrot.slane %v370, 4
      %v373 = vshll.u32 %v291, 16
      %v375 = vrot.slane %v373, 5
      %v376 = vor.u32 %v372, %v375
      %v377 = vrot.slane %v376, 4
      %v379 = vshll.u32 %v292, 16
      %v381 = vrot.slane %v379, 5
      %v382 = vsel %vm344, %v377, %v381
      %v383 = vshrl.u32 %v292, 16
      %v385 = vrot.slane %v383, 4
      %v386 = vor.u32 %v385, %v381
      %v387 = vrot.slane %v386, 4
      %v389 = vshll.u32 %v293, 16
      %v391 = vrot.slane %v389, 5
      %v392 = vsel %vm344, %v387, %v391
      %v394 = vshrl.u32 %v294, 16
      %v396 = vrot.slane %v394, 4
      %v397 = vshll.u32 %v294, 16
      %v399 = vrot.slane %v397, 5
      %v400 = vor.u32 %v396, %v399
      %v401 = vrot.slane %v400, 4
      %v403 = vshll.u32 %v295, 16
      %v405 = vrot.slane %v403, 5
      %v406 = vsel %vm344, %v401, %v405
      %v407 = vshrl.u32 %v295, 16
      %v409 = vrot.slane %v407, 4
      %v410 = vor.u32 %v409, %v405
      %v411 = vrot.slane %v410, 4
      %v413 = vshll.u32 %v296, 16
      %v415 = vrot.slane %v413, 5
      %v416 = vsel %vm344, %v411, %v415
      %v418 = vshrl.u32 %v297, 16
      %v420 = vrot.slane %v418, 4
      %v421 = vshll.u32 %v297, 16
      %v423 = vrot.slane %v421, 5
      %v424 = vor.u32 %v420, %v423
      %v425 = vrot.slane %v424, 4
      %v427 = vshll.u32 %v298, 16
      %v429 = vrot.slane %v427, 5
      %v430 = vsel %vm344, %v425, %v429
      %v431 = vshrl.u32 %v298, 16
      %v433 = vrot.slane %v431, 4
      %v434 = vor.u32 %v433, %v429
      %v435 = vrot.slane %v434, 4
      %v437 = vshll.u32 %v299, 16
      %v439 = vrot.slane %v437, 5
      %v440 = vsel %vm344, %v435, %v439
      %v442 = vshrl.u32 %v300, 16
      %v444 = vrot.slane %v442, 4
      %v445 = vshll.u32 %v300, 16
      %v447 = vrot.slane %v445, 5
      %v448 = vor.u32 %v444, %v447
      %v449 = vrot.slane %v448, 4
      %v451 = vshll.u32 %v301, 16
      %v453 = vrot.slane %v451, 5
      %v454 = vsel %vm344, %v449, %v453
      %v455 = vshrl.u32 %v301, 16
      %v457 = vrot.slane %v455, 4
      %v458 = vor.u32 %v457, %v453
      %v459 = vrot.slane %v458, 4
      %v461 = vshll.u32 %v302, 16
      %v463 = vrot.slane %v461, 5
      %v464 = vsel %vm344, %v459, %v463
      %v466 = vshrl.u32 %v303, 16
      %v468 = vrot.slane %v466, 4
      %v469 = vshll.u32 %v303, 16
      %v471 = vrot.slane %v469, 5
      %v472 = vor.u32 %v468, %v471
      %v473 = vrot.slane %v472, 4
      %v475 = vshll.u32 %v304, 16
      %v477 = vrot.slane %v475, 5
      %v478 = vsel %vm344, %v473, %v477
      %v479 = vshrl.u32 %v304, 16
      %v481 = vrot.slane %v479, 4
      %v482 = vor.u32 %v481, %v477
      %v483 = vrot.slane %v482, 4
      %v485 = vshll.u32 %v305, 16
      %v487 = vrot.slane %v485, 5
      %v488 = vsel %vm344, %v483, %v487
      %v490 = vshrl.u32 %v306, 16
      %v492 = vrot.slane %v490, 4
      %v493 = vshll.u32 %v306, 16
      %v495 = vrot.slane %v493, 5
      %v496 = vor.u32 %v492, %v495
      %v497 = vrot.slane %v496, 4
      %v499 = vshll.u32 %v307, 16
      %v501 = vrot.slane %v499, 5
      %v502 = vsel %vm344, %v497, %v501
      %v503 = vshrl.u32 %v307, 16
      %v505 = vrot.slane %v503, 4
      %v506 = vor.u32 %v505, %v501
      %v507 = vrot.slane %v506, 4
      %v509 = vshll.u32 %v308, 16
      %v511 = vrot.slane %v509, 5
      %v512 = vsel %vm344, %v507, %v511
      %v514 = vshrl.u32 %v309, 16
      %v516 = vrot.slane %v514, 4
      %v517 = vshll.u32 %v309, 16
      %v519 = vrot.slane %v517, 5
      %v520 = vor.u32 %v516, %v519
      %v521 = vrot.slane %v520, 4
      %v523 = vshll.u32 %v310, 16
      %v525 = vrot.slane %v523, 5
      %v526 = vsel %vm344, %v521, %v525
      %v527 = vshrl.u32 %v310, 16
      %v529 = vrot.slane %v527, 4
      %v530 = vor.u32 %v529, %v525
      %v531 = vrot.slane %v530, 4
      %v533 = vshll.u32 %v311, 16
      %v535 = vrot.slane %v533, 5
      %v536 = vsel %vm344, %v531, %v535
      %v538 = vshrl.u32 %v312, 16
      %v540 = vrot.slane %v538, 4
      %v541 = vshll.u32 %v312, 16
      %v543 = vrot.slane %v541, 5
      %v544 = vor.u32 %v540, %v543
      %v545 = vrot.slane %v544, 4
      %v547 = vshll.u32 %v313, 16
      %v549 = vrot.slane %v547, 5
      %v550 = vsel %vm344, %v545, %v549
      %v551 = vshrl.u32 %v313, 16
      %v553 = vrot.slane %v551, 4
      %v554 = vor.u32 %v553, %v549
      %v555 = vrot.slane %v554, 4
      %v557 = vshll.u32 %v314, 16
      %v559 = vrot.slane %v557, 5
      %v560 = vsel %vm344, %v555, %v559
      %v562 = vshrl.u32 %v315, 16
      %v564 = vrot.slane %v562, 4
      %v565 = vshll.u32 %v315, 16
      %v567 = vrot.slane %v565, 5
      %v568 = vor.u32 %v564, %v567
      %v569 = vrot.slane %v568, 4
      %v571 = vshll.u32 %v316, 16
      %v573 = vrot.slane %v571, 5
      %v574 = vsel %vm344, %v569, %v573
      %v575 = vshrl.u32 %v316, 16
      %v577 = vrot.slane %v575, 4
      %v578 = vor.u32 %v577, %v573
      %v579 = vrot.slane %v578, 4
      %v581 = vshll.u32 %v317, 16
      %v583 = vrot.slane %v581, 5
      %v584 = vsel %vm344, %v579, %v583
      %v586 = vshrl.u32 %v318, 16
      %v588 = vrot.slane %v586, 4
      %v589 = vshll.u32 %v318, 16
      %v591 = vrot.slane %v589, 5
      %v592 = vor.u32 %v588, %v591
      %v593 = vrot.slane %v592, 4
      %v595 = vshll.u32 %v319, 16
      %v597 = vrot.slane %v595, 5
      %v598 = vsel %vm344, %v593, %v597
      %v599 = vshrl.u32 %v319, 16
      %v601 = vrot.slane %v599, 4
      %v602 = vor.u32 %v601, %v597
      %v603 = vrot.slane %v602, 4
      %v605 = vshll.u32 %v320, 16
      %v607 = vrot.slane %v605, 5
      %v608 = vsel %vm344, %v603, %v607
      %v610 = vshrl.u32 %v321, 16
      %v612 = vrot.slane %v610, 4
      %v613 = vshll.u32 %v321, 16
      %v615 = vrot.slane %v613, 5
      %v616 = vor.u32 %v612, %v615
      %v617 = vrot.slane %v616, 4
      %v619 = vshll.u32 %v322, 16
      %v621 = vrot.slane %v619, 5
      %v622 = vsel %vm344, %v617, %v621
      %v623 = vshrl.u32 %v322, 16
      %v625 = vrot.slane %v623, 4
      %v626 = vor.u32 %v625, %v621
      %v627 = vrot.slane %v626, 4
      %v629 = vshll.u32 %v323, 16
      %v631 = vrot.slane %v629, 5
      %v632 = vsel %vm344, %v627, %v631
      %v634 = vshrl.u32 %v324, 16
      %v636 = vrot.slane %v634, 4
      %v637 = vshll.u32 %v324, 16
      %v639 = vrot.slane %v637, 5
      %v640 = vor.u32 %v636, %v639
      %v641 = vrot.slane %v640, 4
      %v643 = vshll.u32 %v325, 16
      %v645 = vrot.slane %v643, 5
      %v646 = vsel %vm344, %v641, %v645
      %v647 = vshrl.u32 %v325, 16
      %v649 = vrot.slane %v647, 4
      %v650 = vor.u32 %v649, %v645
      %v651 = vrot.slane %v650, 4
      %v653 = vshll.u32 %v326, 16
      %v655 = vrot.slane %v653, 5
      %v656 = vsel %vm344, %v651, %v655
      %v658 = vshrl.u32 %v327, 16
      %v660 = vrot.slane %v658, 4
      %v661 = vshll.u32 %v327, 16
      %v663 = vrot.slane %v661, 5
      %v664 = vor.u32 %v660, %v663
      %v665 = vrot.slane %v664, 4
      %v667 = vshll.u32 %v328, 16
      %v669 = vrot.slane %v667, 5
      %v670 = vsel %vm344, %v665, %v669
      %v671 = vshrl.u32 %v328, 16
      %v673 = vrot.slane %v671, 4
      %v674 = vor.u32 %v673, %v669
      %v675 = vrot.slane %v674, 4
      %v677 = vshll.u32 %v329, 16
      %v679 = vrot.slane %v677, 5
      %v680 = vsel %vm344, %v675, %v679
      %v682 = vshrl.u32 %v330, 16
      %v684 = vrot.slane %v682, 4
      %v685 = vshll.u32 %v330, 16
      %v687 = vrot.slane %v685, 5
      %v688 = vor.u32 %v684, %v687
      %v689 = vrot.slane %v688, 4
      %v691 = vshll.u32 %v331, 16
      %v693 = vrot.slane %v691, 5
      %v694 = vsel %vm344, %v689, %v693
      %v695 = vshrl.u32 %v331, 16
      %v697 = vrot.slane %v695, 4
      %v698 = vor.u32 %v697, %v693
      %v699 = vrot.slane %v698, 4
      %v701 = vshll.u32 %v332, 16
      %v703 = vrot.slane %v701, 5
      %v704 = vsel %vm344, %v699, %v703
      %v706 = vshrl.u32 %v333, 16
      %v708 = vrot.slane %v706, 4
      %v709 = vshll.u32 %v333, 16
      %v711 = vrot.slane %v709, 5
      %v712 = vor.u32 %v708, %v711
      %v713 = vrot.slane %v712, 4
      %v715 = vshll.u32 %v334, 16
      %v717 = vrot.slane %v715, 5
      %v718 = vsel %vm344, %v713, %v717
      %v719 = vshrl.u32 %v334, 16
      %v721 = vrot.slane %v719, 4
      %v722 = vor.u32 %v721, %v717
      %v723 = vrot.slane %v722, 4
      %v725 = vshll.u32 %v335, 16
      %v727 = vrot.slane %v725, 5
      %v728 = vsel %vm344, %v723, %v727
      %v730 = vshrl.u32 %v336, 16
      %v732 = vrot.slane %v730, 4
      %v733 = vshll.u32 %v336, 16
      %v735 = vrot.slane %v733, 5
      %v736 = vor.u32 %v732, %v735
      %v737 = vrot.slane %v736, 4
      %v739 = vshll.u32 %v337, 16
      %v741 = vrot.slane %v739, 5
      %v742 = vsel %vm344, %v737, %v741
      %v743 = vshrl.u32 %v337, 16
      %v745 = vrot.slane %v743, 4
      %v746 = vor.u32 %v745, %v741
      %v747 = vrot.slane %v746, 4
      %v749 = vshll.u32 %v338, 16
      %v751 = vrot.slane %v749, 5
      %v752 = vsel %vm344, %v747, %v751
      %v754 = vshrl.u32 %v339, 16
      %v756 = vrot.slane %v754, 4
      %v757 = vshll.u32 %v339, 16
      %v759 = vrot.slane %v757, 5
      %v760 = vor.u32 %v756, %v759
      %v761 = vrot.slane %v760, 4
      %v763 = vshll.u32 %v340, 16
      %v765 = vrot.slane %v763, 5
      %v766 = vsel %vm344, %v761, %v765
      %v767 = vshrl.u32 %v340, 16
      %v769 = vrot.slane %v767, 4
      %v770 = vor.u32 %v769, %v765
      %v771 = vrot.slane %v770, 4
      %v773 = vshll.u32 %v341, 16
      %v775 = vrot.slane %v773, 5
      %v776 = vsel %vm344, %v771, %v775
      %813 = vst [vmem:[#allocation2 + $0x4] sm:$0xf] %v358
      %814 = vst [vmem:[#allocation2 + $0x10] sm:$0xf] %v368
      %815 = vst [vmem:[#allocation2 + $0x1c] sm:$0xf] %v382
      %816 = vst [vmem:[#allocation2 + $0x28] sm:$0xf] %v392
      %817 = vst [vmem:[#allocation2 + $0x34] sm:$0xf] %v406
      %818 = vst [vmem:[#allocation2 + $0x40] sm:$0xf] %v416
      %819 = vst [vmem:[#allocation2 + $0x4c] sm:$0xf] %v430
      %820 = vst [vmem:[#allocation2 + $0x58] sm:$0xf] %v440
      %821 = vst [vmem:[#allocation2 + $0x64] sm:$0xf] %v454
      %822 = vst [vmem:[#allocation2 + $0x70] sm:$0xf] %v464
      %823 = vst [vmem:[#allocation2 + $0x7c] sm:$0xf] %v478
      %824 = vst [vmem:[#allocation2 + $0x88] sm:$0xf] %v488
      %825 = vst [vmem:[#allocation2 + $0x94] sm:$0xf] %v502
      %826 = vst [vmem:[#allocation2 + $0xa0] sm:$0xf] %v512
      %827 = vst [vmem:[#allocation2 + $0xac] sm:$0xf] %v526
      %828 = vst [vmem:[#allocation2 + $0xb8] sm:$0xf] %v536
      %829 = vst [vmem:[#allocation2 + $0xc4] sm:$0xf] %v550
      %830 = vst [vmem:[#allocation2 + $0xd0] sm:$0xf] %v560
      %831 = vst [vmem:[#allocation2 + $0xdc] sm:$0xf] %v574
      %832 = vst [vmem:[#allocation2 + $0xe8] sm:$0xf] %v584
      %833 = vst [vmem:[#allocation2 + $0xf4] sm:$0xf] %v598
      %834 = vst [vmem:[#allocation2 + $0x100] sm:$0xf] %v608
      %835 = vst [vmem:[#allocation2 + $0x10c] sm:$0xf] %v622
      %836 = vst [vmem:[#allocation2 + $0x118] sm:$0xf] %v632
      %837 = vst [vmem:[#allocation2 + $0x124] sm:$0xf] %v646
      %838 = vst [vmem:[#allocation2 + $0x130] sm:$0xf] %v656
      %839 = vst [vmem:[#allocation2 + $0x13c] sm:$0xf] %v670
      %840 = vst [vmem:[#allocation2 + $0x148] sm:$0xf] %v680
      %841 = vst [vmem:[#allocation2 + $0x154] sm:$0xf] %v694
      %842 = vst [vmem:[#allocation2 + $0x160] sm:$0xf] %v704
      %843 = vst [vmem:[#allocation2 + $0x16c] sm:$0xf] %v718
      %844 = vst [vmem:[#allocation2 + $0x178] sm:$0xf] %v728
      %845 = vst [vmem:[#allocation2 + $0x184] sm:$0xf] %v742
      %846 = vst [vmem:[#allocation2 + $0x190] sm:$0xf] %v752
      %847 = vst [vmem:[#allocation2 + $0x19c] sm:$0xf] %v766
      %848 = vst [vmem:[#allocation2 + $0x1a8] sm:$0xf] %v776
      %v849 = vld [vmem:[%s207] sm:$0xe]
      %v850 = vld [vmem:[%s207 + $0x4] sm:$0xf]
      %v851 = vld [vmem:[%s207 + $0x8] sm:$0x1]
      %v852 = vld [vmem:[%s207 + $0xc] sm:$0xe]
      %v853 = vld [vmem:[%s207 + $0x10] sm:$0xf]
      %v854 = vld [vmem:[%s207 + $0x14] sm:$0x1]
      %v855 = vld [vmem:[%s207 + $0x18] sm:$0xe]
      %v856 = vld [vmem:[%s207 + $0x1c] sm:$0xf]
      %v857 = vld [vmem:[%s207 + $0x20] sm:$0x1]
      %v858 = vld [vmem:[%s207 + $0x24] sm:$0xe]
      %v859 = vld [vmem:[%s207 + $0x28] sm:$0xf]
      %v860 = vld [vmem:[%s207 + $0x2c] sm:$0x1]
      %v861 = vld [vmem:[%s207 + $0x30] sm:$0xe]
      %v862 = vld [vmem:[%s207 + $0x34] sm:$0xf]
      %v863 = vld [vmem:[%s207 + $0x38] sm:$0x1]
      %v864 = vld [vmem:[%s207 + $0x3c] sm:$0xe]
      %v865 = vld [vmem:[%s207 + $0x40] sm:$0xf]
      %v866 = vld [vmem:[%s207 + $0x44] sm:$0x1]
      %v867 = vld [vmem:[%s207 + $0x48] sm:$0xe]
      %v868 = vld [vmem:[%s207 + $0x4c] sm:$0xf]
      %v869 = vld [vmem:[%s207 + $0x50] sm:$0x1]
      %v870 = vld [vmem:[%s207 + $0x54] sm:$0xe]
      %v871 = vld [vmem:[%s207 + $0x58] sm:$0xf]
      %v872 = vld [vmem:[%s207 + $0x5c] sm:$0x1]
      %v873 = vld [vmem:[%s207 + $0x60] sm:$0xe]
      %v874 = vld [vmem:[%s207 + $0x64] sm:$0xf]
      %v875 = vld [vmem:[%s207 + $0x68] sm:$0x1]
      %v876 = vld [vmem:[%s207 + $0x6c] sm:$0xe]
      %v877 = vld [vmem:[%s207 + $0x70] sm:$0xf]
      %v878 = vld [vmem:[%s207 + $0x74] sm:$0x1]
      %v879 = vld [vmem:[%s207 + $0x78] sm:$0xe]
      %v880 = vld [vmem:[%s207 + $0x7c] sm:$0xf]
      %v881 = vld [vmem:[%s207 + $0x80] sm:$0x1]
      %v882 = vld [vmem:[%s207 + $0x84] sm:$0xe]
      %v883 = vld [vmem:[%s207 + $0x88] sm:$0xf]
      %v884 = vld [vmem:[%s207 + $0x8c] sm:$0x1]
      %v885 = vld [vmem:[%s207 + $0x90] sm:$0xe]
      %v886 = vld [vmem:[%s207 + $0x94] sm:$0xf]
      %v887 = vld [vmem:[%s207 + $0x98] sm:$0x1]
      %v888 = vld [vmem:[%s207 + $0x9c] sm:$0xe]
      %v889 = vld [vmem:[%s207 + $0xa0] sm:$0xf]
      %v890 = vld [vmem:[%s207 + $0xa4] sm:$0x1]
      %v891 = vld [vmem:[%s207 + $0xa8] sm:$0xe]
      %v892 = vld [vmem:[%s207 + $0xac] sm:$0xf]
      %v893 = vld [vmem:[%s207 + $0xb0] sm:$0x1]
      %v894 = vld [vmem:[%s207 + $0xb4] sm:$0xe]
      %v895 = vld [vmem:[%s207 + $0xb8] sm:$0xf]
      %v896 = vld [vmem:[%s207 + $0xbc] sm:$0x1]
      %v897 = vld [vmem:[%s207 + $0xc0] sm:$0xe]
      %v898 = vld [vmem:[%s207 + $0xc4] sm:$0xf]
      %v899 = vld [vmem:[%s207 + $0xc8] sm:$0x1]
      %v900 = vld [vmem:[%s207 + $0xcc] sm:$0xe]
      %v901 = vld [vmem:[%s207 + $0xd0] sm:$0xf]
      %v902 = vld [vmem:[%s207 + $0xd4] sm:$0x1]
      %vm957 = vcmask 1042432
      %vm958 = vcmask 1046532
      %vm959 = vmor %vm957, %vm958
      %v960 = vrot.slane %v849, 5
      %v961 = vrot.slane %v960, 4
      %v962 = vrot.slane %v850, 5
      %v963 = vsel %vm959, %v961, %v962
      %v964 = vrot.slane %v962, 4
      %v965 = vrot.slane %v851, 5
      %v966 = vsel %vm959, %v964, %v965
      %v967 = vrot.slane %v852, 5
      %v968 = vrot.slane %v967, 4
      %v969 = vrot.slane %v853, 5
      %v970 = vsel %vm959, %v968, %v969
      %v971 = vrot.slane %v969, 4
      %v972 = vrot.slane %v854, 5
      %v973 = vsel %vm959, %v971, %v972
      %v974 = vrot.slane %v855, 5
      %v975 = vrot.slane %v974, 4
      %v976 = vrot.slane %v856, 5
      %v977 = vsel %vm959, %v975, %v976
      %v978 = vrot.slane %v976, 4
      %v979 = vrot.slane %v857, 5
      %v980 = vsel %vm959, %v978, %v979
      %v981 = vrot.slane %v858, 5
      %v982 = vrot.slane %v981, 4
      %v983 = vrot.slane %v859, 5
      %v984 = vsel %vm959, %v982, %v983
      %v985 = vrot.slane %v983, 4
      %v986 = vrot.slane %v860, 5
      %v987 = vsel %vm959, %v985, %v986
      %v988 = vrot.slane %v861, 5
      %v989 = vrot.slane %v988, 4
      %v990 = vrot.slane %v862, 5
      %v991 = vsel %vm959, %v989, %v990
      %v992 = vrot.slane %v990, 4
      %v993 = vrot.slane %v863, 5
      %v994 = vsel %vm959, %v992, %v993
      %v995 = vrot.slane %v864, 5
      %v996 = vrot.slane %v995, 4
      %v997 = vrot.slane %v865, 5
      %v998 = vsel %vm959, %v996, %v997
      %v999 = vrot.slane %v997, 4
      %v1000 = vrot.slane %v866, 5
      %v1001 = vsel %vm959, %v999, %v1000
      %v1002 = vrot.slane %v867, 5
      %v1003 = vrot.slane %v1002, 4
      %v1004 = vrot.slane %v868, 5
      %v1005 = vsel %vm959, %v1003, %v1004
      %v1006 = vrot.slane %v1004, 4
      %v1007 = vrot.slane %v869, 5
      %v1008 = vsel %vm959, %v1006, %v1007
      %v1009 = vrot.slane %v870, 5
      %v1010 = vrot.slane %v1009, 4
      %v1011 = vrot.slane %v871, 5
      %v1012 = vsel %vm959, %v1010, %v1011
      %v1013 = vrot.slane %v1011, 4
      %v1014 = vrot.slane %v872, 5
      %v1015 = vsel %vm959, %v1013, %v1014
      %v1016 = vrot.slane %v873, 5
      %v1017 = vrot.slane %v1016, 4
      %v1018 = vrot.slane %v874, 5
      %v1019 = vsel %vm959, %v1017, %v1018
      %v1020 = vrot.slane %v1018, 4
      %v1021 = vrot.slane %v875, 5
      %v1022 = vsel %vm959, %v1020, %v1021
      %v1023 = vrot.slane %v876, 5
      %v1024 = vrot.slane %v1023, 4
      %v1025 = vrot.slane %v877, 5
      %v1026 = vsel %vm959, %v1024, %v1025
      %v1027 = vrot.slane %v1025, 4
      %v1028 = vrot.slane %v878, 5
      %v1029 = vsel %vm959, %v1027, %v1028
      %v1030 = vrot.slane %v879, 5
      %v1031 = vrot.slane %v1030, 4
      %v1032 = vrot.slane %v880, 5
      %v1033 = vsel %vm959, %v1031, %v1032
      %v1034 = vrot.slane %v1032, 4
      %v1035 = vrot.slane %v881, 5
      %v1036 = vsel %vm959, %v1034, %v1035
      %v1037 = vrot.slane %v882, 5
      %v1038 = vrot.slane %v1037, 4
      %v1039 = vrot.slane %v883, 5
      %v1040 = vsel %vm959, %v1038, %v1039
      %v1041 = vrot.slane %v1039, 4
      %v1042 = vrot.slane %v884, 5
      %v1043 = vsel %vm959, %v1041, %v1042
      %v1044 = vrot.slane %v885, 5
      %v1045 = vrot.slane %v1044, 4
      %v1046 = vrot.slane %v886, 5
      %v1047 = vsel %vm959, %v1045, %v1046
      %v1048 = vrot.slane %v1046, 4
      %v1049 = vrot.slane %v887, 5
      %v1050 = vsel %vm959, %v1048, %v1049
      %v1051 = vrot.slane %v888, 5
      %v1052 = vrot.slane %v1051, 4
      %v1053 = vrot.slane %v889, 5
      %v1054 = vsel %vm959, %v1052, %v1053
      %v1055 = vrot.slane %v1053, 4
      %v1056 = vrot.slane %v890, 5
      %v1057 = vsel %vm959, %v1055, %v1056
      %v1058 = vrot.slane %v891, 5
      %v1059 = vrot.slane %v1058, 4
      %v1060 = vrot.slane %v892, 5
      %v1061 = vsel %vm959, %v1059, %v1060
      %v1062 = vrot.slane %v1060, 4
      %v1063 = vrot.slane %v893, 5
      %v1064 = vsel %vm959, %v1062, %v1063
      %v1065 = vrot.slane %v894, 5
      %v1066 = vrot.slane %v1065, 4
      %v1067 = vrot.slane %v895, 5
      %v1068 = vsel %vm959, %v1066, %v1067
      %v1069 = vrot.slane %v1067, 4
      %v1070 = vrot.slane %v896, 5
      %v1071 = vsel %vm959, %v1069, %v1070
      %v1072 = vrot.slane %v897, 5
      %v1073 = vrot.slane %v1072, 4
      %v1074 = vrot.slane %v898, 5
      %v1075 = vsel %vm959, %v1073, %v1074
      %v1076 = vrot.slane %v1074, 4
      %v1077 = vrot.slane %v899, 5
      %v1078 = vsel %vm959, %v1076, %v1077
      %v1079 = vrot.slane %v900, 5
      %v1080 = vrot.slane %v1079, 4
      %v1081 = vrot.slane %v901, 5
      %v1082 = vsel %vm959, %v1080, %v1081
      %v1083 = vrot.slane %v1081, 4
      %v1084 = vrot.slane %v902, 5
      %v1085 = vsel %vm959, %v1083, %v1084
      %1122 = vst [vmem:[#allocation2 + $0x8] sm:$0xf] %v963
      %1123 = vst [vmem:[#allocation2 + $0x14] sm:$0xf] %v966
      %1124 = vst [vmem:[#allocation2 + $0x20] sm:$0xf] %v970
      %1125 = vst [vmem:[#allocation2 + $0x2c] sm:$0xf] %v973
      %1126 = vst [vmem:[#allocation2 + $0x38] sm:$0xf] %v977
      %1127 = vst [vmem:[#allocation2 + $0x44] sm:$0xf] %v980
      %1128 = vst [vmem:[#allocation2 + $0x50] sm:$0xf] %v984
      %1129 = vst [vmem:[#allocation2 + $0x5c] sm:$0xf] %v987
      %1130 = vst [vmem:[#allocation2 + $0x68] sm:$0xf] %v991
      %1131 = vst [vmem:[#allocation2 + $0x74] sm:$0xf] %v994
      %1132 = vst [vmem:[#allocation2 + $0x80] sm:$0xf] %v998
      %1133 = vst [vmem:[#allocation2 + $0x8c] sm:$0xf] %v1001
      %1134 = vst [vmem:[#allocation2 + $0x98] sm:$0xf] %v1005
      %1135 = vst [vmem:[#allocation2 + $0xa4] sm:$0xf] %v1008
      %1136 = vst [vmem:[#allocation2 + $0xb0] sm:$0xf] %v1012
      %1137 = vst [vmem:[#allocation2 + $0xbc] sm:$0xf] %v1015
      %1138 = vst [vmem:[#allocation2 + $0xc8] sm:$0xf] %v1019
      %1139 = vst [vmem:[#allocation2 + $0xd4] sm:$0xf] %v1022
      %1140 = vst [vmem:[#allocation2 + $0xe0] sm:$0xf] %v1026
      %1141 = vst [vmem:[#allocation2 + $0xec] sm:$0xf] %v1029
      %1142 = vst [vmem:[#allocation2 + $0xf8] sm:$0xf] %v1033
      %1143 = vst [vmem:[#allocation2 + $0x104] sm:$0xf] %v1036
      %1144 = vst [vmem:[#allocation2 + $0x110] sm:$0xf] %v1040
      %1145 = vst [vmem:[#allocation2 + $0x11c] sm:$0xf] %v1043
      %1146 = vst [vmem:[#allocation2 + $0x128] sm:$0xf] %v1047
      %1147 = vst [vmem:[#allocation2 + $0x134] sm:$0xf] %v1050
      %1148 = vst [vmem:[#allocation2 + $0x140] sm:$0xf] %v1054
      %1149 = vst [vmem:[#allocation2 + $0x14c] sm:$0xf] %v1057
      %1150 = vst [vmem:[#allocation2 + $0x158] sm:$0xf] %v1061
      %1151 = vst [vmem:[#allocation2 + $0x164] sm:$0xf] %v1064
      %1152 = vst [vmem:[#allocation2 + $0x170] sm:$0xf] %v1068
      %1153 = vst [vmem:[#allocation2 + $0x17c] sm:$0xf] %v1071
      %1154 = vst [vmem:[#allocation2 + $0x188] sm:$0xf] %v1075
      %1155 = vst [vmem:[#allocation2 + $0x194] sm:$0xf] %v1078
      %1156 = vst [vmem:[#allocation2 + $0x1a0] sm:$0xf] %v1082
      %1157 = vst [vmem:[#allocation2 + $0x1ac] sm:$0xf] %v1085
      %v1158 = vld [vmem:[#allocation2] sm:$0xff]
      %v1159 = vld [vmem:[#allocation2 + $0x8] sm:$0xf]
      %v1160 = vld [vmem:[#allocation2 + $0xc] sm:$0xff]
      %v1161 = vld [vmem:[#allocation2 + $0x14] sm:$0xf]
      %v1162 = vld [vmem:[#allocation2 + $0x18] sm:$0xff]
      %v1163 = vld [vmem:[#allocation2 + $0x20] sm:$0xf]
      %v1164 = vld [vmem:[#allocation2 + $0x24] sm:$0xff]
      %v1165 = vld [vmem:[#allocation2 + $0x2c] sm:$0xf]
      %v1166 = vld [vmem:[#allocation2 + $0x30] sm:$0xff]
      %v1167 = vld [vmem:[#allocation2 + $0x38] sm:$0xf]
      %v1168 = vld [vmem:[#allocation2 + $0x3c] sm:$0xff]
      %v1169 = vld [vmem:[#allocation2 + $0x44] sm:$0xf]
      %v1170 = vld [vmem:[#allocation2 + $0x48] sm:$0xff]
      %v1171 = vld [vmem:[#allocation2 + $0x50] sm:$0xf]
      %v1172 = vld [vmem:[#allocation2 + $0x54] sm:$0xff]
      %v1173 = vld [vmem:[#allocation2 + $0x5c] sm:$0xf]
      %v1174 = vld [vmem:[#allocation2 + $0x60] sm:$0xff]
      %v1175 = vld [vmem:[#allocation2 + $0x68] sm:$0xf]
      %v1176 = vld [vmem:[#allocation2 + $0x6c] sm:$0xff]
      %v1177 = vld [vmem:[#allocation2 + $0x74] sm:$0xf]
      %v1178 = vld [vmem:[#allocation2 + $0x78] sm:$0xff]
      %v1179 = vld [vmem:[#allocation2 + $0x80] sm:$0xf]
      %v1180 = vld [vmem:[#allocation2 + $0x84] sm:$0xff]
      %v1181 = vld [vmem:[#allocation2 + $0x8c] sm:$0xf]
      %v1182 = vld [vmem:[#allocation2 + $0x90] sm:$0xff]
      %v1183 = vld [vmem:[#allocation2 + $0x98] sm:$0xf]
      %v1184 = vld [vmem:[#allocation2 + $0x9c] sm:$0xff]
      %v1185 = vld [vmem:[#allocation2 + $0xa4] sm:$0xf]
      %v1186 = vld [vmem:[#allocation2 + $0xa8] sm:$0xff]
      %v1187 = vld [vmem:[#allocation2 + $0xb0] sm:$0xf]
      %v1188 = vld [vmem:[#allocation2 + $0xb4] sm:$0xff]
      %v1189 = vld [vmem:[#allocation2 + $0xbc] sm:$0xf]
      %v1190 = vld [vmem:[#allocation2 + $0xc0] sm:$0xff]
      %v1191 = vld [vmem:[#allocation2 + $0xc8] sm:$0xf]
      %v1192 = vld [vmem:[#allocation2 + $0xcc] sm:$0xff]
      %v1193 = vld [vmem:[#allocation2 + $0xd4] sm:$0xf]
      %v1194 = vld [vmem:[#allocation2 + $0xd8] sm:$0xff]
      %v1195 = vld [vmem:[#allocation2 + $0xe0] sm:$0xf]
      %v1196 = vld [vmem:[#allocation2 + $0xe4] sm:$0xff]
      %v1197 = vld [vmem:[#allocation2 + $0xec] sm:$0xf]
      %v1198 = vld [vmem:[#allocation2 + $0xf0] sm:$0xff]
      %v1199 = vld [vmem:[#allocation2 + $0xf8] sm:$0xf]
      %v1200 = vld [vmem:[#allocation2 + $0xfc] sm:$0xff]
      %v1201 = vld [vmem:[#allocation2 + $0x104] sm:$0xf]
      %v1202 = vld [vmem:[#allocation2 + $0x108] sm:$0xff]
      %v1203 = vld [vmem:[#allocation2 + $0x110] sm:$0xf]
      %v1204 = vld [vmem:[#allocation2 + $0x114] sm:$0xff]
      %v1205 = vld [vmem:[#allocation2 + $0x11c] sm:$0xf]
      %v1206 = vld [vmem:[#allocation2 + $0x120] sm:$0xff]
      %v1207 = vld [vmem:[#allocation2 + $0x128] sm:$0xf]
      %v1208 = vld [vmem:[#allocation2 + $0x12c] sm:$0xff]
      %v1209 = vld [vmem:[#allocation2 + $0x134] sm:$0xf]
      %v1210 = vld [vmem:[#allocation2 + $0x138] sm:$0xff]
      %v1211 = vld [vmem:[#allocation2 + $0x140] sm:$0xf]
      %v1212 = vld [vmem:[#allocation2 + $0x144] sm:$0xff]
      %v1213 = vld [vmem:[#allocation2 + $0x14c] sm:$0xf]
      %v1214 = vld [vmem:[#allocation2 + $0x150] sm:$0xff]
      %v1215 = vld [vmem:[#allocation2 + $0x158] sm:$0xf]
      %v1216 = vld [vmem:[#allocation2 + $0x15c] sm:$0xff]
      %v1217 = vld [vmem:[#allocation2 + $0x164] sm:$0xf]
      %v1218 = vld [vmem:[#allocation2 + $0x168] sm:$0xff]
      %v1219 = vld [vmem:[#allocation2 + $0x170] sm:$0xf]
      %v1220 = vld [vmem:[#allocation2 + $0x174] sm:$0xff]
      %v1221 = vld [vmem:[#allocation2 + $0x17c] sm:$0xf]
      %v1222 = vld [vmem:[%s1] sm:$0xf]
      %v1223 = vld [vmem:[%s1 + $0x4] sm:$0xf]
      %v1224 = vld [vmem:[%s1 + $0x8] sm:$0xf]
      %v1225 = vld [vmem:[%s1 + $0xc] sm:$0xf]
      %v1226 = vld [vmem:[%s1 + $0x10] sm:$0xf]
      %v1227 = vld [vmem:[%s1 + $0x14] sm:$0xf]
      %v1228 = vld [vmem:[%s1 + $0x18] sm:$0xf]
      %v1229 = vld [vmem:[%s1 + $0x1c] sm:$0xf]
      %v1230 = vld [vmem:[%s1 + $0x20] sm:$0xf]
      %v1231 = vld [vmem:[%s1 + $0x24] sm:$0xf]
      %v1232 = vld [vmem:[%s1 + $0x28] sm:$0xf]
      %v1233 = vld [vmem:[%s1 + $0x2c] sm:$0xf]
      %v1234 = vld [vmem:[%s1 + $0x30] sm:$0xf]
      %v1235 = vld [vmem:[%s1 + $0x34] sm:$0xf]
      %v1236 = vld [vmem:[%s1 + $0x38] sm:$0xf]
      %v1237 = vld [vmem:[%s1 + $0x3c] sm:$0xf]
      %v1238 = vld [vmem:[%s1 + $0x40] sm:$0xf]
      %v1239 = vld [vmem:[%s1 + $0x44] sm:$0xf]
      %v1240 = vld [vmem:[%s1 + $0x48] sm:$0xf]
      %v1241 = vld [vmem:[%s1 + $0x4c] sm:$0xf]
      %v1242 = vld [vmem:[%s1 + $0x50] sm:$0xf]
      %v1243 = vld [vmem:[%s1 + $0x54] sm:$0xf]
      %v1244 = vld [vmem:[%s1 + $0x58] sm:$0xf]
      %v1245 = vld [vmem:[%s1 + $0x5c] sm:$0xf]
      %v1246 = vld [vmem:[%s1 + $0x60] sm:$0xf]
      %v1247 = vld [vmem:[%s1 + $0x64] sm:$0xf]
      %v1248 = vld [vmem:[%s1 + $0x68] sm:$0xf]
      %v1249 = vld [vmem:[%s1 + $0x6c] sm:$0xf]
      %v1250 = vld [vmem:[%s1 + $0x70] sm:$0xf]
      %v1251 = vld [vmem:[%s1 + $0x74] sm:$0xf]
      %v1252 = vld [vmem:[%s1 + $0x78] sm:$0xf]
      %v1253 = vld [vmem:[%s1 + $0x7c] sm:$0xf]
      %v1254 = vld [vmem:[%s1 + $0x80] sm:$0xf]
      %v1255 = vld [vmem:[%s1 + $0x84] sm:$0xf]
      %v1256 = vld [vmem:[%s1 + $0x88] sm:$0xf]
      %v1257 = vld [vmem:[%s1 + $0x8c] sm:$0xf]
      %v1258 = vld [vmem:[%s1 + $0x90] sm:$0xf]
      %v1259 = vld [vmem:[%s1 + $0x94] sm:$0xf]
      %v1260 = vld [vmem:[%s1 + $0x98] sm:$0xf]
      %v1261 = vld [vmem:[%s1 + $0x9c] sm:$0xf]
      %v1262 = vld [vmem:[%s1 + $0xa0] sm:$0xf]
      %v1263 = vld [vmem:[%s1 + $0xa4] sm:$0xf]
      %v1264 = vld [vmem:[%s1 + $0xa8] sm:$0xf]
      %v1265 = vld [vmem:[%s1 + $0xac] sm:$0xf]
      %v1266 = vld [vmem:[%s1 + $0xb0] sm:$0xf]
      %v1267 = vld [vmem:[%s1 + $0xb4] sm:$0xf]
      %v1268 = vld [vmem:[%s1 + $0xb8] sm:$0xf]
      %v1269 = vld [vmem:[%s1 + $0xbc] sm:$0xf]
      %s1270 = scalar_lea.vmem [#allocation2], 24
      %v1271 = vld [vmem:[%s1270] sm:$0xff]
      %v1272 = vld [vmem:[%s1270 + $0x8] sm:$0xf]
      %v1273 = vld [vmem:[%s1270 + $0xc] sm:$0xff]
      %v1274 = vld [vmem:[%s1270 + $0x14] sm:$0xf]
      %v1275 = vld [vmem:[%s1270 + $0x18] sm:$0xff]
      %v1276 = vld [vmem:[%s1270 + $0x20] sm:$0xf]
      %v1277 = vld [vmem:[%s1270 + $0x24] sm:$0xff]
      %v1278 = vld [vmem:[%s1270 + $0x2c] sm:$0xf]
      %v1279 = vld [vmem:[%s1270 + $0x30] sm:$0xff]
      %v1280 = vld [vmem:[%s1270 + $0x38] sm:$0xf]
      %v1281 = vld [vmem:[%s1270 + $0x3c] sm:$0xff]
      %v1282 = vld [vmem:[%s1270 + $0x44] sm:$0xf]
      %v1283 = vld [vmem:[%s1270 + $0x48] sm:$0xff]
      %v1284 = vld [vmem:[%s1270 + $0x50] sm:$0xf]
      %v1285 = vld [vmem:[%s1270 + $0x54] sm:$0xff]
      %v1286 = vld [vmem:[%s1270 + $0x5c] sm:$0xf]
      %v1287 = vld [vmem:[%s1270 + $0x60] sm:$0xff]
      %v1288 = vld [vmem:[%s1270 + $0x68] sm:$0xf]
      %v1289 = vld [vmem:[%s1270 + $0x6c] sm:$0xff]
      %v1290 = vld [vmem:[%s1270 + $0x74] sm:$0xf]
      %v1291 = vld [vmem:[%s1270 + $0x78] sm:$0xff]
      %v1292 = vld [vmem:[%s1270 + $0x80] sm:$0xf]
      %v1293 = vld [vmem:[%s1270 + $0x84] sm:$0xff]
      %v1294 = vld [vmem:[%s1270 + $0x8c] sm:$0xf]
      %v1295 = vld [vmem:[%s1270 + $0x90] sm:$0xff]
      %v1296 = vld [vmem:[%s1270 + $0x98] sm:$0xf]
      %v1297 = vld [vmem:[%s1270 + $0x9c] sm:$0xff]
      %v1298 = vld [vmem:[%s1270 + $0xa4] sm:$0xf]
      %v1299 = vld [vmem:[%s1270 + $0xa8] sm:$0xff]
      %v1300 = vld [vmem:[%s1270 + $0xb0] sm:$0xf]
      %v1301 = vld [vmem:[%s1270 + $0xb4] sm:$0xff]
      %v1302 = vld [vmem:[%s1270 + $0xbc] sm:$0xf]
      %v1303 = vld [vmem:[%s1270 + $0xc0] sm:$0xff]
      %v1304 = vld [vmem:[%s1270 + $0xc8] sm:$0xf]
      %v1305 = vld [vmem:[%s1270 + $0xcc] sm:$0xff]
      %v1306 = vld [vmem:[%s1270 + $0xd4] sm:$0xf]
      %v1307 = vld [vmem:[%s1270 + $0xd8] sm:$0xff]
      %v1308 = vld [vmem:[%s1270 + $0xe0] sm:$0xf]
      %v1309 = vld [vmem:[%s1270 + $0xe4] sm:$0xff]
      %v1310 = vld [vmem:[%s1270 + $0xec] sm:$0xf]
      %v1311 = vld [vmem:[%s1270 + $0xf0] sm:$0xff]
      %v1312 = vld [vmem:[%s1270 + $0xf8] sm:$0xf]
      %v1313 = vld [vmem:[%s1270 + $0xfc] sm:$0xff]
      %v1314 = vld [vmem:[%s1270 + $0x104] sm:$0xf]
      %v1315 = vld [vmem:[%s1270 + $0x108] sm:$0xff]
      %v1316 = vld [vmem:[%s1270 + $0x110] sm:$0xf]
      %v1317 = vld [vmem:[%s1270 + $0x114] sm:$0xff]
      %v1318 = vld [vmem:[%s1270 + $0x11c] sm:$0xf]
      %v1319 = vld [vmem:[%s1270 + $0x120] sm:$0xff]
      %v1320 = vld [vmem:[%s1270 + $0x128] sm:$0xf]
      %v1321 = vld [vmem:[%s1270 + $0x12c] sm:$0xff]
      %v1322 = vld [vmem:[%s1270 + $0x134] sm:$0xf]
      %v1323 = vld [vmem:[%s1270 + $0x138] sm:$0xff]
      %v1324 = vld [vmem:[%s1270 + $0x140] sm:$0xf]
      %v1325 = vld [vmem:[%s1270 + $0x144] sm:$0xff]
      %v1326 = vld [vmem:[%s1270 + $0x14c] sm:$0xf]
      %v1327 = vld [vmem:[%s1270 + $0x150] sm:$0xff]
      %v1328 = vld [vmem:[%s1270 + $0x158] sm:$0xf]
      %v1329 = vld [vmem:[%s1270 + $0x15c] sm:$0xff]
      %v1330 = vld [vmem:[%s1270 + $0x164] sm:$0xf]
      %v1331 = vld [vmem:[%s1270 + $0x168] sm:$0xff]
      %v1332 = vld [vmem:[%s1270 + $0x170] sm:$0xf]
      %v1333 = vld [vmem:[%s1270 + $0x174] sm:$0xff]
      %v1334 = vld [vmem:[%s1270 + $0x17c] sm:$0xf]
      %s1335 = scalar_lea.vmem %s1, 192
      %v1336 = vld [vmem:[%s1335] sm:$0xf]
      %v1337 = vld [vmem:[%s1335 + $0x4] sm:$0xf]
      %v1338 = vld [vmem:[%s1335 + $0x8] sm:$0xf]
      %v1339 = vld [vmem:[%s1335 + $0xc] sm:$0xf]
      %v1340 = vld [vmem:[%s1335 + $0x10] sm:$0xf]
      %v1341 = vld [vmem:[%s1335 + $0x14] sm:$0xf]
      %v1342 = vld [vmem:[%s1335 + $0x18] sm:$0xf]
      %v1343 = vld [vmem:[%s1335 + $0x1c] sm:$0xf]
      %v1344 = vld [vmem:[%s1335 + $0x20] sm:$0xf]
      %v1345 = vld [vmem:[%s1335 + $0x24] sm:$0xf]
      %v1346 = vld [vmem:[%s1335 + $0x28] sm:$0xf]
      %v1347 = vld [vmem:[%s1335 + $0x2c] sm:$0xf]
      %v1348 = vld [vmem:[%s1335 + $0x30] sm:$0xf]
      %v1349 = vld [vmem:[%s1335 + $0x34] sm:$0xf]
      %v1350 = vld [vmem:[%s1335 + $0x38] sm:$0xf]
      %v1351 = vld [vmem:[%s1335 + $0x3c] sm:$0xf]
      %v1352 = vld [vmem:[%s1335 + $0x40] sm:$0xf]
      %v1353 = vld [vmem:[%s1335 + $0x44] sm:$0xf]
      %v1354 = vld [vmem:[%s1335 + $0x48] sm:$0xf]
      %v1355 = vld [vmem:[%s1335 + $0x4c] sm:$0xf]
      %v1356 = vld [vmem:[%s1335 + $0x50] sm:$0xf]
      %v1357 = vld [vmem:[%s1335 + $0x54] sm:$0xf]
      %v1358 = vld [vmem:[%s1335 + $0x58] sm:$0xf]
      %v1359 = vld [vmem:[%s1335 + $0x5c] sm:$0xf]
      %v1360 = vld [vmem:[%s1335 + $0x60] sm:$0xf]
      %v1361 = vld [vmem:[%s1335 + $0x64] sm:$0xf]
      %v1362 = vld [vmem:[%s1335 + $0x68] sm:$0xf]
      %v1363 = vld [vmem:[%s1335 + $0x6c] sm:$0xf]
      %v1364 = vld [vmem:[%s1335 + $0x70] sm:$0xf]
      %v1365 = vld [vmem:[%s1335 + $0x74] sm:$0xf]
      %v1366 = vld [vmem:[%s1335 + $0x78] sm:$0xf]
      %v1367 = vld [vmem:[%s1335 + $0x7c] sm:$0xf]
      %v1368 = vld [vmem:[%s1335 + $0x80] sm:$0xf]
      %v1369 = vld [vmem:[%s1335 + $0x84] sm:$0xf]
      %v1370 = vld [vmem:[%s1335 + $0x88] sm:$0xf]
      %v1371 = vld [vmem:[%s1335 + $0x8c] sm:$0xf]
      %v1372 = vld [vmem:[%s1335 + $0x90] sm:$0xf]
      %v1373 = vld [vmem:[%s1335 + $0x94] sm:$0xf]
      %v1374 = vld [vmem:[%s1335 + $0x98] sm:$0xf]
      %v1375 = vld [vmem:[%s1335 + $0x9c] sm:$0xf]
      %v1376 = vld [vmem:[%s1335 + $0xa0] sm:$0xf]
      %v1377 = vld [vmem:[%s1335 + $0xa4] sm:$0xf]
      %v1378 = vld [vmem:[%s1335 + $0xa8] sm:$0xf]
      %v1379 = vld [vmem:[%s1335 + $0xac] sm:$0xf]
      %v1380 = vld [vmem:[%s1335 + $0xb0] sm:$0xf]
      %v1381 = vld [vmem:[%s1335 + $0xb4] sm:$0xf]
      %v1382 = vld [vmem:[%s1335 + $0xb8] sm:$0xf]
      %v1383 = vld [vmem:[%s1335 + $0xbc] sm:$0xf]
      %v1448 = vunpack.c.l.b16 %v1271
      %v1449 = vunpack.c.h.b16 %v1271
      %v1450 = vunpack.c.l.b16 %v1272
      %v1451 = vunpack.c.l.b16 %v1273
      %v1452 = vunpack.c.h.b16 %v1273
      %v1453 = vunpack.c.l.b16 %v1274
      %v1454 = vunpack.c.l.b16 %v1275
      %v1455 = vunpack.c.h.b16 %v1275
      %v1456 = vunpack.c.l.b16 %v1276
      %v1457 = vunpack.c.l.b16 %v1277
      %v1458 = vunpack.c.h.b16 %v1277
      %v1459 = vunpack.c.l.b16 %v1278
      %v1460 = vunpack.c.l.b16 %v1279
      %v1461 = vunpack.c.h.b16 %v1279
      %v1462 = vunpack.c.l.b16 %v1280
      %v1463 = vunpack.c.l.b16 %v1281
      %v1464 = vunpack.c.h.b16 %v1281
      %v1465 = vunpack.c.l.b16 %v1282
      %v1466 = vunpack.c.l.b16 %v1283
      %v1467 = vunpack.c.h.b16 %v1283
      %v1468 = vunpack.c.l.b16 %v1284
      %v1469 = vunpack.c.l.b16 %v1285
      %v1470 = vunpack.c.h.b16 %v1285
      %v1471 = vunpack.c.l.b16 %v1286
      %v1472 = vunpack.c.l.b16 %v1287
      %v1473 = vunpack.c.h.b16 %v1287
      %v1474 = vunpack.c.l.b16 %v1288
      %v1475 = vunpack.c.l.b16 %v1289
      %v1476 = vunpack.c.h.b16 %v1289
      %v1477 = vunpack.c.l.b16 %v1290
      %v1478 = vunpack.c.l.b16 %v1291
      %v1479 = vunpack.c.h.b16 %v1291
      %v1480 = vunpack.c.l.b16 %v1292
      %v1481 = vunpack.c.l.b16 %v1293
      %v1482 = vunpack.c.h.b16 %v1293
      %v1483 = vunpack.c.l.b16 %v1294
      %v1484 = vunpack.c.l.b16 %v1295
      %v1485 = vunpack.c.h.b16 %v1295
      %v1486 = vunpack.c.l.b16 %v1296
      %v1487 = vunpack.c.l.b16 %v1297
      %v1488 = vunpack.c.h.b16 %v1297
      %v1489 = vunpack.c.l.b16 %v1298
      %v1490 = vunpack.c.l.b16 %v1299
      %v1491 = vunpack.c.h.b16 %v1299
      %v1492 = vunpack.c.l.b16 %v1300
      %v1493 = vunpack.c.l.b16 %v1301
      %v1494 = vunpack.c.h.b16 %v1301
      %v1495 = vunpack.c.l.b16 %v1302
      %v1496 = vunpack.c.l.b16 %v1303
      %v1497 = vunpack.c.h.b16 %v1303
      %v1498 = vunpack.c.l.b16 %v1304
      %v1499 = vunpack.c.l.b16 %v1305
      %v1500 = vunpack.c.h.b16 %v1305
      %v1501 = vunpack.c.l.b16 %v1306
      %v1502 = vunpack.c.l.b16 %v1307
      %v1503 = vunpack.c.h.b16 %v1307
      %v1504 = vunpack.c.l.b16 %v1308
      %v1505 = vunpack.c.l.b16 %v1309
      %v1506 = vunpack.c.h.b16 %v1309
      %v1507 = vunpack.c.l.b16 %v1310
      %v1508 = vunpack.c.l.b16 %v1311
      %v1509 = vunpack.c.h.b16 %v1311
      %v1510 = vunpack.c.l.b16 %v1312
      %v1511 = vunpack.c.l.b16 %v1313
      %v1512 = vunpack.c.h.b16 %v1313
      %v1513 = vunpack.c.l.b16 %v1314
      %v1514 = vunpack.c.l.b16 %v1315
      %v1515 = vunpack.c.h.b16 %v1315
      %v1516 = vunpack.c.l.b16 %v1316
      %v1517 = vunpack.c.l.b16 %v1317
      %v1518 = vunpack.c.h.b16 %v1317
      %v1519 = vunpack.c.l.b16 %v1318
      %v1520 = vunpack.c.l.b16 %v1319
      %v1521 = vunpack.c.h.b16 %v1319
      %v1522 = vunpack.c.l.b16 %v1320
      %v1523 = vunpack.c.l.b16 %v1321
      %v1524 = vunpack.c.h.b16 %v1321
      %v1525 = vunpack.c.l.b16 %v1322
      %v1526 = vunpack.c.l.b16 %v1323
      %v1527 = vunpack.c.h.b16 %v1323
      %v1528 = vunpack.c.l.b16 %v1324
      %v1529 = vunpack.c.l.b16 %v1325
      %v1530 = vunpack.c.h.b16 %v1325
      %v1531 = vunpack.c.l.b16 %v1326
      %v1532 = vunpack.c.l.b16 %v1327
      %v1533 = vunpack.c.h.b16 %v1327
      %v1534 = vunpack.c.l.b16 %v1328
      %v1535 = vunpack.c.l.b16 %v1329
      %v1536 = vunpack.c.h.b16 %v1329
      %v1537 = vunpack.c.l.b16 %v1330
      %v1538 = vunpack.c.l.b16 %v1331
      %v1539 = vunpack.c.h.b16 %v1331
      %v1540 = vunpack.c.l.b16 %v1332
      %v1541 = vunpack.c.l.b16 %v1333
      %v1542 = vunpack.c.h.b16 %v1333
      %v1543 = vunpack.c.l.b16 %v1334
      %v1544 = vpack.c.b16 %v1451, %v1448
      %v1545 = vpack.c.b16 %v1452, %v1449
      %v1546 = vpack.c.b16 %v1453, %v1450
      %v1547 = vpack.c.b16 %v1457, %v1454
      %v1548 = vpack.c.b16 %v1458, %v1455
      %v1549 = vpack.c.b16 %v1459, %v1456
      %v1550 = vpack.c.b16 %v1463, %v1460
      %v1551 = vpack.c.b16 %v1464, %v1461
      %v1552 = vpack.c.b16 %v1465, %v1462
      %v1553 = vpack.c.b16 %v1469, %v1466
      %v1554 = vpack.c.b16 %v1470, %v1467
      %v1555 = vpack.c.b16 %v1471, %v1468
      %v1556 = vpack.c.b16 %v1475, %v1472
      %v1557 = vpack.c.b16 %v1476, %v1473
      %v1558 = vpack.c.b16 %v1477, %v1474
      %v1559 = vpack.c.b16 %v1481, %v1478
      %v1560 = vpack.c.b16 %v1482, %v1479
      %v1561 = vpack.c.b16 %v1483, %v1480
      %v1562 = vpack.c.b16 %v1487, %v1484
      %v1563 = vpack.c.b16 %v1488, %v1485
      %v1564 = vpack.c.b16 %v1489, %v1486
      %v1565 = vpack.c.b16 %v1493, %v1490
      %v1566 = vpack.c.b16 %v1494, %v1491
      %v1567 = vpack.c.b16 %v1495, %v1492
      %v1568 = vpack.c.b16 %v1499, %v1496
      %v1569 = vpack.c.b16 %v1500, %v1497
      %v1570 = vpack.c.b16 %v1501, %v1498
      %v1571 = vpack.c.b16 %v1505, %v1502
      %v1572 = vpack.c.b16 %v1506, %v1503
      %v1573 = vpack.c.b16 %v1507, %v1504
      %v1574 = vpack.c.b16 %v1511, %v1508
      %v1575 = vpack.c.b16 %v1512, %v1509
      %v1576 = vpack.c.b16 %v1513, %v1510
      %v1577 = vpack.c.b16 %v1517, %v1514
      %v1578 = vpack.c.b16 %v1518, %v1515
      %v1579 = vpack.c.b16 %v1519, %v1516
      %v1580 = vpack.c.b16 %v1523, %v1520
      %v1581 = vpack.c.b16 %v1524, %v1521
      %v1582 = vpack.c.b16 %v1525, %v1522
      %v1583 = vpack.c.b16 %v1529, %v1526
      %v1584 = vpack.c.b16 %v1530, %v1527
      %v1585 = vpack.c.b16 %v1531, %v1528
      %v1586 = vpack.c.b16 %v1535, %v1532
      %v1587 = vpack.c.b16 %v1536, %v1533
      %v1588 = vpack.c.b16 %v1537, %v1534
      %v1589 = vpack.c.b16 %v1541, %v1538
      %v1590 = vpack.c.b16 %v1542, %v1539
      %v1591 = vpack.c.b16 %v1543, %v1540
      %v1688 = vunpack.c.l.b16 %v1336
      %v1689 = vunpack.c.l.b16 %v1337
      %v1690 = vunpack.c.l.b16 %v1338
      %v1691 = vunpack.c.l.b16 %v1339
      %v1692 = vunpack.c.l.b16 %v1340
      %v1693 = vunpack.c.l.b16 %v1341
      %v1694 = vunpack.c.l.b16 %v1342
      %v1695 = vunpack.c.l.b16 %v1343
      %v1696 = vunpack.c.l.b16 %v1344
      %v1697 = vunpack.c.l.b16 %v1345
      %v1698 = vunpack.c.l.b16 %v1346
      %v1699 = vunpack.c.l.b16 %v1347
      %v1700 = vunpack.c.l.b16 %v1348
      %v1701 = vunpack.c.l.b16 %v1349
      %v1702 = vunpack.c.l.b16 %v1350
      %v1703 = vunpack.c.l.b16 %v1351
      %v1704 = vunpack.c.l.b16 %v1352
      %v1705 = vunpack.c.l.b16 %v1353
      %v1706 = vunpack.c.l.b16 %v1354
      %v1707 = vunpack.c.l.b16 %v1355
      %v1708 = vunpack.c.l.b16 %v1356
      %v1709 = vunpack.c.l.b16 %v1357
      %v1710 = vunpack.c.l.b16 %v1358
      %v1711 = vunpack.c.l.b16 %v1359
      %v1712 = vunpack.c.l.b16 %v1360
      %v1713 = vunpack.c.l.b16 %v1361
      %v1714 = vunpack.c.l.b16 %v1362
      %v1715 = vunpack.c.l.b16 %v1363
      %v1716 = vunpack.c.l.b16 %v1364
      %v1717 = vunpack.c.l.b16 %v1365
      %v1718 = vunpack.c.l.b16 %v1366
      %v1719 = vunpack.c.l.b16 %v1367
      %v1720 = vunpack.c.l.b16 %v1368
      %v1721 = vunpack.c.l.b16 %v1369
      %v1722 = vunpack.c.l.b16 %v1370
      %v1723 = vunpack.c.l.b16 %v1371
      %v1724 = vunpack.c.l.b16 %v1372
      %v1725 = vunpack.c.l.b16 %v1373
      %v1726 = vunpack.c.l.b16 %v1374
      %v1727 = vunpack.c.l.b16 %v1375
      %v1728 = vunpack.c.l.b16 %v1376
      %v1729 = vunpack.c.l.b16 %v1377
      %v1730 = vunpack.c.l.b16 %v1378
      %v1731 = vunpack.c.l.b16 %v1379
      %v1732 = vunpack.c.l.b16 %v1380
      %v1733 = vunpack.c.l.b16 %v1381
      %v1734 = vunpack.c.l.b16 %v1382
      %v1735 = vunpack.c.l.b16 %v1383
      %v1736 = vpack.c.b16 %v1689, %v1688
      %v1737 = vpack.c.b16 %v1691, %v1690
      %v1738 = vpack.c.b16 %v1693, %v1692
      %v1739 = vpack.c.b16 %v1695, %v1694
      %v1740 = vpack.c.b16 %v1697, %v1696
      %v1741 = vpack.c.b16 %v1699, %v1698
      %v1742 = vpack.c.b16 %v1701, %v1700
      %v1743 = vpack.c.b16 %v1703, %v1702
      %v1744 = vpack.c.b16 %v1705, %v1704
      %v1745 = vpack.c.b16 %v1707, %v1706
      %v1746 = vpack.c.b16 %v1709, %v1708
      %v1747 = vpack.c.b16 %v1711, %v1710
      %v1748 = vpack.c.b16 %v1713, %v1712
      %v1749 = vpack.c.b16 %v1715, %v1714
      %v1750 = vpack.c.b16 %v1717, %v1716
      %v1751 = vpack.c.b16 %v1719, %v1718
      %v1752 = vpack.c.b16 %v1721, %v1720
      %v1753 = vpack.c.b16 %v1723, %v1722
      %v1754 = vpack.c.b16 %v1725, %v1724
      %v1755 = vpack.c.b16 %v1727, %v1726
      %v1756 = vpack.c.b16 %v1729, %v1728
      %v1757 = vpack.c.b16 %v1731, %v1730
      %v1758 = vpack.c.b16 %v1733, %v1732
      %v1759 = vpack.c.b16 %v1735, %v1734
      %1784 = vmatprep.subr.bf16.mxu0 0
      %1785 = vmatpush1.bf16.msra.mxu0 %v1743
      %1786 = vmatprep.subr.bf16.mxu0 0
      %1787 = vmatpush1.bf16.msra.mxu0 %v1742
      %1788 = vmatprep.subr.bf16.mxu0 0
      %1789 = vmatpush1.bf16.msra.mxu0 %v1741
      %1790 = vmatprep.subr.bf16.mxu0 0
      %1791 = vmatpush1.bf16.msra.mxu0 %v1740
      %1792 = vmatprep.subr.bf16.mxu0 0
      %1793 = vmatpush1.bf16.msra.mxu0 %v1739
      %1794 = vmatprep.subr.bf16.mxu0 0
      %1795 = vmatpush1.bf16.msra.mxu0 %v1738
      %1796 = vmatprep.subr.bf16.mxu0 0
      %1797 = vmatpush1.bf16.msra.mxu0 %v1737
      %1798 = vmatprep.subr.bf16.mxu0 0
      %1799 = vmatpush1.bf16.msra.mxu0 %v1736
      %1800 = vmatprep.subr.bf16.mxu0 0
      %1801 = vmatpush2.bf16.msra.mxu0 %v1751
      %1802 = vmatprep.subr.bf16.mxu0 0
      %1803 = vmatpush2.bf16.msra.mxu0 %v1750
      %1804 = vmatprep.subr.bf16.mxu0 0
      %1805 = vmatpush2.bf16.msra.mxu0 %v1749
      %1806 = vmatprep.subr.bf16.mxu0 0
      %1807 = vmatpush2.bf16.msra.mxu0 %v1748
      %1808 = vmatprep.subr.bf16.mxu0 0
      %1809 = vmatpush2.bf16.msra.mxu0 %v1747
      %1810 = vmatprep.subr.bf16.mxu0 0
      %1811 = vmatpush2.bf16.msra.mxu0 %v1746
      %1812 = vmatprep.subr.bf16.mxu0 0
      %1813 = vmatpush2.bf16.msra.mxu0 %v1745
      %1814 = vmatprep.subr.bf16.mxu0 0
      %1815 = vmatpush2.bf16.msra.mxu0 %v1744
      %1816 = vmatprep.mubr.bf16.mxu0 %v1545
      %1817 = vmatmul.mubr.bf16.gmra.mxu0 %v1544
      %v1818 = vpop.f32.mrf.mxu0
      %v1819 = vadd.f32 0.0, %v1818
      %v1820 = vpop.f32.mrf.mxu0
      %v1821 = vpop.f32.mrf.mxu0
      %v1822 = vadd.f32 0.0, %v1821
      %v1823 = vpop.f32.mrf.mxu0
      %1824 = vmatprep.mubr.bf16.mxu0 %v1548
      %1825 = vmatmul.mubr.bf16.gmra.mxu0 %v1547
      %v1826 = vpop.f32.mrf.mxu0
      %v1827 = vadd.f32 0.0, %v1826
      %v1828 = vpop.f32.mrf.mxu0
      %v1829 = vpop.f32.mrf.mxu0
      %v1830 = vadd.f32 0.0, %v1829
      %v1831 = vpop.f32.mrf.mxu0
      %1832 = vmatprep.mubr.bf16.mxu0 %v1551
      %1833 = vmatmul.mubr.bf16.gmra.mxu0 %v1550
      %v1834 = vpop.f32.mrf.mxu0
      %v1835 = vadd.f32 0.0, %v1834
      %v1836 = vpop.f32.mrf.mxu0
      %v1837 = vpop.f32.mrf.mxu0
      %v1838 = vadd.f32 0.0, %v1837
      %v1839 = vpop.f32.mrf.mxu0
      %1840 = vmatprep.mubr.bf16.mxu0 %v1554
      %1841 = vmatmul.mubr.bf16.gmra.mxu0 %v1553
      %v1842 = vpop.f32.mrf.mxu0
      %v1843 = vadd.f32 0.0, %v1842
      %v1844 = vpop.f32.mrf.mxu0
      %v1845 = vpop.f32.mrf.mxu0
      %v1846 = vadd.f32 0.0, %v1845
      %v1847 = vpop.f32.mrf.mxu0
      %1848 = vmatprep.mubr.bf16.mxu0 %v1557
      %1849 = vmatmul.mubr.bf16.gmra.mxu0 %v1556
      %v1850 = vpop.f32.mrf.mxu0
      %v1851 = vadd.f32 0.0, %v1850
      %v1852 = vpop.f32.mrf.mxu0
      %v1853 = vpop.f32.mrf.mxu0
      %v1854 = vadd.f32 0.0, %v1853
      %v1855 = vpop.f32.mrf.mxu0
      %1856 = vmatprep.mubr.bf16.mxu0 %v1560
      %1857 = vmatmul.mubr.bf16.gmra.mxu0 %v1559
      %v1858 = vpop.f32.mrf.mxu0
      %v1859 = vadd.f32 0.0, %v1858
      %v1860 = vpop.f32.mrf.mxu0
      %v1861 = vpop.f32.mrf.mxu0
      %v1862 = vadd.f32 0.0, %v1861
      %v1863 = vpop.f32.mrf.mxu0
      %1864 = vmatprep.mubr.bf16.mxu0 %v1563
      %1865 = vmatmul.mubr.bf16.gmra.mxu0 %v1562
      %v1866 = vpop.f32.mrf.mxu0
      %v1867 = vadd.f32 0.0, %v1866
      %v1868 = vpop.f32.mrf.mxu0
      %v1869 = vpop.f32.mrf.mxu0
      %v1870 = vadd.f32 0.0, %v1869
      %v1871 = vpop.f32.mrf.mxu0
      %1872 = vmatprep.mubr.bf16.mxu0 %v1566
      %1873 = vmatmul.mubr.bf16.gmra.mxu0 %v1565
      %v1874 = vpop.f32.mrf.mxu0
      %v1875 = vadd.f32 0.0, %v1874
      %v1876 = vpop.f32.mrf.mxu0
      %v1877 = vpop.f32.mrf.mxu0
      %v1878 = vadd.f32 0.0, %v1877
      %v1879 = vpop.f32.mrf.mxu0
      %1880 = vmatprep.mubr.bf16.mxu0 %v1569
      %1881 = vmatmul.mubr.bf16.gmra.mxu0 %v1568
      %v1882 = vpop.f32.mrf.mxu0
      %v1883 = vadd.f32 0.0, %v1882
      %v1884 = vpop.f32.mrf.mxu0
      %v1885 = vpop.f32.mrf.mxu0
      %v1886 = vadd.f32 0.0, %v1885
      %v1887 = vpop.f32.mrf.mxu0
      %1888 = vmatprep.mubr.bf16.mxu0 %v1572
      %1889 = vmatmul.mubr.bf16.gmra.mxu0 %v1571
      %v1890 = vpop.f32.mrf.mxu0
      %v1891 = vadd.f32 0.0, %v1890
      %v1892 = vpop.f32.mrf.mxu0
      %v1893 = vpop.f32.mrf.mxu0
      %v1894 = vadd.f32 0.0, %v1893
      %v1895 = vpop.f32.mrf.mxu0
      %1896 = vmatprep.mubr.bf16.mxu0 %v1575
      %1897 = vmatmul.mubr.bf16.gmra.mxu0 %v1574
      %v1898 = vpop.f32.mrf.mxu0
      %v1899 = vadd.f32 0.0, %v1898
      %v1900 = vpop.f32.mrf.mxu0
      %v1901 = vpop.f32.mrf.mxu0
      %v1902 = vadd.f32 0.0, %v1901
      %v1903 = vpop.f32.mrf.mxu0
      %1904 = vmatprep.mubr.bf16.mxu0 %v1578
      %1905 = vmatmul.mubr.bf16.gmra.mxu0 %v1577
      %v1906 = vpop.f32.mrf.mxu0
      %v1907 = vadd.f32 0.0, %v1906
      %v1908 = vpop.f32.mrf.mxu0
      %v1909 = vpop.f32.mrf.mxu0
      %v1910 = vadd.f32 0.0, %v1909
      %v1911 = vpop.f32.mrf.mxu0
      %1912 = vmatprep.mubr.bf16.mxu0 %v1581
      %1913 = vmatmul.mubr.bf16.gmra.mxu0 %v1580
      %v1914 = vpop.f32.mrf.mxu0
      %v1915 = vadd.f32 0.0, %v1914
      %v1916 = vpop.f32.mrf.mxu0
      %v1917 = vpop.f32.mrf.mxu0
      %v1918 = vadd.f32 0.0, %v1917
      %v1919 = vpop.f32.mrf.mxu0
      %1920 = vmatprep.mubr.bf16.mxu0 %v1584
      %1921 = vmatmul.mubr.bf16.gmra.mxu0 %v1583
      %v1922 = vpop.f32.mrf.mxu0
      %v1923 = vadd.f32 0.0, %v1922
      %v1924 = vpop.f32.mrf.mxu0
      %v1925 = vpop.f32.mrf.mxu0
      %v1926 = vadd.f32 0.0, %v1925
      %v1927 = vpop.f32.mrf.mxu0
      %1928 = vmatprep.mubr.bf16.mxu0 %v1587
      %1929 = vmatmul.mubr.bf16.gmra.mxu0 %v1586
      %v1930 = vpop.f32.mrf.mxu0
      %v1931 = vadd.f32 0.0, %v1930
      %v1932 = vpop.f32.mrf.mxu0
      %v1933 = vpop.f32.mrf.mxu0
      %v1934 = vadd.f32 0.0, %v1933
      %v1935 = vpop.f32.mrf.mxu0
      %1936 = vmatprep.mubr.bf16.mxu0 %v1590
      %1937 = vmatmul.mubr.bf16.gmra.mxu0 %v1589
      %v1938 = vpop.f32.mrf.mxu0
      %v1939 = vadd.f32 0.0, %v1938
      %v1940 = vpop.f32.mrf.mxu0
      %v1941 = vpop.f32.mrf.mxu0
      %v1942 = vadd.f32 0.0, %v1941
      %v1943 = vpop.f32.mrf.mxu0
      %1944 = vdwg.mxu0
      %1945 = vmatprep.subr.bf16.mxu0 0
      %1946 = vmatpush1.bf16.msra.mxu0 %v1759
      %1947 = vmatprep.subr.bf16.mxu0 0
      %1948 = vmatpush1.bf16.msra.mxu0 %v1758
      %1949 = vmatprep.subr.bf16.mxu0 0
      %1950 = vmatpush1.bf16.msra.mxu0 %v1757
      %1951 = vmatprep.subr.bf16.mxu0 0
      %1952 = vmatpush1.bf16.msra.mxu0 %v1756
      %1953 = vmatprep.subr.bf16.mxu0 0
      %1954 = vmatpush1.bf16.msra.mxu0 %v1755
      %1955 = vmatprep.subr.bf16.mxu0 0
      %1956 = vmatpush1.bf16.msra.mxu0 %v1754
      %1957 = vmatprep.subr.bf16.mxu0 0
      %1958 = vmatpush1.bf16.msra.mxu0 %v1753
      %1959 = vmatprep.subr.bf16.mxu0 0
      %1960 = vmatpush1.bf16.msra.mxu0 %v1752
      %1961 = vmatprep.subr.bf16.mxu0 0
      %1962 = vmatpush2.bf16.msra.mxu0 0
      %1963 = vmatprep.subr.bf16.mxu0 0
      %1964 = vmatpush2.bf16.msra.mxu0 0
      %1965 = vmatprep.subr.bf16.mxu0 0
      %1966 = vmatpush2.bf16.msra.mxu0 0
      %1967 = vmatprep.subr.bf16.mxu0 0
      %1968 = vmatpush2.bf16.msra.mxu0 0
      %1969 = vmatprep.subr.bf16.mxu0 0
      %1970 = vmatpush2.bf16.msra.mxu0 0
      %1971 = vmatprep.subr.bf16.mxu0 0
      %1972 = vmatpush2.bf16.msra.mxu0 0
      %1973 = vmatprep.subr.bf16.mxu0 0
      %1974 = vmatpush2.bf16.msra.mxu0 0
      %1975 = vmatprep.subr.bf16.mxu0 0
      %1976 = vmatpush2.bf16.msra.mxu0 0
      %1977 = vmatprep.mubr.bf16.mxu0 0
      %1978 = vmatmul.mubr.bf16.gmra.mxu0 %v1546
      %v1979 = vpop.f32.mrf.mxu0
      %v1980 = vadd.f32 %v1819, %v1979
      %v1981 = vpop.f32.mrf.mxu0
      %v1982 = vpop.f32.mrf.mxu0
      %v1983 = vadd.f32 %v1822, %v1982
      %v1984 = vpop.f32.mrf.mxu0
      %1985 = vmatprep.mubr.bf16.mxu0 0
      %1986 = vmatmul.mubr.bf16.gmra.mxu0 %v1549
      %v1987 = vpop.f32.mrf.mxu0
      %v1988 = vadd.f32 %v1827, %v1987
      %v1989 = vpop.f32.mrf.mxu0
      %v1990 = vpop.f32.mrf.mxu0
      %v1991 = vadd.f32 %v1830, %v1990
      %v1992 = vpop.f32.mrf.mxu0
      %1993 = vmatprep.mubr.bf16.mxu0 0
      %1994 = vmatmul.mubr.bf16.gmra.mxu0 %v1552
      %v1995 = vpop.f32.mrf.mxu0
      %v1996 = vadd.f32 %v1835, %v1995
      %v1997 = vpop.f32.mrf.mxu0
      %v1998 = vpop.f32.mrf.mxu0
      %v1999 = vadd.f32 %v1838, %v1998
      %v2000 = vpop.f32.mrf.mxu0
      %2001 = vmatprep.mubr.bf16.mxu0 0
      %2002 = vmatmul.mubr.bf16.gmra.mxu0 %v1555
      %v2003 = vpop.f32.mrf.mxu0
      %v2004 = vadd.f32 %v1843, %v2003
      %v2005 = vpop.f32.mrf.mxu0
      %v2006 = vpop.f32.mrf.mxu0
      %v2007 = vadd.f32 %v1846, %v2006
      %v2008 = vpop.f32.mrf.mxu0
      %2009 = vmatprep.mubr.bf16.mxu0 0
      %2010 = vmatmul.mubr.bf16.gmra.mxu0 %v1558
      %v2011 = vpop.f32.mrf.mxu0
      %v2012 = vadd.f32 %v1851, %v2011
      %v2013 = vpop.f32.mrf.mxu0
      %v2014 = vpop.f32.mrf.mxu0
      %v2015 = vadd.f32 %v1854, %v2014
      %v2016 = vpop.f32.mrf.mxu0
      %2017 = vmatprep.mubr.bf16.mxu0 0
      %2018 = vmatmul.mubr.bf16.gmra.mxu0 %v1561
      %v2019 = vpop.f32.mrf.mxu0
      %v2020 = vadd.f32 %v1859, %v2019
      %v2021 = vpop.f32.mrf.mxu0
      %v2022 = vpop.f32.mrf.mxu0
      %v2023 = vadd.f32 %v1862, %v2022
      %v2024 = vpop.f32.mrf.mxu0
      %2025 = vmatprep.mubr.bf16.mxu0 0
      %2026 = vmatmul.mubr.bf16.gmra.mxu0 %v1564
      %v2027 = vpop.f32.mrf.mxu0
      %v2028 = vadd.f32 %v1867, %v2027
      %v2029 = vpop.f32.mrf.mxu0
      %v2030 = vpop.f32.mrf.mxu0
      %v2031 = vadd.f32 %v1870, %v2030
      %v2032 = vpop.f32.mrf.mxu0
      %2033 = vmatprep.mubr.bf16.mxu0 0
      %2034 = vmatmul.mubr.bf16.gmra.mxu0 %v1567
      %v2035 = vpop.f32.mrf.mxu0
      %v2036 = vadd.f32 %v1875, %v2035
      %v2037 = vpop.f32.mrf.mxu0
      %v2038 = vpop.f32.mrf.mxu0
      %v2039 = vadd.f32 %v1878, %v2038
      %v2040 = vpop.f32.mrf.mxu0
      %2041 = vmatprep.mubr.bf16.mxu0 0
      %2042 = vmatmul.mubr.bf16.gmra.mxu0 %v1570
      %v2043 = vpop.f32.mrf.mxu0
      %v2044 = vadd.f32 %v1883, %v2043
      %v2045 = vpop.f32.mrf.mxu0
      %v2046 = vpop.f32.mrf.mxu0
      %v2047 = vadd.f32 %v1886, %v2046
      %v2048 = vpop.f32.mrf.mxu0
      %2049 = vmatprep.mubr.bf16.mxu0 0
      %2050 = vmatmul.mubr.bf16.gmra.mxu0 %v1573
      %v2051 = vpop.f32.mrf.mxu0
      %v2052 = vadd.f32 %v1891, %v2051
      %v2053 = vpop.f32.mrf.mxu0
      %v2054 = vpop.f32.mrf.mxu0
      %v2055 = vadd.f32 %v1894, %v2054
      %v2056 = vpop.f32.mrf.mxu0
      %2057 = vmatprep.mubr.bf16.mxu0 0
      %2058 = vmatmul.mubr.bf16.gmra.mxu0 %v1576
      %v2059 = vpop.f32.mrf.mxu0
      %v2060 = vadd.f32 %v1899, %v2059
      %v2061 = vpop.f32.mrf.mxu0
      %v2062 = vpop.f32.mrf.mxu0
      %v2063 = vadd.f32 %v1902, %v2062
      %v2064 = vpop.f32.mrf.mxu0
      %2065 = vmatprep.mubr.bf16.mxu0 0
      %2066 = vmatmul.mubr.bf16.gmra.mxu0 %v1579
      %v2067 = vpop.f32.mrf.mxu0
      %v2068 = vadd.f32 %v1907, %v2067
      %v2069 = vpop.f32.mrf.mxu0
      %v2070 = vpop.f32.mrf.mxu0
      %v2071 = vadd.f32 %v1910, %v2070
      %v2072 = vpop.f32.mrf.mxu0
      %2073 = vmatprep.mubr.bf16.mxu0 0
      %2074 = vmatmul.mubr.bf16.gmra.mxu0 %v1582
      %v2075 = vpop.f32.mrf.mxu0
      %v2076 = vadd.f32 %v1915, %v2075
      %v2077 = vpop.f32.mrf.mxu0
      %v2078 = vpop.f32.mrf.mxu0
      %v2079 = vadd.f32 %v1918, %v2078
      %v2080 = vpop.f32.mrf.mxu0
      %2081 = vmatprep.mubr.bf16.mxu0 0
      %2082 = vmatmul.mubr.bf16.gmra.mxu0 %v1585
      %v2083 = vpop.f32.mrf.mxu0
      %v2084 = vadd.f32 %v1923, %v2083
      %v2085 = vpop.f32.mrf.mxu0
      %v2086 = vpop.f32.mrf.mxu0
      %v2087 = vadd.f32 %v1926, %v2086
      %v2088 = vpop.f32.mrf.mxu0
      %2089 = vmatprep.mubr.bf16.mxu0 0
      %2090 = vmatmul.mubr.bf16.gmra.mxu0 %v1588
      %v2091 = vpop.f32.mrf.mxu0
      %v2092 = vadd.f32 %v1931, %v2091
      %v2093 = vpop.f32.mrf.mxu0
      %v2094 = vpop.f32.mrf.mxu0
      %v2095 = vadd.f32 %v1934, %v2094
      %v2096 = vpop.f32.mrf.mxu0
      %2097 = vmatprep.mubr.bf16.mxu0 0
      %2098 = vmatmul.mubr.bf16.gmra.mxu0 %v1591
      %v2099 = vpop.f32.mrf.mxu0
      %v2100 = vadd.f32 %v1939, %v2099
      %v2101 = vpop.f32.mrf.mxu0
      %v2102 = vpop.f32.mrf.mxu0
      %v2103 = vadd.f32 %v1942, %v2102
      %v2104 = vpop.f32.mrf.mxu0
      %2105 = vdwg.mxu0
      %v2170 = vunpack.c.l.b16 %v1158
      %v2171 = vunpack.c.h.b16 %v1158
      %v2172 = vunpack.c.l.b16 %v1159
      %v2173 = vunpack.c.l.b16 %v1160
      %v2174 = vunpack.c.h.b16 %v1160
      %v2175 = vunpack.c.l.b16 %v1161
      %v2176 = vunpack.c.l.b16 %v1162
      %v2177 = vunpack.c.h.b16 %v1162
      %v2178 = vunpack.c.l.b16 %v1163
      %v2179 = vunpack.c.l.b16 %v1164
      %v2180 = vunpack.c.h.b16 %v1164
      %v2181 = vunpack.c.l.b16 %v1165
      %v2182 = vunpack.c.l.b16 %v1166
      %v2183 = vunpack.c.h.b16 %v1166
      %v2184 = vunpack.c.l.b16 %v1167
      %v2185 = vunpack.c.l.b16 %v1168
      %v2186 = vunpack.c.h.b16 %v1168
      %v2187 = vunpack.c.l.b16 %v1169
      %v2188 = vunpack.c.l.b16 %v1170
      %v2189 = vunpack.c.h.b16 %v1170
      %v2190 = vunpack.c.l.b16 %v1171
      %v2191 = vunpack.c.l.b16 %v1172
      %v2192 = vunpack.c.h.b16 %v1172
      %v2193 = vunpack.c.l.b16 %v1173
      %v2194 = vunpack.c.l.b16 %v1174
      %v2195 = vunpack.c.h.b16 %v1174
      %v2196 = vunpack.c.l.b16 %v1175
      %v2197 = vunpack.c.l.b16 %v1176
      %v2198 = vunpack.c.h.b16 %v1176
      %v2199 = vunpack.c.l.b16 %v1177
      %v2200 = vunpack.c.l.b16 %v1178
      %v2201 = vunpack.c.h.b16 %v1178
      %v2202 = vunpack.c.l.b16 %v1179
      %v2203 = vunpack.c.l.b16 %v1180
      %v2204 = vunpack.c.h.b16 %v1180
      %v2205 = vunpack.c.l.b16 %v1181
      %v2206 = vunpack.c.l.b16 %v1182
      %v2207 = vunpack.c.h.b16 %v1182
      %v2208 = vunpack.c.l.b16 %v1183
      %v2209 = vunpack.c.l.b16 %v1184
      %v2210 = vunpack.c.h.b16 %v1184
      %v2211 = vunpack.c.l.b16 %v1185
      %v2212 = vunpack.c.l.b16 %v1186
      %v2213 = vunpack.c.h.b16 %v1186
      %v2214 = vunpack.c.l.b16 %v1187
      %v2215 = vunpack.c.l.b16 %v1188
      %v2216 = vunpack.c.h.b16 %v1188
      %v2217 = vunpack.c.l.b16 %v1189
      %v2218 = vunpack.c.l.b16 %v1190
      %v2219 = vunpack.c.h.b16 %v1190
      %v2220 = vunpack.c.l.b16 %v1191
      %v2221 = vunpack.c.l.b16 %v1192
      %v2222 = vunpack.c.h.b16 %v1192
      %v2223 = vunpack.c.l.b16 %v1193
      %v2224 = vunpack.c.l.b16 %v1194
      %v2225 = vunpack.c.h.b16 %v1194
      %v2226 = vunpack.c.l.b16 %v1195
      %v2227 = vunpack.c.l.b16 %v1196
      %v2228 = vunpack.c.h.b16 %v1196
      %v2229 = vunpack.c.l.b16 %v1197
      %v2230 = vunpack.c.l.b16 %v1198
      %v2231 = vunpack.c.h.b16 %v1198
      %v2232 = vunpack.c.l.b16 %v1199
      %v2233 = vunpack.c.l.b16 %v1200
      %v2234 = vunpack.c.h.b16 %v1200
      %v2235 = vunpack.c.l.b16 %v1201
      %v2236 = vunpack.c.l.b16 %v1202
      %v2237 = vunpack.c.h.b16 %v1202
      %v2238 = vunpack.c.l.b16 %v1203
      %v2239 = vunpack.c.l.b16 %v1204
      %v2240 = vunpack.c.h.b16 %v1204
      %v2241 = vunpack.c.l.b16 %v1205
      %v2242 = vunpack.c.l.b16 %v1206
      %v2243 = vunpack.c.h.b16 %v1206
      %v2244 = vunpack.c.l.b16 %v1207
      %v2245 = vunpack.c.l.b16 %v1208
      %v2246 = vunpack.c.h.b16 %v1208
      %v2247 = vunpack.c.l.b16 %v1209
      %v2248 = vunpack.c.l.b16 %v1210
      %v2249 = vunpack.c.h.b16 %v1210
      %v2250 = vunpack.c.l.b16 %v1211
      %v2251 = vunpack.c.l.b16 %v1212
      %v2252 = vunpack.c.h.b16 %v1212
      %v2253 = vunpack.c.l.b16 %v1213
      %v2254 = vunpack.c.l.b16 %v1214
      %v2255 = vunpack.c.h.b16 %v1214
      %v2256 = vunpack.c.l.b16 %v1215
      %v2257 = vunpack.c.l.b16 %v1216
      %v2258 = vunpack.c.h.b16 %v1216
      %v2259 = vunpack.c.l.b16 %v1217
      %v2260 = vunpack.c.l.b16 %v1218
      %v2261 = vunpack.c.h.b16 %v1218
      %v2262 = vunpack.c.l.b16 %v1219
      %v2263 = vunpack.c.l.b16 %v1220
      %v2264 = vunpack.c.h.b16 %v1220
      %v2265 = vunpack.c.l.b16 %v1221
      %v2266 = vpack.c.b16 %v2173, %v2170
      %v2267 = vpack.c.b16 %v2174, %v2171
      %v2268 = vpack.c.b16 %v2175, %v2172
      %v2269 = vpack.c.b16 %v2179, %v2176
      %v2270 = vpack.c.b16 %v2180, %v2177
      %v2271 = vpack.c.b16 %v2181, %v2178
      %v2272 = vpack.c.b16 %v2185, %v2182
      %v2273 = vpack.c.b16 %v2186, %v2183
      %v2274 = vpack.c.b16 %v2187, %v2184
      %v2275 = vpack.c.b16 %v2191, %v2188
      %v2276 = vpack.c.b16 %v2192, %v2189
      %v2277 = vpack.c.b16 %v2193, %v2190
      %v2278 = vpack.c.b16 %v2197, %v2194
      %v2279 = vpack.c.b16 %v2198, %v2195
      %v2280 = vpack.c.b16 %v2199, %v2196
      %v2281 = vpack.c.b16 %v2203, %v2200
      %v2282 = vpack.c.b16 %v2204, %v2201
      %v2283 = vpack.c.b16 %v2205, %v2202
      %v2284 = vpack.c.b16 %v2209, %v2206
      %v2285 = vpack.c.b16 %v2210, %v2207
      %v2286 = vpack.c.b16 %v2211, %v2208
      %v2287 = vpack.c.b16 %v2215, %v2212
      %v2288 = vpack.c.b16 %v2216, %v2213
      %v2289 = vpack.c.b16 %v2217, %v2214
      %v2290 = vpack.c.b16 %v2221, %v2218
      %v2291 = vpack.c.b16 %v2222, %v2219
      %v2292 = vpack.c.b16 %v2223, %v2220
      %v2293 = vpack.c.b16 %v2227, %v2224
      %v2294 = vpack.c.b16 %v2228, %v2225
      %v2295 = vpack.c.b16 %v2229, %v2226
      %v2296 = vpack.c.b16 %v2233, %v2230
      %v2297 = vpack.c.b16 %v2234, %v2231
      %v2298 = vpack.c.b16 %v2235, %v2232
      %v2299 = vpack.c.b16 %v2239, %v2236
      %v2300 = vpack.c.b16 %v2240, %v2237
      %v2301 = vpack.c.b16 %v2241, %v2238
      %v2302 = vpack.c.b16 %v2245, %v2242
      %v2303 = vpack.c.b16 %v2246, %v2243
      %v2304 = vpack.c.b16 %v2247, %v2244
      %v2305 = vpack.c.b16 %v2251, %v2248
      %v2306 = vpack.c.b16 %v2252, %v2249
      %v2307 = vpack.c.b16 %v2253, %v2250
      %v2308 = vpack.c.b16 %v2257, %v2254
      %v2309 = vpack.c.b16 %v2258, %v2255
      %v2310 = vpack.c.b16 %v2259, %v2256
      %v2311 = vpack.c.b16 %v2263, %v2260
      %v2312 = vpack.c.b16 %v2264, %v2261
      %v2313 = vpack.c.b16 %v2265, %v2262
      %v2410 = vunpack.c.l.b16 %v1222
      %v2411 = vunpack.c.l.b16 %v1223
      %v2412 = vunpack.c.l.b16 %v1224
      %v2413 = vunpack.c.l.b16 %v1225
      %v2414 = vunpack.c.l.b16 %v1226
      %v2415 = vunpack.c.l.b16 %v1227
      %v2416 = vunpack.c.l.b16 %v1228
      %v2417 = vunpack.c.l.b16 %v1229
      %v2418 = vunpack.c.l.b16 %v1230
      %v2419 = vunpack.c.l.b16 %v1231
      %v2420 = vunpack.c.l.b16 %v1232
      %v2421 = vunpack.c.l.b16 %v1233
      %v2422 = vunpack.c.l.b16 %v1234
      %v2423 = vunpack.c.l.b16 %v1235
      %v2424 = vunpack.c.l.b16 %v1236
      %v2425 = vunpack.c.l.b16 %v1237
      %v2426 = vunpack.c.l.b16 %v1238
      %v2427 = vunpack.c.l.b16 %v1239
      %v2428 = vunpack.c.l.b16 %v1240
      %v2429 = vunpack.c.l.b16 %v1241
      %v2430 = vunpack.c.l.b16 %v1242
      %v2431 = vunpack.c.l.b16 %v1243
      %v2432 = vunpack.c.l.b16 %v1244
      %v2433 = vunpack.c.l.b16 %v1245
      %v2434 = vunpack.c.l.b16 %v1246
      %v2435 = vunpack.c.l.b16 %v1247
      %v2436 = vunpack.c.l.b16 %v1248
      %v2437 = vunpack.c.l.b16 %v1249
      %v2438 = vunpack.c.l.b16 %v1250
      %v2439 = vunpack.c.l.b16 %v1251
      %v2440 = vunpack.c.l.b16 %v1252
      %v2441 = vunpack.c.l.b16 %v1253
      %v2442 = vunpack.c.l.b16 %v1254
      %v2443 = vunpack.c.l.b16 %v1255
      %v2444 = vunpack.c.l.b16 %v1256
      %v2445 = vunpack.c.l.b16 %v1257
      %v2446 = vunpack.c.l.b16 %v1258
      %v2447 = vunpack.c.l.b16 %v1259
      %v2448 = vunpack.c.l.b16 %v1260
      %v2449 = vunpack.c.l.b16 %v1261
      %v2450 = vunpack.c.l.b16 %v1262
      %v2451 = vunpack.c.l.b16 %v1263
      %v2452 = vunpack.c.l.b16 %v1264
      %v2453 = vunpack.c.l.b16 %v1265
      %v2454 = vunpack.c.l.b16 %v1266
      %v2455 = vunpack.c.l.b16 %v1267
      %v2456 = vunpack.c.l.b16 %v1268
      %v2457 = vunpack.c.l.b16 %v1269
      %v2458 = vpack.c.b16 %v2411, %v2410
      %v2459 = vpack.c.b16 %v2413, %v2412
      %v2460 = vpack.c.b16 %v2415, %v2414
      %v2461 = vpack.c.b16 %v2417, %v2416
      %v2462 = vpack.c.b16 %v2419, %v2418
      %v2463 = vpack.c.b16 %v2421, %v2420
      %v2464 = vpack.c.b16 %v2423, %v2422
      %v2465 = vpack.c.b16 %v2425, %v2424
      %v2466 = vpack.c.b16 %v2427, %v2426
      %v2467 = vpack.c.b16 %v2429, %v2428
      %v2468 = vpack.c.b16 %v2431, %v2430
      %v2469 = vpack.c.b16 %v2433, %v2432
      %v2470 = vpack.c.b16 %v2435, %v2434
      %v2471 = vpack.c.b16 %v2437, %v2436
      %v2472 = vpack.c.b16 %v2439, %v2438
      %v2473 = vpack.c.b16 %v2441, %v2440
      %v2474 = vpack.c.b16 %v2443, %v2442
      %v2475 = vpack.c.b16 %v2445, %v2444
      %v2476 = vpack.c.b16 %v2447, %v2446
      %v2477 = vpack.c.b16 %v2449, %v2448
      %v2478 = vpack.c.b16 %v2451, %v2450
      %v2479 = vpack.c.b16 %v2453, %v2452
      %v2480 = vpack.c.b16 %v2455, %v2454
      %v2481 = vpack.c.b16 %v2457, %v2456
      %2506 = vmatprep.subr.bf16.mxu0 0
      %2507 = vmatpush1.bf16.msra.mxu0 %v2465
      %2508 = vmatprep.subr.bf16.mxu0 0
      %2509 = vmatpush1.bf16.msra.mxu0 %v2464
      %2510 = vmatprep.subr.bf16.mxu0 0
      %2511 = vmatpush1.bf16.msra.mxu0 %v2463
      %2512 = vmatprep.subr.bf16.mxu0 0
      %2513 = vmatpush1.bf16.msra.mxu0 %v2462
      %2514 = vmatprep.subr.bf16.mxu0 0
      %2515 = vmatpush1.bf16.msra.mxu0 %v2461
      %2516 = vmatprep.subr.bf16.mxu0 0
      %2517 = vmatpush1.bf16.msra.mxu0 %v2460
      %2518 = vmatprep.subr.bf16.mxu0 0
      %2519 = vmatpush1.bf16.msra.mxu0 %v2459
      %2520 = vmatprep.subr.bf16.mxu0 0
      %2521 = vmatpush1.bf16.msra.mxu0 %v2458
      %2522 = vmatprep.subr.bf16.mxu0 0
      %2523 = vmatpush2.bf16.msra.mxu0 %v2473
      %2524 = vmatprep.subr.bf16.mxu0 0
      %2525 = vmatpush2.bf16.msra.mxu0 %v2472
      %2526 = vmatprep.subr.bf16.mxu0 0
      %2527 = vmatpush2.bf16.msra.mxu0 %v2471
      %2528 = vmatprep.subr.bf16.mxu0 0
      %2529 = vmatpush2.bf16.msra.mxu0 %v2470
      %2530 = vmatprep.subr.bf16.mxu0 0
      %2531 = vmatpush2.bf16.msra.mxu0 %v2469
      %2532 = vmatprep.subr.bf16.mxu0 0
      %2533 = vmatpush2.bf16.msra.mxu0 %v2468
      %2534 = vmatprep.subr.bf16.mxu0 0
      %2535 = vmatpush2.bf16.msra.mxu0 %v2467
      %2536 = vmatprep.subr.bf16.mxu0 0
      %2537 = vmatpush2.bf16.msra.mxu0 %v2466
      %2538 = vmatprep.mubr.bf16.mxu0 %v2267
      %2539 = vmatmul.mubr.bf16.gmra.mxu0 %v2266
      %v2540 = vpop.f32.mrf.mxu0
      %v2541 = vadd.f32 %v1980, %v2540
      %v2542 = vpop.f32.mrf.mxu0
      %v2543 = vpop.f32.mrf.mxu0
      %v2544 = vadd.f32 %v1983, %v2543
      %v2545 = vpop.f32.mrf.mxu0
      %2546 = vmatprep.mubr.bf16.mxu0 %v2270
      %2547 = vmatmul.mubr.bf16.gmra.mxu0 %v2269
      %v2548 = vpop.f32.mrf.mxu0
      %v2549 = vadd.f32 %v1988, %v2548
      %v2550 = vpop.f32.mrf.mxu0
      %v2551 = vpop.f32.mrf.mxu0
      %v2552 = vadd.f32 %v1991, %v2551
      %v2553 = vpop.f32.mrf.mxu0
      %2554 = vmatprep.mubr.bf16.mxu0 %v2273
      %2555 = vmatmul.mubr.bf16.gmra.mxu0 %v2272
      %v2556 = vpop.f32.mrf.mxu0
      %v2557 = vadd.f32 %v1996, %v2556
      %v2558 = vpop.f32.mrf.mxu0
      %v2559 = vpop.f32.mrf.mxu0
      %v2560 = vadd.f32 %v1999, %v2559
      %v2561 = vpop.f32.mrf.mxu0
      %2562 = vmatprep.mubr.bf16.mxu0 %v2276
      %2563 = vmatmul.mubr.bf16.gmra.mxu0 %v2275
      %v2564 = vpop.f32.mrf.mxu0
      %v2565 = vadd.f32 %v2004, %v2564
      %v2566 = vpop.f32.mrf.mxu0
      %v2567 = vpop.f32.mrf.mxu0
      %v2568 = vadd.f32 %v2007, %v2567
      %v2569 = vpop.f32.mrf.mxu0
      %2570 = vmatprep.mubr.bf16.mxu0 %v2279
      %2571 = vmatmul.mubr.bf16.gmra.mxu0 %v2278
      %v2572 = vpop.f32.mrf.mxu0
      %v2573 = vadd.f32 %v2012, %v2572
      %v2574 = vpop.f32.mrf.mxu0
      %v2575 = vpop.f32.mrf.mxu0
      %v2576 = vadd.f32 %v2015, %v2575
      %v2577 = vpop.f32.mrf.mxu0
      %2578 = vmatprep.mubr.bf16.mxu0 %v2282
      %2579 = vmatmul.mubr.bf16.gmra.mxu0 %v2281
      %v2580 = vpop.f32.mrf.mxu0
      %v2581 = vadd.f32 %v2020, %v2580
      %v2582 = vpop.f32.mrf.mxu0
      %v2583 = vpop.f32.mrf.mxu0
      %v2584 = vadd.f32 %v2023, %v2583
      %v2585 = vpop.f32.mrf.mxu0
      %2586 = vmatprep.mubr.bf16.mxu0 %v2285
      %2587 = vmatmul.mubr.bf16.gmra.mxu0 %v2284
      %v2588 = vpop.f32.mrf.mxu0
      %v2589 = vadd.f32 %v2028, %v2588
      %v2590 = vpop.f32.mrf.mxu0
      %v2591 = vpop.f32.mrf.mxu0
      %v2592 = vadd.f32 %v2031, %v2591
      %v2593 = vpop.f32.mrf.mxu0
      %2594 = vmatprep.mubr.bf16.mxu0 %v2288
      %2595 = vmatmul.mubr.bf16.gmra.mxu0 %v2287
      %v2596 = vpop.f32.mrf.mxu0
      %v2597 = vadd.f32 %v2036, %v2596
      %v2598 = vpop.f32.mrf.mxu0
      %v2599 = vpop.f32.mrf.mxu0
      %v2600 = vadd.f32 %v2039, %v2599
      %v2601 = vpop.f32.mrf.mxu0
      %2602 = vmatprep.mubr.bf16.mxu0 %v2291
      %2603 = vmatmul.mubr.bf16.gmra.mxu0 %v2290
      %v2604 = vpop.f32.mrf.mxu0
      %v2605 = vadd.f32 %v2044, %v2604
      %v2606 = vpop.f32.mrf.mxu0
      %v2607 = vpop.f32.mrf.mxu0
      %v2608 = vadd.f32 %v2047, %v2607
      %v2609 = vpop.f32.mrf.mxu0
      %2610 = vmatprep.mubr.bf16.mxu0 %v2294
      %2611 = vmatmul.mubr.bf16.gmra.mxu0 %v2293
      %v2612 = vpop.f32.mrf.mxu0
      %v2613 = vadd.f32 %v2052, %v2612
      %v2614 = vpop.f32.mrf.mxu0
      %v2615 = vpop.f32.mrf.mxu0
      %v2616 = vadd.f32 %v2055, %v2615
      %v2617 = vpop.f32.mrf.mxu0
      %2618 = vmatprep.mubr.bf16.mxu0 %v2297
      %2619 = vmatmul.mubr.bf16.gmra.mxu0 %v2296
      %v2620 = vpop.f32.mrf.mxu0
      %v2621 = vadd.f32 %v2060, %v2620
      %v2622 = vpop.f32.mrf.mxu0
      %v2623 = vpop.f32.mrf.mxu0
      %v2624 = vadd.f32 %v2063, %v2623
      %v2625 = vpop.f32.mrf.mxu0
      %2626 = vmatprep.mubr.bf16.mxu0 %v2300
      %2627 = vmatmul.mubr.bf16.gmra.mxu0 %v2299
      %v2628 = vpop.f32.mrf.mxu0
      %v2629 = vadd.f32 %v2068, %v2628
      %v2630 = vpop.f32.mrf.mxu0
      %v2631 = vpop.f32.mrf.mxu0
      %v2632 = vadd.f32 %v2071, %v2631
      %v2633 = vpop.f32.mrf.mxu0
      %2634 = vmatprep.mubr.bf16.mxu0 %v2303
      %2635 = vmatmul.mubr.bf16.gmra.mxu0 %v2302
      %v2636 = vpop.f32.mrf.mxu0
      %v2637 = vadd.f32 %v2076, %v2636
      %v2638 = vpop.f32.mrf.mxu0
      %v2639 = vpop.f32.mrf.mxu0
      %v2640 = vadd.f32 %v2079, %v2639
      %v2641 = vpop.f32.mrf.mxu0
      %2642 = vmatprep.mubr.bf16.mxu0 %v2306
      %2643 = vmatmul.mubr.bf16.gmra.mxu0 %v2305
      %v2644 = vpop.f32.mrf.mxu0
      %v2645 = vadd.f32 %v2084, %v2644
      %v2646 = vpop.f32.mrf.mxu0
      %v2647 = vpop.f32.mrf.mxu0
      %v2648 = vadd.f32 %v2087, %v2647
      %v2649 = vpop.f32.mrf.mxu0
      %2650 = vmatprep.mubr.bf16.mxu0 %v2309
      %2651 = vmatmul.mubr.bf16.gmra.mxu0 %v2308
      %v2652 = vpop.f32.mrf.mxu0
      %v2653 = vadd.f32 %v2092, %v2652
      %v2654 = vpop.f32.mrf.mxu0
      %v2655 = vpop.f32.mrf.mxu0
      %v2656 = vadd.f32 %v2095, %v2655
      %v2657 = vpop.f32.mrf.mxu0
      %2658 = vmatprep.mubr.bf16.mxu0 %v2312
      %2659 = vmatmul.mubr.bf16.gmra.mxu0 %v2311
      %v2660 = vpop.f32.mrf.mxu0
      %v2661 = vadd.f32 %v2100, %v2660
      %v2662 = vpop.f32.mrf.mxu0
      %v2663 = vpop.f32.mrf.mxu0
      %v2664 = vadd.f32 %v2103, %v2663
      %v2665 = vpop.f32.mrf.mxu0
      %2666 = vdwg.mxu0
      %2667 = vmatprep.subr.bf16.mxu0 0
      %2668 = vmatpush1.bf16.msra.mxu0 %v2481
      %2669 = vmatprep.subr.bf16.mxu0 0
      %2670 = vmatpush1.bf16.msra.mxu0 %v2480
      %2671 = vmatprep.subr.bf16.mxu0 0
      %2672 = vmatpush1.bf16.msra.mxu0 %v2479
      %2673 = vmatprep.subr.bf16.mxu0 0
      %2674 = vmatpush1.bf16.msra.mxu0 %v2478
      %2675 = vmatprep.subr.bf16.mxu0 0
      %2676 = vmatpush1.bf16.msra.mxu0 %v2477
      %2677 = vmatprep.subr.bf16.mxu0 0
      %2678 = vmatpush1.bf16.msra.mxu0 %v2476
      %2679 = vmatprep.subr.bf16.mxu0 0
      %2680 = vmatpush1.bf16.msra.mxu0 %v2475
      %2681 = vmatprep.subr.bf16.mxu0 0
      %2682 = vmatpush1.bf16.msra.mxu0 %v2474
      %2683 = vmatprep.subr.bf16.mxu0 0
      %2684 = vmatpush2.bf16.msra.mxu0 0
      %2685 = vmatprep.subr.bf16.mxu0 0
      %2686 = vmatpush2.bf16.msra.mxu0 0
      %2687 = vmatprep.subr.bf16.mxu0 0
      %2688 = vmatpush2.bf16.msra.mxu0 0
      %2689 = vmatprep.subr.bf16.mxu0 0
      %2690 = vmatpush2.bf16.msra.mxu0 0
      %2691 = vmatprep.subr.bf16.mxu0 0
      %2692 = vmatpush2.bf16.msra.mxu0 0
      %2693 = vmatprep.subr.bf16.mxu0 0
      %2694 = vmatpush2.bf16.msra.mxu0 0
      %2695 = vmatprep.subr.bf16.mxu0 0
      %2696 = vmatpush2.bf16.msra.mxu0 0
      %2697 = vmatprep.subr.bf16.mxu0 0
      %2698 = vmatpush2.bf16.msra.mxu0 0
      %2699 = vmatprep.mubr.bf16.mxu0 0
      %2700 = vmatmul.mubr.bf16.gmra.mxu0 %v2268
      %v2701 = vpop.f32.mrf.mxu0
      %v2702 = vadd.f32 %v2541, %v2701
      %v2703 = vpop.f32.mrf.mxu0
      %v2704 = vpop.f32.mrf.mxu0
      %v2705 = vadd.f32 %v2544, %v2704
      %v2706 = vpop.f32.mrf.mxu0
      %2707 = vmatprep.mubr.bf16.mxu0 0
      %2708 = vmatmul.mubr.bf16.gmra.mxu0 %v2271
      %v2709 = vpop.f32.mrf.mxu0
      %v2710 = vadd.f32 %v2549, %v2709
      %v2711 = vpop.f32.mrf.mxu0
      %v2712 = vpop.f32.mrf.mxu0
      %v2713 = vadd.f32 %v2552, %v2712
      %v2714 = vpop.f32.mrf.mxu0
      %2715 = vmatprep.mubr.bf16.mxu0 0
      %2716 = vmatmul.mubr.bf16.gmra.mxu0 %v2274
      %v2717 = vpop.f32.mrf.mxu0
      %v2718 = vadd.f32 %v2557, %v2717
      %v2719 = vpop.f32.mrf.mxu0
      %v2720 = vpop.f32.mrf.mxu0
      %v2721 = vadd.f32 %v2560, %v2720
      %v2722 = vpop.f32.mrf.mxu0
      %2723 = vmatprep.mubr.bf16.mxu0 0
      %2724 = vmatmul.mubr.bf16.gmra.mxu0 %v2277
      %v2725 = vpop.f32.mrf.mxu0
      %v2726 = vadd.f32 %v2565, %v2725
      %v2727 = vpop.f32.mrf.mxu0
      %v2728 = vpop.f32.mrf.mxu0
      %v2729 = vadd.f32 %v2568, %v2728
      %v2730 = vpop.f32.mrf.mxu0
      %2731 = vmatprep.mubr.bf16.mxu0 0
      %2732 = vmatmul.mubr.bf16.gmra.mxu0 %v2280
      %v2733 = vpop.f32.mrf.mxu0
      %v2734 = vadd.f32 %v2573, %v2733
      %v2735 = vpop.f32.mrf.mxu0
      %v2736 = vpop.f32.mrf.mxu0
      %v2737 = vadd.f32 %v2576, %v2736
      %v2738 = vpop.f32.mrf.mxu0
      %2739 = vmatprep.mubr.bf16.mxu0 0
      %2740 = vmatmul.mubr.bf16.gmra.mxu0 %v2283
      %v2741 = vpop.f32.mrf.mxu0
      %v2742 = vadd.f32 %v2581, %v2741
      %v2743 = vpop.f32.mrf.mxu0
      %v2744 = vpop.f32.mrf.mxu0
      %v2745 = vadd.f32 %v2584, %v2744
      %v2746 = vpop.f32.mrf.mxu0
      %2747 = vmatprep.mubr.bf16.mxu0 0
      %2748 = vmatmul.mubr.bf16.gmra.mxu0 %v2286
      %v2749 = vpop.f32.mrf.mxu0
      %v2750 = vadd.f32 %v2589, %v2749
      %v2751 = vpop.f32.mrf.mxu0
      %v2752 = vpop.f32.mrf.mxu0
      %v2753 = vadd.f32 %v2592, %v2752
      %v2754 = vpop.f32.mrf.mxu0
      %2755 = vmatprep.mubr.bf16.mxu0 0
      %2756 = vmatmul.mubr.bf16.gmra.mxu0 %v2289
      %v2757 = vpop.f32.mrf.mxu0
      %v2758 = vadd.f32 %v2597, %v2757
      %v2759 = vpop.f32.mrf.mxu0
      %v2760 = vpop.f32.mrf.mxu0
      %v2761 = vadd.f32 %v2600, %v2760
      %v2762 = vpop.f32.mrf.mxu0
      %2763 = vmatprep.mubr.bf16.mxu0 0
      %2764 = vmatmul.mubr.bf16.gmra.mxu0 %v2292
      %v2765 = vpop.f32.mrf.mxu0
      %v2766 = vadd.f32 %v2605, %v2765
      %v2767 = vpop.f32.mrf.mxu0
      %v2768 = vpop.f32.mrf.mxu0
      %v2769 = vadd.f32 %v2608, %v2768
      %v2770 = vpop.f32.mrf.mxu0
      %2771 = vmatprep.mubr.bf16.mxu0 0
      %2772 = vmatmul.mubr.bf16.gmra.mxu0 %v2295
      %v2773 = vpop.f32.mrf.mxu0
      %v2774 = vadd.f32 %v2613, %v2773
      %v2775 = vpop.f32.mrf.mxu0
      %v2776 = vpop.f32.mrf.mxu0
      %v2777 = vadd.f32 %v2616, %v2776
      %v2778 = vpop.f32.mrf.mxu0
      %2779 = vmatprep.mubr.bf16.mxu0 0
      %2780 = vmatmul.mubr.bf16.gmra.mxu0 %v2298
      %v2781 = vpop.f32.mrf.mxu0
      %v2782 = vadd.f32 %v2621, %v2781
      %v2783 = vpop.f32.mrf.mxu0
      %v2784 = vpop.f32.mrf.mxu0
      %v2785 = vadd.f32 %v2624, %v2784
      %v2786 = vpop.f32.mrf.mxu0
      %2787 = vmatprep.mubr.bf16.mxu0 0
      %2788 = vmatmul.mubr.bf16.gmra.mxu0 %v2301
      %v2789 = vpop.f32.mrf.mxu0
      %v2790 = vadd.f32 %v2629, %v2789
      %v2791 = vpop.f32.mrf.mxu0
      %v2792 = vpop.f32.mrf.mxu0
      %v2793 = vadd.f32 %v2632, %v2792
      %v2794 = vpop.f32.mrf.mxu0
      %2795 = vmatprep.mubr.bf16.mxu0 0
      %2796 = vmatmul.mubr.bf16.gmra.mxu0 %v2304
      %v2797 = vpop.f32.mrf.mxu0
      %v2798 = vadd.f32 %v2637, %v2797
      %v2799 = vpop.f32.mrf.mxu0
      %v2800 = vpop.f32.mrf.mxu0
      %v2801 = vadd.f32 %v2640, %v2800
      %v2802 = vpop.f32.mrf.mxu0
      %2803 = vmatprep.mubr.bf16.mxu0 0
      %2804 = vmatmul.mubr.bf16.gmra.mxu0 %v2307
      %v2805 = vpop.f32.mrf.mxu0
      %v2806 = vadd.f32 %v2645, %v2805
      %v2807 = vpop.f32.mrf.mxu0
      %v2808 = vpop.f32.mrf.mxu0
      %v2809 = vadd.f32 %v2648, %v2808
      %v2810 = vpop.f32.mrf.mxu0
      %2811 = vmatprep.mubr.bf16.mxu0 0
      %2812 = vmatmul.mubr.bf16.gmra.mxu0 %v2310
      %v2813 = vpop.f32.mrf.mxu0
      %v2814 = vadd.f32 %v2653, %v2813
      %v2815 = vpop.f32.mrf.mxu0
      %v2816 = vpop.f32.mrf.mxu0
      %v2817 = vadd.f32 %v2656, %v2816
      %v2818 = vpop.f32.mrf.mxu0
      %2819 = vmatprep.mubr.bf16.mxu0 0
      %2820 = vmatmul.mubr.bf16.gmra.mxu0 %v2313
      %v2821 = vpop.f32.mrf.mxu0
      %v2822 = vadd.f32 %v2661, %v2821
      %v2823 = vpop.f32.mrf.mxu0
      %v2824 = vpop.f32.mrf.mxu0
      %v2825 = vadd.f32 %v2664, %v2824
      %v2826 = vpop.f32.mrf.mxu0
      %2827 = vdwg.mxu0
      %s2828 = scalar_lea.vmem [#allocation2], 48
      %v2829 = vld [vmem:[%s2828] sm:$0xff]
      %v2830 = vld [vmem:[%s2828 + $0x8] sm:$0xf]
      %v2831 = vld [vmem:[%s2828 + $0xc] sm:$0xff]
      %v2832 = vld [vmem:[%s2828 + $0x14] sm:$0xf]
      %v2833 = vld [vmem:[%s2828 + $0x18] sm:$0xff]
      %v2834 = vld [vmem:[%s2828 + $0x20] sm:$0xf]
      %v2835 = vld [vmem:[%s2828 + $0x24] sm:$0xff]
      %v2836 = vld [vmem:[%s2828 + $0x2c] sm:$0xf]
      %v2837 = vld [vmem:[%s2828 + $0x30] sm:$0xff]
      %v2838 = vld [vmem:[%s2828 + $0x38] sm:$0xf]
      %v2839 = vld [vmem:[%s2828 + $0x3c] sm:$0xff]
      %v2840 = vld [vmem:[%s2828 + $0x44] sm:$0xf]
      %v2841 = vld [vmem:[%s2828 + $0x48] sm:$0xff]
      %v2842 = vld [vmem:[%s2828 + $0x50] sm:$0xf]
      %v2843 = vld [vmem:[%s2828 + $0x54] sm:$0xff]
      %v2844 = vld [vmem:[%s2828 + $0x5c] sm:$0xf]
      %v2845 = vld [vmem:[%s2828 + $0x60] sm:$0xff]
      %v2846 = vld [vmem:[%s2828 + $0x68] sm:$0xf]
      %v2847 = vld [vmem:[%s2828 + $0x6c] sm:$0xff]
      %v2848 = vld [vmem:[%s2828 + $0x74] sm:$0xf]
      %v2849 = vld [vmem:[%s2828 + $0x78] sm:$0xff]
      %v2850 = vld [vmem:[%s2828 + $0x80] sm:$0xf]
      %v2851 = vld [vmem:[%s2828 + $0x84] sm:$0xff]
      %v2852 = vld [vmem:[%s2828 + $0x8c] sm:$0xf]
      %v2853 = vld [vmem:[%s2828 + $0x90] sm:$0xff]
      %v2854 = vld [vmem:[%s2828 + $0x98] sm:$0xf]
      %v2855 = vld [vmem:[%s2828 + $0x9c] sm:$0xff]
      %v2856 = vld [vmem:[%s2828 + $0xa4] sm:$0xf]
      %v2857 = vld [vmem:[%s2828 + $0xa8] sm:$0xff]
      %v2858 = vld [vmem:[%s2828 + $0xb0] sm:$0xf]
      %v2859 = vld [vmem:[%s2828 + $0xb4] sm:$0xff]
      %v2860 = vld [vmem:[%s2828 + $0xbc] sm:$0xf]
      %v2861 = vld [vmem:[%s2828 + $0xc0] sm:$0xff]
      %v2862 = vld [vmem:[%s2828 + $0xc8] sm:$0xf]
      %v2863 = vld [vmem:[%s2828 + $0xcc] sm:$0xff]
      %v2864 = vld [vmem:[%s2828 + $0xd4] sm:$0xf]
      %v2865 = vld [vmem:[%s2828 + $0xd8] sm:$0xff]
      %v2866 = vld [vmem:[%s2828 + $0xe0] sm:$0xf]
      %v2867 = vld [vmem:[%s2828 + $0xe4] sm:$0xff]
      %v2868 = vld [vmem:[%s2828 + $0xec] sm:$0xf]
      %v2869 = vld [vmem:[%s2828 + $0xf0] sm:$0xff]
      %v2870 = vld [vmem:[%s2828 + $0xf8] sm:$0xf]
      %v2871 = vld [vmem:[%s2828 + $0xfc] sm:$0xff]
      %v2872 = vld [vmem:[%s2828 + $0x104] sm:$0xf]
      %v2873 = vld [vmem:[%s2828 + $0x108] sm:$0xff]
      %v2874 = vld [vmem:[%s2828 + $0x110] sm:$0xf]
      %v2875 = vld [vmem:[%s2828 + $0x114] sm:$0xff]
      %v2876 = vld [vmem:[%s2828 + $0x11c] sm:$0xf]
      %v2877 = vld [vmem:[%s2828 + $0x120] sm:$0xff]
      %v2878 = vld [vmem:[%s2828 + $0x128] sm:$0xf]
      %v2879 = vld [vmem:[%s2828 + $0x12c] sm:$0xff]
      %v2880 = vld [vmem:[%s2828 + $0x134] sm:$0xf]
      %v2881 = vld [vmem:[%s2828 + $0x138] sm:$0xff]
      %v2882 = vld [vmem:[%s2828 + $0x140] sm:$0xf]
      %v2883 = vld [vmem:[%s2828 + $0x144] sm:$0xff]
      %v2884 = vld [vmem:[%s2828 + $0x14c] sm:$0xf]
      %v2885 = vld [vmem:[%s2828 + $0x150] sm:$0xff]
      %v2886 = vld [vmem:[%s2828 + $0x158] sm:$0xf]
      %v2887 = vld [vmem:[%s2828 + $0x15c] sm:$0xff]
      %v2888 = vld [vmem:[%s2828 + $0x164] sm:$0xf]
      %v2889 = vld [vmem:[%s2828 + $0x168] sm:$0xff]
      %v2890 = vld [vmem:[%s2828 + $0x170] sm:$0xf]
      %v2891 = vld [vmem:[%s2828 + $0x174] sm:$0xff]
      %v2892 = vld [vmem:[%s2828 + $0x17c] sm:$0xf]
      %s2893 = scalar_lea.vmem %s1, 384
      %v2894 = vld [vmem:[%s2893] sm:$0xf]
      %v2895 = vld [vmem:[%s2893 + $0x4] sm:$0xf]
      %v2896 = vld [vmem:[%s2893 + $0x8] sm:$0xf]
      %v2897 = vld [vmem:[%s2893 + $0xc] sm:$0xf]
      %v2898 = vld [vmem:[%s2893 + $0x10] sm:$0xf]
      %v2899 = vld [vmem:[%s2893 + $0x14] sm:$0xf]
      %v2900 = vld [vmem:[%s2893 + $0x18] sm:$0xf]
      %v2901 = vld [vmem:[%s2893 + $0x1c] sm:$0xf]
      %v2902 = vld [vmem:[%s2893 + $0x20] sm:$0xf]
      %v2903 = vld [vmem:[%s2893 + $0x24] sm:$0xf]
      %v2904 = vld [vmem:[%s2893 + $0x28] sm:$0xf]
      %v2905 = vld [vmem:[%s2893 + $0x2c] sm:$0xf]
      %v2906 = vld [vmem:[%s2893 + $0x30] sm:$0xf]
      %v2907 = vld [vmem:[%s2893 + $0x34] sm:$0xf]
      %v2908 = vld [vmem:[%s2893 + $0x38] sm:$0xf]
      %v2909 = vld [vmem:[%s2893 + $0x3c] sm:$0xf]
      %v2910 = vld [vmem:[%s2893 + $0x40] sm:$0xf]
      %v2911 = vld [vmem:[%s2893 + $0x44] sm:$0xf]
      %v2912 = vld [vmem:[%s2893 + $0x48] sm:$0xf]
      %v2913 = vld [vmem:[%s2893 + $0x4c] sm:$0xf]
      %v2914 = vld [vmem:[%s2893 + $0x50] sm:$0xf]
      %v2915 = vld [vmem:[%s2893 + $0x54] sm:$0xf]
      %v2916 = vld [vmem:[%s2893 + $0x58] sm:$0xf]
      %v2917 = vld [vmem:[%s2893 + $0x5c] sm:$0xf]
      %v2918 = vld [vmem:[%s2893 + $0x60] sm:$0xf]
      %v2919 = vld [vmem:[%s2893 + $0x64] sm:$0xf]
      %v2920 = vld [vmem:[%s2893 + $0x68] sm:$0xf]
      %v2921 = vld [vmem:[%s2893 + $0x6c] sm:$0xf]
      %v2922 = vld [vmem:[%s2893 + $0x70] sm:$0xf]
      %v2923 = vld [vmem:[%s2893 + $0x74] sm:$0xf]
      %v2924 = vld [vmem:[%s2893 + $0x78] sm:$0xf]
      %v2925 = vld [vmem:[%s2893 + $0x7c] sm:$0xf]
      %v2926 = vld [vmem:[%s2893 + $0x80] sm:$0xf]
      %v2927 = vld [vmem:[%s2893 + $0x84] sm:$0xf]
      %v2928 = vld [vmem:[%s2893 + $0x88] sm:$0xf]
      %v2929 = vld [vmem:[%s2893 + $0x8c] sm:$0xf]
      %v2930 = vld [vmem:[%s2893 + $0x90] sm:$0xf]
      %v2931 = vld [vmem:[%s2893 + $0x94] sm:$0xf]
      %v2932 = vld [vmem:[%s2893 + $0x98] sm:$0xf]
      %v2933 = vld [vmem:[%s2893 + $0x9c] sm:$0xf]
      %v2934 = vld [vmem:[%s2893 + $0xa0] sm:$0xf]
      %v2935 = vld [vmem:[%s2893 + $0xa4] sm:$0xf]
      %v2936 = vld [vmem:[%s2893 + $0xa8] sm:$0xf]
      %v2937 = vld [vmem:[%s2893 + $0xac] sm:$0xf]
      %v2938 = vld [vmem:[%s2893 + $0xb0] sm:$0xf]
      %v2939 = vld [vmem:[%s2893 + $0xb4] sm:$0xf]
      %v2940 = vld [vmem:[%s2893 + $0xb8] sm:$0xf]
      %v2941 = vld [vmem:[%s2893 + $0xbc] sm:$0xf]
      %v3006 = vunpack.c.l.b16 %v2829
      %v3007 = vunpack.c.h.b16 %v2829
      %v3008 = vunpack.c.l.b16 %v2830
      %v3009 = vunpack.c.l.b16 %v2831
      %v3010 = vunpack.c.h.b16 %v2831
      %v3011 = vunpack.c.l.b16 %v2832
      %v3012 = vunpack.c.l.b16 %v2833
      %v3013 = vunpack.c.h.b16 %v2833
      %v3014 = vunpack.c.l.b16 %v2834
      %v3015 = vunpack.c.l.b16 %v2835
      %v3016 = vunpack.c.h.b16 %v2835
      %v3017 = vunpack.c.l.b16 %v2836
      %v3018 = vunpack.c.l.b16 %v2837
      %v3019 = vunpack.c.h.b16 %v2837
      %v3020 = vunpack.c.l.b16 %v2838
      %v3021 = vunpack.c.l.b16 %v2839
      %v3022 = vunpack.c.h.b16 %v2839
      %v3023 = vunpack.c.l.b16 %v2840
      %v3024 = vunpack.c.l.b16 %v2841
      %v3025 = vunpack.c.h.b16 %v2841
      %v3026 = vunpack.c.l.b16 %v2842
      %v3027 = vunpack.c.l.b16 %v2843
      %v3028 = vunpack.c.h.b16 %v2843
      %v3029 = vunpack.c.l.b16 %v2844
      %v3030 = vunpack.c.l.b16 %v2845
      %v3031 = vunpack.c.h.b16 %v2845
      %v3032 = vunpack.c.l.b16 %v2846
      %v3033 = vunpack.c.l.b16 %v2847
      %v3034 = vunpack.c.h.b16 %v2847
      %v3035 = vunpack.c.l.b16 %v2848
      %v3036 = vunpack.c.l.b16 %v2849
      %v3037 = vunpack.c.h.b16 %v2849
      %v3038 = vunpack.c.l.b16 %v2850
      %v3039 = vunpack.c.l.b16 %v2851
      %v3040 = vunpack.c.h.b16 %v2851
      %v3041 = vunpack.c.l.b16 %v2852
      %v3042 = vunpack.c.l.b16 %v2853
      %v3043 = vunpack.c.h.b16 %v2853
      %v3044 = vunpack.c.l.b16 %v2854
      %v3045 = vunpack.c.l.b16 %v2855
      %v3046 = vunpack.c.h.b16 %v2855
      %v3047 = vunpack.c.l.b16 %v2856
      %v3048 = vunpack.c.l.b16 %v2857
      %v3049 = vunpack.c.h.b16 %v2857
      %v3050 = vunpack.c.l.b16 %v2858
      %v3051 = vunpack.c.l.b16 %v2859
      %v3052 = vunpack.c.h.b16 %v2859
      %v3053 = vunpack.c.l.b16 %v2860
      %v3054 = vunpack.c.l.b16 %v2861
      %v3055 = vunpack.c.h.b16 %v2861
      %v3056 = vunpack.c.l.b16 %v2862
      %v3057 = vunpack.c.l.b16 %v2863
      %v3058 = vunpack.c.h.b16 %v2863
      %v3059 = vunpack.c.l.b16 %v2864
      %v3060 = vunpack.c.l.b16 %v2865
      %v3061 = vunpack.c.h.b16 %v2865
      %v3062 = vunpack.c.l.b16 %v2866
      %v3063 = vunpack.c.l.b16 %v2867
      %v3064 = vunpack.c.h.b16 %v2867
      %v3065 = vunpack.c.l.b16 %v2868
      %v3066 = vunpack.c.l.b16 %v2869
      %v3067 = vunpack.c.h.b16 %v2869
      %v3068 = vunpack.c.l.b16 %v2870
      %v3069 = vunpack.c.l.b16 %v2871
      %v3070 = vunpack.c.h.b16 %v2871
      %v3071 = vunpack.c.l.b16 %v2872
      %v3072 = vunpack.c.l.b16 %v2873
      %v3073 = vunpack.c.h.b16 %v2873
      %v3074 = vunpack.c.l.b16 %v2874
      %v3075 = vunpack.c.l.b16 %v2875
      %v3076 = vunpack.c.h.b16 %v2875
      %v3077 = vunpack.c.l.b16 %v2876
      %v3078 = vunpack.c.l.b16 %v2877
      %v3079 = vunpack.c.h.b16 %v2877
      %v3080 = vunpack.c.l.b16 %v2878
      %v3081 = vunpack.c.l.b16 %v2879
      %v3082 = vunpack.c.h.b16 %v2879
      %v3083 = vunpack.c.l.b16 %v2880
      %v3084 = vunpack.c.l.b16 %v2881
      %v3085 = vunpack.c.h.b16 %v2881
      %v3086 = vunpack.c.l.b16 %v2882
      %v3087 = vunpack.c.l.b16 %v2883
      %v3088 = vunpack.c.h.b16 %v2883
      %v3089 = vunpack.c.l.b16 %v2884
      %v3090 = vunpack.c.l.b16 %v2885
      %v3091 = vunpack.c.h.b16 %v2885
      %v3092 = vunpack.c.l.b16 %v2886
      %v3093 = vunpack.c.l.b16 %v2887
      %v3094 = vunpack.c.h.b16 %v2887
      %v3095 = vunpack.c.l.b16 %v2888
      %v3096 = vunpack.c.l.b16 %v2889
      %v3097 = vunpack.c.h.b16 %v2889
      %v3098 = vunpack.c.l.b16 %v2890
      %v3099 = vunpack.c.l.b16 %v2891
      %v3100 = vunpack.c.h.b16 %v2891
      %v3101 = vunpack.c.l.b16 %v2892
      %v3102 = vpack.c.b16 %v3009, %v3006
      %v3103 = vpack.c.b16 %v3010, %v3007
      %v3104 = vpack.c.b16 %v3011, %v3008
      %v3105 = vpack.c.b16 %v3015, %v3012
      %v3106 = vpack.c.b16 %v3016, %v3013
      %v3107 = vpack.c.b16 %v3017, %v3014
      %v3108 = vpack.c.b16 %v3021, %v3018
      %v3109 = vpack.c.b16 %v3022, %v3019
      %v3110 = vpack.c.b16 %v3023, %v3020
      %v3111 = vpack.c.b16 %v3027, %v3024
      %v3112 = vpack.c.b16 %v3028, %v3025
      %v3113 = vpack.c.b16 %v3029, %v3026
      %v3114 = vpack.c.b16 %v3033, %v3030
      %v3115 = vpack.c.b16 %v3034, %v3031
      %v3116 = vpack.c.b16 %v3035, %v3032
      %v3117 = vpack.c.b16 %v3039, %v3036
      %v3118 = vpack.c.b16 %v3040, %v3037
      %v3119 = vpack.c.b16 %v3041, %v3038
      %v3120 = vpack.c.b16 %v3045, %v3042
      %v3121 = vpack.c.b16 %v3046, %v3043
      %v3122 = vpack.c.b16 %v3047, %v3044
      %v3123 = vpack.c.b16 %v3051, %v3048
      %v3124 = vpack.c.b16 %v3052, %v3049
      %v3125 = vpack.c.b16 %v3053, %v3050
      %v3126 = vpack.c.b16 %v3057, %v3054
      %v3127 = vpack.c.b16 %v3058, %v3055
      %v3128 = vpack.c.b16 %v3059, %v3056
      %v3129 = vpack.c.b16 %v3063, %v3060
      %v3130 = vpack.c.b16 %v3064, %v3061
      %v3131 = vpack.c.b16 %v3065, %v3062
      %v3132 = vpack.c.b16 %v3069, %v3066
      %v3133 = vpack.c.b16 %v3070, %v3067
      %v3134 = vpack.c.b16 %v3071, %v3068
      %v3135 = vpack.c.b16 %v3075, %v3072
      %v3136 = vpack.c.b16 %v3076, %v3073
      %v3137 = vpack.c.b16 %v3077, %v3074
      %v3138 = vpack.c.b16 %v3081, %v3078
      %v3139 = vpack.c.b16 %v3082, %v3079
      %v3140 = vpack.c.b16 %v3083, %v3080
      %v3141 = vpack.c.b16 %v3087, %v3084
      %v3142 = vpack.c.b16 %v3088, %v3085
      %v3143 = vpack.c.b16 %v3089, %v3086
      %v3144 = vpack.c.b16 %v3093, %v3090
      %v3145 = vpack.c.b16 %v3094, %v3091
      %v3146 = vpack.c.b16 %v3095, %v3092
      %v3147 = vpack.c.b16 %v3099, %v3096
      %v3148 = vpack.c.b16 %v3100, %v3097
      %v3149 = vpack.c.b16 %v3101, %v3098
      %v3246 = vunpack.c.l.b16 %v2894
      %v3247 = vunpack.c.l.b16 %v2895
      %v3248 = vunpack.c.l.b16 %v2896
      %v3249 = vunpack.c.l.b16 %v2897
      %v3250 = vunpack.c.l.b16 %v2898
      %v3251 = vunpack.c.l.b16 %v2899
      %v3252 = vunpack.c.l.b16 %v2900
      %v3253 = vunpack.c.l.b16 %v2901
      %v3254 = vunpack.c.l.b16 %v2902
      %v3255 = vunpack.c.l.b16 %v2903
      %v3256 = vunpack.c.l.b16 %v2904
      %v3257 = vunpack.c.l.b16 %v2905
      %v3258 = vunpack.c.l.b16 %v2906
      %v3259 = vunpack.c.l.b16 %v2907
      %v3260 = vunpack.c.l.b16 %v2908
      %v3261 = vunpack.c.l.b16 %v2909
      %v3262 = vunpack.c.l.b16 %v2910
      %v3263 = vunpack.c.l.b16 %v2911
      %v3264 = vunpack.c.l.b16 %v2912
      %v3265 = vunpack.c.l.b16 %v2913
      %v3266 = vunpack.c.l.b16 %v2914
      %v3267 = vunpack.c.l.b16 %v2915
      %v3268 = vunpack.c.l.b16 %v2916
      %v3269 = vunpack.c.l.b16 %v2917
      %v3270 = vunpack.c.l.b16 %v2918
      %v3271 = vunpack.c.l.b16 %v2919
      %v3272 = vunpack.c.l.b16 %v2920
      %v3273 = vunpack.c.l.b16 %v2921
      %v3274 = vunpack.c.l.b16 %v2922
      %v3275 = vunpack.c.l.b16 %v2923
      %v3276 = vunpack.c.l.b16 %v2924
      %v3277 = vunpack.c.l.b16 %v2925
      %v3278 = vunpack.c.l.b16 %v2926
      %v3279 = vunpack.c.l.b16 %v2927
      %v3280 = vunpack.c.l.b16 %v2928
      %v3281 = vunpack.c.l.b16 %v2929
      %v3282 = vunpack.c.l.b16 %v2930
      %v3283 = vunpack.c.l.b16 %v2931
      %v3284 = vunpack.c.l.b16 %v2932
      %v3285 = vunpack.c.l.b16 %v2933
      %v3286 = vunpack.c.l.b16 %v2934
      %v3287 = vunpack.c.l.b16 %v2935
      %v3288 = vunpack.c.l.b16 %v2936
      %v3289 = vunpack.c.l.b16 %v2937
      %v3290 = vunpack.c.l.b16 %v2938
      %v3291 = vunpack.c.l.b16 %v2939
      %v3292 = vunpack.c.l.b16 %v2940
      %v3293 = vunpack.c.l.b16 %v2941
      %v3294 = vpack.c.b16 %v3247, %v3246
      %v3295 = vpack.c.b16 %v3249, %v3248
      %v3296 = vpack.c.b16 %v3251, %v3250
      %v3297 = vpack.c.b16 %v3253, %v3252
      %v3298 = vpack.c.b16 %v3255, %v3254
      %v3299 = vpack.c.b16 %v3257, %v3256
      %v3300 = vpack.c.b16 %v3259, %v3258
      %v3301 = vpack.c.b16 %v3261, %v3260
      %v3302 = vpack.c.b16 %v3263, %v3262
      %v3303 = vpack.c.b16 %v3265, %v3264
      %v3304 = vpack.c.b16 %v3267, %v3266
      %v3305 = vpack.c.b16 %v3269, %v3268
      %v3306 = vpack.c.b16 %v3271, %v3270
      %v3307 = vpack.c.b16 %v3273, %v3272
      %v3308 = vpack.c.b16 %v3275, %v3274
      %v3309 = vpack.c.b16 %v3277, %v3276
      %v3310 = vpack.c.b16 %v3279, %v3278
      %v3311 = vpack.c.b16 %v3281, %v3280
      %v3312 = vpack.c.b16 %v3283, %v3282
      %v3313 = vpack.c.b16 %v3285, %v3284
      %v3314 = vpack.c.b16 %v3287, %v3286
      %v3315 = vpack.c.b16 %v3289, %v3288
      %v3316 = vpack.c.b16 %v3291, %v3290
      %v3317 = vpack.c.b16 %v3293, %v3292
      %3342 = vmatprep.subr.bf16.mxu0 0
      %3343 = vmatpush1.bf16.msra.mxu0 %v3301
      %3344 = vmatprep.subr.bf16.mxu0 0
      %3345 = vmatpush1.bf16.msra.mxu0 %v3300
      %3346 = vmatprep.subr.bf16.mxu0 0
      %3347 = vmatpush1.bf16.msra.mxu0 %v3299
      %3348 = vmatprep.subr.bf16.mxu0 0
      %3349 = vmatpush1.bf16.msra.mxu0 %v3298
      %3350 = vmatprep.subr.bf16.mxu0 0
      %3351 = vmatpush1.bf16.msra.mxu0 %v3297
      %3352 = vmatprep.subr.bf16.mxu0 0
      %3353 = vmatpush1.bf16.msra.mxu0 %v3296
      %3354 = vmatprep.subr.bf16.mxu0 0
      %3355 = vmatpush1.bf16.msra.mxu0 %v3295
      %3356 = vmatprep.subr.bf16.mxu0 0
      %3357 = vmatpush1.bf16.msra.mxu0 %v3294
      %3358 = vmatprep.subr.bf16.mxu0 0
      %3359 = vmatpush2.bf16.msra.mxu0 %v3309
      %3360 = vmatprep.subr.bf16.mxu0 0
      %3361 = vmatpush2.bf16.msra.mxu0 %v3308
      %3362 = vmatprep.subr.bf16.mxu0 0
      %3363 = vmatpush2.bf16.msra.mxu0 %v3307
      %3364 = vmatprep.subr.bf16.mxu0 0
      %3365 = vmatpush2.bf16.msra.mxu0 %v3306
      %3366 = vmatprep.subr.bf16.mxu0 0
      %3367 = vmatpush2.bf16.msra.mxu0 %v3305
      %3368 = vmatprep.subr.bf16.mxu0 0
      %3369 = vmatpush2.bf16.msra.mxu0 %v3304
      %3370 = vmatprep.subr.bf16.mxu0 0
      %3371 = vmatpush2.bf16.msra.mxu0 %v3303
      %3372 = vmatprep.subr.bf16.mxu0 0
      %3373 = vmatpush2.bf16.msra.mxu0 %v3302
      %3374 = vmatprep.mubr.bf16.mxu0 %v3103
      %3375 = vmatmul.mubr.bf16.gmra.mxu0 %v3102
      %v3376 = vpop.f32.mrf.mxu0
      %v3377 = vadd.f32 0.0, %v3376
      %v3378 = vpop.f32.mrf.mxu0
      %v3379 = vpop.f32.mrf.mxu0
      %v3380 = vadd.f32 0.0, %v3379
      %v3381 = vpop.f32.mrf.mxu0
      %3382 = vmatprep.mubr.bf16.mxu0 %v3106
      %3383 = vmatmul.mubr.bf16.gmra.mxu0 %v3105
      %v3384 = vpop.f32.mrf.mxu0
      %v3385 = vadd.f32 0.0, %v3384
      %v3386 = vpop.f32.mrf.mxu0
      %v3387 = vpop.f32.mrf.mxu0
      %v3388 = vadd.f32 0.0, %v3387
      %v3389 = vpop.f32.mrf.mxu0
      %3390 = vmatprep.mubr.bf16.mxu0 %v3109
      %3391 = vmatmul.mubr.bf16.gmra.mxu0 %v3108
      %v3392 = vpop.f32.mrf.mxu0
      %v3393 = vadd.f32 0.0, %v3392
      %v3394 = vpop.f32.mrf.mxu0
      %v3395 = vpop.f32.mrf.mxu0
      %v3396 = vadd.f32 0.0, %v3395
      %v3397 = vpop.f32.mrf.mxu0
      %3398 = vmatprep.mubr.bf16.mxu0 %v3112
      %3399 = vmatmul.mubr.bf16.gmra.mxu0 %v3111
      %v3400 = vpop.f32.mrf.mxu0
      %v3401 = vadd.f32 0.0, %v3400
      %v3402 = vpop.f32.mrf.mxu0
      %v3403 = vpop.f32.mrf.mxu0
      %v3404 = vadd.f32 0.0, %v3403
      %v3405 = vpop.f32.mrf.mxu0
      %3406 = vmatprep.mubr.bf16.mxu0 %v3115
      %3407 = vmatmul.mubr.bf16.gmra.mxu0 %v3114
      %v3408 = vpop.f32.mrf.mxu0
      %v3409 = vadd.f32 0.0, %v3408
      %v3410 = vpop.f32.mrf.mxu0
      %v3411 = vpop.f32.mrf.mxu0
      %v3412 = vadd.f32 0.0, %v3411
      %v3413 = vpop.f32.mrf.mxu0
      %3414 = vmatprep.mubr.bf16.mxu0 %v3118
      %3415 = vmatmul.mubr.bf16.gmra.mxu0 %v3117
      %v3416 = vpop.f32.mrf.mxu0
      %v3417 = vadd.f32 0.0, %v3416
      %v3418 = vpop.f32.mrf.mxu0
      %v3419 = vpop.f32.mrf.mxu0
      %v3420 = vadd.f32 0.0, %v3419
      %v3421 = vpop.f32.mrf.mxu0
      %3422 = vmatprep.mubr.bf16.mxu0 %v3121
      %3423 = vmatmul.mubr.bf16.gmra.mxu0 %v3120
      %v3424 = vpop.f32.mrf.mxu0
      %v3425 = vadd.f32 0.0, %v3424
      %v3426 = vpop.f32.mrf.mxu0
      %v3427 = vpop.f32.mrf.mxu0
      %v3428 = vadd.f32 0.0, %v3427
      %v3429 = vpop.f32.mrf.mxu0
      %3430 = vmatprep.mubr.bf16.mxu0 %v3124
      %3431 = vmatmul.mubr.bf16.gmra.mxu0 %v3123
      %v3432 = vpop.f32.mrf.mxu0
      %v3433 = vadd.f32 0.0, %v3432
      %v3434 = vpop.f32.mrf.mxu0
      %v3435 = vpop.f32.mrf.mxu0
      %v3436 = vadd.f32 0.0, %v3435
      %v3437 = vpop.f32.mrf.mxu0
      %3438 = vmatprep.mubr.bf16.mxu0 %v3127
      %3439 = vmatmul.mubr.bf16.gmra.mxu0 %v3126
      %v3440 = vpop.f32.mrf.mxu0
      %v3441 = vadd.f32 0.0, %v3440
      %v3442 = vpop.f32.mrf.mxu0
      %v3443 = vpop.f32.mrf.mxu0
      %v3444 = vadd.f32 0.0, %v3443
      %v3445 = vpop.f32.mrf.mxu0
      %3446 = vmatprep.mubr.bf16.mxu0 %v3130
      %3447 = vmatmul.mubr.bf16.gmra.mxu0 %v3129
      %v3448 = vpop.f32.mrf.mxu0
      %v3449 = vadd.f32 0.0, %v3448
      %v3450 = vpop.f32.mrf.mxu0
      %v3451 = vpop.f32.mrf.mxu0
      %v3452 = vadd.f32 0.0, %v3451
      %v3453 = vpop.f32.mrf.mxu0
      %3454 = vmatprep.mubr.bf16.mxu0 %v3133
      %3455 = vmatmul.mubr.bf16.gmra.mxu0 %v3132
      %v3456 = vpop.f32.mrf.mxu0
      %v3457 = vadd.f32 0.0, %v3456
      %v3458 = vpop.f32.mrf.mxu0
      %v3459 = vpop.f32.mrf.mxu0
      %v3460 = vadd.f32 0.0, %v3459
      %v3461 = vpop.f32.mrf.mxu0
      %3462 = vmatprep.mubr.bf16.mxu0 %v3136
      %3463 = vmatmul.mubr.bf16.gmra.mxu0 %v3135
      %v3464 = vpop.f32.mrf.mxu0
      %v3465 = vadd.f32 0.0, %v3464
      %v3466 = vpop.f32.mrf.mxu0
      %v3467 = vpop.f32.mrf.mxu0
      %v3468 = vadd.f32 0.0, %v3467
      %v3469 = vpop.f32.mrf.mxu0
      %3470 = vmatprep.mubr.bf16.mxu0 %v3139
      %3471 = vmatmul.mubr.bf16.gmra.mxu0 %v3138
      %v3472 = vpop.f32.mrf.mxu0
      %v3473 = vadd.f32 0.0, %v3472
      %v3474 = vpop.f32.mrf.mxu0
      %v3475 = vpop.f32.mrf.mxu0
      %v3476 = vadd.f32 0.0, %v3475
      %v3477 = vpop.f32.mrf.mxu0
      %3478 = vmatprep.mubr.bf16.mxu0 %v3142
      %3479 = vmatmul.mubr.bf16.gmra.mxu0 %v3141
      %v3480 = vpop.f32.mrf.mxu0
      %v3481 = vadd.f32 0.0, %v3480
      %v3482 = vpop.f32.mrf.mxu0
      %v3483 = vpop.f32.mrf.mxu0
      %v3484 = vadd.f32 0.0, %v3483
      %v3485 = vpop.f32.mrf.mxu0
      %3486 = vmatprep.mubr.bf16.mxu0 %v3145
      %3487 = vmatmul.mubr.bf16.gmra.mxu0 %v3144
      %v3488 = vpop.f32.mrf.mxu0
      %v3489 = vadd.f32 0.0, %v3488
      %v3490 = vpop.f32.mrf.mxu0
      %v3491 = vpop.f32.mrf.mxu0
      %v3492 = vadd.f32 0.0, %v3491
      %v3493 = vpop.f32.mrf.mxu0
      %3494 = vmatprep.mubr.bf16.mxu0 %v3148
      %3495 = vmatmul.mubr.bf16.gmra.mxu0 %v3147
      %v3496 = vpop.f32.mrf.mxu0
      %v3497 = vadd.f32 0.0, %v3496
      %v3498 = vpop.f32.mrf.mxu0
      %v3499 = vpop.f32.mrf.mxu0
      %v3500 = vadd.f32 0.0, %v3499
      %v3501 = vpop.f32.mrf.mxu0
      %3502 = vdwg.mxu0
      %3503 = vmatprep.subr.bf16.mxu0 0
      %3504 = vmatpush1.bf16.msra.mxu0 %v3317
      %3505 = vmatprep.subr.bf16.mxu0 0
      %3506 = vmatpush1.bf16.msra.mxu0 %v3316
      %3507 = vmatprep.subr.bf16.mxu0 0
      %3508 = vmatpush1.bf16.msra.mxu0 %v3315
      %3509 = vmatprep.subr.bf16.mxu0 0
      %3510 = vmatpush1.bf16.msra.mxu0 %v3314
      %3511 = vmatprep.subr.bf16.mxu0 0
      %3512 = vmatpush1.bf16.msra.mxu0 %v3313
      %3513 = vmatprep.subr.bf16.mxu0 0
      %3514 = vmatpush1.bf16.msra.mxu0 %v3312
      %3515 = vmatprep.subr.bf16.mxu0 0
      %3516 = vmatpush1.bf16.msra.mxu0 %v3311
      %3517 = vmatprep.subr.bf16.mxu0 0
      %3518 = vmatpush1.bf16.msra.mxu0 %v3310
      %3519 = vmatprep.subr.bf16.mxu0 0
      %3520 = vmatpush2.bf16.msra.mxu0 0
      %3521 = vmatprep.subr.bf16.mxu0 0
      %3522 = vmatpush2.bf16.msra.mxu0 0
      %3523 = vmatprep.subr.bf16.mxu0 0
      %3524 = vmatpush2.bf16.msra.mxu0 0
      %3525 = vmatprep.subr.bf16.mxu0 0
      %3526 = vmatpush2.bf16.msra.mxu0 0
      %3527 = vmatprep.subr.bf16.mxu0 0
      %3528 = vmatpush2.bf16.msra.mxu0 0
      %3529 = vmatprep.subr.bf16.mxu0 0
      %3530 = vmatpush2.bf16.msra.mxu0 0
      %3531 = vmatprep.subr.bf16.mxu0 0
      %3532 = vmatpush2.bf16.msra.mxu0 0
      %3533 = vmatprep.subr.bf16.mxu0 0
      %3534 = vmatpush2.bf16.msra.mxu0 0
      %3535 = vmatprep.mubr.bf16.mxu0 0
      %3536 = vmatmul.mubr.bf16.gmra.mxu0 %v3104
      %v3537 = vpop.f32.mrf.mxu0
      %v3538 = vadd.f32 %v3377, %v3537
      %v3539 = vpop.f32.mrf.mxu0
      %v3540 = vpop.f32.mrf.mxu0
      %v3541 = vadd.f32 %v3380, %v3540
      %v3542 = vpop.f32.mrf.mxu0
      %3543 = vmatprep.mubr.bf16.mxu0 0
      %3544 = vmatmul.mubr.bf16.gmra.mxu0 %v3107
      %v3545 = vpop.f32.mrf.mxu0
      %v3546 = vadd.f32 %v3385, %v3545
      %v3547 = vpop.f32.mrf.mxu0
      %v3548 = vpop.f32.mrf.mxu0
      %v3549 = vadd.f32 %v3388, %v3548
      %v3550 = vpop.f32.mrf.mxu0
      %3551 = vmatprep.mubr.bf16.mxu0 0
      %3552 = vmatmul.mubr.bf16.gmra.mxu0 %v3110
      %v3553 = vpop.f32.mrf.mxu0
      %v3554 = vadd.f32 %v3393, %v3553
      %v3555 = vpop.f32.mrf.mxu0
      %v3556 = vpop.f32.mrf.mxu0
      %v3557 = vadd.f32 %v3396, %v3556
      %v3558 = vpop.f32.mrf.mxu0
      %3559 = vmatprep.mubr.bf16.mxu0 0
      %3560 = vmatmul.mubr.bf16.gmra.mxu0 %v3113
      %v3561 = vpop.f32.mrf.mxu0
      %v3562 = vadd.f32 %v3401, %v3561
      %v3563 = vpop.f32.mrf.mxu0
      %v3564 = vpop.f32.mrf.mxu0
      %v3565 = vadd.f32 %v3404, %v3564
      %v3566 = vpop.f32.mrf.mxu0
      %3567 = vmatprep.mubr.bf16.mxu0 0
      %3568 = vmatmul.mubr.bf16.gmra.mxu0 %v3116
      %v3569 = vpop.f32.mrf.mxu0
      %v3570 = vadd.f32 %v3409, %v3569
      %v3571 = vpop.f32.mrf.mxu0
      %v3572 = vpop.f32.mrf.mxu0
      %v3573 = vadd.f32 %v3412, %v3572
      %v3574 = vpop.f32.mrf.mxu0
      %3575 = vmatprep.mubr.bf16.mxu0 0
      %3576 = vmatmul.mubr.bf16.gmra.mxu0 %v3119
      %v3577 = vpop.f32.mrf.mxu0
      %v3578 = vadd.f32 %v3417, %v3577
      %v3579 = vpop.f32.mrf.mxu0
      %v3580 = vpop.f32.mrf.mxu0
      %v3581 = vadd.f32 %v3420, %v3580
      %v3582 = vpop.f32.mrf.mxu0
      %3583 = vmatprep.mubr.bf16.mxu0 0
      %3584 = vmatmul.mubr.bf16.gmra.mxu0 %v3122
      %v3585 = vpop.f32.mrf.mxu0
      %v3586 = vadd.f32 %v3425, %v3585
      %v3587 = vpop.f32.mrf.mxu0
      %v3588 = vpop.f32.mrf.mxu0
      %v3589 = vadd.f32 %v3428, %v3588
      %v3590 = vpop.f32.mrf.mxu0
      %3591 = vmatprep.mubr.bf16.mxu0 0
      %3592 = vmatmul.mubr.bf16.gmra.mxu0 %v3125
      %v3593 = vpop.f32.mrf.mxu0
      %v3594 = vadd.f32 %v3433, %v3593
      %v3595 = vpop.f32.mrf.mxu0
      %v3596 = vpop.f32.mrf.mxu0
      %v3597 = vadd.f32 %v3436, %v3596
      %v3598 = vpop.f32.mrf.mxu0
      %3599 = vmatprep.mubr.bf16.mxu0 0
      %3600 = vmatmul.mubr.bf16.gmra.mxu0 %v3128
      %v3601 = vpop.f32.mrf.mxu0
      %v3602 = vadd.f32 %v3441, %v3601
      %v3603 = vpop.f32.mrf.mxu0
      %v3604 = vpop.f32.mrf.mxu0
      %v3605 = vadd.f32 %v3444, %v3604
      %v3606 = vpop.f32.mrf.mxu0
      %3607 = vmatprep.mubr.bf16.mxu0 0
      %3608 = vmatmul.mubr.bf16.gmra.mxu0 %v3131
      %v3609 = vpop.f32.mrf.mxu0
      %v3610 = vadd.f32 %v3449, %v3609
      %v3611 = vpop.f32.mrf.mxu0
      %v3612 = vpop.f32.mrf.mxu0
      %v3613 = vadd.f32 %v3452, %v3612
      %v3614 = vpop.f32.mrf.mxu0
      %3615 = vmatprep.mubr.bf16.mxu0 0
      %3616 = vmatmul.mubr.bf16.gmra.mxu0 %v3134
      %v3617 = vpop.f32.mrf.mxu0
      %v3618 = vadd.f32 %v3457, %v3617
      %v3619 = vpop.f32.mrf.mxu0
      %v3620 = vpop.f32.mrf.mxu0
      %v3621 = vadd.f32 %v3460, %v3620
      %v3622 = vpop.f32.mrf.mxu0
      %3623 = vmatprep.mubr.bf16.mxu0 0
      %3624 = vmatmul.mubr.bf16.gmra.mxu0 %v3137
      %v3625 = vpop.f32.mrf.mxu0
      %v3626 = vadd.f32 %v3465, %v3625
      %v3627 = vpop.f32.mrf.mxu0
      %v3628 = vpop.f32.mrf.mxu0
      %v3629 = vadd.f32 %v3468, %v3628
      %v3630 = vpop.f32.mrf.mxu0
      %3631 = vmatprep.mubr.bf16.mxu0 0
      %3632 = vmatmul.mubr.bf16.gmra.mxu0 %v3140
      %v3633 = vpop.f32.mrf.mxu0
      %v3634 = vadd.f32 %v3473, %v3633
      %v3635 = vpop.f32.mrf.mxu0
      %v3636 = vpop.f32.mrf.mxu0
      %v3637 = vadd.f32 %v3476, %v3636
      %v3638 = vpop.f32.mrf.mxu0
      %3639 = vmatprep.mubr.bf16.mxu0 0
      %3640 = vmatmul.mubr.bf16.gmra.mxu0 %v3143
      %v3641 = vpop.f32.mrf.mxu0
      %v3642 = vadd.f32 %v3481, %v3641
      %v3643 = vpop.f32.mrf.mxu0
      %v3644 = vpop.f32.mrf.mxu0
      %v3645 = vadd.f32 %v3484, %v3644
      %v3646 = vpop.f32.mrf.mxu0
      %3647 = vmatprep.mubr.bf16.mxu0 0
      %3648 = vmatmul.mubr.bf16.gmra.mxu0 %v3146
      %v3649 = vpop.f32.mrf.mxu0
      %v3650 = vadd.f32 %v3489, %v3649
      %v3651 = vpop.f32.mrf.mxu0
      %v3652 = vpop.f32.mrf.mxu0
      %v3653 = vadd.f32 %v3492, %v3652
      %v3654 = vpop.f32.mrf.mxu0
      %3655 = vmatprep.mubr.bf16.mxu0 0
      %3656 = vmatmul.mubr.bf16.gmra.mxu0 %v3149
      %v3657 = vpop.f32.mrf.mxu0
      %v3658 = vadd.f32 %v3497, %v3657
      %v3659 = vpop.f32.mrf.mxu0
      %v3660 = vpop.f32.mrf.mxu0
      %v3661 = vadd.f32 %v3500, %v3660
      %v3662 = vpop.f32.mrf.mxu0
      %3663 = vdwg.mxu0
      %v3664 = vadd.f32 %v2702, %v3538
      %v3665 = vadd.f32 %v2705, %v3541
      %v3666 = vadd.f32 %v2710, %v3546
      %v3667 = vadd.f32 %v2713, %v3549
      %v3668 = vadd.f32 %v2718, %v3554
      %v3669 = vadd.f32 %v2721, %v3557
      %v3670 = vadd.f32 %v2726, %v3562
      %v3671 = vadd.f32 %v2729, %v3565
      %v3672 = vadd.f32 %v2734, %v3570
      %v3673 = vadd.f32 %v2737, %v3573
      %v3674 = vadd.f32 %v2742, %v3578
      %v3675 = vadd.f32 %v2745, %v3581
      %v3676 = vadd.f32 %v2750, %v3586
      %v3677 = vadd.f32 %v2753, %v3589
      %v3678 = vadd.f32 %v2758, %v3594
      %v3679 = vadd.f32 %v2761, %v3597
      %v3680 = vadd.f32 %v2766, %v3602
      %v3681 = vadd.f32 %v2769, %v3605
      %v3682 = vadd.f32 %v2774, %v3610
      %v3683 = vadd.f32 %v2777, %v3613
      %v3684 = vadd.f32 %v2782, %v3618
      %v3685 = vadd.f32 %v2785, %v3621
      %v3686 = vadd.f32 %v2790, %v3626
      %v3687 = vadd.f32 %v2793, %v3629
      %v3688 = vadd.f32 %v2798, %v3634
      %v3689 = vadd.f32 %v2801, %v3637
      %v3690 = vadd.f32 %v2806, %v3642
      %v3691 = vadd.f32 %v2809, %v3645
      %v3692 = vadd.f32 %v2814, %v3650
      %v3693 = vadd.f32 %v2817, %v3653
      %v3694 = vadd.f32 %v2822, %v3658
      %v3695 = vadd.f32 %v2825, %v3661
      %p3696 = scmp.eq.s32.totalorder %s19, 0
      %p3697 = scmp.eq.s32.totalorder %s20, 0
      %p3698 = pnand %p3696, %p3697
      %p3699 = pneg %p3698
      // Predicated region
      $region37: #{double_conv_block.3} parent=35 // pred_check
        _
      $region38: #{double_conv_block.3} parent=35 // pred_check_branch
        %3701 = sbr.rel (%p3698) target = $region40
      $region39: #{double_conv_block.3} parent=35 // pred_region
        %3702 = vst [vmem:[#allocation3] sm:$0x1] 0.0
        %3703 = vst [vmem:[#allocation4] sm:$0x1] 0.0
      $region40: #{double_conv_block.3} parent=35 // pred_fallthru
        _
      // Predicated region
      $region41: #{double_conv_block.3} parent=35 // pred_check
        %p3704 = pneg %p3696
      $region42: #{double_conv_block.3} parent=35 // pred_check_branch
        %3706 = sbr.rel (%p3704) target = $region44
      $region43: #{double_conv_block.3} parent=35 // pred_region
        %v3707 = vld [vmem:[#allocation3] sm:$0x1]
        %v3708 = vadd.f32 %v3664, %v3665
        %v3709 = vadd.f32 %v3708, %v3666
        %v3710 = vadd.f32 %v3709, %v3667
        %v3711 = vadd.f32 %v3710, %v3668
        %v3712 = vadd.f32 %v3711, %v3669
        %v3713 = vadd.f32 %v3712, %v3670
        %v3714 = vadd.f32 %v3713, %v3671
        %v3715 = vadd.f32 %v3714, %v3672
        %v3716 = vadd.f32 %v3715, %v3673
        %v3717 = vadd.f32 %v3716, %v3674
        %v3718 = vadd.f32 %v3717, %v3675
        %v3719 = vadd.f32 %v3718, %v3676
        %v3720 = vadd.f32 %v3719, %v3677
        %v3721 = vadd.f32 %v3720, %v3678
        %v3722 = vadd.f32 %v3721, %v3679
        %v3723 = vadd.f32 %v3722, %v3680
        %v3724 = vadd.f32 %v3723, %v3681
        %v3725 = vadd.f32 %v3724, %v3682
        %v3726 = vadd.f32 %v3725, %v3683
        %v3727 = vadd.f32 %v3726, %v3684
        %v3728 = vadd.f32 %v3727, %v3685
        %v3729 = vadd.f32 %v3728, %v3686
        %v3730 = vadd.f32 %v3729, %v3687
        %v3731 = vadd.f32 %v3730, %v3688
        %v3732 = vadd.f32 %v3731, %v3689
        %v3733 = vadd.f32 %v3732, %v3690
        %v3734 = vadd.f32 %v3733, %v3691
        %v3735 = vadd.f32 %v3734, %v3692
        %v3736 = vadd.f32 %v3735, %v3693
        %v3737 = vadd.f32 %v3736, %v3694
        %v3738 = vadd.f32 %v3737, %v3695
        %v3739 = vrot.slane %v3738, 4
        %v3740 = vadd.f32 %v3738, %v3739
        %v3741 = vrot.slane %v3740, 2
        %v3742 = vadd.f32 %v3740, %v3741
        %v3743 = vrot.slane %v3742, 1
        %v3744 = vadd.f32 %v3742, %v3743
        %v3745 = vadd.f32 %v3707, %v3744
        %3746 = vst [vmem:[#allocation3] sm:$0x1] %v3745
        %v3747 = vld [vmem:[#allocation4] sm:$0x1]
        %v3748 = vmul.f32 %v3664, %v3664
        %v3749 = vmul.f32 %v3665, %v3665
        %v3750 = vmul.f32 %v3666, %v3666
        %v3751 = vmul.f32 %v3667, %v3667
        %v3752 = vmul.f32 %v3668, %v3668
        %v3753 = vmul.f32 %v3669, %v3669
        %v3754 = vmul.f32 %v3670, %v3670
        %v3755 = vmul.f32 %v3671, %v3671
        %v3756 = vmul.f32 %v3672, %v3672
        %v3757 = vmul.f32 %v3673, %v3673
        %v3758 = vmul.f32 %v3674, %v3674
        %v3759 = vmul.f32 %v3675, %v3675
        %v3760 = vmul.f32 %v3676, %v3676
        %v3761 = vmul.f32 %v3677, %v3677
        %v3762 = vmul.f32 %v3678, %v3678
        %v3763 = vmul.f32 %v3679, %v3679
        %v3764 = vmul.f32 %v3680, %v3680
        %v3765 = vmul.f32 %v3681, %v3681
        %v3766 = vmul.f32 %v3682, %v3682
        %v3767 = vmul.f32 %v3683, %v3683
        %v3768 = vmul.f32 %v3684, %v3684
        %v3769 = vmul.f32 %v3685, %v3685
        %v3770 = vmul.f32 %v3686, %v3686
        %v3771 = vmul.f32 %v3687, %v3687
        %v3772 = vmul.f32 %v3688, %v3688
        %v3773 = vmul.f32 %v3689, %v3689
        %v3774 = vmul.f32 %v3690, %v3690
        %v3775 = vmul.f32 %v3691, %v3691
        %v3776 = vmul.f32 %v3692, %v3692
        %v3777 = vmul.f32 %v3693, %v3693
        %v3778 = vmul.f32 %v3694, %v3694
        %v3779 = vmul.f32 %v3695, %v3695
        %v3780 = vadd.f32 %v3748, %v3749
        %v3781 = vadd.f32 %v3780, %v3750
        %v3782 = vadd.f32 %v3781, %v3751
        %v3783 = vadd.f32 %v3782, %v3752
        %v3784 = vadd.f32 %v3783, %v3753
        %v3785 = vadd.f32 %v3784, %v3754
        %v3786 = vadd.f32 %v3785, %v3755
        %v3787 = vadd.f32 %v3786, %v3756
        %v3788 = vadd.f32 %v3787, %v3757
        %v3789 = vadd.f32 %v3788, %v3758
        %v3790 = vadd.f32 %v3789, %v3759
        %v3791 = vadd.f32 %v3790, %v3760
        %v3792 = vadd.f32 %v3791, %v3761
        %v3793 = vadd.f32 %v3792, %v3762
        %v3794 = vadd.f32 %v3793, %v3763
        %v3795 = vadd.f32 %v3794, %v3764
        %v3796 = vadd.f32 %v3795, %v3765
        %v3797 = vadd.f32 %v3796, %v3766
        %v3798 = vadd.f32 %v3797, %v3767
        %v3799 = vadd.f32 %v3798, %v3768
        %v3800 = vadd.f32 %v3799, %v3769
        %v3801 = vadd.f32 %v3800, %v3770
        %v3802 = vadd.f32 %v3801, %v3771
        %v3803 = vadd.f32 %v3802, %v3772
        %v3804 = vadd.f32 %v3803, %v3773
        %v3805 = vadd.f32 %v3804, %v3774
        %v3806 = vadd.f32 %v3805, %v3775
        %v3807 = vadd.f32 %v3806, %v3776
        %v3808 = vadd.f32 %v3807, %v3777
        %v3809 = vadd.f32 %v3808, %v3778
        %v3810 = vadd.f32 %v3809, %v3779
        %v3811 = vrot.slane %v3810, 4
        %v3812 = vadd.f32 %v3810, %v3811
        %v3813 = vrot.slane %v3812, 2
        %v3814 = vadd.f32 %v3812, %v3813
        %v3815 = vrot.slane %v3814, 1
        %v3816 = vadd.f32 %v3814, %v3815
        %v3817 = vadd.f32 %v3747, %v3816
        %3818 = vst [vmem:[#allocation4] sm:$0x1] %v3817
      $region44: #{double_conv_block.3} parent=35 // pred_fallthru
        _
      %p3819 = scmp.eq.s32.totalorder %s19, 1
      %p3820 = pnand %p3819, %p3697
      %p3821 = pneg %p3820
      // Predicated region
      $region45: #{double_conv_block.3} parent=35 // pred_check
        _
      $region46: #{double_conv_block.3} parent=35 // pred_check_branch
        %3823 = sbr.rel (%p3820) target = $region48
      $region47: #{double_conv_block.3} parent=35 // pred_region
        %v3824 = vld [vmem:[#allocation3] sm:$0x1]
        %v3825 = vmul.f32 %v3824, 0.001953125
        %v3826 = vld [vmem:[#allocation4] sm:$0x1]
        %v3827 = vmul.f32 %v3826, 0.001953125
        %v3828 = vmul.f32 %v3825, %v3825
        %v3829 = vsub.f32 %v3827, %v3828
        %v3830 = vadd.f32 %v3829, 1e-05
        %v3831 = vrsqrt.pop %v3830
        %v3832 = vld [vmem:[%s2] sm:$0x1]
        %v3833 = vmul.f32 %v3832, %v3831
        %3834 = vst [vmem:[#allocation5] sm:$0x1] %v3833
        %v3835 = vld [vmem:[%s3] sm:$0x1]
        %v3836 = vmul.f32 %v3825, %v3833
        %v3837 = vsub.f32 %v3835, %v3836
        %3838 = vst [vmem:[#allocation6] sm:$0x1] %v3837
      $region48: #{double_conv_block.3} parent=35 // pred_fallthru
        _
      // Predicated region
      $region49: #{double_conv_block.3} parent=35 // pred_check
        %p3839 = pneg %p3819
      $region50: #{double_conv_block.3} parent=35 // pred_check_branch
        %3841 = sbr.rel (%p3839) target = $region52
      $region51: #{double_conv_block.3} parent=35 // pred_region
        %v3842 = vld [vmem:[#allocation5] sm:$0x1]
        %v3844 = vlaneseq
        %v3845 = vshrl.u32 %v3844, 7
        %v3846 = vsub.s32 0, %v3845
        %v3847 = vrot.slane %v3842, %v3846
        %v3849 = vmul.f32 %v3664, %v3847
        %v3850 = vmul.f32 %v3665, %v3847
        %v3851 = vmul.f32 %v3666, %v3847
        %v3852 = vmul.f32 %v3667, %v3847
        %v3853 = vmul.f32 %v3668, %v3847
        %v3854 = vmul.f32 %v3669, %v3847
        %v3855 = vmul.f32 %v3670, %v3847
        %v3856 = vmul.f32 %v3671, %v3847
        %v3857 = vmul.f32 %v3672, %v3847
        %v3858 = vmul.f32 %v3673, %v3847
        %v3859 = vmul.f32 %v3674, %v3847
        %v3860 = vmul.f32 %v3675, %v3847
        %v3861 = vmul.f32 %v3676, %v3847
        %v3862 = vmul.f32 %v3677, %v3847
        %v3863 = vmul.f32 %v3678, %v3847
        %v3864 = vmul.f32 %v3679, %v3847
        %v3865 = vmul.f32 %v3680, %v3847
        %v3866 = vmul.f32 %v3681, %v3847
        %v3867 = vmul.f32 %v3682, %v3847
        %v3868 = vmul.f32 %v3683, %v3847
        %v3869 = vmul.f32 %v3684, %v3847
        %v3870 = vmul.f32 %v3685, %v3847
        %v3871 = vmul.f32 %v3686, %v3847
        %v3872 = vmul.f32 %v3687, %v3847
        %v3873 = vmul.f32 %v3688, %v3847
        %v3874 = vmul.f32 %v3689, %v3847
        %v3875 = vmul.f32 %v3690, %v3847
        %v3876 = vmul.f32 %v3691, %v3847
        %v3877 = vmul.f32 %v3692, %v3847
        %v3878 = vmul.f32 %v3693, %v3847
        %v3879 = vmul.f32 %v3694, %v3847
        %v3880 = vmul.f32 %v3695, %v3847
        %v3881 = vld [vmem:[#allocation6] sm:$0x1]
        %v3883 = vlaneseq
        %v3884 = vshrl.u32 %v3883, 7
        %v3885 = vsub.s32 0, %v3884
        %v3886 = vrot.slane %v3881, %v3885
        %v3888 = vadd.f32 %v3849, %v3886
        %v3889 = vadd.f32 %v3850, %v3886
        %v3890 = vadd.f32 %v3851, %v3886
        %v3891 = vadd.f32 %v3852, %v3886
        %v3892 = vadd.f32 %v3853, %v3886
        %v3893 = vadd.f32 %v3854, %v3886
        %v3894 = vadd.f32 %v3855, %v3886
        %v3895 = vadd.f32 %v3856, %v3886
        %v3896 = vadd.f32 %v3857, %v3886
        %v3897 = vadd.f32 %v3858, %v3886
        %v3898 = vadd.f32 %v3859, %v3886
        %v3899 = vadd.f32 %v3860, %v3886
        %v3900 = vadd.f32 %v3861, %v3886
        %v3901 = vadd.f32 %v3862, %v3886
        %v3902 = vadd.f32 %v3863, %v3886
        %v3903 = vadd.f32 %v3864, %v3886
        %v3904 = vadd.f32 %v3865, %v3886
        %v3905 = vadd.f32 %v3866, %v3886
        %v3906 = vadd.f32 %v3867, %v3886
        %v3907 = vadd.f32 %v3868, %v3886
        %v3908 = vadd.f32 %v3869, %v3886
        %v3909 = vadd.f32 %v3870, %v3886
        %v3910 = vadd.f32 %v3871, %v3886
        %v3911 = vadd.f32 %v3872, %v3886
        %v3912 = vadd.f32 %v3873, %v3886
        %v3913 = vadd.f32 %v3874, %v3886
        %v3914 = vadd.f32 %v3875, %v3886
        %v3915 = vadd.f32 %v3876, %v3886
        %v3916 = vadd.f32 %v3877, %v3886
        %v3917 = vadd.f32 %v3878, %v3886
        %v3918 = vadd.f32 %v3879, %v3886
        %v3919 = vadd.f32 %v3880, %v3886
        %v3920 = vmax.f32 %v3888, 0.0
        %v3921 = vmax.f32 %v3889, 0.0
        %v3922 = vmax.f32 %v3890, 0.0
        %v3923 = vmax.f32 %v3891, 0.0
        %v3924 = vmax.f32 %v3892, 0.0
        %v3925 = vmax.f32 %v3893, 0.0
        %v3926 = vmax.f32 %v3894, 0.0
        %v3927 = vmax.f32 %v3895, 0.0
        %v3928 = vmax.f32 %v3896, 0.0
        %v3929 = vmax.f32 %v3897, 0.0
        %v3930 = vmax.f32 %v3898, 0.0
        %v3931 = vmax.f32 %v3899, 0.0
        %v3932 = vmax.f32 %v3900, 0.0
        %v3933 = vmax.f32 %v3901, 0.0
        %v3934 = vmax.f32 %v3902, 0.0
        %v3935 = vmax.f32 %v3903, 0.0
        %v3936 = vmax.f32 %v3904, 0.0
        %v3937 = vmax.f32 %v3905, 0.0
        %v3938 = vmax.f32 %v3906, 0.0
        %v3939 = vmax.f32 %v3907, 0.0
        %v3940 = vmax.f32 %v3908, 0.0
        %v3941 = vmax.f32 %v3909, 0.0
        %v3942 = vmax.f32 %v3910, 0.0
        %v3943 = vmax.f32 %v3911, 0.0
        %v3944 = vmax.f32 %v3912, 0.0
        %v3945 = vmax.f32 %v3913, 0.0
        %v3946 = vmax.f32 %v3914, 0.0
        %v3947 = vmax.f32 %v3915, 0.0
        %v3948 = vmax.f32 %v3916, 0.0
        %v3949 = vmax.f32 %v3917, 0.0
        %v3950 = vmax.f32 %v3918, 0.0
        %v3951 = vmax.f32 %v3919, 0.0
        %3952 = vst [vmem:[%s213] sm:$0xff] %v3920
        %3953 = vst [vmem:[%s213 + $0x8] sm:$0xff] %v3921
        %3954 = vst [vmem:[%s213 + $0x10] sm:$0xff] %v3922
        %3955 = vst [vmem:[%s213 + $0x18] sm:$0xff] %v3923
        %3956 = vst [vmem:[%s213 + $0x20] sm:$0xff] %v3924
        %3957 = vst [vmem:[%s213 + $0x28] sm:$0xff] %v3925
        %3958 = vst [vmem:[%s213 + $0x30] sm:$0xff] %v3926
        %3959 = vst [vmem:[%s213 + $0x38] sm:$0xff] %v3927
        %3960 = vst [vmem:[%s213 + $0x40] sm:$0xff] %v3928
        %3961 = vst [vmem:[%s213 + $0x48] sm:$0xff] %v3929
        %3962 = vst [vmem:[%s213 + $0x50] sm:$0xff] %v3930
        %3963 = vst [vmem:[%s213 + $0x58] sm:$0xff] %v3931
        %3964 = vst [vmem:[%s213 + $0x60] sm:$0xff] %v3932
        %3965 = vst [vmem:[%s213 + $0x68] sm:$0xff] %v3933
        %3966 = vst [vmem:[%s213 + $0x70] sm:$0xff] %v3934
        %3967 = vst [vmem:[%s213 + $0x78] sm:$0xff] %v3935
        %3968 = vst [vmem:[%s213 + $0x80] sm:$0xff] %v3936
        %3969 = vst [vmem:[%s213 + $0x88] sm:$0xff] %v3937
        %3970 = vst [vmem:[%s213 + $0x90] sm:$0xff] %v3938
        %3971 = vst [vmem:[%s213 + $0x98] sm:$0xff] %v3939
        %3972 = vst [vmem:[%s213 + $0xa0] sm:$0xff] %v3940
        %3973 = vst [vmem:[%s213 + $0xa8] sm:$0xff] %v3941
        %3974 = vst [vmem:[%s213 + $0xb0] sm:$0xff] %v3942
        %3975 = vst [vmem:[%s213 + $0xb8] sm:$0xff] %v3943
        %3976 = vst [vmem:[%s213 + $0xc0] sm:$0xff] %v3944
        %3977 = vst [vmem:[%s213 + $0xc8] sm:$0xff] %v3945
        %3978 = vst [vmem:[%s213 + $0xd0] sm:$0xff] %v3946
        %3979 = vst [vmem:[%s213 + $0xd8] sm:$0xff] %v3947
        %3980 = vst [vmem:[%s213 + $0xe0] sm:$0xff] %v3948
        %3981 = vst [vmem:[%s213 + $0xe8] sm:$0xff] %v3949
        %3982 = vst [vmem:[%s213 + $0xf0] sm:$0xff] %v3950
        %3983 = vst [vmem:[%s213 + $0xf8] sm:$0xff] %v3951
      $region52: #{double_conv_block.3} parent=35 // pred_fallthru
        _
      %s3984 = smul.u32 %s20, %s19
      %p3985 = scmp.lt.s32.totalorder %s3984, 1
      %s3986 = scalar_select %p3985, %s3984, 1
      %s3987 = smul.addr %s3986, 32
      %s3988 = smul.addr %s3987, 8
      %s3989 = scalar_lea.vmem %s4, %s3988
      // Predicated region
      $region53: #{double_conv_block.3} parent=35 // pred_check
        %p3990 = pneg %p136
      $region54: #{double_conv_block.3} parent=35 // pred_check_branch
        %3992 = sbr.rel (%p3990) target = $region56
      $region55: #{double_conv_block.3} parent=35 // pred_region
        %s3993 = smul.u32 %s20, %s19
      $region56: #{double_conv_block.3} parent=35 // pred_fallthru
        _
    $region36: #{double_conv_block.3} parent=5 // pred_fallthru
      _
    %p3994 = scmp.le.s32.totalorder 2, %s10
    // Predicated region
    $region57: #{double_conv_block.3} parent=5 // pred_check
      %p3995 = pneg %p3994
    $region58: #{double_conv_block.3} parent=5 // pred_check_branch
      %3997 = sbr.rel (%p3995) target = $region60
    $region59: #{double_conv_block.3} parent=5 // pred_region
      %s3998 = ssub.s32 %s10, 2
      // Predicated region
      $region61: #{double_conv_block.3} parent=59 // pred_check
        %p3999 = pneg %p142
      $region62: #{double_conv_block.3} parent=59 // pred_check_branch
        %4001 = sbr.rel (%p3999) target = $region64
      $region63: #{double_conv_block.3} parent=59 // pred_region
        %s4002 = smul.u32 %s22, %s21
        %p4003 = scmp.lt.s32.totalorder %s4002, 1
        %s4004 = scalar_select %p4003, %s4002, 1
        %s4005 = smul.addr %s4004, 32
        %s4006 = smul.addr %s4005, 8
        %s4007 = scalar_lea.vmem %s4, %s4006
      $region64: #{double_conv_block.3} parent=59 // pred_fallthru
        _
    $region60: #{double_conv_block.3} parent=5 // pred_fallthru
      _
  $region6: #{double_conv_block.3} parent=0 // loop_footer
    %s14 = sadd.s32 1, %s10
  $region7: #{double_conv_block.3} parent=0 // loop_footer_branch
    %9 = sbr.rel target = $region3
  $region8: #{double_conv_block.3} parent=0 // loop_exit
    _

// kernel: double_conv_block.2
$region0: #{double_conv_block.2}
  #allocation0 [shape = 'u32[]', space=smem, size = 0x4, offset = 0x4, fixed_abs, tag = 'smem constant byte address 0x4 - core index']
  #allocation1 [shape = 'u32[144,128]{1,0:T(1,128)}', space=vmem, size = 0x12000, scoped, tag = 'internal scratch']
  #allocation2 [shape = 'bf16[18,16,384]{2,1,0:T(8,128)(2,1)}', space=vmem, size = 0x36000, scoped, tag = 'scratch operand']
  #allocation3 [shape = 'f32[1,128]{1,0:T(1,128)}', space=vmem, size = 0x200, scoped, tag = 'scratch operand']
  #allocation4 [shape = 'f32[1,128]{1,0:T(1,128)}', space=vmem, size = 0x200, scoped, tag = 'scratch operand']
  #allocation5 [shape = 'f32[1,128]{1,0:T(1,128)}', space=vmem, size = 0x200, scoped, tag = 'scratch operand']
  #allocation6 [shape = 'f32[1,128]{1,0:T(1,128)}', space=vmem, size = 0x200, scoped, tag = 'scratch operand']
  %s0 = inlined_call_operand.vmem [shape: bf16[2,18,18,128], index: 0, kind: input, shape index: {}]
  %s1 = inlined_call_operand.vmem [shape: bf16[3,384,128], index: 1, kind: input, shape index: {}]
  %s2 = inlined_call_operand.vmem [shape: f32[1,128], index: 2, kind: input, shape index: {}]
  %s3 = inlined_call_operand.vmem [shape: f32[1,128], index: 3, kind: input, shape index: {}]
  %s4 = inlined_call_operand.vmem [shape: bf16[2,16,16,128], index: 4, kind: output, shape index: {}]
  %s5 = sld [smem:[#allocation0]]
  $region65: #{double_conv_block.2} parent=0
    _
  %s7 = ssub.s32 1, %s5
  %s8 = scalar_select 0, %s7, %s5
  loop: start=0, step=1, limit=6
  $region2: #{double_conv_block.2} parent=0 // loop_pre_header
    _
  $region3: #{double_conv_block.2} parent=0 // loop_header
    %s10 = sphi 0, %s14
    %p11 = scmp.ge.s32.totalorder %s10, 6
    %s17 = sphi 0, %s29
    %s18 = sphi 0, %s25
    %s19 = sphi 0, %s17
    %s20 = sphi 0, %s18
    %s21 = sphi 0, %s19
    %s22 = sphi 0, %s20
    %s32 = sphi 0, %s34
    %s35 = sphi 0, %s32
    %s36 = sphi 0, %s35
    %s52 = sphi 0, %s36
    %s56 = sphi 0, %s56
    %s58 = sphi 0, %s56
    %s59 = sphi 0, %s58
    %s73 = sphi 0, %s59
    %s77 = sphi 0, %s77
    %s79 = sphi 0, %s77
    %s80 = sphi 0, %s79
    %s94 = sphi 0, %s80
    %s98 = sphi 0, %s98
    %s100 = sphi 0, %s98
    %s101 = sphi 0, %s100
    %s115 = sphi 0, %s101
    %s123 = sphi 0, %s125
    %s126 = sphi 0, %s123
    %s127 = sphi 0, %s126
    %s143 = sphi 0, %s127
  $region4: #{double_conv_block.2} parent=0 // loop_header_branch
    %13 = sbr.rel (%p11) target = $region8
  $region5: #{double_conv_block.2} parent=0 // loop_body
    %s15 = ssub.s32 %s10, 1
    %s16 = ssub.s32 %s10, 2
    %s23 = sadd.s32 1, %s18
    %p24 = scmp.ge.s32.totalorder %s23, 2
    %s25 = scalar_select %p24, 0, %s23
    %s26 = sadd.s32 1, %s17
    %s27 = scalar_select %p24, %s26, %s17
    %p28 = scmp.ge.s32.totalorder %s27, 2
    %s29 = scalar_select %p28, 0, %s27
    %s30 = ssub.s32 %s18, %s25
    %p31 = scmp.eq.s32.totalorder %s30, 0
    %s33 = sadd.s32 %s32, 1
    %s34 = scalar_select %p31, %s32, %s33
    %p37 = pneg %p31
    %p38 = scmp.eq.s32.totalorder %s10, 3
    %p39 = por %p37, %p38
    %p40 = scmp.ne.s32.totalorder %s32, %s35
    %p41 = scmp.eq.s32.totalorder %s10, 0
    %p42 = por %p40, %p41
    %p43 = scmp.ne.s32.totalorder %s32, %s35
    %p44 = scmp.eq.s32.totalorder %s15, 3
    %p45 = por %p43, %p44
    %p46 = scmp.ne.s32.totalorder %s35, %s36
    %p47 = scmp.eq.s32.totalorder %s15, 0
    %p48 = por %p46, %p47
    %p49 = scmp.ne.s32.totalorder %s35, %s36
    %p50 = scmp.eq.s32.totalorder %s16, 3
    %p51 = por %p49, %p50
    %p53 = scmp.ne.s32.totalorder %s36, %s52
    %p54 = scmp.eq.s32.totalorder %s16, 0
    %p55 = por %p53, %p54
    %s57 = sadd.s32 %s56, 1
    %p60 = scmp.eq.s32.totalorder %s10, 3
    %p61 = scmp.ne.s32.totalorder %s56, %s58
    %p62 = scmp.eq.s32.totalorder %s10, 0
    %p63 = por %p61, %p62
    %p64 = scmp.ne.s32.totalorder %s56, %s58
    %p65 = scmp.eq.s32.totalorder %s15, 3
    %p66 = por %p64, %p65
    %p67 = scmp.ne.s32.totalorder %s58, %s59
    %p68 = scmp.eq.s32.totalorder %s15, 0
    %p69 = por %p67, %p68
    %p70 = scmp.ne.s32.totalorder %s58, %s59
    %p71 = scmp.eq.s32.totalorder %s16, 3
    %p72 = por %p70, %p71
    %p74 = scmp.ne.s32.totalorder %s59, %s73
    %p75 = scmp.eq.s32.totalorder %s16, 0
    %p76 = por %p74, %p75
    %s78 = sadd.s32 %s77, 1
    %p81 = scmp.eq.s32.totalorder %s10, 3
    %p82 = scmp.ne.s32.totalorder %s77, %s79
    %p83 = scmp.eq.s32.totalorder %s10, 0
    %p84 = por %p82, %p83
    %p85 = scmp.ne.s32.totalorder %s77, %s79
    %p86 = scmp.eq.s32.totalorder %s15, 3
    %p87 = por %p85, %p86
    %p88 = scmp.ne.s32.totalorder %s79, %s80
    %p89 = scmp.eq.s32.totalorder %s15, 0
    %p90 = por %p88, %p89
    %p91 = scmp.ne.s32.totalorder %s79, %s80
    %p92 = scmp.eq.s32.totalorder %s16, 3
    %p93 = por %p91, %p92
    %p95 = scmp.ne.s32.totalorder %s80, %s94
    %p96 = scmp.eq.s32.totalorder %s16, 0
    %p97 = por %p95, %p96
    %s99 = sadd.s32 %s98, 1
    %p102 = scmp.eq.s32.totalorder %s10, 3
    %p103 = scmp.ne.s32.totalorder %s98, %s100
    %p104 = scmp.eq.s32.totalorder %s10, 0
    %p105 = por %p103, %p104
    %p106 = scmp.ne.s32.totalorder %s98, %s100
    %p107 = scmp.eq.s32.totalorder %s15, 3
    %p108 = por %p106, %p107
    %p109 = scmp.ne.s32.totalorder %s100, %s101
    %p110 = scmp.eq.s32.totalorder %s15, 0
    %p111 = por %p109, %p110
    %p112 = scmp.ne.s32.totalorder %s100, %s101
    %p113 = scmp.eq.s32.totalorder %s16, 3
    %p114 = por %p112, %p113
    %p116 = scmp.ne.s32.totalorder %s101, %s115
    %p117 = scmp.eq.s32.totalorder %s16, 0
    %p118 = por %p116, %p117
    %s119 = smul.u32 %s18, %s17
    %s120 = smul.u32 %s25, %s29
    %s121 = ssub.s32 %s119, %s120
    %p122 = scmp.eq.s32.totalorder %s121, 0
    %s124 = sadd.s32 %s123, 1
    %s125 = scalar_select %p122, %s123, %s124
    %p128 = pneg %p122
    %p129 = scmp.eq.s32.totalorder %s10, 3
    %p130 = por %p128, %p129
    %p131 = scmp.ne.s32.totalorder %s123, %s126
    %p132 = scmp.eq.s32.totalorder %s10, 0
    %p133 = por %p131, %p132
    %p134 = scmp.ne.s32.totalorder %s123, %s126
    %p135 = scmp.eq.s32.totalorder %s15, 3
    %p136 = por %p134, %p135
    %p137 = scmp.ne.s32.totalorder %s126, %s127
    %p138 = scmp.eq.s32.totalorder %s15, 0
    %p139 = por %p137, %p138
    %p140 = scmp.ne.s32.totalorder %s126, %s127
    %p141 = scmp.eq.s32.totalorder %s16, 3
    %p142 = por %p140, %p141
    %p144 = scmp.ne.s32.totalorder %s127, %s143
    %p145 = scmp.eq.s32.totalorder %s16, 0
    %p146 = por %p144, %p145
    %p147 = scmp.le.s32.totalorder 1, %s10
    %p148 = scmp.lt.s32.totalorder %s10, 5
    %p149 = pnand %p147, %p148
    %p150 = pneg %p149
    // Predicated region
    $region9: #{double_conv_block.2} parent=5 // pred_check
      _
    $region10: #{double_conv_block.2} parent=5 // pred_check_branch
      %152 = sbr.rel (%p149) target = $region12
    $region11: #{double_conv_block.2} parent=5 // pred_region
      %s153 = ssub.s32 %s10, 1
      // Predicated region
      $region13: #{double_conv_block.2} parent=11 // pred_check
        %p154 = pneg %p69
      $region14: #{double_conv_block.2} parent=11 // pred_check_branch
        %156 = sbr.rel (%p154) target = $region16
      $region15: #{double_conv_block.2} parent=11 // pred_region
        _
      $region16: #{double_conv_block.2} parent=11 // pred_fallthru
        _
      // Predicated region
      $region17: #{double_conv_block.2} parent=11 // pred_check
        %p157 = pneg %p90
      $region18: #{double_conv_block.2} parent=11 // pred_check_branch
        %159 = sbr.rel (%p157) target = $region20
      $region19: #{double_conv_block.2} parent=11 // pred_region
        _
      $region20: #{double_conv_block.2} parent=11 // pred_fallthru
        _
      // Predicated region
      $region21: #{double_conv_block.2} parent=11 // pred_check
        %p160 = pneg %p111
      $region22: #{double_conv_block.2} parent=11 // pred_check_branch
        %162 = sbr.rel (%p160) target = $region24
      $region23: #{double_conv_block.2} parent=11 // pred_region
        _
      $region24: #{double_conv_block.2} parent=11 // pred_fallthru
        _
    $region12: #{double_conv_block.2} parent=5 // pred_fallthru
      _
    %p163 = scmp.lt.s32.totalorder %s10, 4
    // Predicated region
    $region25: #{double_conv_block.2} parent=5 // pred_check
      %p164 = pneg %p163
    $region26: #{double_conv_block.2} parent=5 // pred_check_branch
      %166 = sbr.rel (%p164) target = $region28
    $region27: #{double_conv_block.2} parent=5 // pred_region
      // Predicated region
      $region29: #{double_conv_block.2} parent=27 // pred_check
        %p167 = pneg %p42
      $region30: #{double_conv_block.2} parent=27 // pred_check_branch
        %169 = sbr.rel (%p167) target = $region32
      $region31: #{double_conv_block.2} parent=27 // pred_region
        %p170 = scmp.lt.s32.totalorder %s18, 1
        %s171 = scalar_select %p170, %s18, 1
        %s172 = smul.addr %s171, 54
        %s173 = smul.addr %s172, 4
        %s174 = scalar_lea.vmem %s0, %s173
      $region32: #{double_conv_block.2} parent=27 // pred_fallthru
        _
    $region28: #{double_conv_block.2} parent=5 // pred_fallthru
      _
    %p175 = scmp.le.s32.totalorder 1, %s10
    %p176 = scmp.lt.s32.totalorder %s10, 5
    %p177 = pnand %p175, %p176
    %p178 = pneg %p177
    // Predicated region
    $region33: #{double_conv_block.2} parent=5 // pred_check
      _
    $region34: #{double_conv_block.2} parent=5 // pred_check_branch
      %180 = sbr.rel (%p177) target = $region36
    $region35: #{double_conv_block.2} parent=5 // pred_region
      %s181 = ssub.s32 %s10, 1
      %p182 = scmp.lt.s32.totalorder %s20, 1
      %s183 = scalar_select %p182, %s20, 1
      %s184 = smul.addr %s183, 54
      %s185 = smul.addr %s184, 4
      %s186 = scalar_lea.vmem %s0, %s185
      %p187 = pneg %p48
      %p188 = pneg %p45
      %p189 = pneg %p69
      %p190 = pneg %p66
      %p191 = pneg %p90
      %p192 = pneg %p87
      %p193 = pneg %p111
      %p194 = pneg %p108
      %p195 = pneg %p139
      %p196 = pneg %p136
      %s197 = smul.u32 %s20, %s19
      %p198 = scmp.lt.s32.totalorder %s197, 1
      %s199 = scalar_select %p198, %s197, 1
      %s200 = smul.addr %s199, 32
      %s201 = smul.addr %s200, 4
      %s202 = scalar_lea.vmem %s4, %s201
      %p203 = scmp.lt.s32.totalorder %s20, 1
      %s204 = scalar_select %p203, %s20, 1
      %s205 = smul.addr %s204, 54
      %s206 = smul.addr %s205, 4
      %s207 = scalar_lea.vmem %s0, %s206
      %s208 = smul.u32 %s20, %s19
      %p209 = scmp.lt.s32.totalorder %s208, 1
      %s210 = scalar_select %p209, %s208, 1
      %s211 = smul.addr %s210, 32
      %s212 = smul.addr %s211, 4
      %s213 = scalar_lea.vmem %s4, %s212
      %s214 = smul.u32 %s20, %s19
      %v216 = vld [vmem:[%s207] sm:$0xf]
      %v217 = vld [vmem:[%s207 + $0x4] sm:$0xf]
      %v218 = vld [vmem:[%s207 + $0xc] sm:$0xf]
      %v219 = vld [vmem:[%s207 + $0x10] sm:$0xf]
      %v220 = vld [vmem:[%s207 + $0x18] sm:$0xf]
      %v221 = vld [vmem:[%s207 + $0x1c] sm:$0xf]
      %v222 = vld [vmem:[%s207 + $0x24] sm:$0xf]
      %v223 = vld [vmem:[%s207 + $0x28] sm:$0xf]
      %v224 = vld [vmem:[%s207 + $0x30] sm:$0xf]
      %v225 = vld [vmem:[%s207 + $0x34] sm:$0xf]
      %v226 = vld [vmem:[%s207 + $0x3c] sm:$0xf]
      %v227 = vld [vmem:[%s207 + $0x40] sm:$0xf]
      %v228 = vld [vmem:[%s207 + $0x48] sm:$0xf]
      %v229 = vld [vmem:[%s207 + $0x4c] sm:$0xf]
      %v230 = vld [vmem:[%s207 + $0x54] sm:$0xf]
      %v231 = vld [vmem:[%s207 + $0x58] sm:$0xf]
      %v232 = vld [vmem:[%s207 + $0x60] sm:$0xf]
      %v233 = vld [vmem:[%s207 + $0x64] sm:$0xf]
      %v234 = vld [vmem:[%s207 + $0x6c] sm:$0xf]
      %v235 = vld [vmem:[%s207 + $0x70] sm:$0xf]
      %v236 = vld [vmem:[%s207 + $0x78] sm:$0xf]
      %v237 = vld [vmem:[%s207 + $0x7c] sm:$0xf]
      %v238 = vld [vmem:[%s207 + $0x84] sm:$0xf]
      %v239 = vld [vmem:[%s207 + $0x88] sm:$0xf]
      %v240 = vld [vmem:[%s207 + $0x90] sm:$0xf]
      %v241 = vld [vmem:[%s207 + $0x94] sm:$0xf]
      %v242 = vld [vmem:[%s207 + $0x9c] sm:$0xf]
      %v243 = vld [vmem:[%s207 + $0xa0] sm:$0xf]
      %v244 = vld [vmem:[%s207 + $0xa8] sm:$0xf]
      %v245 = vld [vmem:[%s207 + $0xac] sm:$0xf]
      %v246 = vld [vmem:[%s207 + $0xb4] sm:$0xf]
      %v247 = vld [vmem:[%s207 + $0xb8] sm:$0xf]
      %v248 = vld [vmem:[%s207 + $0xc0] sm:$0xf]
      %v249 = vld [vmem:[%s207 + $0xc4] sm:$0xf]
      %v250 = vld [vmem:[%s207 + $0xcc] sm:$0xf]
      %v251 = vld [vmem:[%s207 + $0xd0] sm:$0xf]
      %252 = vst [vmem:[#allocation2] sm:$0xf] %v216
      %253 = vst [vmem:[#allocation2 + $0xc] sm:$0xf] %v217
      %254 = vst [vmem:[#allocation2 + $0x18] sm:$0xf] %v218
      %255 = vst [vmem:[#allocation2 + $0x24] sm:$0xf] %v219
      %256 = vst [vmem:[#allocation2 + $0x30] sm:$0xf] %v220
      %257 = vst [vmem:[#allocation2 + $0x3c] sm:$0xf] %v221
      %258 = vst [vmem:[#allocation2 + $0x48] sm:$0xf] %v222
      %259 = vst [vmem:[#allocation2 + $0x54] sm:$0xf] %v223
      %260 = vst [vmem:[#allocation2 + $0x60] sm:$0xf] %v224
      %261 = vst [vmem:[#allocation2 + $0x6c] sm:$0xf] %v225
      %262 = vst [vmem:[#allocation2 + $0x78] sm:$0xf] %v226
      %263 = vst [vmem:[#allocation2 + $0x84] sm:$0xf] %v227
      %264 = vst [vmem:[#allocation2 + $0x90] sm:$0xf] %v228
      %265 = vst [vmem:[#allocation2 + $0x9c] sm:$0xf] %v229
      %266 = vst [vmem:[#allocation2 + $0xa8] sm:$0xf] %v230
      %267 = vst [vmem:[#allocation2 + $0xb4] sm:$0xf] %v231
      %268 = vst [vmem:[#allocation2 + $0xc0] sm:$0xf] %v232
      %269 = vst [vmem:[#allocation2 + $0xcc] sm:$0xf] %v233
      %270 = vst [vmem:[#allocation2 + $0xd8] sm:$0xf] %v234
      %271 = vst [vmem:[#allocation2 + $0xe4] sm:$0xf] %v235
      %272 = vst [vmem:[#allocation2 + $0xf0] sm:$0xf] %v236
      %273 = vst [vmem:[#allocation2 + $0xfc] sm:$0xf] %v237
      %274 = vst [vmem:[#allocation2 + $0x108] sm:$0xf] %v238
      %275 = vst [vmem:[#allocation2 + $0x114] sm:$0xf] %v239
      %276 = vst [vmem:[#allocation2 + $0x120] sm:$0xf] %v240
      %277 = vst [vmem:[#allocation2 + $0x12c] sm:$0xf] %v241
      %278 = vst [vmem:[#allocation2 + $0x138] sm:$0xf] %v242
      %279 = vst [vmem:[#allocation2 + $0x144] sm:$0xf] %v243
      %280 = vst [vmem:[#allocation2 + $0x150] sm:$0xf] %v244
      %281 = vst [vmem:[#allocation2 + $0x15c] sm:$0xf] %v245
      %282 = vst [vmem:[#allocation2 + $0x168] sm:$0xf] %v246
      %283 = vst [vmem:[#allocation2 + $0x174] sm:$0xf] %v247
      %284 = vst [vmem:[#allocation2 + $0x180] sm:$0xf] %v248
      %285 = vst [vmem:[#allocation2 + $0x18c] sm:$0xf] %v249
      %286 = vst [vmem:[#allocation2 + $0x198] sm:$0xf] %v250
      %287 = vst [vmem:[#allocation2 + $0x1a4] sm:$0xf] %v251
      %v288 = vld [vmem:[%s207] sm:$0xf]
      %v289 = vld [vmem:[%s207 + $0x4] sm:$0xf]
      %v290 = vld [vmem:[%s207 + $0x8] sm:$0x1]
      %v291 = vld [vmem:[%s207 + $0xc] sm:$0xf]
      %v292 = vld [vmem:[%s207 + $0x10] sm:$0xf]
      %v293 = vld [vmem:[%s207 + $0x14] sm:$0x1]
      %v294 = vld [vmem:[%s207 + $0x18] sm:$0xf]
      %v295 = vld [vmem:[%s207 + $0x1c] sm:$0xf]
      %v296 = vld [vmem:[%s207 + $0x20] sm:$0x1]
      %v297 = vld [vmem:[%s207 + $0x24] sm:$0xf]
      %v298 = vld [vmem:[%s207 + $0x28] sm:$0xf]
      %v299 = vld [vmem:[%s207 + $0x2c] sm:$0x1]
      %v300 = vld [vmem:[%s207 + $0x30] sm:$0xf]
      %v301 = vld [vmem:[%s207 + $0x34] sm:$0xf]
      %v302 = vld [vmem:[%s207 + $0x38] sm:$0x1]
      %v303 = vld [vmem:[%s207 + $0x3c] sm:$0xf]
      %v304 = vld [vmem:[%s207 + $0x40] sm:$0xf]
      %v305 = vld [vmem:[%s207 + $0x44] sm:$0x1]
      %v306 = vld [vmem:[%s207 + $0x48] sm:$0xf]
      %v307 = vld [vmem:[%s207 + $0x4c] sm:$0xf]
      %v308 = vld [vmem:[%s207 + $0x50] sm:$0x1]
      %v309 = vld [vmem:[%s207 + $0x54] sm:$0xf]
      %v310 = vld [vmem:[%s207 + $0x58] sm:$0xf]
      %v311 = vld [vmem:[%s207 + $0x5c] sm:$0x1]
      %v312 = vld [vmem:[%s207 + $0x60] sm:$0xf]
      %v313 = vld [vmem:[%s207 + $0x64] sm:$0xf]
      %v314 = vld [vmem:[%s207 + $0x68] sm:$0x1]
      %v315 = vld [vmem:[%s207 + $0x6c] sm:$0xf]
      %v316 = vld [vmem:[%s207 + $0x70] sm:$0xf]
      %v317 = vld [vmem:[%s207 + $0x74] sm:$0x1]
      %v318 = vld [vmem:[%s207 + $0x78] sm:$0xf]
      %v319 = vld [vmem:[%s207 + $0x7c] sm:$0xf]
      %v320 = vld [vmem:[%s207 + $0x80] sm:$0x1]
      %v321 = vld [vmem:[%s207 + $0x84] sm:$0xf]
      %v322 = vld [vmem:[%s207 + $0x88] sm:$0xf]
      %v323 = vld [vmem:[%s207 + $0x8c] sm:$0x1]
      %v324 = vld [vmem:[%s207 + $0x90] sm:$0xf]
      %v325 = vld [vmem:[%s207 + $0x94] sm:$0xf]
      %v326 = vld [vmem:[%s207 + $0x98] sm:$0x1]
      %v327 = vld [vmem:[%s207 + $0x9c] sm:$0xf]
      %v328 = vld [vmem:[%s207 + $0xa0] sm:$0xf]
      %v329 = vld [vmem:[%s207 + $0xa4] sm:$0x1]
      %v330 = vld [vmem:[%s207 + $0xa8] sm:$0xf]
      %v331 = vld [vmem:[%s207 + $0xac] sm:$0xf]
      %v332 = vld [vmem:[%s207 + $0xb0] sm:$0x1]
      %v333 = vld [vmem:[%s207 + $0xb4] sm:$0xf]
      %v334 = vld [vmem:[%s207 + $0xb8] sm:$0xf]
      %v335 = vld [vmem:[%s207 + $0xbc] sm:$0x1]
      %v336 = vld [vmem:[%s207 + $0xc0] sm:$0xf]
      %v337 = vld [vmem:[%s207 + $0xc4] sm:$0xf]
      %v338 = vld [vmem:[%s207 + $0xc8] sm:$0x1]
      %v339 = vld [vmem:[%s207 + $0xcc] sm:$0xf]
      %v340 = vld [vmem:[%s207 + $0xd0] sm:$0xf]
      %v341 = vld [vmem:[%s207 + $0xd4] sm:$0x1]
      %vm342 = vsmask.f32 3328
      %vm343 = vsmask.f32 7440
      %vm344 = vmor %vm342, %vm343
      %v346 = vshrl.u32 %v288, 16
      %v348 = vrot.slane %v346, 4
      %v349 = vshll.u32 %v288, 16
      %v351 = vrot.slane %v349, 5
      %v352 = vor.u32 %v348, %v351
      %v353 = vrot.slane %v352, 4
      %v355 = vshll.u32 %v289, 16
      %v357 = vrot.slane %v355, 5
      %v358 = vsel %vm344, %v353, %v357
      %v359 = vshrl.u32 %v289, 16
      %v361 = vrot.slane %v359, 4
      %v362 = vor.u32 %v361, %v357
      %v363 = vrot.slane %v362, 4
      %v365 = vshll.u32 %v290, 16
      %v367 = vrot.slane %v365, 5
      %v368 = vsel %vm344, %v363, %v367
      %v370 = vshrl.u32 %v291, 16
      %v372 = vrot.slane %v370, 4
      %v373 = vshll.u32 %v291, 16
      %v375 = vrot.slane %v373, 5
      %v376 = vor.u32 %v372, %v375
      %v377 = vrot.slane %v376, 4
      %v379 = vshll.u32 %v292, 16
      %v381 = vrot.slane %v379, 5
      %v382 = vsel %vm344, %v377, %v381
      %v383 = vshrl.u32 %v292, 16
      %v385 = vrot.slane %v383, 4
      %v386 = vor.u32 %v385, %v381
      %v387 = vrot.slane %v386, 4
      %v389 = vshll.u32 %v293, 16
      %v391 = vrot.slane %v389, 5
      %v392 = vsel %vm344, %v387, %v391
      %v394 = vshrl.u32 %v294, 16
      %v396 = vrot.slane %v394, 4
      %v397 = vshll.u32 %v294, 16
      %v399 = vrot.slane %v397, 5
      %v400 = vor.u32 %v396, %v399
      %v401 = vrot.slane %v400, 4
      %v403 = vshll.u32 %v295, 16
      %v405 = vrot.slane %v403, 5
      %v406 = vsel %vm344, %v401, %v405
      %v407 = vshrl.u32 %v295, 16
      %v409 = vrot.slane %v407, 4
      %v410 = vor.u32 %v409, %v405
      %v411 = vrot.slane %v410, 4
      %v413 = vshll.u32 %v296, 16
      %v415 = vrot.slane %v413, 5
      %v416 = vsel %vm344, %v411, %v415
      %v418 = vshrl.u32 %v297, 16
      %v420 = vrot.slane %v418, 4
      %v421 = vshll.u32 %v297, 16
      %v423 = vrot.slane %v421, 5
      %v424 = vor.u32 %v420, %v423
      %v425 = vrot.slane %v424, 4
      %v427 = vshll.u32 %v298, 16
      %v429 = vrot.slane %v427, 5
      %v430 = vsel %vm344, %v425, %v429
      %v431 = vshrl.u32 %v298, 16
      %v433 = vrot.slane %v431, 4
      %v434 = vor.u32 %v433, %v429
      %v435 = vrot.slane %v434, 4
      %v437 = vshll.u32 %v299, 16
      %v439 = vrot.slane %v437, 5
      %v440 = vsel %vm344, %v435, %v439
      %v442 = vshrl.u32 %v300, 16
      %v444 = vrot.slane %v442, 4
      %v445 = vshll.u32 %v300, 16
      %v447 = vrot.slane %v445, 5
      %v448 = vor.u32 %v444, %v447
      %v449 = vrot.slane %v448, 4
      %v451 = vshll.u32 %v301, 16
      %v453 = vrot.slane %v451, 5
      %v454 = vsel %vm344, %v449, %v453
      %v455 = vshrl.u32 %v301, 16
      %v457 = vrot.slane %v455, 4
      %v458 = vor.u32 %v457, %v453
      %v459 = vrot.slane %v458, 4
      %v461 = vshll.u32 %v302, 16
      %v463 = vrot.slane %v461, 5
      %v464 = vsel %vm344, %v459, %v463
      %v466 = vshrl.u32 %v303, 16
      %v468 = vrot.slane %v466, 4
      %v469 = vshll.u32 %v303, 16
      %v471 = vrot.slane %v469, 5
      %v472 = vor.u32 %v468, %v471
      %v473 = vrot.slane %v472, 4
      %v475 = vshll.u32 %v304, 16
      %v477 = vrot.slane %v475, 5
      %v478 = vsel %vm344, %v473, %v477
      %v479 = vshrl.u32 %v304, 16
      %v481 = vrot.slane %v479, 4
      %v482 = vor.u32 %v481, %v477
      %v483 = vrot.slane %v482, 4
      %v485 = vshll.u32 %v305, 16
      %v487 = vrot.slane %v485, 5
      %v488 = vsel %vm344, %v483, %v487
      %v490 = vshrl.u32 %v306, 16
      %v492 = vrot.slane %v490, 4
      %v493 = vshll.u32 %v306, 16
      %v495 = vrot.slane %v493, 5
      %v496 = vor.u32 %v492, %v495
      %v497 = vrot.slane %v496, 4
      %v499 = vshll.u32 %v307, 16
      %v501 = vrot.slane %v499, 5
      %v502 = vsel %vm344, %v497, %v501
      %v503 = vshrl.u32 %v307, 16
      %v505 = vrot.slane %v503, 4
      %v506 = vor.u32 %v505, %v501
      %v507 = vrot.slane %v506, 4
      %v509 = vshll.u32 %v308, 16
      %v511 = vrot.slane %v509, 5
      %v512 = vsel %vm344, %v507, %v511
      %v514 = vshrl.u32 %v309, 16
      %v516 = vrot.slane %v514, 4
      %v517 = vshll.u32 %v309, 16
      %v519 = vrot.slane %v517, 5
      %v520 = vor.u32 %v516, %v519
      %v521 = vrot.slane %v520, 4
      %v523 = vshll.u32 %v310, 16
      %v525 = vrot.slane %v523, 5
      %v526 = vsel %vm344, %v521, %v525
      %v527 = vshrl.u32 %v310, 16
      %v529 = vrot.slane %v527, 4
      %v530 = vor.u32 %v529, %v525
      %v531 = vrot.slane %v530, 4
      %v533 = vshll.u32 %v311, 16
      %v535 = vrot.slane %v533, 5
      %v536 = vsel %vm344, %v531, %v535
      %v538 = vshrl.u32 %v312, 16
      %v540 = vrot.slane %v538, 4
      %v541 = vshll.u32 %v312, 16
      %v543 = vrot.slane %v541, 5
      %v544 = vor.u32 %v540, %v543
      %v545 = vrot.slane %v544, 4
      %v547 = vshll.u32 %v313, 16
      %v549 = vrot.slane %v547, 5
      %v550 = vsel %vm344, %v545, %v549
      %v551 = vshrl.u32 %v313, 16
      %v553 = vrot.slane %v551, 4
      %v554 = vor.u32 %v553, %v549
      %v555 = vrot.slane %v554, 4
      %v557 = vshll.u32 %v314, 16
      %v559 = vrot.slane %v557, 5
      %v560 = vsel %vm344, %v555, %v559
      %v562 = vshrl.u32 %v315, 16
      %v564 = vrot.slane %v562, 4
      %v565 = vshll.u32 %v315, 16
      %v567 = vrot.slane %v565, 5
      %v568 = vor.u32 %v564, %v567
      %v569 = vrot.slane %v568, 4
      %v571 = vshll.u32 %v316, 16
      %v573 = vrot.slane %v571, 5
      %v574 = vsel %vm344, %v569, %v573
      %v575 = vshrl.u32 %v316, 16
      %v577 = vrot.slane %v575, 4
      %v578 = vor.u32 %v577, %v573
      %v579 = vrot.slane %v578, 4
      %v581 = vshll.u32 %v317, 16
      %v583 = vrot.slane %v581, 5
      %v584 = vsel %vm344, %v579, %v583
      %v586 = vshrl.u32 %v318, 16
      %v588 = vrot.slane %v586, 4
      %v589 = vshll.u32 %v318, 16
      %v591 = vrot.slane %v589, 5
      %v592 = vor.u32 %v588, %v591
      %v593 = vrot.slane %v592, 4
      %v595 = vshll.u32 %v319, 16
      %v597 = vrot.slane %v595, 5
      %v598 = vsel %vm344, %v593, %v597
      %v599 = vshrl.u32 %v319, 16
      %v601 = vrot.slane %v599, 4
      %v602 = vor.u32 %v601, %v597
      %v603 = vrot.slane %v602, 4
      %v605 = vshll.u32 %v320, 16
      %v607 = vrot.slane %v605, 5
      %v608 = vsel %vm344, %v603, %v607
      %v610 = vshrl.u32 %v321, 16
      %v612 = vrot.slane %v610, 4
      %v613 = vshll.u32 %v321, 16
      %v615 = vrot.slane %v613, 5
      %v616 = vor.u32 %v612, %v615
      %v617 = vrot.slane %v616, 4
      %v619 = vshll.u32 %v322, 16
      %v621 = vrot.slane %v619, 5
      %v622 = vsel %vm344, %v617, %v621
      %v623 = vshrl.u32 %v322, 16
      %v625 = vrot.slane %v623, 4
      %v626 = vor.u32 %v625, %v621
      %v627 = vrot.slane %v626, 4
      %v629 = vshll.u32 %v323, 16
      %v631 = vrot.slane %v629, 5
      %v632 = vsel %vm344, %v627, %v631
      %v634 = vshrl.u32 %v324, 16
      %v636 = vrot.slane %v634, 4
      %v637 = vshll.u32 %v324, 16
      %v639 = vrot.slane %v637, 5
      %v640 = vor.u32 %v636, %v639
      %v641 = vrot.slane %v640, 4
      %v643 = vshll.u32 %v325, 16
      %v645 = vrot.slane %v643, 5
      %v646 = vsel %vm344, %v641, %v645
      %v647 = vshrl.u32 %v325, 16
      %v649 = vrot.slane %v647, 4
      %v650 = vor.u32 %v649, %v645
      %v651 = vrot.slane %v650, 4
      %v653 = vshll.u32 %v326, 16
      %v655 = vrot.slane %v653, 5
      %v656 = vsel %vm344, %v651, %v655
      %v658 = vshrl.u32 %v327, 16
      %v660 = vrot.slane %v658, 4
      %v661 = vshll.u32 %v327, 16
      %v663 = vrot.slane %v661, 5
      %v664 = vor.u32 %v660, %v663
      %v665 = vrot.slane %v664, 4
      %v667 = vshll.u32 %v328, 16
      %v669 = vrot.slane %v667, 5
      %v670 = vsel %vm344, %v665, %v669
      %v671 = vshrl.u32 %v328, 16
      %v673 = vrot.slane %v671, 4
      %v674 = vor.u32 %v673, %v669
      %v675 = vrot.slane %v674, 4
      %v677 = vshll.u32 %v329, 16
      %v679 = vrot.slane %v677, 5
      %v680 = vsel %vm344, %v675, %v679
      %v682 = vshrl.u32 %v330, 16
      %v684 = vrot.slane %v682, 4
      %v685 = vshll.u32 %v330, 16
      %v687 = vrot.slane %v685, 5
      %v688 = vor.u32 %v684, %v687
      %v689 = vrot.slane %v688, 4
      %v691 = vshll.u32 %v331, 16
      %v693 = vrot.slane %v691, 5
      %v694 = vsel %vm344, %v689, %v693
      %v695 = vshrl.u32 %v331, 16
      %v697 = vrot.slane %v695, 4
      %v698 = vor.u32 %v697, %v693
      %v699 = vrot.slane %v698, 4
      %v701 = vshll.u32 %v332, 16
      %v703 = vrot.slane %v701, 5
      %v704 = vsel %vm344, %v699, %v703
      %v706 = vshrl.u32 %v333, 16
      %v708 = vrot.slane %v706, 4
      %v709 = vshll.u32 %v333, 16
      %v711 = vrot.slane %v709, 5
      %v712 = vor.u32 %v708, %v711
      %v713 = vrot.slane %v712, 4
      %v715 = vshll.u32 %v334, 16
      %v717 = vrot.slane %v715, 5
      %v718 = vsel %vm344, %v713, %v717
      %v719 = vshrl.u32 %v334, 16
      %v721 = vrot.slane %v719, 4
      %v722 = vor.u32 %v721, %v717
      %v723 = vrot.slane %v722, 4
      %v725 = vshll.u32 %v335, 16
      %v727 = vrot.slane %v725, 5
      %v728 = vsel %vm344, %v723, %v727
      %v730 = vshrl.u32 %v336, 16
      %v732 = vrot.slane %v730, 4
      %v733 = vshll.u32 %v336, 16
      %v735 = vrot.slane %v733, 5
      %v736 = vor.u32 %v732, %v735
      %v737 = vrot.slane %v736, 4
      %v739 = vshll.u32 %v337, 16
      %v741 = vrot.slane %v739, 5
      %v742 = vsel %vm344, %v737, %v741
      %v743 = vshrl.u32 %v337, 16
      %v745 = vrot.slane %v743, 4
      %v746 = vor.u32 %v745, %v741
      %v747 = vrot.slane %v746, 4
      %v749 = vshll.u32 %v338, 16
      %v751 = vrot.slane %v749, 5
      %v752 = vsel %vm344, %v747, %v751
      %v754 = vshrl.u32 %v339, 16
      %v756 = vrot.slane %v754, 4
      %v757 = vshll.u32 %v339, 16
      %v759 = vrot.slane %v757, 5
      %v760 = vor.u32 %v756, %v759
      %v761 = vrot.slane %v760, 4
      %v763 = vshll.u32 %v340, 16
      %v765 = vrot.slane %v763, 5
      %v766 = vsel %vm344, %v761, %v765
      %v767 = vshrl.u32 %v340, 16
      %v769 = vrot.slane %v767, 4
      %v770 = vor.u32 %v769, %v765
      %v771 = vrot.slane %v770, 4
      %v773 = vshll.u32 %v341, 16
      %v775 = vrot.slane %v773, 5
      %v776 = vsel %vm344, %v771, %v775
      %813 = vst [vmem:[#allocation2 + $0x4] sm:$0xf] %v358
      %814 = vst [vmem:[#allocation2 + $0x10] sm:$0xf] %v368
      %815 = vst [vmem:[#allocation2 + $0x1c] sm:$0xf] %v382
      %816 = vst [vmem:[#allocation2 + $0x28] sm:$0xf] %v392
      %817 = vst [vmem:[#allocation2 + $0x34] sm:$0xf] %v406
      %818 = vst [vmem:[#allocation2 + $0x40] sm:$0xf] %v416
      %819 = vst [vmem:[#allocation2 + $0x4c] sm:$0xf] %v430
      %820 = vst [vmem:[#allocation2 + $0x58] sm:$0xf] %v440
      %821 = vst [vmem:[#allocation2 + $0x64] sm:$0xf] %v454
      %822 = vst [vmem:[#allocation2 + $0x70] sm:$0xf] %v464
      %823 = vst [vmem:[#allocation2 + $0x7c] sm:$0xf] %v478
      %824 = vst [vmem:[#allocation2 + $0x88] sm:$0xf] %v488
      %825 = vst [vmem:[#allocation2 + $0x94] sm:$0xf] %v502
      %826 = vst [vmem:[#allocation2 + $0xa0] sm:$0xf] %v512
      %827 = vst [vmem:[#allocation2 + $0xac] sm:$0xf] %v526
      %828 = vst [vmem:[#allocation2 + $0xb8] sm:$0xf] %v536
      %829 = vst [vmem:[#allocation2 + $0xc4] sm:$0xf] %v550
      %830 = vst [vmem:[#allocation2 + $0xd0] sm:$0xf] %v560
      %831 = vst [vmem:[#allocation2 + $0xdc] sm:$0xf] %v574
      %832 = vst [vmem:[#allocation2 + $0xe8] sm:$0xf] %v584
      %833 = vst [vmem:[#allocation2 + $0xf4] sm:$0xf] %v598
      %834 = vst [vmem:[#allocation2 + $0x100] sm:$0xf] %v608
      %835 = vst [vmem:[#allocation2 + $0x10c] sm:$0xf] %v622
      %836 = vst [vmem:[#allocation2 + $0x118] sm:$0xf] %v632
      %837 = vst [vmem:[#allocation2 + $0x124] sm:$0xf] %v646
      %838 = vst [vmem:[#allocation2 + $0x130] sm:$0xf] %v656
      %839 = vst [vmem:[#allocation2 + $0x13c] sm:$0xf] %v670
      %840 = vst [vmem:[#allocation2 + $0x148] sm:$0xf] %v680
      %841 = vst [vmem:[#allocation2 + $0x154] sm:$0xf] %v694
      %842 = vst [vmem:[#allocation2 + $0x160] sm:$0xf] %v704
      %843 = vst [vmem:[#allocation2 + $0x16c] sm:$0xf] %v718
      %844 = vst [vmem:[#allocation2 + $0x178] sm:$0xf] %v728
      %845 = vst [vmem:[#allocation2 + $0x184] sm:$0xf] %v742
      %846 = vst [vmem:[#allocation2 + $0x190] sm:$0xf] %v752
      %847 = vst [vmem:[#allocation2 + $0x19c] sm:$0xf] %v766
      %848 = vst [vmem:[#allocation2 + $0x1a8] sm:$0xf] %v776
      %v849 = vld [vmem:[%s207] sm:$0xe]
      %v850 = vld [vmem:[%s207 + $0x4] sm:$0xf]
      %v851 = vld [vmem:[%s207 + $0x8] sm:$0x1]
      %v852 = vld [vmem:[%s207 + $0xc] sm:$0xe]
      %v853 = vld [vmem:[%s207 + $0x10] sm:$0xf]
      %v854 = vld [vmem:[%s207 + $0x14] sm:$0x1]
      %v855 = vld [vmem:[%s207 + $0x18] sm:$0xe]
      %v856 = vld [vmem:[%s207 + $0x1c] sm:$0xf]
      %v857 = vld [vmem:[%s207 + $0x20] sm:$0x1]
      %v858 = vld [vmem:[%s207 + $0x24] sm:$0xe]
      %v859 = vld [vmem:[%s207 + $0x28] sm:$0xf]
      %v860 = vld [vmem:[%s207 + $0x2c] sm:$0x1]
      %v861 = vld [vmem:[%s207 + $0x30] sm:$0xe]
      %v862 = vld [vmem:[%s207 + $0x34] sm:$0xf]
      %v863 = vld [vmem:[%s207 + $0x38] sm:$0x1]
      %v864 = vld [vmem:[%s207 + $0x3c] sm:$0xe]
      %v865 = vld [vmem:[%s207 + $0x40] sm:$0xf]
      %v866 = vld [vmem:[%s207 + $0x44] sm:$0x1]
      %v867 = vld [vmem:[%s207 + $0x48] sm:$0xe]
      %v868 = vld [vmem:[%s207 + $0x4c] sm:$0xf]
      %v869 = vld [vmem:[%s207 + $0x50] sm:$0x1]
      %v870 = vld [vmem:[%s207 + $0x54] sm:$0xe]
      %v871 = vld [vmem:[%s207 + $0x58] sm:$0xf]
      %v872 = vld [vmem:[%s207 + $0x5c] sm:$0x1]
      %v873 = vld [vmem:[%s207 + $0x60] sm:$0xe]
      %v874 = vld [vmem:[%s207 + $0x64] sm:$0xf]
      %v875 = vld [vmem:[%s207 + $0x68] sm:$0x1]
      %v876 = vld [vmem:[%s207 + $0x6c] sm:$0xe]
      %v877 = vld [vmem:[%s207 + $0x70] sm:$0xf]
      %v878 = vld [vmem:[%s207 + $0x74] sm:$0x1]
      %v879 = vld [vmem:[%s207 + $0x78] sm:$0xe]
      %v880 = vld [vmem:[%s207 + $0x7c] sm:$0xf]
      %v881 = vld [vmem:[%s207 + $0x80] sm:$0x1]
      %v882 = vld [vmem:[%s207 + $0x84] sm:$0xe]
      %v883 = vld [vmem:[%s207 + $0x88] sm:$0xf]
      %v884 = vld [vmem:[%s207 + $0x8c] sm:$0x1]
      %v885 = vld [vmem:[%s207 + $0x90] sm:$0xe]
      %v886 = vld [vmem:[%s207 + $0x94] sm:$0xf]
      %v887 = vld [vmem:[%s207 + $0x98] sm:$0x1]
      %v888 = vld [vmem:[%s207 + $0x9c] sm:$0xe]
      %v889 = vld [vmem:[%s207 + $0xa0] sm:$0xf]
      %v890 = vld [vmem:[%s207 + $0xa4] sm:$0x1]
      %v891 = vld [vmem:[%s207 + $0xa8] sm:$0xe]
      %v892 = vld [vmem:[%s207 + $0xac] sm:$0xf]
      %v893 = vld [vmem:[%s207 + $0xb0] sm:$0x1]
      %v894 = vld [vmem:[%s207 + $0xb4] sm:$0xe]
      %v895 = vld [vmem:[%s207 + $0xb8] sm:$0xf]
      %v896 = vld [vmem:[%s207 + $0xbc] sm:$0x1]
      %v897 = vld [vmem:[%s207 + $0xc0] sm:$0xe]
      %v898 = vld [vmem:[%s207 + $0xc4] sm:$0xf]
      %v899 = vld [vmem:[%s207 + $0xc8] sm:$0x1]
      %v900 = vld [vmem:[%s207 + $0xcc] sm:$0xe]
      %v901 = vld [vmem:[%s207 + $0xd0] sm:$0xf]
      %v902 = vld [vmem:[%s207 + $0xd4] sm:$0x1]
      %vm957 = vcmask 1042432
      %vm958 = vcmask 1046532
      %vm959 = vmor %vm957, %vm958
      %v960 = vrot.slane %v849, 5
      %v961 = vrot.slane %v960, 4
      %v962 = vrot.slane %v850, 5
      %v963 = vsel %vm959, %v961, %v962
      %v964 = vrot.slane %v962, 4
      %v965 = vrot.slane %v851, 5
      %v966 = vsel %vm959, %v964, %v965
      %v967 = vrot.slane %v852, 5
      %v968 = vrot.slane %v967, 4
      %v969 = vrot.slane %v853, 5
      %v970 = vsel %vm959, %v968, %v969
      %v971 = vrot.slane %v969, 4
      %v972 = vrot.slane %v854, 5
      %v973 = vsel %vm959, %v971, %v972
      %v974 = vrot.slane %v855, 5
      %v975 = vrot.slane %v974, 4
      %v976 = vrot.slane %v856, 5
      %v977 = vsel %vm959, %v975, %v976
      %v978 = vrot.slane %v976, 4
      %v979 = vrot.slane %v857, 5
      %v980 = vsel %vm959, %v978, %v979
      %v981 = vrot.slane %v858, 5
      %v982 = vrot.slane %v981, 4
      %v983 = vrot.slane %v859, 5
      %v984 = vsel %vm959, %v982, %v983
      %v985 = vrot.slane %v983, 4
      %v986 = vrot.slane %v860, 5
      %v987 = vsel %vm959, %v985, %v986
      %v988 = vrot.slane %v861, 5
      %v989 = vrot.slane %v988, 4
      %v990 = vrot.slane %v862, 5
      %v991 = vsel %vm959, %v989, %v990
      %v992 = vrot.slane %v990, 4
      %v993 = vrot.slane %v863, 5
      %v994 = vsel %vm959, %v992, %v993
      %v995 = vrot.slane %v864, 5
      %v996 = vrot.slane %v995, 4
      %v997 = vrot.slane %v865, 5
      %v998 = vsel %vm959, %v996, %v997
      %v999 = vrot.slane %v997, 4
      %v1000 = vrot.slane %v866, 5
      %v1001 = vsel %vm959, %v999, %v1000
      %v1002 = vrot.slane %v867, 5
      %v1003 = vrot.slane %v1002, 4
      %v1004 = vrot.slane %v868, 5
      %v1005 = vsel %vm959, %v1003, %v1004
      %v1006 = vrot.slane %v1004, 4
      %v1007 = vrot.slane %v869, 5
      %v1008 = vsel %vm959, %v1006, %v1007
      %v1009 = vrot.slane %v870, 5
      %v1010 = vrot.slane %v1009, 4
      %v1011 = vrot.slane %v871, 5
      %v1012 = vsel %vm959, %v1010, %v1011
      %v1013 = vrot.slane %v1011, 4
      %v1014 = vrot.slane %v872, 5
      %v1015 = vsel %vm959, %v1013, %v1014
      %v1016 = vrot.slane %v873, 5
      %v1017 = vrot.slane %v1016, 4
      %v1018 = vrot.slane %v874, 5
      %v1019 = vsel %vm959, %v1017, %v1018
      %v1020 = vrot.slane %v1018, 4
      %v1021 = vrot.slane %v875, 5
      %v1022 = vsel %vm959, %v1020, %v1021
      %v1023 = vrot.slane %v876, 5
      %v1024 = vrot.slane %v1023, 4
      %v1025 = vrot.slane %v877, 5
      %v1026 = vsel %vm959, %v1024, %v1025
      %v1027 = vrot.slane %v1025, 4
      %v1028 = vrot.slane %v878, 5
      %v1029 = vsel %vm959, %v1027, %v1028
      %v1030 = vrot.slane %v879, 5
      %v1031 = vrot.slane %v1030, 4
      %v1032 = vrot.slane %v880, 5
      %v1033 = vsel %vm959, %v1031, %v1032
      %v1034 = vrot.slane %v1032, 4
      %v1035 = vrot.slane %v881, 5
      %v1036 = vsel %vm959, %v1034, %v1035
      %v1037 = vrot.slane %v882, 5
      %v1038 = vrot.slane %v1037, 4
      %v1039 = vrot.slane %v883, 5
      %v1040 = vsel %vm959, %v1038, %v1039
      %v1041 = vrot.slane %v1039, 4
      %v1042 = vrot.slane %v884, 5
      %v1043 = vsel %vm959, %v1041, %v1042
      %v1044 = vrot.slane %v885, 5
      %v1045 = vrot.slane %v1044, 4
      %v1046 = vrot.slane %v886, 5
      %v1047 = vsel %vm959, %v1045, %v1046
      %v1048 = vrot.slane %v1046, 4
      %v1049 = vrot.slane %v887, 5
      %v1050 = vsel %vm959, %v1048, %v1049
      %v1051 = vrot.slane %v888, 5
      %v1052 = vrot.slane %v1051, 4
      %v1053 = vrot.slane %v889, 5
      %v1054 = vsel %vm959, %v1052, %v1053
      %v1055 = vrot.slane %v1053, 4
      %v1056 = vrot.slane %v890, 5
      %v1057 = vsel %vm959, %v1055, %v1056
      %v1058 = vrot.slane %v891, 5
      %v1059 = vrot.slane %v1058, 4
      %v1060 = vrot.slane %v892, 5
      %v1061 = vsel %vm959, %v1059, %v1060
      %v1062 = vrot.slane %v1060, 4
      %v1063 = vrot.slane %v893, 5
      %v1064 = vsel %vm959, %v1062, %v1063
      %v1065 = vrot.slane %v894, 5
      %v1066 = vrot.slane %v1065, 4
      %v1067 = vrot.slane %v895, 5
      %v1068 = vsel %vm959, %v1066, %v1067
      %v1069 = vrot.slane %v1067, 4
      %v1070 = vrot.slane %v896, 5
      %v1071 = vsel %vm959, %v1069, %v1070
      %v1072 = vrot.slane %v897, 5
      %v1073 = vrot.slane %v1072, 4
      %v1074 = vrot.slane %v898, 5
      %v1075 = vsel %vm959, %v1073, %v1074
      %v1076 = vrot.slane %v1074, 4
      %v1077 = vrot.slane %v899, 5
      %v1078 = vsel %vm959, %v1076, %v1077
      %v1079 = vrot.slane %v900, 5
      %v1080 = vrot.slane %v1079, 4
      %v1081 = vrot.slane %v901, 5
      %v1082 = vsel %vm959, %v1080, %v1081
      %v1083 = vrot.slane %v1081, 4
      %v1084 = vrot.slane %v902, 5
      %v1085 = vsel %vm959, %v1083, %v1084
      %1122 = vst [vmem:[#allocation2 + $0x8] sm:$0xf] %v963
      %1123 = vst [vmem:[#allocation2 + $0x14] sm:$0xf] %v966
      %1124 = vst [vmem:[#allocation2 + $0x20] sm:$0xf] %v970
      %1125 = vst [vmem:[#allocation2 + $0x2c] sm:$0xf] %v973
      %1126 = vst [vmem:[#allocation2 + $0x38] sm:$0xf] %v977
      %1127 = vst [vmem:[#allocation2 + $0x44] sm:$0xf] %v980
      %1128 = vst [vmem:[#allocation2 + $0x50] sm:$0xf] %v984
      %1129 = vst [vmem:[#allocation2 + $0x5c] sm:$0xf] %v987
      %1130 = vst [vmem:[#allocation2 + $0x68] sm:$0xf] %v991
      %1131 = vst [vmem:[#allocation2 + $0x74] sm:$0xf] %v994
      %1132 = vst [vmem:[#allocation2 + $0x80] sm:$0xf] %v998
      %1133 = vst [vmem:[#allocation2 + $0x8c] sm:$0xf] %v1001
      %1134 = vst [vmem:[#allocation2 + $0x98] sm:$0xf] %v1005
      %1135 = vst [vmem:[#allocation2 + $0xa4] sm:$0xf] %v1008
      %1136 = vst [vmem:[#allocation2 + $0xb0] sm:$0xf] %v1012
      %1137 = vst [vmem:[#allocation2 + $0xbc] sm:$0xf] %v1015
      %1138 = vst [vmem:[#allocation2 + $0xc8] sm:$0xf] %v1019
      %1139 = vst [vmem:[#allocation2 + $0xd4] sm:$0xf] %v1022
      %1140 = vst [vmem:[#allocation2 + $0xe0] sm:$0xf] %v1026
      %1141 = vst [vmem:[#allocation2 + $0xec] sm:$0xf] %v1029
      %1142 = vst [vmem:[#allocation2 + $0xf8] sm:$0xf] %v1033
      %1143 = vst [vmem:[#allocation2 + $0x104] sm:$0xf] %v1036
      %1144 = vst [vmem:[#allocation2 + $0x110] sm:$0xf] %v1040
      %1145 = vst [vmem:[#allocation2 + $0x11c] sm:$0xf] %v1043
      %1146 = vst [vmem:[#allocation2 + $0x128] sm:$0xf] %v1047
      %1147 = vst [vmem:[#allocation2 + $0x134] sm:$0xf] %v1050
      %1148 = vst [vmem:[#allocation2 + $0x140] sm:$0xf] %v1054
      %1149 = vst [vmem:[#allocation2 + $0x14c] sm:$0xf] %v1057
      %1150 = vst [vmem:[#allocation2 + $0x158] sm:$0xf] %v1061
      %1151 = vst [vmem:[#allocation2 + $0x164] sm:$0xf] %v1064
      %1152 = vst [vmem:[#allocation2 + $0x170] sm:$0xf] %v1068
      %1153 = vst [vmem:[#allocation2 + $0x17c] sm:$0xf] %v1071
      %1154 = vst [vmem:[#allocation2 + $0x188] sm:$0xf] %v1075
      %1155 = vst [vmem:[#allocation2 + $0x194] sm:$0xf] %v1078
      %1156 = vst [vmem:[#allocation2 + $0x1a0] sm:$0xf] %v1082
      %1157 = vst [vmem:[#allocation2 + $0x1ac] sm:$0xf] %v1085
      %v1158 = vld [vmem:[#allocation2] sm:$0xff]
      %v1159 = vld [vmem:[#allocation2 + $0x8] sm:$0xf]
      %v1160 = vld [vmem:[#allocation2 + $0xc] sm:$0xff]
      %v1161 = vld [vmem:[#allocation2 + $0x14] sm:$0xf]
      %v1162 = vld [vmem:[#allocation2 + $0x18] sm:$0xff]
      %v1163 = vld [vmem:[#allocation2 + $0x20] sm:$0xf]
      %v1164 = vld [vmem:[#allocation2 + $0x24] sm:$0xff]
      %v1165 = vld [vmem:[#allocation2 + $0x2c] sm:$0xf]
      %v1166 = vld [vmem:[#allocation2 + $0x30] sm:$0xff]
      %v1167 = vld [vmem:[#allocation2 + $0x38] sm:$0xf]
      %v1168 = vld [vmem:[#allocation2 + $0x3c] sm:$0xff]
      %v1169 = vld [vmem:[#allocation2 + $0x44] sm:$0xf]
      %v1170 = vld [vmem:[#allocation2 + $0x48] sm:$0xff]
      %v1171 = vld [vmem:[#allocation2 + $0x50] sm:$0xf]
      %v1172 = vld [vmem:[#allocation2 + $0x54] sm:$0xff]
      %v1173 = vld [vmem:[#allocation2 + $0x5c] sm:$0xf]
      %v1174 = vld [vmem:[#allocation2 + $0x60] sm:$0xff]
      %v1175 = vld [vmem:[#allocation2 + $0x68] sm:$0xf]
      %v1176 = vld [vmem:[#allocation2 + $0x6c] sm:$0xff]
      %v1177 = vld [vmem:[#allocation2 + $0x74] sm:$0xf]
      %v1178 = vld [vmem:[#allocation2 + $0x78] sm:$0xff]
      %v1179 = vld [vmem:[#allocation2 + $0x80] sm:$0xf]
      %v1180 = vld [vmem:[#allocation2 + $0x84] sm:$0xff]
      %v1181 = vld [vmem:[#allocation2 + $0x8c] sm:$0xf]
      %v1182 = vld [vmem:[#allocation2 + $0x90] sm:$0xff]
      %v1183 = vld [vmem:[#allocation2 + $0x98] sm:$0xf]
      %v1184 = vld [vmem:[#allocation2 + $0x9c] sm:$0xff]
      %v1185 = vld [vmem:[#allocation2 + $0xa4] sm:$0xf]
      %v1186 = vld [vmem:[#allocation2 + $0xa8] sm:$0xff]
      %v1187 = vld [vmem:[#allocation2 + $0xb0] sm:$0xf]
      %v1188 = vld [vmem:[#allocation2 + $0xb4] sm:$0xff]
      %v1189 = vld [vmem:[#allocation2 + $0xbc] sm:$0xf]
      %v1190 = vld [vmem:[#allocation2 + $0xc0] sm:$0xff]
      %v1191 = vld [vmem:[#allocation2 + $0xc8] sm:$0xf]
      %v1192 = vld [vmem:[#allocation2 + $0xcc] sm:$0xff]
      %v1193 = vld [vmem:[#allocation2 + $0xd4] sm:$0xf]
      %v1194 = vld [vmem:[#allocation2 + $0xd8] sm:$0xff]
      %v1195 = vld [vmem:[#allocation2 + $0xe0] sm:$0xf]
      %v1196 = vld [vmem:[#allocation2 + $0xe4] sm:$0xff]
      %v1197 = vld [vmem:[#allocation2 + $0xec] sm:$0xf]
      %v1198 = vld [vmem:[#allocation2 + $0xf0] sm:$0xff]
      %v1199 = vld [vmem:[#allocation2 + $0xf8] sm:$0xf]
      %v1200 = vld [vmem:[#allocation2 + $0xfc] sm:$0xff]
      %v1201 = vld [vmem:[#allocation2 + $0x104] sm:$0xf]
      %v1202 = vld [vmem:[#allocation2 + $0x108] sm:$0xff]
      %v1203 = vld [vmem:[#allocation2 + $0x110] sm:$0xf]
      %v1204 = vld [vmem:[#allocation2 + $0x114] sm:$0xff]
      %v1205 = vld [vmem:[#allocation2 + $0x11c] sm:$0xf]
      %v1206 = vld [vmem:[#allocation2 + $0x120] sm:$0xff]
      %v1207 = vld [vmem:[#allocation2 + $0x128] sm:$0xf]
      %v1208 = vld [vmem:[#allocation2 + $0x12c] sm:$0xff]
      %v1209 = vld [vmem:[#allocation2 + $0x134] sm:$0xf]
      %v1210 = vld [vmem:[#allocation2 + $0x138] sm:$0xff]
      %v1211 = vld [vmem:[#allocation2 + $0x140] sm:$0xf]
      %v1212 = vld [vmem:[#allocation2 + $0x144] sm:$0xff]
      %v1213 = vld [vmem:[#allocation2 + $0x14c] sm:$0xf]
      %v1214 = vld [vmem:[#allocation2 + $0x150] sm:$0xff]
      %v1215 = vld [vmem:[#allocation2 + $0x158] sm:$0xf]
      %v1216 = vld [vmem:[#allocation2 + $0x15c] sm:$0xff]
      %v1217 = vld [vmem:[#allocation2 + $0x164] sm:$0xf]
      %v1218 = vld [vmem:[#allocation2 + $0x168] sm:$0xff]
      %v1219 = vld [vmem:[#allocation2 + $0x170] sm:$0xf]
      %v1220 = vld [vmem:[#allocation2 + $0x174] sm:$0xff]
      %v1221 = vld [vmem:[#allocation2 + $0x17c] sm:$0xf]
      %v1222 = vld [vmem:[%s1] sm:$0xf]
      %v1223 = vld [vmem:[%s1 + $0x4] sm:$0xf]
      %v1224 = vld [vmem:[%s1 + $0x8] sm:$0xf]
      %v1225 = vld [vmem:[%s1 + $0xc] sm:$0xf]
      %v1226 = vld [vmem:[%s1 + $0x10] sm:$0xf]
      %v1227 = vld [vmem:[%s1 + $0x14] sm:$0xf]
      %v1228 = vld [vmem:[%s1 + $0x18] sm:$0xf]
      %v1229 = vld [vmem:[%s1 + $0x1c] sm:$0xf]
      %v1230 = vld [vmem:[%s1 + $0x20] sm:$0xf]
      %v1231 = vld [vmem:[%s1 + $0x24] sm:$0xf]
      %v1232 = vld [vmem:[%s1 + $0x28] sm:$0xf]
      %v1233 = vld [vmem:[%s1 + $0x2c] sm:$0xf]
      %v1234 = vld [vmem:[%s1 + $0x30] sm:$0xf]
      %v1235 = vld [vmem:[%s1 + $0x34] sm:$0xf]
      %v1236 = vld [vmem:[%s1 + $0x38] sm:$0xf]
      %v1237 = vld [vmem:[%s1 + $0x3c] sm:$0xf]
      %v1238 = vld [vmem:[%s1 + $0x40] sm:$0xf]
      %v1239 = vld [vmem:[%s1 + $0x44] sm:$0xf]
      %v1240 = vld [vmem:[%s1 + $0x48] sm:$0xf]
      %v1241 = vld [vmem:[%s1 + $0x4c] sm:$0xf]
      %v1242 = vld [vmem:[%s1 + $0x50] sm:$0xf]
      %v1243 = vld [vmem:[%s1 + $0x54] sm:$0xf]
      %v1244 = vld [vmem:[%s1 + $0x58] sm:$0xf]
      %v1245 = vld [vmem:[%s1 + $0x5c] sm:$0xf]
      %v1246 = vld [vmem:[%s1 + $0x60] sm:$0xf]
      %v1247 = vld [vmem:[%s1 + $0x64] sm:$0xf]
      %v1248 = vld [vmem:[%s1 + $0x68] sm:$0xf]
      %v1249 = vld [vmem:[%s1 + $0x6c] sm:$0xf]
      %v1250 = vld [vmem:[%s1 + $0x70] sm:$0xf]
      %v1251 = vld [vmem:[%s1 + $0x74] sm:$0xf]
      %v1252 = vld [vmem:[%s1 + $0x78] sm:$0xf]
      %v1253 = vld [vmem:[%s1 + $0x7c] sm:$0xf]
      %v1254 = vld [vmem:[%s1 + $0x80] sm:$0xf]
      %v1255 = vld [vmem:[%s1 + $0x84] sm:$0xf]
      %v1256 = vld [vmem:[%s1 + $0x88] sm:$0xf]
      %v1257 = vld [vmem:[%s1 + $0x8c] sm:$0xf]
      %v1258 = vld [vmem:[%s1 + $0x90] sm:$0xf]
      %v1259 = vld [vmem:[%s1 + $0x94] sm:$0xf]
      %v1260 = vld [vmem:[%s1 + $0x98] sm:$0xf]
      %v1261 = vld [vmem:[%s1 + $0x9c] sm:$0xf]
      %v1262 = vld [vmem:[%s1 + $0xa0] sm:$0xf]
      %v1263 = vld [vmem:[%s1 + $0xa4] sm:$0xf]
      %v1264 = vld [vmem:[%s1 + $0xa8] sm:$0xf]
      %v1265 = vld [vmem:[%s1 + $0xac] sm:$0xf]
      %v1266 = vld [vmem:[%s1 + $0xb0] sm:$0xf]
      %v1267 = vld [vmem:[%s1 + $0xb4] sm:$0xf]
      %v1268 = vld [vmem:[%s1 + $0xb8] sm:$0xf]
      %v1269 = vld [vmem:[%s1 + $0xbc] sm:$0xf]
      %s1270 = scalar_lea.vmem [#allocation2], 24
      %v1271 = vld [vmem:[%s1270] sm:$0xff]
      %v1272 = vld [vmem:[%s1270 + $0x8] sm:$0xf]
      %v1273 = vld [vmem:[%s1270 + $0xc] sm:$0xff]
      %v1274 = vld [vmem:[%s1270 + $0x14] sm:$0xf]
      %v1275 = vld [vmem:[%s1270 + $0x18] sm:$0xff]
      %v1276 = vld [vmem:[%s1270 + $0x20] sm:$0xf]
      %v1277 = vld [vmem:[%s1270 + $0x24] sm:$0xff]
      %v1278 = vld [vmem:[%s1270 + $0x2c] sm:$0xf]
      %v1279 = vld [vmem:[%s1270 + $0x30] sm:$0xff]
      %v1280 = vld [vmem:[%s1270 + $0x38] sm:$0xf]
      %v1281 = vld [vmem:[%s1270 + $0x3c] sm:$0xff]
      %v1282 = vld [vmem:[%s1270 + $0x44] sm:$0xf]
      %v1283 = vld [vmem:[%s1270 + $0x48] sm:$0xff]
      %v1284 = vld [vmem:[%s1270 + $0x50] sm:$0xf]
      %v1285 = vld [vmem:[%s1270 + $0x54] sm:$0xff]
      %v1286 = vld [vmem:[%s1270 + $0x5c] sm:$0xf]
      %v1287 = vld [vmem:[%s1270 + $0x60] sm:$0xff]
      %v1288 = vld [vmem:[%s1270 + $0x68] sm:$0xf]
      %v1289 = vld [vmem:[%s1270 + $0x6c] sm:$0xff]
      %v1290 = vld [vmem:[%s1270 + $0x74] sm:$0xf]
      %v1291 = vld [vmem:[%s1270 + $0x78] sm:$0xff]
      %v1292 = vld [vmem:[%s1270 + $0x80] sm:$0xf]
      %v1293 = vld [vmem:[%s1270 + $0x84] sm:$0xff]
      %v1294 = vld [vmem:[%s1270 + $0x8c] sm:$0xf]
      %v1295 = vld [vmem:[%s1270 + $0x90] sm:$0xff]
      %v1296 = vld [vmem:[%s1270 + $0x98] sm:$0xf]
      %v1297 = vld [vmem:[%s1270 + $0x9c] sm:$0xff]
      %v1298 = vld [vmem:[%s1270 + $0xa4] sm:$0xf]
      %v1299 = vld [vmem:[%s1270 + $0xa8] sm:$0xff]
      %v1300 = vld [vmem:[%s1270 + $0xb0] sm:$0xf]
      %v1301 = vld [vmem:[%s1270 + $0xb4] sm:$0xff]
      %v1302 = vld [vmem:[%s1270 + $0xbc] sm:$0xf]
      %v1303 = vld [vmem:[%s1270 + $0xc0] sm:$0xff]
      %v1304 = vld [vmem:[%s1270 + $0xc8] sm:$0xf]
      %v1305 = vld [vmem:[%s1270 + $0xcc] sm:$0xff]
      %v1306 = vld [vmem:[%s1270 + $0xd4] sm:$0xf]
      %v1307 = vld [vmem:[%s1270 + $0xd8] sm:$0xff]
      %v1308 = vld [vmem:[%s1270 + $0xe0] sm:$0xf]
      %v1309 = vld [vmem:[%s1270 + $0xe4] sm:$0xff]
      %v1310 = vld [vmem:[%s1270 + $0xec] sm:$0xf]
      %v1311 = vld [vmem:[%s1270 + $0xf0] sm:$0xff]
      %v1312 = vld [vmem:[%s1270 + $0xf8] sm:$0xf]
      %v1313 = vld [vmem:[%s1270 + $0xfc] sm:$0xff]
      %v1314 = vld [vmem:[%s1270 + $0x104] sm:$0xf]
      %v1315 = vld [vmem:[%s1270 + $0x108] sm:$0xff]
      %v1316 = vld [vmem:[%s1270 + $0x110] sm:$0xf]
      %v1317 = vld [vmem:[%s1270 + $0x114] sm:$0xff]
      %v1318 = vld [vmem:[%s1270 + $0x11c] sm:$0xf]
      %v1319 = vld [vmem:[%s1270 + $0x120] sm:$0xff]
      %v1320 = vld [vmem:[%s1270 + $0x128] sm:$0xf]
      %v1321 = vld [vmem:[%s1270 + $0x12c] sm:$0xff]
      %v1322 = vld [vmem:[%s1270 + $0x134] sm:$0xf]
      %v1323 = vld [vmem:[%s1270 + $0x138] sm:$0xff]
      %v1324 = vld [vmem:[%s1270 + $0x140] sm:$0xf]
      %v1325 = vld [vmem:[%s1270 + $0x144] sm:$0xff]
      %v1326 = vld [vmem:[%s1270 + $0x14c] sm:$0xf]
      %v1327 = vld [vmem:[%s1270 + $0x150] sm:$0xff]
      %v1328 = vld [vmem:[%s1270 + $0x158] sm:$0xf]
      %v1329 = vld [vmem:[%s1270 + $0x15c] sm:$0xff]
      %v1330 = vld [vmem:[%s1270 + $0x164] sm:$0xf]
      %v1331 = vld [vmem:[%s1270 + $0x168] sm:$0xff]
      %v1332 = vld [vmem:[%s1270 + $0x170] sm:$0xf]
      %v1333 = vld [vmem:[%s1270 + $0x174] sm:$0xff]
      %v1334 = vld [vmem:[%s1270 + $0x17c] sm:$0xf]
      %s1335 = scalar_lea.vmem %s1, 192
      %v1336 = vld [vmem:[%s1335] sm:$0xf]
      %v1337 = vld [vmem:[%s1335 + $0x4] sm:$0xf]
      %v1338 = vld [vmem:[%s1335 + $0x8] sm:$0xf]
      %v1339 = vld [vmem:[%s1335 + $0xc] sm:$0xf]
      %v1340 = vld [vmem:[%s1335 + $0x10] sm:$0xf]
      %v1341 = vld [vmem:[%s1335 + $0x14] sm:$0xf]
      %v1342 = vld [vmem:[%s1335 + $0x18] sm:$0xf]
      %v1343 = vld [vmem:[%s1335 + $0x1c] sm:$0xf]
      %v1344 = vld [vmem:[%s1335 + $0x20] sm:$0xf]
      %v1345 = vld [vmem:[%s1335 + $0x24] sm:$0xf]
      %v1346 = vld [vmem:[%s1335 + $0x28] sm:$0xf]
      %v1347 = vld [vmem:[%s1335 + $0x2c] sm:$0xf]
      %v1348 = vld [vmem:[%s1335 + $0x30] sm:$0xf]
      %v1349 = vld [vmem:[%s1335 + $0x34] sm:$0xf]
      %v1350 = vld [vmem:[%s1335 + $0x38] sm:$0xf]
      %v1351 = vld [vmem:[%s1335 + $0x3c] sm:$0xf]
      %v1352 = vld [vmem:[%s1335 + $0x40] sm:$0xf]
      %v1353 = vld [vmem:[%s1335 + $0x44] sm:$0xf]
      %v1354 = vld [vmem:[%s1335 + $0x48] sm:$0xf]
      %v1355 = vld [vmem:[%s1335 + $0x4c] sm:$0xf]
      %v1356 = vld [vmem:[%s1335 + $0x50] sm:$0xf]
      %v1357 = vld [vmem:[%s1335 + $0x54] sm:$0xf]
      %v1358 = vld [vmem:[%s1335 + $0x58] sm:$0xf]
      %v1359 = vld [vmem:[%s1335 + $0x5c] sm:$0xf]
      %v1360 = vld [vmem:[%s1335 + $0x60] sm:$0xf]
      %v1361 = vld [vmem:[%s1335 + $0x64] sm:$0xf]
      %v1362 = vld [vmem:[%s1335 + $0x68] sm:$0xf]
      %v1363 = vld [vmem:[%s1335 + $0x6c] sm:$0xf]
      %v1364 = vld [vmem:[%s1335 + $0x70] sm:$0xf]
      %v1365 = vld [vmem:[%s1335 + $0x74] sm:$0xf]
      %v1366 = vld [vmem:[%s1335 + $0x78] sm:$0xf]
      %v1367 = vld [vmem:[%s1335 + $0x7c] sm:$0xf]
      %v1368 = vld [vmem:[%s1335 + $0x80] sm:$0xf]
      %v1369 = vld [vmem:[%s1335 + $0x84] sm:$0xf]
      %v1370 = vld [vmem:[%s1335 + $0x88] sm:$0xf]
      %v1371 = vld [vmem:[%s1335 + $0x8c] sm:$0xf]
      %v1372 = vld [vmem:[%s1335 + $0x90] sm:$0xf]
      %v1373 = vld [vmem:[%s1335 + $0x94] sm:$0xf]
      %v1374 = vld [vmem:[%s1335 + $0x98] sm:$0xf]
      %v1375 = vld [vmem:[%s1335 + $0x9c] sm:$0xf]
      %v1376 = vld [vmem:[%s1335 + $0xa0] sm:$0xf]
      %v1377 = vld [vmem:[%s1335 + $0xa4] sm:$0xf]
      %v1378 = vld [vmem:[%s1335 + $0xa8] sm:$0xf]
      %v1379 = vld [vmem:[%s1335 + $0xac] sm:$0xf]
      %v1380 = vld [vmem:[%s1335 + $0xb0] sm:$0xf]
      %v1381 = vld [vmem:[%s1335 + $0xb4] sm:$0xf]
      %v1382 = vld [vmem:[%s1335 + $0xb8] sm:$0xf]
      %v1383 = vld [vmem:[%s1335 + $0xbc] sm:$0xf]
      %v1448 = vunpack.c.l.b16 %v1271
      %v1449 = vunpack.c.h.b16 %v1271
      %v1450 = vunpack.c.l.b16 %v1272
      %v1451 = vunpack.c.l.b16 %v1273
      %v1452 = vunpack.c.h.b16 %v1273
      %v1453 = vunpack.c.l.b16 %v1274
      %v1454 = vunpack.c.l.b16 %v1275
      %v1455 = vunpack.c.h.b16 %v1275
      %v1456 = vunpack.c.l.b16 %v1276
      %v1457 = vunpack.c.l.b16 %v1277
      %v1458 = vunpack.c.h.b16 %v1277
      %v1459 = vunpack.c.l.b16 %v1278
      %v1460 = vunpack.c.l.b16 %v1279
      %v1461 = vunpack.c.h.b16 %v1279
      %v1462 = vunpack.c.l.b16 %v1280
      %v1463 = vunpack.c.l.b16 %v1281
      %v1464 = vunpack.c.h.b16 %v1281
      %v1465 = vunpack.c.l.b16 %v1282
      %v1466 = vunpack.c.l.b16 %v1283
      %v1467 = vunpack.c.h.b16 %v1283
      %v1468 = vunpack.c.l.b16 %v1284
      %v1469 = vunpack.c.l.b16 %v1285
      %v1470 = vunpack.c.h.b16 %v1285
      %v1471 = vunpack.c.l.b16 %v1286
      %v1472 = vunpack.c.l.b16 %v1287
      %v1473 = vunpack.c.h.b16 %v1287
      %v1474 = vunpack.c.l.b16 %v1288
      %v1475 = vunpack.c.l.b16 %v1289
      %v1476 = vunpack.c.h.b16 %v1289
      %v1477 = vunpack.c.l.b16 %v1290
      %v1478 = vunpack.c.l.b16 %v1291
      %v1479 = vunpack.c.h.b16 %v1291
      %v1480 = vunpack.c.l.b16 %v1292
      %v1481 = vunpack.c.l.b16 %v1293
      %v1482 = vunpack.c.h.b16 %v1293
      %v1483 = vunpack.c.l.b16 %v1294
      %v1484 = vunpack.c.l.b16 %v1295
      %v1485 = vunpack.c.h.b16 %v1295
      %v1486 = vunpack.c.l.b16 %v1296
      %v1487 = vunpack.c.l.b16 %v1297
      %v1488 = vunpack.c.h.b16 %v1297
      %v1489 = vunpack.c.l.b16 %v1298
      %v1490 = vunpack.c.l.b16 %v1299
      %v1491 = vunpack.c.h.b16 %v1299
      %v1492 = vunpack.c.l.b16 %v1300
      %v1493 = vunpack.c.l.b16 %v1301
      %v1494 = vunpack.c.h.b16 %v1301
      %v1495 = vunpack.c.l.b16 %v1302
      %v1496 = vunpack.c.l.b16 %v1303
      %v1497 = vunpack.c.h.b16 %v1303
      %v1498 = vunpack.c.l.b16 %v1304
      %v1499 = vunpack.c.l.b16 %v1305
      %v1500 = vunpack.c.h.b16 %v1305
      %v1501 = vunpack.c.l.b16 %v1306
      %v1502 = vunpack.c.l.b16 %v1307
      %v1503 = vunpack.c.h.b16 %v1307
      %v1504 = vunpack.c.l.b16 %v1308
      %v1505 = vunpack.c.l.b16 %v1309
      %v1506 = vunpack.c.h.b16 %v1309
      %v1507 = vunpack.c.l.b16 %v1310
      %v1508 = vunpack.c.l.b16 %v1311
      %v1509 = vunpack.c.h.b16 %v1311
      %v1510 = vunpack.c.l.b16 %v1312
      %v1511 = vunpack.c.l.b16 %v1313
      %v1512 = vunpack.c.h.b16 %v1313
      %v1513 = vunpack.c.l.b16 %v1314
      %v1514 = vunpack.c.l.b16 %v1315
      %v1515 = vunpack.c.h.b16 %v1315
      %v1516 = vunpack.c.l.b16 %v1316
      %v1517 = vunpack.c.l.b16 %v1317
      %v1518 = vunpack.c.h.b16 %v1317
      %v1519 = vunpack.c.l.b16 %v1318
      %v1520 = vunpack.c.l.b16 %v1319
      %v1521 = vunpack.c.h.b16 %v1319
      %v1522 = vunpack.c.l.b16 %v1320
      %v1523 = vunpack.c.l.b16 %v1321
      %v1524 = vunpack.c.h.b16 %v1321
      %v1525 = vunpack.c.l.b16 %v1322
      %v1526 = vunpack.c.l.b16 %v1323
      %v1527 = vunpack.c.h.b16 %v1323
      %v1528 = vunpack.c.l.b16 %v1324
      %v1529 = vunpack.c.l.b16 %v1325
      %v1530 = vunpack.c.h.b16 %v1325
      %v1531 = vunpack.c.l.b16 %v1326
      %v1532 = vunpack.c.l.b16 %v1327
      %v1533 = vunpack.c.h.b16 %v1327
      %v1534 = vunpack.c.l.b16 %v1328
      %v1535 = vunpack.c.l.b16 %v1329
      %v1536 = vunpack.c.h.b16 %v1329
      %v1537 = vunpack.c.l.b16 %v1330
      %v1538 = vunpack.c.l.b16 %v1331
      %v1539 = vunpack.c.h.b16 %v1331
      %v1540 = vunpack.c.l.b16 %v1332
      %v1541 = vunpack.c.l.b16 %v1333
      %v1542 = vunpack.c.h.b16 %v1333
      %v1543 = vunpack.c.l.b16 %v1334
      %v1544 = vpack.c.b16 %v1451, %v1448
      %v1545 = vpack.c.b16 %v1452, %v1449
      %v1546 = vpack.c.b16 %v1453, %v1450
      %v1547 = vpack.c.b16 %v1457, %v1454
      %v1548 = vpack.c.b16 %v1458, %v1455
      %v1549 = vpack.c.b16 %v1459, %v1456
      %v1550 = vpack.c.b16 %v1463, %v1460
      %v1551 = vpack.c.b16 %v1464, %v1461
      %v1552 = vpack.c.b16 %v1465, %v1462
      %v1553 = vpack.c.b16 %v1469, %v1466
      %v1554 = vpack.c.b16 %v1470, %v1467
      %v1555 = vpack.c.b16 %v1471, %v1468
      %v1556 = vpack.c.b16 %v1475, %v1472
      %v1557 = vpack.c.b16 %v1476, %v1473
      %v1558 = vpack.c.b16 %v1477, %v1474
      %v1559 = vpack.c.b16 %v1481, %v1478
      %v1560 = vpack.c.b16 %v1482, %v1479
      %v1561 = vpack.c.b16 %v1483, %v1480
      %v1562 = vpack.c.b16 %v1487, %v1484
      %v1563 = vpack.c.b16 %v1488, %v1485
      %v1564 = vpack.c.b16 %v1489, %v1486
      %v1565 = vpack.c.b16 %v1493, %v1490
      %v1566 = vpack.c.b16 %v1494, %v1491
      %v1567 = vpack.c.b16 %v1495, %v1492
      %v1568 = vpack.c.b16 %v1499, %v1496
      %v1569 = vpack.c.b16 %v1500, %v1497
      %v1570 = vpack.c.b16 %v1501, %v1498
      %v1571 = vpack.c.b16 %v1505, %v1502
      %v1572 = vpack.c.b16 %v1506, %v1503
      %v1573 = vpack.c.b16 %v1507, %v1504
      %v1574 = vpack.c.b16 %v1511, %v1508
      %v1575 = vpack.c.b16 %v1512, %v1509
      %v1576 = vpack.c.b16 %v1513, %v1510
      %v1577 = vpack.c.b16 %v1517, %v1514
      %v1578 = vpack.c.b16 %v1518, %v1515
      %v1579 = vpack.c.b16 %v1519, %v1516
      %v1580 = vpack.c.b16 %v1523, %v1520
      %v1581 = vpack.c.b16 %v1524, %v1521
      %v1582 = vpack.c.b16 %v1525, %v1522
      %v1583 = vpack.c.b16 %v1529, %v1526
      %v1584 = vpack.c.b16 %v1530, %v1527
      %v1585 = vpack.c.b16 %v1531, %v1528
      %v1586 = vpack.c.b16 %v1535, %v1532
      %v1587 = vpack.c.b16 %v1536, %v1533
      %v1588 = vpack.c.b16 %v1537, %v1534
      %v1589 = vpack.c.b16 %v1541, %v1538
      %v1590 = vpack.c.b16 %v1542, %v1539
      %v1591 = vpack.c.b16 %v1543, %v1540
      %v1688 = vunpack.c.l.b16 %v1336
      %v1689 = vunpack.c.l.b16 %v1337
      %v1690 = vunpack.c.l.b16 %v1338
      %v1691 = vunpack.c.l.b16 %v1339
      %v1692 = vunpack.c.l.b16 %v1340
      %v1693 = vunpack.c.l.b16 %v1341
      %v1694 = vunpack.c.l.b16 %v1342
      %v1695 = vunpack.c.l.b16 %v1343
      %v1696 = vunpack.c.l.b16 %v1344
      %v1697 = vunpack.c.l.b16 %v1345
      %v1698 = vunpack.c.l.b16 %v1346
      %v1699 = vunpack.c.l.b16 %v1347
      %v1700 = vunpack.c.l.b16 %v1348
      %v1701 = vunpack.c.l.b16 %v1349
      %v1702 = vunpack.c.l.b16 %v1350
      %v1703 = vunpack.c.l.b16 %v1351
      %v1704 = vunpack.c.l.b16 %v1352
      %v1705 = vunpack.c.l.b16 %v1353
      %v1706 = vunpack.c.l.b16 %v1354
      %v1707 = vunpack.c.l.b16 %v1355
      %v1708 = vunpack.c.l.b16 %v1356
      %v1709 = vunpack.c.l.b16 %v1357
      %v1710 = vunpack.c.l.b16 %v1358
      %v1711 = vunpack.c.l.b16 %v1359
      %v1712 = vunpack.c.l.b16 %v1360
      %v1713 = vunpack.c.l.b16 %v1361
      %v1714 = vunpack.c.l.b16 %v1362
      %v1715 = vunpack.c.l.b16 %v1363
      %v1716 = vunpack.c.l.b16 %v1364
      %v1717 = vunpack.c.l.b16 %v1365
      %v1718 = vunpack.c.l.b16 %v1366
      %v1719 = vunpack.c.l.b16 %v1367
      %v1720 = vunpack.c.l.b16 %v1368
      %v1721 = vunpack.c.l.b16 %v1369
      %v1722 = vunpack.c.l.b16 %v1370
      %v1723 = vunpack.c.l.b16 %v1371
      %v1724 = vunpack.c.l.b16 %v1372
      %v1725 = vunpack.c.l.b16 %v1373
      %v1726 = vunpack.c.l.b16 %v1374
      %v1727 = vunpack.c.l.b16 %v1375
      %v1728 = vunpack.c.l.b16 %v1376
      %v1729 = vunpack.c.l.b16 %v1377
      %v1730 = vunpack.c.l.b16 %v1378
      %v1731 = vunpack.c.l.b16 %v1379
      %v1732 = vunpack.c.l.b16 %v1380
      %v1733 = vunpack.c.l.b16 %v1381
      %v1734 = vunpack.c.l.b16 %v1382
      %v1735 = vunpack.c.l.b16 %v1383
      %v1736 = vpack.c.b16 %v1689, %v1688
      %v1737 = vpack.c.b16 %v1691, %v1690
      %v1738 = vpack.c.b16 %v1693, %v1692
      %v1739 = vpack.c.b16 %v1695, %v1694
      %v1740 = vpack.c.b16 %v1697, %v1696
      %v1741 = vpack.c.b16 %v1699, %v1698
      %v1742 = vpack.c.b16 %v1701, %v1700
      %v1743 = vpack.c.b16 %v1703, %v1702
      %v1744 = vpack.c.b16 %v1705, %v1704
      %v1745 = vpack.c.b16 %v1707, %v1706
      %v1746 = vpack.c.b16 %v1709, %v1708
      %v1747 = vpack.c.b16 %v1711, %v1710
      %v1748 = vpack.c.b16 %v1713, %v1712
      %v1749 = vpack.c.b16 %v1715, %v1714
      %v1750 = vpack.c.b16 %v1717, %v1716
      %v1751 = vpack.c.b16 %v1719, %v1718
      %v1752 = vpack.c.b16 %v1721, %v1720
      %v1753 = vpack.c.b16 %v1723, %v1722
      %v1754 = vpack.c.b16 %v1725, %v1724
      %v1755 = vpack.c.b16 %v1727, %v1726
      %v1756 = vpack.c.b16 %v1729, %v1728
      %v1757 = vpack.c.b16 %v1731, %v1730
      %v1758 = vpack.c.b16 %v1733, %v1732
      %v1759 = vpack.c.b16 %v1735, %v1734
      %1784 = vmatprep.subr.bf16.mxu0 0
      %1785 = vmatpush1.bf16.msra.mxu0 %v1743
      %1786 = vmatprep.subr.bf16.mxu0 0
      %1787 = vmatpush1.bf16.msra.mxu0 %v1742
      %1788 = vmatprep.subr.bf16.mxu0 0
      %1789 = vmatpush1.bf16.msra.mxu0 %v1741
      %1790 = vmatprep.subr.bf16.mxu0 0
      %1791 = vmatpush1.bf16.msra.mxu0 %v1740
      %1792 = vmatprep.subr.bf16.mxu0 0
      %1793 = vmatpush1.bf16.msra.mxu0 %v1739
      %1794 = vmatprep.subr.bf16.mxu0 0
      %1795 = vmatpush1.bf16.msra.mxu0 %v1738
      %1796 = vmatprep.subr.bf16.mxu0 0
      %1797 = vmatpush1.bf16.msra.mxu0 %v1737
      %1798 = vmatprep.subr.bf16.mxu0 0
      %1799 = vmatpush1.bf16.msra.mxu0 %v1736
      %1800 = vmatprep.subr.bf16.mxu0 0
      %1801 = vmatpush2.bf16.msra.mxu0 %v1751
      %1802 = vmatprep.subr.bf16.mxu0 0
      %1803 = vmatpush2.bf16.msra.mxu0 %v1750
      %1804 = vmatprep.subr.bf16.mxu0 0
      %1805 = vmatpush2.bf16.msra.mxu0 %v1749
      %1806 = vmatprep.subr.bf16.mxu0 0
      %1807 = vmatpush2.bf16.msra.mxu0 %v1748
      %1808 = vmatprep.subr.bf16.mxu0 0
      %1809 = vmatpush2.bf16.msra.mxu0 %v1747
      %1810 = vmatprep.subr.bf16.mxu0 0
      %1811 = vmatpush2.bf16.msra.mxu0 %v1746
      %1812 = vmatprep.subr.bf16.mxu0 0
      %1813 = vmatpush2.bf16.msra.mxu0 %v1745
      %1814 = vmatprep.subr.bf16.mxu0 0
      %1815 = vmatpush2.bf16.msra.mxu0 %v1744
      %1816 = vmatprep.mubr.bf16.mxu0 %v1545
      %1817 = vmatmul.mubr.bf16.gmra.mxu0 %v1544
      %v1818 = vpop.f32.mrf.mxu0
      %v1819 = vadd.f32 0.0, %v1818
      %v1820 = vpop.f32.mrf.mxu0
      %v1821 = vpop.f32.mrf.mxu0
      %v1822 = vadd.f32 0.0, %v1821
      %v1823 = vpop.f32.mrf.mxu0
      %1824 = vmatprep.mubr.bf16.mxu0 %v1548
      %1825 = vmatmul.mubr.bf16.gmra.mxu0 %v1547
      %v1826 = vpop.f32.mrf.mxu0
      %v1827 = vadd.f32 0.0, %v1826
      %v1828 = vpop.f32.mrf.mxu0
      %v1829 = vpop.f32.mrf.mxu0
      %v1830 = vadd.f32 0.0, %v1829
      %v1831 = vpop.f32.mrf.mxu0
      %1832 = vmatprep.mubr.bf16.mxu0 %v1551
      %1833 = vmatmul.mubr.bf16.gmra.mxu0 %v1550
      %v1834 = vpop.f32.mrf.mxu0
      %v1835 = vadd.f32 0.0, %v1834
      %v1836 = vpop.f32.mrf.mxu0
      %v1837 = vpop.f32.mrf.mxu0
      %v1838 = vadd.f32 0.0, %v1837
      %v1839 = vpop.f32.mrf.mxu0
      %1840 = vmatprep.mubr.bf16.mxu0 %v1554
      %1841 = vmatmul.mubr.bf16.gmra.mxu0 %v1553
      %v1842 = vpop.f32.mrf.mxu0
      %v1843 = vadd.f32 0.0, %v1842
      %v1844 = vpop.f32.mrf.mxu0
      %v1845 = vpop.f32.mrf.mxu0
      %v1846 = vadd.f32 0.0, %v1845
      %v1847 = vpop.f32.mrf.mxu0
      %1848 = vmatprep.mubr.bf16.mxu0 %v1557
      %1849 = vmatmul.mubr.bf16.gmra.mxu0 %v1556
      %v1850 = vpop.f32.mrf.mxu0
      %v1851 = vadd.f32 0.0, %v1850
      %v1852 = vpop.f32.mrf.mxu0
      %v1853 = vpop.f32.mrf.mxu0
      %v1854 = vadd.f32 0.0, %v1853
      %v1855 = vpop.f32.mrf.mxu0
      %1856 = vmatprep.mubr.bf16.mxu0 %v1560
      %1857 = vmatmul.mubr.bf16.gmra.mxu0 %v1559
      %v1858 = vpop.f32.mrf.mxu0
      %v1859 = vadd.f32 0.0, %v1858
      %v1860 = vpop.f32.mrf.mxu0
      %v1861 = vpop.f32.mrf.mxu0
      %v1862 = vadd.f32 0.0, %v1861
      %v1863 = vpop.f32.mrf.mxu0
      %1864 = vmatprep.mubr.bf16.mxu0 %v1563
      %1865 = vmatmul.mubr.bf16.gmra.mxu0 %v1562
      %v1866 = vpop.f32.mrf.mxu0
      %v1867 = vadd.f32 0.0, %v1866
      %v1868 = vpop.f32.mrf.mxu0
      %v1869 = vpop.f32.mrf.mxu0
      %v1870 = vadd.f32 0.0, %v1869
      %v1871 = vpop.f32.mrf.mxu0
      %1872 = vmatprep.mubr.bf16.mxu0 %v1566
      %1873 = vmatmul.mubr.bf16.gmra.mxu0 %v1565
      %v1874 = vpop.f32.mrf.mxu0
      %v1875 = vadd.f32 0.0, %v1874
      %v1876 = vpop.f32.mrf.mxu0
      %v1877 = vpop.f32.mrf.mxu0
      %v1878 = vadd.f32 0.0, %v1877
      %v1879 = vpop.f32.mrf.mxu0
      %1880 = vmatprep.mubr.bf16.mxu0 %v1569
      %1881 = vmatmul.mubr.bf16.gmra.mxu0 %v1568
      %v1882 = vpop.f32.mrf.mxu0
      %v1883 = vadd.f32 0.0, %v1882
      %v1884 = vpop.f32.mrf.mxu0
      %v1885 = vpop.f32.mrf.mxu0
      %v1886 = vadd.f32 0.0, %v1885
      %v1887 = vpop.f32.mrf.mxu0
      %1888 = vmatprep.mubr.bf16.mxu0 %v1572
      %1889 = vmatmul.mubr.bf16.gmra.mxu0 %v1571
      %v1890 = vpop.f32.mrf.mxu0
      %v1891 = vadd.f32 0.0, %v1890
      %v1892 = vpop.f32.mrf.mxu0
      %v1893 = vpop.f32.mrf.mxu0
      %v1894 = vadd.f32 0.0, %v1893
      %v1895 = vpop.f32.mrf.mxu0
      %1896 = vmatprep.mubr.bf16.mxu0 %v1575
      %1897 = vmatmul.mubr.bf16.gmra.mxu0 %v1574
      %v1898 = vpop.f32.mrf.mxu0
      %v1899 = vadd.f32 0.0, %v1898
      %v1900 = vpop.f32.mrf.mxu0
      %v1901 = vpop.f32.mrf.mxu0
      %v1902 = vadd.f32 0.0, %v1901
      %v1903 = vpop.f32.mrf.mxu0
      %1904 = vmatprep.mubr.bf16.mxu0 %v1578
      %1905 = vmatmul.mubr.bf16.gmra.mxu0 %v1577
      %v1906 = vpop.f32.mrf.mxu0
      %v1907 = vadd.f32 0.0, %v1906
      %v1908 = vpop.f32.mrf.mxu0
      %v1909 = vpop.f32.mrf.mxu0
      %v1910 = vadd.f32 0.0, %v1909
      %v1911 = vpop.f32.mrf.mxu0
      %1912 = vmatprep.mubr.bf16.mxu0 %v1581
      %1913 = vmatmul.mubr.bf16.gmra.mxu0 %v1580
      %v1914 = vpop.f32.mrf.mxu0
      %v1915 = vadd.f32 0.0, %v1914
      %v1916 = vpop.f32.mrf.mxu0
      %v1917 = vpop.f32.mrf.mxu0
      %v1918 = vadd.f32 0.0, %v1917
      %v1919 = vpop.f32.mrf.mxu0
      %1920 = vmatprep.mubr.bf16.mxu0 %v1584
      %1921 = vmatmul.mubr.bf16.gmra.mxu0 %v1583
      %v1922 = vpop.f32.mrf.mxu0
      %v1923 = vadd.f32 0.0, %v1922
      %v1924 = vpop.f32.mrf.mxu0
      %v1925 = vpop.f32.mrf.mxu0
      %v1926 = vadd.f32 0.0, %v1925
      %v1927 = vpop.f32.mrf.mxu0
      %1928 = vmatprep.mubr.bf16.mxu0 %v1587
      %1929 = vmatmul.mubr.bf16.gmra.mxu0 %v1586
      %v1930 = vpop.f32.mrf.mxu0
      %v1931 = vadd.f32 0.0, %v1930
      %v1932 = vpop.f32.mrf.mxu0
      %v1933 = vpop.f32.mrf.mxu0
      %v1934 = vadd.f32 0.0, %v1933
      %v1935 = vpop.f32.mrf.mxu0
      %1936 = vmatprep.mubr.bf16.mxu0 %v1590
      %1937 = vmatmul.mubr.bf16.gmra.mxu0 %v1589
      %v1938 = vpop.f32.mrf.mxu0
      %v1939 = vadd.f32 0.0, %v1938
      %v1940 = vpop.f32.mrf.mxu0
      %v1941 = vpop.f32.mrf.mxu0
      %v1942 = vadd.f32 0.0, %v1941
      %v1943 = vpop.f32.mrf.mxu0
      %1944 = vdwg.mxu0
      %1945 = vmatprep.subr.bf16.mxu0 0
      %1946 = vmatpush1.bf16.msra.mxu0 %v1759
      %1947 = vmatprep.subr.bf16.mxu0 0
      %1948 = vmatpush1.bf16.msra.mxu0 %v1758
      %1949 = vmatprep.subr.bf16.mxu0 0
      %1950 = vmatpush1.bf16.msra.mxu0 %v1757
      %1951 = vmatprep.subr.bf16.mxu0 0
      %1952 = vmatpush1.bf16.msra.mxu0 %v1756
      %1953 = vmatprep.subr.bf16.mxu0 0
      %1954 = vmatpush1.bf16.msra.mxu0 %v1755
      %1955 = vmatprep.subr.bf16.mxu0 0
      %1956 = vmatpush1.bf16.msra.mxu0 %v1754
      %1957 = vmatprep.subr.bf16.mxu0 0
      %1958 = vmatpush1.bf16.msra.mxu0 %v1753
      %1959 = vmatprep.subr.bf16.mxu0 0
      %1960 = vmatpush1.bf16.msra.mxu0 %v1752
      %1961 = vmatprep.subr.bf16.mxu0 0
      %1962 = vmatpush2.bf16.msra.mxu0 0
      %1963 = vmatprep.subr.bf16.mxu0 0
      %1964 = vmatpush2.bf16.msra.mxu0 0
      %1965 = vmatprep.subr.bf16.mxu0 0
      %1966 = vmatpush2.bf16.msra.mxu0 0
      %1967 = vmatprep.subr.bf16.mxu0 0
      %1968 = vmatpush2.bf16.msra.mxu0 0
      %1969 = vmatprep.subr.bf16.mxu0 0
      %1970 = vmatpush2.bf16.msra.mxu0 0
      %1971 = vmatprep.subr.bf16.mxu0 0
      %1972 = vmatpush2.bf16.msra.mxu0 0
      %1973 = vmatprep.subr.bf16.mxu0 0
      %1974 = vmatpush2.bf16.msra.mxu0 0
      %1975 = vmatprep.subr.bf16.mxu0 0
      %1976 = vmatpush2.bf16.msra.mxu0 0
      %1977 = vmatprep.mubr.bf16.mxu0 0
      %1978 = vmatmul.mubr.bf16.gmra.mxu0 %v1546
      %v1979 = vpop.f32.mrf.mxu0
      %v1980 = vadd.f32 %v1819, %v1979
      %v1981 = vpop.f32.mrf.mxu0
      %v1982 = vpop.f32.mrf.mxu0
      %v1983 = vadd.f32 %v1822, %v1982
      %v1984 = vpop.f32.mrf.mxu0
      %1985 = vmatprep.mubr.bf16.mxu0 0
      %1986 = vmatmul.mubr.bf16.gmra.mxu0 %v1549
      %v1987 = vpop.f32.mrf.mxu0
      %v1988 = vadd.f32 %v1827, %v1987
      %v1989 = vpop.f32.mrf.mxu0
      %v1990 = vpop.f32.mrf.mxu0
      %v1991 = vadd.f32 %v1830, %v1990
      %v1992 = vpop.f32.mrf.mxu0
      %1993 = vmatprep.mubr.bf16.mxu0 0
      %1994 = vmatmul.mubr.bf16.gmra.mxu0 %v1552
      %v1995 = vpop.f32.mrf.mxu0
      %v1996 = vadd.f32 %v1835, %v1995
      %v1997 = vpop.f32.mrf.mxu0
      %v1998 = vpop.f32.mrf.mxu0
      %v1999 = vadd.f32 %v1838, %v1998
      %v2000 = vpop.f32.mrf.mxu0
      %2001 = vmatprep.mubr.bf16.mxu0 0
      %2002 = vmatmul.mubr.bf16.gmra.mxu0 %v1555
      %v2003 = vpop.f32.mrf.mxu0
      %v2004 = vadd.f32 %v1843, %v2003
      %v2005 = vpop.f32.mrf.mxu0
      %v2006 = vpop.f32.mrf.mxu0
      %v2007 = vadd.f32 %v1846, %v2006
      %v2008 = vpop.f32.mrf.mxu0
      %2009 = vmatprep.mubr.bf16.mxu0 0
      %2010 = vmatmul.mubr.bf16.gmra.mxu0 %v1558
      %v2011 = vpop.f32.mrf.mxu0
      %v2012 = vadd.f32 %v1851, %v2011
      %v2013 = vpop.f32.mrf.mxu0
      %v2014 = vpop.f32.mrf.mxu0
      %v2015 = vadd.f32 %v1854, %v2014
      %v2016 = vpop.f32.mrf.mxu0
      %2017 = vmatprep.mubr.bf16.mxu0 0
      %2018 = vmatmul.mubr.bf16.gmra.mxu0 %v1561
      %v2019 = vpop.f32.mrf.mxu0
      %v2020 = vadd.f32 %v1859, %v2019
      %v2021 = vpop.f32.mrf.mxu0
      %v2022 = vpop.f32.mrf.mxu0
      %v2023 = vadd.f32 %v1862, %v2022
      %v2024 = vpop.f32.mrf.mxu0
      %2025 = vmatprep.mubr.bf16.mxu0 0
      %2026 = vmatmul.mubr.bf16.gmra.mxu0 %v1564
      %v2027 = vpop.f32.mrf.mxu0
      %v2028 = vadd.f32 %v1867, %v2027
      %v2029 = vpop.f32.mrf.mxu0
      %v2030 = vpop.f32.mrf.mxu0
      %v2031 = vadd.f32 %v1870, %v2030
      %v2032 = vpop.f32.mrf.mxu0
      %2033 = vmatprep.mubr.bf16.mxu0 0
      %2034 = vmatmul.mubr.bf16.gmra.mxu0 %v1567
      %v2035 = vpop.f32.mrf.mxu0
      %v2036 = vadd.f32 %v1875, %v2035
      %v2037 = vpop.f32.mrf.mxu0
      %v2038 = vpop.f32.mrf.mxu0
      %v2039 = vadd.f32 %v1878, %v2038
      %v2040 = vpop.f32.mrf.mxu0
      %2041 = vmatprep.mubr.bf16.mxu0 0
      %2042 = vmatmul.mubr.bf16.gmra.mxu0 %v1570
      %v2043 = vpop.f32.mrf.mxu0
      %v2044 = vadd.f32 %v1883, %v2043
      %v2045 = vpop.f32.mrf.mxu0
      %v2046 = vpop.f32.mrf.mxu0
      %v2047 = vadd.f32 %v1886, %v2046
      %v2048 = vpop.f32.mrf.mxu0
      %2049 = vmatprep.mubr.bf16.mxu0 0
      %2050 = vmatmul.mubr.bf16.gmra.mxu0 %v1573
      %v2051 = vpop.f32.mrf.mxu0
      %v2052 = vadd.f32 %v1891, %v2051
      %v2053 = vpop.f32.mrf.mxu0
      %v2054 = vpop.f32.mrf.mxu0
      %v2055 = vadd.f32 %v1894, %v2054
      %v2056 = vpop.f32.mrf.mxu0
      %2057 = vmatprep.mubr.bf16.mxu0 0
      %2058 = vmatmul.mubr.bf16.gmra.mxu0 %v1576
      %v2059 = vpop.f32.mrf.mxu0
      %v2060 = vadd.f32 %v1899, %v2059
      %v2061 = vpop.f32.mrf.mxu0
      %v2062 = vpop.f32.mrf.mxu0
      %v2063 = vadd.f32 %v1902, %v2062
      %v2064 = vpop.f32.mrf.mxu0
      %2065 = vmatprep.mubr.bf16.mxu0 0
      %2066 = vmatmul.mubr.bf16.gmra.mxu0 %v1579
      %v2067 = vpop.f32.mrf.mxu0
      %v2068 = vadd.f32 %v1907, %v2067
      %v2069 = vpop.f32.mrf.mxu0
      %v2070 = vpop.f32.mrf.mxu0
      %v2071 = vadd.f32 %v1910, %v2070
      %v2072 = vpop.f32.mrf.mxu0
      %2073 = vmatprep.mubr.bf16.mxu0 0
      %2074 = vmatmul.mubr.bf16.gmra.mxu0 %v1582
      %v2075 = vpop.f32.mrf.mxu0
      %v2076 = vadd.f32 %v1915, %v2075
      %v2077 = vpop.f32.mrf.mxu0
      %v2078 = vpop.f32.mrf.mxu0
      %v2079 = vadd.f32 %v1918, %v2078
      %v2080 = vpop.f32.mrf.mxu0
      %2081 = vmatprep.mubr.bf16.mxu0 0
      %2082 = vmatmul.mubr.bf16.gmra.mxu0 %v1585
      %v2083 = vpop.f32.mrf.mxu0
      %v2084 = vadd.f32 %v1923, %v2083
      %v2085 = vpop.f32.mrf.mxu0
      %v2086 = vpop.f32.mrf.mxu0
      %v2087 = vadd.f32 %v1926, %v2086
      %v2088 = vpop.f32.mrf.mxu0
      %2089 = vmatprep.mubr.bf16.mxu0 0
      %2090 = vmatmul.mubr.bf16.gmra.mxu0 %v1588
      %v2091 = vpop.f32.mrf.mxu0
      %v2092 = vadd.f32 %v1931, %v2091
      %v2093 = vpop.f32.mrf.mxu0
      %v2094 = vpop.f32.mrf.mxu0
      %v2095 = vadd.f32 %v1934, %v2094
      %v2096 = vpop.f32.mrf.mxu0
      %2097 = vmatprep.mubr.bf16.mxu0 0
      %2098 = vmatmul.mubr.bf16.gmra.mxu0 %v1591
      %v2099 = vpop.f32.mrf.mxu0
      %v2100 = vadd.f32 %v1939, %v2099
      %v2101 = vpop.f32.mrf.mxu0
      %v2102 = vpop.f32.mrf.mxu0
      %v2103 = vadd.f32 %v1942, %v2102
      %v2104 = vpop.f32.mrf.mxu0
      %2105 = vdwg.mxu0
      %v2170 = vunpack.c.l.b16 %v1158
      %v2171 = vunpack.c.h.b16 %v1158
      %v2172 = vunpack.c.l.b16 %v1159
      %v2173 = vunpack.c.l.b16 %v1160
      %v2174 = vunpack.c.h.b16 %v1160
      %v2175 = vunpack.c.l.b16 %v1161
      %v2176 = vunpack.c.l.b16 %v1162
      %v2177 = vunpack.c.h.b16 %v1162
      %v2178 = vunpack.c.l.b16 %v1163
      %v2179 = vunpack.c.l.b16 %v1164
      %v2180 = vunpack.c.h.b16 %v1164
      %v2181 = vunpack.c.l.b16 %v1165
      %v2182 = vunpack.c.l.b16 %v1166
      %v2183 = vunpack.c.h.b16 %v1166
      %v2184 = vunpack.c.l.b16 %v1167
      %v2185 = vunpack.c.l.b16 %v1168
      %v2186 = vunpack.c.h.b16 %v1168
      %v2187 = vunpack.c.l.b16 %v1169
      %v2188 = vunpack.c.l.b16 %v1170
      %v2189 = vunpack.c.h.b16 %v1170
      %v2190 = vunpack.c.l.b16 %v1171
      %v2191 = vunpack.c.l.b16 %v1172
      %v2192 = vunpack.c.h.b16 %v1172
      %v2193 = vunpack.c.l.b16 %v1173
      %v2194 = vunpack.c.l.b16 %v1174
      %v2195 = vunpack.c.h.b16 %v1174
      %v2196 = vunpack.c.l.b16 %v1175
      %v2197 = vunpack.c.l.b16 %v1176
      %v2198 = vunpack.c.h.b16 %v1176
      %v2199 = vunpack.c.l.b16 %v1177
      %v2200 = vunpack.c.l.b16 %v1178
      %v2201 = vunpack.c.h.b16 %v1178
      %v2202 = vunpack.c.l.b16 %v1179
      %v2203 = vunpack.c.l.b16 %v1180
      %v2204 = vunpack.c.h.b16 %v1180
      %v2205 = vunpack.c.l.b16 %v1181
      %v2206 = vunpack.c.l.b16 %v1182
      %v2207 = vunpack.c.h.b16 %v1182
      %v2208 = vunpack.c.l.b16 %v1183
      %v2209 = vunpack.c.l.b16 %v1184
      %v2210 = vunpack.c.h.b16 %v1184
      %v2211 = vunpack.c.l.b16 %v1185
      %v2212 = vunpack.c.l.b16 %v1186
      %v2213 = vunpack.c.h.b16 %v1186
      %v2214 = vunpack.c.l.b16 %v1187
      %v2215 = vunpack.c.l.b16 %v1188
      %v2216 = vunpack.c.h.b16 %v1188
      %v2217 = vunpack.c.l.b16 %v1189
      %v2218 = vunpack.c.l.b16 %v1190
      %v2219 = vunpack.c.h.b16 %v1190
      %v2220 = vunpack.c.l.b16 %v1191
      %v2221 = vunpack.c.l.b16 %v1192
      %v2222 = vunpack.c.h.b16 %v1192
      %v2223 = vunpack.c.l.b16 %v1193
      %v2224 = vunpack.c.l.b16 %v1194
      %v2225 = vunpack.c.h.b16 %v1194
      %v2226 = vunpack.c.l.b16 %v1195
      %v2227 = vunpack.c.l.b16 %v1196
      %v2228 = vunpack.c.h.b16 %v1196
      %v2229 = vunpack.c.l.b16 %v1197
      %v2230 = vunpack.c.l.b16 %v1198
      %v2231 = vunpack.c.h.b16 %v1198
      %v2232 = vunpack.c.l.b16 %v1199
      %v2233 = vunpack.c.l.b16 %v1200
      %v2234 = vunpack.c.h.b16 %v1200
      %v2235 = vunpack.c.l.b16 %v1201
      %v2236 = vunpack.c.l.b16 %v1202
      %v2237 = vunpack.c.h.b16 %v1202
      %v2238 = vunpack.c.l.b16 %v1203
      %v2239 = vunpack.c.l.b16 %v1204
      %v2240 = vunpack.c.h.b16 %v1204
      %v2241 = vunpack.c.l.b16 %v1205
      %v2242 = vunpack.c.l.b16 %v1206
      %v2243 = vunpack.c.h.b16 %v1206
      %v2244 = vunpack.c.l.b16 %v1207
      %v2245 = vunpack.c.l.b16 %v1208
      %v2246 = vunpack.c.h.b16 %v1208
      %v2247 = vunpack.c.l.b16 %v1209
      %v2248 = vunpack.c.l.b16 %v1210
      %v2249 = vunpack.c.h.b16 %v1210
      %v2250 = vunpack.c.l.b16 %v1211
      %v2251 = vunpack.c.l.b16 %v1212
      %v2252 = vunpack.c.h.b16 %v1212
      %v2253 = vunpack.c.l.b16 %v1213
      %v2254 = vunpack.c.l.b16 %v1214
      %v2255 = vunpack.c.h.b16 %v1214
      %v2256 = vunpack.c.l.b16 %v1215
      %v2257 = vunpack.c.l.b16 %v1216
      %v2258 = vunpack.c.h.b16 %v1216
      %v2259 = vunpack.c.l.b16 %v1217
      %v2260 = vunpack.c.l.b16 %v1218
      %v2261 = vunpack.c.h.b16 %v1218
      %v2262 = vunpack.c.l.b16 %v1219
      %v2263 = vunpack.c.l.b16 %v1220
      %v2264 = vunpack.c.h.b16 %v1220
      %v2265 = vunpack.c.l.b16 %v1221
      %v2266 = vpack.c.b16 %v2173, %v2170
      %v2267 = vpack.c.b16 %v2174, %v2171
      %v2268 = vpack.c.b16 %v2175, %v2172
      %v2269 = vpack.c.b16 %v2179, %v2176
      %v2270 = vpack.c.b16 %v2180, %v2177
      %v2271 = vpack.c.b16 %v2181, %v2178
      %v2272 = vpack.c.b16 %v2185, %v2182
      %v2273 = vpack.c.b16 %v2186, %v2183
      %v2274 = vpack.c.b16 %v2187, %v2184
      %v2275 = vpack.c.b16 %v2191, %v2188
      %v2276 = vpack.c.b16 %v2192, %v2189
      %v2277 = vpack.c.b16 %v2193, %v2190
      %v2278 = vpack.c.b16 %v2197, %v2194
      %v2279 = vpack.c.b16 %v2198, %v2195
      %v2280 = vpack.c.b16 %v2199, %v2196
      %v2281 = vpack.c.b16 %v2203, %v2200
      %v2282 = vpack.c.b16 %v2204, %v2201
      %v2283 = vpack.c.b16 %v2205, %v2202
      %v2284 = vpack.c.b16 %v2209, %v2206
      %v2285 = vpack.c.b16 %v2210, %v2207
      %v2286 = vpack.c.b16 %v2211, %v2208
      %v2287 = vpack.c.b16 %v2215, %v2212
      %v2288 = vpack.c.b16 %v2216, %v2213
      %v2289 = vpack.c.b16 %v2217, %v2214
      %v2290 = vpack.c.b16 %v2221, %v2218
      %v2291 = vpack.c.b16 %v2222, %v2219
      %v2292 = vpack.c.b16 %v2223, %v2220
      %v2293 = vpack.c.b16 %v2227, %v2224
      %v2294 = vpack.c.b16 %v2228, %v2225
      %v2295 = vpack.c.b16 %v2229, %v2226
      %v2296 = vpack.c.b16 %v2233, %v2230
      %v2297 = vpack.c.b16 %v2234, %v2231
      %v2298 = vpack.c.b16 %v2235, %v2232
      %v2299 = vpack.c.b16 %v2239, %v2236
      %v2300 = vpack.c.b16 %v2240, %v2237
      %v2301 = vpack.c.b16 %v2241, %v2238
      %v2302 = vpack.c.b16 %v2245, %v2242
      %v2303 = vpack.c.b16 %v2246, %v2243
      %v2304 = vpack.c.b16 %v2247, %v2244
      %v2305 = vpack.c.b16 %v2251, %v2248
      %v2306 = vpack.c.b16 %v2252, %v2249
      %v2307 = vpack.c.b16 %v2253, %v2250
      %v2308 = vpack.c.b16 %v2257, %v2254
      %v2309 = vpack.c.b16 %v2258, %v2255
      %v2310 = vpack.c.b16 %v2259, %v2256
      %v2311 = vpack.c.b16 %v2263, %v2260
      %v2312 = vpack.c.b16 %v2264, %v2261
      %v2313 = vpack.c.b16 %v2265, %v2262
      %v2410 = vunpack.c.l.b16 %v1222
      %v2411 = vunpack.c.l.b16 %v1223
      %v2412 = vunpack.c.l.b16 %v1224
      %v2413 = vunpack.c.l.b16 %v1225
      %v2414 = vunpack.c.l.b16 %v1226
      %v2415 = vunpack.c.l.b16 %v1227
      %v2416 = vunpack.c.l.b16 %v1228
      %v2417 = vunpack.c.l.b16 %v1229
      %v2418 = vunpack.c.l.b16 %v1230
      %v2419 = vunpack.c.l.b16 %v1231
      %v2420 = vunpack.c.l.b16 %v1232
      %v2421 = vunpack.c.l.b16 %v1233
      %v2422 = vunpack.c.l.b16 %v1234
      %v2423 = vunpack.c.l.b16 %v1235
      %v2424 = vunpack.c.l.b16 %v1236
      %v2425 = vunpack.c.l.b16 %v1237
      %v2426 = vunpack.c.l.b16 %v1238
      %v2427 = vunpack.c.l.b16 %v1239
      %v2428 = vunpack.c.l.b16 %v1240
      %v2429 = vunpack.c.l.b16 %v1241
      %v2430 = vunpack.c.l.b16 %v1242
      %v2431 = vunpack.c.l.b16 %v1243
      %v2432 = vunpack.c.l.b16 %v1244
      %v2433 = vunpack.c.l.b16 %v1245
      %v2434 = vunpack.c.l.b16 %v1246
      %v2435 = vunpack.c.l.b16 %v1247
      %v2436 = vunpack.c.l.b16 %v1248
      %v2437 = vunpack.c.l.b16 %v1249
      %v2438 = vunpack.c.l.b16 %v1250
      %v2439 = vunpack.c.l.b16 %v1251
      %v2440 = vunpack.c.l.b16 %v1252
      %v2441 = vunpack.c.l.b16 %v1253
      %v2442 = vunpack.c.l.b16 %v1254
      %v2443 = vunpack.c.l.b16 %v1255
      %v2444 = vunpack.c.l.b16 %v1256
      %v2445 = vunpack.c.l.b16 %v1257
      %v2446 = vunpack.c.l.b16 %v1258
      %v2447 = vunpack.c.l.b16 %v1259
      %v2448 = vunpack.c.l.b16 %v1260
      %v2449 = vunpack.c.l.b16 %v1261
      %v2450 = vunpack.c.l.b16 %v1262
      %v2451 = vunpack.c.l.b16 %v1263
      %v2452 = vunpack.c.l.b16 %v1264
      %v2453 = vunpack.c.l.b16 %v1265
      %v2454 = vunpack.c.l.b16 %v1266
      %v2455 = vunpack.c.l.b16 %v1267
      %v2456 = vunpack.c.l.b16 %v1268
      %v2457 = vunpack.c.l.b16 %v1269
      %v2458 = vpack.c.b16 %v2411, %v2410
      %v2459 = vpack.c.b16 %v2413, %v2412
      %v2460 = vpack.c.b16 %v2415, %v2414
      %v2461 = vpack.c.b16 %v2417, %v2416
      %v2462 = vpack.c.b16 %v2419, %v2418
      %v2463 = vpack.c.b16 %v2421, %v2420
      %v2464 = vpack.c.b16 %v2423, %v2422
      %v2465 = vpack.c.b16 %v2425, %v2424
      %v2466 = vpack.c.b16 %v2427, %v2426
      %v2467 = vpack.c.b16 %v2429, %v2428
      %v2468 = vpack.c.b16 %v2431, %v2430
      %v2469 = vpack.c.b16 %v2433, %v2432
      %v2470 = vpack.c.b16 %v2435, %v2434
      %v2471 = vpack.c.b16 %v2437, %v2436
      %v2472 = vpack.c.b16 %v2439, %v2438
      %v2473 = vpack.c.b16 %v2441, %v2440
      %v2474 = vpack.c.b16 %v2443, %v2442
      %v2475 = vpack.c.b16 %v2445, %v2444
      %v2476 = vpack.c.b16 %v2447, %v2446
      %v2477 = vpack.c.b16 %v2449, %v2448
      %v2478 = vpack.c.b16 %v2451, %v2450
      %v2479 = vpack.c.b16 %v2453, %v2452
      %v2480 = vpack.c.b16 %v2455, %v2454
      %v2481 = vpack.c.b16 %v2457, %v2456
      %2506 = vmatprep.subr.bf16.mxu0 0
      %2507 = vmatpush1.bf16.msra.mxu0 %v2465
      %2508 = vmatprep.subr.bf16.mxu0 0
      %2509 = vmatpush1.bf16.msra.mxu0 %v2464
      %2510 = vmatprep.subr.bf16.mxu0 0
      %2511 = vmatpush1.bf16.msra.mxu0 %v2463
      %2512 = vmatprep.subr.bf16.mxu0 0
      %2513 = vmatpush1.bf16.msra.mxu0 %v2462
      %2514 = vmatprep.subr.bf16.mxu0 0
      %2515 = vmatpush1.bf16.msra.mxu0 %v2461
      %2516 = vmatprep.subr.bf16.mxu0 0
      %2517 = vmatpush1.bf16.msra.mxu0 %v2460
      %2518 = vmatprep.subr.bf16.mxu0 0
      %2519 = vmatpush1.bf16.msra.mxu0 %v2459
      %2520 = vmatprep.subr.bf16.mxu0 0
      %2521 = vmatpush1.bf16.msra.mxu0 %v2458
      %2522 = vmatprep.subr.bf16.mxu0 0
      %2523 = vmatpush2.bf16.msra.mxu0 %v2473
      %2524 = vmatprep.subr.bf16.mxu0 0
      %2525 = vmatpush2.bf16.msra.mxu0 %v2472
      %2526 = vmatprep.subr.bf16.mxu0 0
      %2527 = vmatpush2.bf16.msra.mxu0 %v2471
      %2528 = vmatprep.subr.bf16.mxu0 0
      %2529 = vmatpush2.bf16.msra.mxu0 %v2470
      %2530 = vmatprep.subr.bf16.mxu0 0
      %2531 = vmatpush2.bf16.msra.mxu0 %v2469
      %2532 = vmatprep.subr.bf16.mxu0 0
      %2533 = vmatpush2.bf16.msra.mxu0 %v2468
      %2534 = vmatprep.subr.bf16.mxu0 0
      %2535 = vmatpush2.bf16.msra.mxu0 %v2467
      %2536 = vmatprep.subr.bf16.mxu0 0
      %2537 = vmatpush2.bf16.msra.mxu0 %v2466
      %2538 = vmatprep.mubr.bf16.mxu0 %v2267
      %2539 = vmatmul.mubr.bf16.gmra.mxu0 %v2266
      %v2540 = vpop.f32.mrf.mxu0
      %v2541 = vadd.f32 %v1980, %v2540
      %v2542 = vpop.f32.mrf.mxu0
      %v2543 = vpop.f32.mrf.mxu0
      %v2544 = vadd.f32 %v1983, %v2543
      %v2545 = vpop.f32.mrf.mxu0
      %2546 = vmatprep.mubr.bf16.mxu0 %v2270
      %2547 = vmatmul.mubr.bf16.gmra.mxu0 %v2269
      %v2548 = vpop.f32.mrf.mxu0
      %v2549 = vadd.f32 %v1988, %v2548
      %v2550 = vpop.f32.mrf.mxu0
      %v2551 = vpop.f32.mrf.mxu0
      %v2552 = vadd.f32 %v1991, %v2551
      %v2553 = vpop.f32.mrf.mxu0
      %2554 = vmatprep.mubr.bf16.mxu0 %v2273
      %2555 = vmatmul.mubr.bf16.gmra.mxu0 %v2272
      %v2556 = vpop.f32.mrf.mxu0
      %v2557 = vadd.f32 %v1996, %v2556
      %v2558 = vpop.f32.mrf.mxu0
      %v2559 = vpop.f32.mrf.mxu0
      %v2560 = vadd.f32 %v1999, %v2559
      %v2561 = vpop.f32.mrf.mxu0
      %2562 = vmatprep.mubr.bf16.mxu0 %v2276
      %2563 = vmatmul.mubr.bf16.gmra.mxu0 %v2275
      %v2564 = vpop.f32.mrf.mxu0
      %v2565 = vadd.f32 %v2004, %v2564
      %v2566 = vpop.f32.mrf.mxu0
      %v2567 = vpop.f32.mrf.mxu0
      %v2568 = vadd.f32 %v2007, %v2567
      %v2569 = vpop.f32.mrf.mxu0
      %2570 = vmatprep.mubr.bf16.mxu0 %v2279
      %2571 = vmatmul.mubr.bf16.gmra.mxu0 %v2278
      %v2572 = vpop.f32.mrf.mxu0
      %v2573 = vadd.f32 %v2012, %v2572
      %v2574 = vpop.f32.mrf.mxu0
      %v2575 = vpop.f32.mrf.mxu0
      %v2576 = vadd.f32 %v2015, %v2575
      %v2577 = vpop.f32.mrf.mxu0
      %2578 = vmatprep.mubr.bf16.mxu0 %v2282
      %2579 = vmatmul.mubr.bf16.gmra.mxu0 %v2281
      %v2580 = vpop.f32.mrf.mxu0
      %v2581 = vadd.f32 %v2020, %v2580
      %v2582 = vpop.f32.mrf.mxu0
      %v2583 = vpop.f32.mrf.mxu0
      %v2584 = vadd.f32 %v2023, %v2583
      %v2585 = vpop.f32.mrf.mxu0
      %2586 = vmatprep.mubr.bf16.mxu0 %v2285
      %2587 = vmatmul.mubr.bf16.gmra.mxu0 %v2284
      %v2588 = vpop.f32.mrf.mxu0
      %v2589 = vadd.f32 %v2028, %v2588
      %v2590 = vpop.f32.mrf.mxu0
      %v2591 = vpop.f32.mrf.mxu0
      %v2592 = vadd.f32 %v2031, %v2591
      %v2593 = vpop.f32.mrf.mxu0
      %2594 = vmatprep.mubr.bf16.mxu0 %v2288
      %2595 = vmatmul.mubr.bf16.gmra.mxu0 %v2287
      %v2596 = vpop.f32.mrf.mxu0
      %v2597 = vadd.f32 %v2036, %v2596
      %v2598 = vpop.f32.mrf.mxu0
      %v2599 = vpop.f32.mrf.mxu0
      %v2600 = vadd.f32 %v2039, %v2599
      %v2601 = vpop.f32.mrf.mxu0
      %2602 = vmatprep.mubr.bf16.mxu0 %v2291
      %2603 = vmatmul.mubr.bf16.gmra.mxu0 %v2290
      %v2604 = vpop.f32.mrf.mxu0
      %v2605 = vadd.f32 %v2044, %v2604
      %v2606 = vpop.f32.mrf.mxu0
      %v2607 = vpop.f32.mrf.mxu0
      %v2608 = vadd.f32 %v2047, %v2607
      %v2609 = vpop.f32.mrf.mxu0
      %2610 = vmatprep.mubr.bf16.mxu0 %v2294
      %2611 = vmatmul.mubr.bf16.gmra.mxu0 %v2293
      %v2612 = vpop.f32.mrf.mxu0
      %v2613 = vadd.f32 %v2052, %v2612
      %v2614 = vpop.f32.mrf.mxu0
      %v2615 = vpop.f32.mrf.mxu0
      %v2616 = vadd.f32 %v2055, %v2615
      %v2617 = vpop.f32.mrf.mxu0
      %2618 = vmatprep.mubr.bf16.mxu0 %v2297
      %2619 = vmatmul.mubr.bf16.gmra.mxu0 %v2296
      %v2620 = vpop.f32.mrf.mxu0
      %v2621 = vadd.f32 %v2060, %v2620
      %v2622 = vpop.f32.mrf.mxu0
      %v2623 = vpop.f32.mrf.mxu0
      %v2624 = vadd.f32 %v2063, %v2623
      %v2625 = vpop.f32.mrf.mxu0
      %2626 = vmatprep.mubr.bf16.mxu0 %v2300
      %2627 = vmatmul.mubr.bf16.gmra.mxu0 %v2299
      %v2628 = vpop.f32.mrf.mxu0
      %v2629 = vadd.f32 %v2068, %v2628
      %v2630 = vpop.f32.mrf.mxu0
      %v2631 = vpop.f32.mrf.mxu0
      %v2632 = vadd.f32 %v2071, %v2631
      %v2633 = vpop.f32.mrf.mxu0
      %2634 = vmatprep.mubr.bf16.mxu0 %v2303
      %2635 = vmatmul.mubr.bf16.gmra.mxu0 %v2302
      %v2636 = vpop.f32.mrf.mxu0
      %v2637 = vadd.f32 %v2076, %v2636
      %v2638 = vpop.f32.mrf.mxu0
      %v2639 = vpop.f32.mrf.mxu0
      %v2640 = vadd.f32 %v2079, %v2639
      %v2641 = vpop.f32.mrf.mxu0
      %2642 = vmatprep.mubr.bf16.mxu0 %v2306
      %2643 = vmatmul.mubr.bf16.gmra.mxu0 %v2305
      %v2644 = vpop.f32.mrf.mxu0
      %v2645 = vadd.f32 %v2084, %v2644
      %v2646 = vpop.f32.mrf.mxu0
      %v2647 = vpop.f32.mrf.mxu0
      %v2648 = vadd.f32 %v2087, %v2647
      %v2649 = vpop.f32.mrf.mxu0
      %2650 = vmatprep.mubr.bf16.mxu0 %v2309
      %2651 = vmatmul.mubr.bf16.gmra.mxu0 %v2308
      %v2652 = vpop.f32.mrf.mxu0
      %v2653 = vadd.f32 %v2092, %v2652
      %v2654 = vpop.f32.mrf.mxu0
      %v2655 = vpop.f32.mrf.mxu0
      %v2656 = vadd.f32 %v2095, %v2655
      %v2657 = vpop.f32.mrf.mxu0
      %2658 = vmatprep.mubr.bf16.mxu0 %v2312
      %2659 = vmatmul.mubr.bf16.gmra.mxu0 %v2311
      %v2660 = vpop.f32.mrf.mxu0
      %v2661 = vadd.f32 %v2100, %v2660
      %v2662 = vpop.f32.mrf.mxu0
      %v2663 = vpop.f32.mrf.mxu0
      %v2664 = vadd.f32 %v2103, %v2663
      %v2665 = vpop.f32.mrf.mxu0
      %2666 = vdwg.mxu0
      %2667 = vmatprep.subr.bf16.mxu0 0
      %2668 = vmatpush1.bf16.msra.mxu0 %v2481
      %2669 = vmatprep.subr.bf16.mxu0 0
      %2670 = vmatpush1.bf16.msra.mxu0 %v2480
      %2671 = vmatprep.subr.bf16.mxu0 0
      %2672 = vmatpush1.bf16.msra.mxu0 %v2479
      %2673 = vmatprep.subr.bf16.mxu0 0
      %2674 = vmatpush1.bf16.msra.mxu0 %v2478
      %2675 = vmatprep.subr.bf16.mxu0 0
      %2676 = vmatpush1.bf16.msra.mxu0 %v2477
      %2677 = vmatprep.subr.bf16.mxu0 0
      %2678 = vmatpush1.bf16.msra.mxu0 %v2476
      %2679 = vmatprep.subr.bf16.mxu0 0
      %2680 = vmatpush1.bf16.msra.mxu0 %v2475
      %2681 = vmatprep.subr.bf16.mxu0 0
      %2682 = vmatpush1.bf16.msra.mxu0 %v2474
      %2683 = vmatprep.subr.bf16.mxu0 0
      %2684 = vmatpush2.bf16.msra.mxu0 0
      %2685 = vmatprep.subr.bf16.mxu0 0
      %2686 = vmatpush2.bf16.msra.mxu0 0
      %2687 = vmatprep.subr.bf16.mxu0 0
      %2688 = vmatpush2.bf16.msra.mxu0 0
      %2689 = vmatprep.subr.bf16.mxu0 0
      %2690 = vmatpush2.bf16.msra.mxu0 0
      %2691 = vmatprep.subr.bf16.mxu0 0
      %2692 = vmatpush2.bf16.msra.mxu0 0
      %2693 = vmatprep.subr.bf16.mxu0 0
      %2694 = vmatpush2.bf16.msra.mxu0 0
      %2695 = vmatprep.subr.bf16.mxu0 0
      %2696 = vmatpush2.bf16.msra.mxu0 0
      %2697 = vmatprep.subr.bf16.mxu0 0
      %2698 = vmatpush2.bf16.msra.mxu0 0
      %2699 = vmatprep.mubr.bf16.mxu0 0
      %2700 = vmatmul.mubr.bf16.gmra.mxu0 %v2268
      %v2701 = vpop.f32.mrf.mxu0
      %v2702 = vadd.f32 %v2541, %v2701
      %v2703 = vpop.f32.mrf.mxu0
      %v2704 = vpop.f32.mrf.mxu0
      %v2705 = vadd.f32 %v2544, %v2704
      %v2706 = vpop.f32.mrf.mxu0
      %2707 = vmatprep.mubr.bf16.mxu0 0
      %2708 = vmatmul.mubr.bf16.gmra.mxu0 %v2271
      %v2709 = vpop.f32.mrf.mxu0
      %v2710 = vadd.f32 %v2549, %v2709
      %v2711 = vpop.f32.mrf.mxu0
      %v2712 = vpop.f32.mrf.mxu0
      %v2713 = vadd.f32 %v2552, %v2712
      %v2714 = vpop.f32.mrf.mxu0
      %2715 = vmatprep.mubr.bf16.mxu0 0
      %2716 = vmatmul.mubr.bf16.gmra.mxu0 %v2274
      %v2717 = vpop.f32.mrf.mxu0
      %v2718 = vadd.f32 %v2557, %v2717
      %v2719 = vpop.f32.mrf.mxu0
      %v2720 = vpop.f32.mrf.mxu0
      %v2721 = vadd.f32 %v2560, %v2720
      %v2722 = vpop.f32.mrf.mxu0
      %2723 = vmatprep.mubr.bf16.mxu0 0
      %2724 = vmatmul.mubr.bf16.gmra.mxu0 %v2277
      %v2725 = vpop.f32.mrf.mxu0
      %v2726 = vadd.f32 %v2565, %v2725
      %v2727 = vpop.f32.mrf.mxu0
      %v2728 = vpop.f32.mrf.mxu0
      %v2729 = vadd.f32 %v2568, %v2728
      %v2730 = vpop.f32.mrf.mxu0
      %2731 = vmatprep.mubr.bf16.mxu0 0
      %2732 = vmatmul.mubr.bf16.gmra.mxu0 %v2280
      %v2733 = vpop.f32.mrf.mxu0
      %v2734 = vadd.f32 %v2573, %v2733
      %v2735 = vpop.f32.mrf.mxu0
      %v2736 = vpop.f32.mrf.mxu0
      %v2737 = vadd.f32 %v2576, %v2736
      %v2738 = vpop.f32.mrf.mxu0
      %2739 = vmatprep.mubr.bf16.mxu0 0
      %2740 = vmatmul.mubr.bf16.gmra.mxu0 %v2283
      %v2741 = vpop.f32.mrf.mxu0
      %v2742 = vadd.f32 %v2581, %v2741
      %v2743 = vpop.f32.mrf.mxu0
      %v2744 = vpop.f32.mrf.mxu0
      %v2745 = vadd.f32 %v2584, %v2744
      %v2746 = vpop.f32.mrf.mxu0
      %2747 = vmatprep.mubr.bf16.mxu0 0
      %2748 = vmatmul.mubr.bf16.gmra.mxu0 %v2286
      %v2749 = vpop.f32.mrf.mxu0
      %v2750 = vadd.f32 %v2589, %v2749
      %v2751 = vpop.f32.mrf.mxu0
      %v2752 = vpop.f32.mrf.mxu0
      %v2753 = vadd.f32 %v2592, %v2752
      %v2754 = vpop.f32.mrf.mxu0
      %2755 = vmatprep.mubr.bf16.mxu0 0
      %2756 = vmatmul.mubr.bf16.gmra.mxu0 %v2289
      %v2757 = vpop.f32.mrf.mxu0
      %v2758 = vadd.f32 %v2597, %v2757
      %v2759 = vpop.f32.mrf.mxu0
      %v2760 = vpop.f32.mrf.mxu0
      %v2761 = vadd.f32 %v2600, %v2760
      %v2762 = vpop.f32.mrf.mxu0
      %2763 = vmatprep.mubr.bf16.mxu0 0
      %2764 = vmatmul.mubr.bf16.gmra.mxu0 %v2292
      %v2765 = vpop.f32.mrf.mxu0
      %v2766 = vadd.f32 %v2605, %v2765
      %v2767 = vpop.f32.mrf.mxu0
      %v2768 = vpop.f32.mrf.mxu0
      %v2769 = vadd.f32 %v2608, %v2768
      %v2770 = vpop.f32.mrf.mxu0
      %2771 = vmatprep.mubr.bf16.mxu0 0
      %2772 = vmatmul.mubr.bf16.gmra.mxu0 %v2295
      %v2773 = vpop.f32.mrf.mxu0
      %v2774 = vadd.f32 %v2613, %v2773
      %v2775 = vpop.f32.mrf.mxu0
      %v2776 = vpop.f32.mrf.mxu0
      %v2777 = vadd.f32 %v2616, %v2776
      %v2778 = vpop.f32.mrf.mxu0
      %2779 = vmatprep.mubr.bf16.mxu0 0
      %2780 = vmatmul.mubr.bf16.gmra.mxu0 %v2298
      %v2781 = vpop.f32.mrf.mxu0
      %v2782 = vadd.f32 %v2621, %v2781
      %v2783 = vpop.f32.mrf.mxu0
      %v2784 = vpop.f32.mrf.mxu0
      %v2785 = vadd.f32 %v2624, %v2784
      %v2786 = vpop.f32.mrf.mxu0
      %2787 = vmatprep.mubr.bf16.mxu0 0
      %2788 = vmatmul.mubr.bf16.gmra.mxu0 %v2301
      %v2789 = vpop.f32.mrf.mxu0
      %v2790 = vadd.f32 %v2629, %v2789
      %v2791 = vpop.f32.mrf.mxu0
      %v2792 = vpop.f32.mrf.mxu0
      %v2793 = vadd.f32 %v2632, %v2792
      %v2794 = vpop.f32.mrf.mxu0
      %2795 = vmatprep.mubr.bf16.mxu0 0
      %2796 = vmatmul.mubr.bf16.gmra.mxu0 %v2304
      %v2797 = vpop.f32.mrf.mxu0
      %v2798 = vadd.f32 %v2637, %v2797
      %v2799 = vpop.f32.mrf.mxu0
      %v2800 = vpop.f32.mrf.mxu0
      %v2801 = vadd.f32 %v2640, %v2800
      %v2802 = vpop.f32.mrf.mxu0
      %2803 = vmatprep.mubr.bf16.mxu0 0
      %2804 = vmatmul.mubr.bf16.gmra.mxu0 %v2307
      %v2805 = vpop.f32.mrf.mxu0
      %v2806 = vadd.f32 %v2645, %v2805
      %v2807 = vpop.f32.mrf.mxu0
      %v2808 = vpop.f32.mrf.mxu0
      %v2809 = vadd.f32 %v2648, %v2808
      %v2810 = vpop.f32.mrf.mxu0
      %2811 = vmatprep.mubr.bf16.mxu0 0
      %2812 = vmatmul.mubr.bf16.gmra.mxu0 %v2310
      %v2813 = vpop.f32.mrf.mxu0
      %v2814 = vadd.f32 %v2653, %v2813
      %v2815 = vpop.f32.mrf.mxu0
      %v2816 = vpop.f32.mrf.mxu0
      %v2817 = vadd.f32 %v2656, %v2816
      %v2818 = vpop.f32.mrf.mxu0
      %2819 = vmatprep.mubr.bf16.mxu0 0
      %2820 = vmatmul.mubr.bf16.gmra.mxu0 %v2313
      %v2821 = vpop.f32.mrf.mxu0
      %v2822 = vadd.f32 %v2661, %v2821
      %v2823 = vpop.f32.mrf.mxu0
      %v2824 = vpop.f32.mrf.mxu0
      %v2825 = vadd.f32 %v2664, %v2824
      %v2826 = vpop.f32.mrf.mxu0
      %2827 = vdwg.mxu0
      %s2828 = scalar_lea.vmem [#allocation2], 48
      %v2829 = vld [vmem:[%s2828] sm:$0xff]
      %v2830 = vld [vmem:[%s2828 + $0x8] sm:$0xf]
      %v2831 = vld [vmem:[%s2828 + $0xc] sm:$0xff]
      %v2832 = vld [vmem:[%s2828 + $0x14] sm:$0xf]
      %v2833 = vld [vmem:[%s2828 + $0x18] sm:$0xff]
      %v2834 = vld [vmem:[%s2828 + $0x20] sm:$0xf]
      %v2835 = vld [vmem:[%s2828 + $0x24] sm:$0xff]
      %v2836 = vld [vmem:[%s2828 + $0x2c] sm:$0xf]
      %v2837 = vld [vmem:[%s2828 + $0x30] sm:$0xff]
      %v2838 = vld [vmem:[%s2828 + $0x38] sm:$0xf]
      %v2839 = vld [vmem:[%s2828 + $0x3c] sm:$0xff]
      %v2840 = vld [vmem:[%s2828 + $0x44] sm:$0xf]
      %v2841 = vld [vmem:[%s2828 + $0x48] sm:$0xff]
      %v2842 = vld [vmem:[%s2828 + $0x50] sm:$0xf]
      %v2843 = vld [vmem:[%s2828 + $0x54] sm:$0xff]
      %v2844 = vld [vmem:[%s2828 + $0x5c] sm:$0xf]
      %v2845 = vld [vmem:[%s2828 + $0x60] sm:$0xff]
      %v2846 = vld [vmem:[%s2828 + $0x68] sm:$0xf]
      %v2847 = vld [vmem:[%s2828 + $0x6c] sm:$0xff]
      %v2848 = vld [vmem:[%s2828 + $0x74] sm:$0xf]
      %v2849 = vld [vmem:[%s2828 + $0x78] sm:$0xff]
      %v2850 = vld [vmem:[%s2828 + $0x80] sm:$0xf]
      %v2851 = vld [vmem:[%s2828 + $0x84] sm:$0xff]
      %v2852 = vld [vmem:[%s2828 + $0x8c] sm:$0xf]
      %v2853 = vld [vmem:[%s2828 + $0x90] sm:$0xff]
      %v2854 = vld [vmem:[%s2828 + $0x98] sm:$0xf]
      %v2855 = vld [vmem:[%s2828 + $0x9c] sm:$0xff]
      %v2856 = vld [vmem:[%s2828 + $0xa4] sm:$0xf]
      %v2857 = vld [vmem:[%s2828 + $0xa8] sm:$0xff]
      %v2858 = vld [vmem:[%s2828 + $0xb0] sm:$0xf]
      %v2859 = vld [vmem:[%s2828 + $0xb4] sm:$0xff]
      %v2860 = vld [vmem:[%s2828 + $0xbc] sm:$0xf]
      %v2861 = vld [vmem:[%s2828 + $0xc0] sm:$0xff]
      %v2862 = vld [vmem:[%s2828 + $0xc8] sm:$0xf]
      %v2863 = vld [vmem:[%s2828 + $0xcc] sm:$0xff]
      %v2864 = vld [vmem:[%s2828 + $0xd4] sm:$0xf]
      %v2865 = vld [vmem:[%s2828 + $0xd8] sm:$0xff]
      %v2866 = vld [vmem:[%s2828 + $0xe0] sm:$0xf]
      %v2867 = vld [vmem:[%s2828 + $0xe4] sm:$0xff]
      %v2868 = vld [vmem:[%s2828 + $0xec] sm:$0xf]
      %v2869 = vld [vmem:[%s2828 + $0xf0] sm:$0xff]
      %v2870 = vld [vmem:[%s2828 + $0xf8] sm:$0xf]
      %v2871 = vld [vmem:[%s2828 + $0xfc] sm:$0xff]
      %v2872 = vld [vmem:[%s2828 + $0x104] sm:$0xf]
      %v2873 = vld [vmem:[%s2828 + $0x108] sm:$0xff]
      %v2874 = vld [vmem:[%s2828 + $0x110] sm:$0xf]
      %v2875 = vld [vmem:[%s2828 + $0x114] sm:$0xff]
      %v2876 = vld [vmem:[%s2828 + $0x11c] sm:$0xf]
      %v2877 = vld [vmem:[%s2828 + $0x120] sm:$0xff]
      %v2878 = vld [vmem:[%s2828 + $0x128] sm:$0xf]
      %v2879 = vld [vmem:[%s2828 + $0x12c] sm:$0xff]
      %v2880 = vld [vmem:[%s2828 + $0x134] sm:$0xf]
      %v2881 = vld [vmem:[%s2828 + $0x138] sm:$0xff]
      %v2882 = vld [vmem:[%s2828 + $0x140] sm:$0xf]
      %v2883 = vld [vmem:[%s2828 + $0x144] sm:$0xff]
      %v2884 = vld [vmem:[%s2828 + $0x14c] sm:$0xf]
      %v2885 = vld [vmem:[%s2828 + $0x150] sm:$0xff]
      %v2886 = vld [vmem:[%s2828 + $0x158] sm:$0xf]
      %v2887 = vld [vmem:[%s2828 + $0x15c] sm:$0xff]
      %v2888 = vld [vmem:[%s2828 + $0x164] sm:$0xf]
      %v2889 = vld [vmem:[%s2828 + $0x168] sm:$0xff]
      %v2890 = vld [vmem:[%s2828 + $0x170] sm:$0xf]
      %v2891 = vld [vmem:[%s2828 + $0x174] sm:$0xff]
      %v2892 = vld [vmem:[%s2828 + $0x17c] sm:$0xf]
      %s2893 = scalar_lea.vmem %s1, 384
      %v2894 = vld [vmem:[%s2893] sm:$0xf]
      %v2895 = vld [vmem:[%s2893 + $0x4] sm:$0xf]
      %v2896 = vld [vmem:[%s2893 + $0x8] sm:$0xf]
      %v2897 = vld [vmem:[%s2893 + $0xc] sm:$0xf]
      %v2898 = vld [vmem:[%s2893 + $0x10] sm:$0xf]
      %v2899 = vld [vmem:[%s2893 + $0x14] sm:$0xf]
      %v2900 = vld [vmem:[%s2893 + $0x18] sm:$0xf]
      %v2901 = vld [vmem:[%s2893 + $0x1c] sm:$0xf]
      %v2902 = vld [vmem:[%s2893 + $0x20] sm:$0xf]
      %v2903 = vld [vmem:[%s2893 + $0x24] sm:$0xf]
      %v2904 = vld [vmem:[%s2893 + $0x28] sm:$0xf]
      %v2905 = vld [vmem:[%s2893 + $0x2c] sm:$0xf]
      %v2906 = vld [vmem:[%s2893 + $0x30] sm:$0xf]
      %v2907 = vld [vmem:[%s2893 + $0x34] sm:$0xf]
      %v2908 = vld [vmem:[%s2893 + $0x38] sm:$0xf]
      %v2909 = vld [vmem:[%s2893 + $0x3c] sm:$0xf]
      %v2910 = vld [vmem:[%s2893 + $0x40] sm:$0xf]
      %v2911 = vld [vmem:[%s2893 + $0x44] sm:$0xf]
      %v2912 = vld [vmem:[%s2893 + $0x48] sm:$0xf]
      %v2913 = vld [vmem:[%s2893 + $0x4c] sm:$0xf]
      %v2914 = vld [vmem:[%s2893 + $0x50] sm:$0xf]
      %v2915 = vld [vmem:[%s2893 + $0x54] sm:$0xf]
      %v2916 = vld [vmem:[%s2893 + $0x58] sm:$0xf]
      %v2917 = vld [vmem:[%s2893 + $0x5c] sm:$0xf]
      %v2918 = vld [vmem:[%s2893 + $0x60] sm:$0xf]
      %v2919 = vld [vmem:[%s2893 + $0x64] sm:$0xf]
      %v2920 = vld [vmem:[%s2893 + $0x68] sm:$0xf]
      %v2921 = vld [vmem:[%s2893 + $0x6c] sm:$0xf]
      %v2922 = vld [vmem:[%s2893 + $0x70] sm:$0xf]
      %v2923 = vld [vmem:[%s2893 + $0x74] sm:$0xf]
      %v2924 = vld [vmem:[%s2893 + $0x78] sm:$0xf]
      %v2925 = vld [vmem:[%s2893 + $0x7c] sm:$0xf]
      %v2926 = vld [vmem:[%s2893 + $0x80] sm:$0xf]
      %v2927 = vld [vmem:[%s2893 + $0x84] sm:$0xf]
      %v2928 = vld [vmem:[%s2893 + $0x88] sm:$0xf]
      %v2929 = vld [vmem:[%s2893 + $0x8c] sm:$0xf]
      %v2930 = vld [vmem:[%s2893 + $0x90] sm:$0xf]
      %v2931 = vld [vmem:[%s2893 + $0x94] sm:$0xf]
      %v2932 = vld [vmem:[%s2893 + $0x98] sm:$0xf]
      %v2933 = vld [vmem:[%s2893 + $0x9c] sm:$0xf]
      %v2934 = vld [vmem:[%s2893 + $0xa0] sm:$0xf]
      %v2935 = vld [vmem:[%s2893 + $0xa4] sm:$0xf]
      %v2936 = vld [vmem:[%s2893 + $0xa8] sm:$0xf]
      %v2937 = vld [vmem:[%s2893 + $0xac] sm:$0xf]
      %v2938 = vld [vmem:[%s2893 + $0xb0] sm:$0xf]
      %v2939 = vld [vmem:[%s2893 + $0xb4] sm:$0xf]
      %v2940 = vld [vmem:[%s2893 + $0xb8] sm:$0xf]
      %v2941 = vld [vmem:[%s2893 + $0xbc] sm:$0xf]
      %v3006 = vunpack.c.l.b16 %v2829
      %v3007 = vunpack.c.h.b16 %v2829
      %v3008 = vunpack.c.l.b16 %v2830
      %v3009 = vunpack.c.l.b16 %v2831
      %v3010 = vunpack.c.h.b16 %v2831
      %v3011 = vunpack.c.l.b16 %v2832
      %v3012 = vunpack.c.l.b16 %v2833
      %v3013 = vunpack.c.h.b16 %v2833
      %v3014 = vunpack.c.l.b16 %v2834
      %v3015 = vunpack.c.l.b16 %v2835
      %v3016 = vunpack.c.h.b16 %v2835
      %v3017 = vunpack.c.l.b16 %v2836
      %v3018 = vunpack.c.l.b16 %v2837
      %v3019 = vunpack.c.h.b16 %v2837
      %v3020 = vunpack.c.l.b16 %v2838
      %v3021 = vunpack.c.l.b16 %v2839
      %v3022 = vunpack.c.h.b16 %v2839
      %v3023 = vunpack.c.l.b16 %v2840
      %v3024 = vunpack.c.l.b16 %v2841
      %v3025 = vunpack.c.h.b16 %v2841
      %v3026 = vunpack.c.l.b16 %v2842
      %v3027 = vunpack.c.l.b16 %v2843
      %v3028 = vunpack.c.h.b16 %v2843
      %v3029 = vunpack.c.l.b16 %v2844
      %v3030 = vunpack.c.l.b16 %v2845
      %v3031 = vunpack.c.h.b16 %v2845
      %v3032 = vunpack.c.l.b16 %v2846
      %v3033 = vunpack.c.l.b16 %v2847
      %v3034 = vunpack.c.h.b16 %v2847
      %v3035 = vunpack.c.l.b16 %v2848
      %v3036 = vunpack.c.l.b16 %v2849
      %v3037 = vunpack.c.h.b16 %v2849
      %v3038 = vunpack.c.l.b16 %v2850
      %v3039 = vunpack.c.l.b16 %v2851
      %v3040 = vunpack.c.h.b16 %v2851
      %v3041 = vunpack.c.l.b16 %v2852
      %v3042 = vunpack.c.l.b16 %v2853
      %v3043 = vunpack.c.h.b16 %v2853
      %v3044 = vunpack.c.l.b16 %v2854
      %v3045 = vunpack.c.l.b16 %v2855
      %v3046 = vunpack.c.h.b16 %v2855
      %v3047 = vunpack.c.l.b16 %v2856
      %v3048 = vunpack.c.l.b16 %v2857
      %v3049 = vunpack.c.h.b16 %v2857
      %v3050 = vunpack.c.l.b16 %v2858
      %v3051 = vunpack.c.l.b16 %v2859
      %v3052 = vunpack.c.h.b16 %v2859
      %v3053 = vunpack.c.l.b16 %v2860
      %v3054 = vunpack.c.l.b16 %v2861
      %v3055 = vunpack.c.h.b16 %v2861
      %v3056 = vunpack.c.l.b16 %v2862
      %v3057 = vunpack.c.l.b16 %v2863
      %v3058 = vunpack.c.h.b16 %v2863
      %v3059 = vunpack.c.l.b16 %v2864
      %v3060 = vunpack.c.l.b16 %v2865
      %v3061 = vunpack.c.h.b16 %v2865
      %v3062 = vunpack.c.l.b16 %v2866
      %v3063 = vunpack.c.l.b16 %v2867
      %v3064 = vunpack.c.h.b16 %v2867
      %v3065 = vunpack.c.l.b16 %v2868
      %v3066 = vunpack.c.l.b16 %v2869
      %v3067 = vunpack.c.h.b16 %v2869
      %v3068 = vunpack.c.l.b16 %v2870
      %v3069 = vunpack.c.l.b16 %v2871
      %v3070 = vunpack.c.h.b16 %v2871
      %v3071 = vunpack.c.l.b16 %v2872
      %v3072 = vunpack.c.l.b16 %v2873
      %v3073 = vunpack.c.h.b16 %v2873
      %v3074 = vunpack.c.l.b16 %v2874
      %v3075 = vunpack.c.l.b16 %v2875
      %v3076 = vunpack.c.h.b16 %v2875
      %v3077 = vunpack.c.l.b16 %v2876
      %v3078 = vunpack.c.l.b16 %v2877
      %v3079 = vunpack.c.h.b16 %v2877
      %v3080 = vunpack.c.l.b16 %v2878
      %v3081 = vunpack.c.l.b16 %v2879
      %v3082 = vunpack.c.h.b16 %v2879
      %v3083 = vunpack.c.l.b16 %v2880
      %v3084 = vunpack.c.l.b16 %v2881
      %v3085 = vunpack.c.h.b16 %v2881
      %v3086 = vunpack.c.l.b16 %v2882
      %v3087 = vunpack.c.l.b16 %v2883
      %v3088 = vunpack.c.h.b16 %v2883
      %v3089 = vunpack.c.l.b16 %v2884
      %v3090 = vunpack.c.l.b16 %v2885
      %v3091 = vunpack.c.h.b16 %v2885
      %v3092 = vunpack.c.l.b16 %v2886
      %v3093 = vunpack.c.l.b16 %v2887
      %v3094 = vunpack.c.h.b16 %v2887
      %v3095 = vunpack.c.l.b16 %v2888
      %v3096 = vunpack.c.l.b16 %v2889
      %v3097 = vunpack.c.h.b16 %v2889
      %v3098 = vunpack.c.l.b16 %v2890
      %v3099 = vunpack.c.l.b16 %v2891
      %v3100 = vunpack.c.h.b16 %v2891
      %v3101 = vunpack.c.l.b16 %v2892
      %v3102 = vpack.c.b16 %v3009, %v3006
      %v3103 = vpack.c.b16 %v3010, %v3007
      %v3104 = vpack.c.b16 %v3011, %v3008
      %v3105 = vpack.c.b16 %v3015, %v3012
      %v3106 = vpack.c.b16 %v3016, %v3013
      %v3107 = vpack.c.b16 %v3017, %v3014
      %v3108 = vpack.c.b16 %v3021, %v3018
      %v3109 = vpack.c.b16 %v3022, %v3019
      %v3110 = vpack.c.b16 %v3023, %v3020
      %v3111 = vpack.c.b16 %v3027, %v3024
      %v3112 = vpack.c.b16 %v3028, %v3025
      %v3113 = vpack.c.b16 %v3029, %v3026
      %v3114 = vpack.c.b16 %v3033, %v3030
      %v3115 = vpack.c.b16 %v3034, %v3031
      %v3116 = vpack.c.b16 %v3035, %v3032
      %v3117 = vpack.c.b16 %v3039, %v3036
      %v3118 = vpack.c.b16 %v3040, %v3037
      %v3119 = vpack.c.b16 %v3041, %v3038
      %v3120 = vpack.c.b16 %v3045, %v3042
      %v3121 = vpack.c.b16 %v3046, %v3043
      %v3122 = vpack.c.b16 %v3047, %v3044
      %v3123 = vpack.c.b16 %v3051, %v3048
      %v3124 = vpack.c.b16 %v3052, %v3049
      %v3125 = vpack.c.b16 %v3053, %v3050
      %v3126 = vpack.c.b16 %v3057, %v3054
      %v3127 = vpack.c.b16 %v3058, %v3055
      %v3128 = vpack.c.b16 %v3059, %v3056
      %v3129 = vpack.c.b16 %v3063, %v3060
      %v3130 = vpack.c.b16 %v3064, %v3061
      %v3131 = vpack.c.b16 %v3065, %v3062
      %v3132 = vpack.c.b16 %v3069, %v3066
      %v3133 = vpack.c.b16 %v3070, %v3067
      %v3134 = vpack.c.b16 %v3071, %v3068
      %v3135 = vpack.c.b16 %v3075, %v3072
      %v3136 = vpack.c.b16 %v3076, %v3073
      %v3137 = vpack.c.b16 %v3077, %v3074
      %v3138 = vpack.c.b16 %v3081, %v3078
      %v3139 = vpack.c.b16 %v3082, %v3079
      %v3140 = vpack.c.b16 %v3083, %v3080
      %v3141 = vpack.c.b16 %v3087, %v3084
      %v3142 = vpack.c.b16 %v3088, %v3085
      %v3143 = vpack.c.b16 %v3089, %v3086
      %v3144 = vpack.c.b16 %v3093, %v3090
      %v3145 = vpack.c.b16 %v3094, %v3091
      %v3146 = vpack.c.b16 %v3095, %v3092
      %v3147 = vpack.c.b16 %v3099, %v3096
      %v3148 = vpack.c.b16 %v3100, %v3097
      %v3149 = vpack.c.b16 %v3101, %v3098
      %v3246 = vunpack.c.l.b16 %v2894
      %v3247 = vunpack.c.l.b16 %v2895
      %v3248 = vunpack.c.l.b16 %v2896
      %v3249 = vunpack.c.l.b16 %v2897
      %v3250 = vunpack.c.l.b16 %v2898
      %v3251 = vunpack.c.l.b16 %v2899
      %v3252 = vunpack.c.l.b16 %v2900
      %v3253 = vunpack.c.l.b16 %v2901
      %v3254 = vunpack.c.l.b16 %v2902
      %v3255 = vunpack.c.l.b16 %v2903
      %v3256 = vunpack.c.l.b16 %v2904
      %v3257 = vunpack.c.l.b16 %v2905
      %v3258 = vunpack.c.l.b16 %v2906
      %v3259 = vunpack.c.l.b16 %v2907
      %v3260 = vunpack.c.l.b16 %v2908
      %v3261 = vunpack.c.l.b16 %v2909
      %v3262 = vunpack.c.l.b16 %v2910
      %v3263 = vunpack.c.l.b16 %v2911
      %v3264 = vunpack.c.l.b16 %v2912
      %v3265 = vunpack.c.l.b16 %v2913
      %v3266 = vunpack.c.l.b16 %v2914
      %v3267 = vunpack.c.l.b16 %v2915
      %v3268 = vunpack.c.l.b16 %v2916
      %v3269 = vunpack.c.l.b16 %v2917
      %v3270 = vunpack.c.l.b16 %v2918
      %v3271 = vunpack.c.l.b16 %v2919
      %v3272 = vunpack.c.l.b16 %v2920
      %v3273 = vunpack.c.l.b16 %v2921
      %v3274 = vunpack.c.l.b16 %v2922
      %v3275 = vunpack.c.l.b16 %v2923
      %v3276 = vunpack.c.l.b16 %v2924
      %v3277 = vunpack.c.l.b16 %v2925
      %v3278 = vunpack.c.l.b16 %v2926
      %v3279 = vunpack.c.l.b16 %v2927
      %v3280 = vunpack.c.l.b16 %v2928
      %v3281 = vunpack.c.l.b16 %v2929
      %v3282 = vunpack.c.l.b16 %v2930
      %v3283 = vunpack.c.l.b16 %v2931
      %v3284 = vunpack.c.l.b16 %v2932
      %v3285 = vunpack.c.l.b16 %v2933
      %v3286 = vunpack.c.l.b16 %v2934
      %v3287 = vunpack.c.l.b16 %v2935
      %v3288 = vunpack.c.l.b16 %v2936
      %v3289 = vunpack.c.l.b16 %v2937
      %v3290 = vunpack.c.l.b16 %v2938
      %v3291 = vunpack.c.l.b16 %v2939
      %v3292 = vunpack.c.l.b16 %v2940
      %v3293 = vunpack.c.l.b16 %v2941
      %v3294 = vpack.c.b16 %v3247, %v3246
      %v3295 = vpack.c.b16 %v3249, %v3248
      %v3296 = vpack.c.b16 %v3251, %v3250
      %v3297 = vpack.c.b16 %v3253, %v3252
      %v3298 = vpack.c.b16 %v3255, %v3254
      %v3299 = vpack.c.b16 %v3257, %v3256
      %v3300 = vpack.c.b16 %v3259, %v3258
      %v3301 = vpack.c.b16 %v3261, %v3260
      %v3302 = vpack.c.b16 %v3263, %v3262
      %v3303 = vpack.c.b16 %v3265, %v3264
      %v3304 = vpack.c.b16 %v3267, %v3266
      %v3305 = vpack.c.b16 %v3269, %v3268
      %v3306 = vpack.c.b16 %v3271, %v3270
      %v3307 = vpack.c.b16 %v3273, %v3272
      %v3308 = vpack.c.b16 %v3275, %v3274
      %v3309 = vpack.c.b16 %v3277, %v3276
      %v3310 = vpack.c.b16 %v3279, %v3278
      %v3311 = vpack.c.b16 %v3281, %v3280
      %v3312 = vpack.c.b16 %v3283, %v3282
      %v3313 = vpack.c.b16 %v3285, %v3284
      %v3314 = vpack.c.b16 %v3287, %v3286
      %v3315 = vpack.c.b16 %v3289, %v3288
      %v3316 = vpack.c.b16 %v3291, %v3290
      %v3317 = vpack.c.b16 %v3293, %v3292
      %3342 = vmatprep.subr.bf16.mxu0 0
      %3343 = vmatpush1.bf16.msra.mxu0 %v3301
      %3344 = vmatprep.subr.bf16.mxu0 0
      %3345 = vmatpush1.bf16.msra.mxu0 %v3300
      %3346 = vmatprep.subr.bf16.mxu0 0
      %3347 = vmatpush1.bf16.msra.mxu0 %v3299
      %3348 = vmatprep.subr.bf16.mxu0 0
      %3349 = vmatpush1.bf16.msra.mxu0 %v3298
      %3350 = vmatprep.subr.bf16.mxu0 0
      %3351 = vmatpush1.bf16.msra.mxu0 %v3297
      %3352 = vmatprep.subr.bf16.mxu0 0
      %3353 = vmatpush1.bf16.msra.mxu0 %v3296
      %3354 = vmatprep.subr.bf16.mxu0 0
      %3355 = vmatpush1.bf16.msra.mxu0 %v3295
      %3356 = vmatprep.subr.bf16.mxu0 0
      %3357 = vmatpush1.bf16.msra.mxu0 %v3294
      %3358 = vmatprep.subr.bf16.mxu0 0
      %3359 = vmatpush2.bf16.msra.mxu0 %v3309
      %3360 = vmatprep.subr.bf16.mxu0 0
      %3361 = vmatpush2.bf16.msra.mxu0 %v3308
      %3362 = vmatprep.subr.bf16.mxu0 0
      %3363 = vmatpush2.bf16.msra.mxu0 %v3307
      %3364 = vmatprep.subr.bf16.mxu0 0
      %3365 = vmatpush2.bf16.msra.mxu0 %v3306
      %3366 = vmatprep.subr.bf16.mxu0 0
      %3367 = vmatpush2.bf16.msra.mxu0 %v3305
      %3368 = vmatprep.subr.bf16.mxu0 0
      %3369 = vmatpush2.bf16.msra.mxu0 %v3304
      %3370 = vmatprep.subr.bf16.mxu0 0
      %3371 = vmatpush2.bf16.msra.mxu0 %v3303
      %3372 = vmatprep.subr.bf16.mxu0 0
      %3373 = vmatpush2.bf16.msra.mxu0 %v3302
      %3374 = vmatprep.mubr.bf16.mxu0 %v3103
      %3375 = vmatmul.mubr.bf16.gmra.mxu0 %v3102
      %v3376 = vpop.f32.mrf.mxu0
      %v3377 = vadd.f32 0.0, %v3376
      %v3378 = vpop.f32.mrf.mxu0
      %v3379 = vpop.f32.mrf.mxu0
      %v3380 = vadd.f32 0.0, %v3379
      %v3381 = vpop.f32.mrf.mxu0
      %3382 = vmatprep.mubr.bf16.mxu0 %v3106
      %3383 = vmatmul.mubr.bf16.gmra.mxu0 %v3105
      %v3384 = vpop.f32.mrf.mxu0
      %v3385 = vadd.f32 0.0, %v3384
      %v3386 = vpop.f32.mrf.mxu0
      %v3387 = vpop.f32.mrf.mxu0
      %v3388 = vadd.f32 0.0, %v3387
      %v3389 = vpop.f32.mrf.mxu0
      %3390 = vmatprep.mubr.bf16.mxu0 %v3109
      %3391 = vmatmul.mubr.bf16.gmra.mxu0 %v3108
      %v3392 = vpop.f32.mrf.mxu0
      %v3393 = vadd.f32 0.0, %v3392
      %v3394 = vpop.f32.mrf.mxu0
      %v3395 = vpop.f32.mrf.mxu0
      %v3396 = vadd.f32 0.0, %v3395
      %v3397 = vpop.f32.mrf.mxu0
      %3398 = vmatprep.mubr.bf16.mxu0 %v3112
      %3399 = vmatmul.mubr.bf16.gmra.mxu0 %v3111
      %v3400 = vpop.f32.mrf.mxu0
      %v3401 = vadd.f32 0.0, %v3400
      %v3402 = vpop.f32.mrf.mxu0
      %v3403 = vpop.f32.mrf.mxu0
      %v3404 = vadd.f32 0.0, %v3403
      %v3405 = vpop.f32.mrf.mxu0
      %3406 = vmatprep.mubr.bf16.mxu0 %v3115
      %3407 = vmatmul.mubr.bf16.gmra.mxu0 %v3114
      %v3408 = vpop.f32.mrf.mxu0
      %v3409 = vadd.f32 0.0, %v3408
      %v3410 = vpop.f32.mrf.mxu0
      %v3411 = vpop.f32.mrf.mxu0
      %v3412 = vadd.f32 0.0, %v3411
      %v3413 = vpop.f32.mrf.mxu0
      %3414 = vmatprep.mubr.bf16.mxu0 %v3118
      %3415 = vmatmul.mubr.bf16.gmra.mxu0 %v3117
      %v3416 = vpop.f32.mrf.mxu0
      %v3417 = vadd.f32 0.0, %v3416
      %v3418 = vpop.f32.mrf.mxu0
      %v3419 = vpop.f32.mrf.mxu0
      %v3420 = vadd.f32 0.0, %v3419
      %v3421 = vpop.f32.mrf.mxu0
      %3422 = vmatprep.mubr.bf16.mxu0 %v3121
      %3423 = vmatmul.mubr.bf16.gmra.mxu0 %v3120
      %v3424 = vpop.f32.mrf.mxu0
      %v3425 = vadd.f32 0.0, %v3424
      %v3426 = vpop.f32.mrf.mxu0
      %v3427 = vpop.f32.mrf.mxu0
      %v3428 = vadd.f32 0.0, %v3427
      %v3429 = vpop.f32.mrf.mxu0
      %3430 = vmatprep.mubr.bf16.mxu0 %v3124
      %3431 = vmatmul.mubr.bf16.gmra.mxu0 %v3123
      %v3432 = vpop.f32.mrf.mxu0
      %v3433 = vadd.f32 0.0, %v3432
      %v3434 = vpop.f32.mrf.mxu0
      %v3435 = vpop.f32.mrf.mxu0
      %v3436 = vadd.f32 0.0, %v3435
      %v3437 = vpop.f32.mrf.mxu0
      %3438 = vmatprep.mubr.bf16.mxu0 %v3127
      %3439 = vmatmul.mubr.bf16.gmra.mxu0 %v3126
      %v3440 = vpop.f32.mrf.mxu0
      %v3441 = vadd.f32 0.0, %v3440
      %v3442 = vpop.f32.mrf.mxu0
      %v3443 = vpop.f32.mrf.mxu0
      %v3444 = vadd.f32 0.0, %v3443
      %v3445 = vpop.f32.mrf.mxu0
      %3446 = vmatprep.mubr.bf16.mxu0 %v3130
      %3447 = vmatmul.mubr.bf16.gmra.mxu0 %v3129
      %v3448 = vpop.f32.mrf.mxu0
      %v3449 = vadd.f32 0.0, %v3448
      %v3450 = vpop.f32.mrf.mxu0
      %v3451 = vpop.f32.mrf.mxu0
      %v3452 = vadd.f32 0.0, %v3451
      %v3453 = vpop.f32.mrf.mxu0
      %3454 = vmatprep.mubr.bf16.mxu0 %v3133
      %3455 = vmatmul.mubr.bf16.gmra.mxu0 %v3132
      %v3456 = vpop.f32.mrf.mxu0
      %v3457 = vadd.f32 0.0, %v3456
      %v3458 = vpop.f32.mrf.mxu0
      %v3459 = vpop.f32.mrf.mxu0
      %v3460 = vadd.f32 0.0, %v3459
      %v3461 = vpop.f32.mrf.mxu0
      %3462 = vmatprep.mubr.bf16.mxu0 %v3136
      %3463 = vmatmul.mubr.bf16.gmra.mxu0 %v3135
      %v3464 = vpop.f32.mrf.mxu0
      %v3465 = vadd.f32 0.0, %v3464
      %v3466 = vpop.f32.mrf.mxu0
      %v3467 = vpop.f32.mrf.mxu0
      %v3468 = vadd.f32 0.0, %v3467
      %v3469 = vpop.f32.mrf.mxu0
      %3470 = vmatprep.mubr.bf16.mxu0 %v3139
      %3471 = vmatmul.mubr.bf16.gmra.mxu0 %v3138
      %v3472 = vpop.f32.mrf.mxu0
      %v3473 = vadd.f32 0.0, %v3472
      %v3474 = vpop.f32.mrf.mxu0
      %v3475 = vpop.f32.mrf.mxu0
      %v3476 = vadd.f32 0.0, %v3475
      %v3477 = vpop.f32.mrf.mxu0
      %3478 = vmatprep.mubr.bf16.mxu0 %v3142
      %3479 = vmatmul.mubr.bf16.gmra.mxu0 %v3141
      %v3480 = vpop.f32.mrf.mxu0
      %v3481 = vadd.f32 0.0, %v3480
      %v3482 = vpop.f32.mrf.mxu0
      %v3483 = vpop.f32.mrf.mxu0
      %v3484 = vadd.f32 0.0, %v3483
      %v3485 = vpop.f32.mrf.mxu0
      %3486 = vmatprep.mubr.bf16.mxu0 %v3145
      %3487 = vmatmul.mubr.bf16.gmra.mxu0 %v3144
      %v3488 = vpop.f32.mrf.mxu0
      %v3489 = vadd.f32 0.0, %v3488
      %v3490 = vpop.f32.mrf.mxu0
      %v3491 = vpop.f32.mrf.mxu0
      %v3492 = vadd.f32 0.0, %v3491
      %v3493 = vpop.f32.mrf.mxu0
      %3494 = vmatprep.mubr.bf16.mxu0 %v3148
      %3495 = vmatmul.mubr.bf16.gmra.mxu0 %v3147
      %v3496 = vpop.f32.mrf.mxu0
      %v3497 = vadd.f32 0.0, %v3496
      %v3498 = vpop.f32.mrf.mxu0
      %v3499 = vpop.f32.mrf.mxu0
      %v3500 = vadd.f32 0.0, %v3499
      %v3501 = vpop.f32.mrf.mxu0
      %3502 = vdwg.mxu0
      %3503 = vmatprep.subr.bf16.mxu0 0
      %3504 = vmatpush1.bf16.msra.mxu0 %v3317
      %3505 = vmatprep.subr.bf16.mxu0 0
      %3506 = vmatpush1.bf16.msra.mxu0 %v3316
      %3507 = vmatprep.subr.bf16.mxu0 0
      %3508 = vmatpush1.bf16.msra.mxu0 %v3315
      %3509 = vmatprep.subr.bf16.mxu0 0
      %3510 = vmatpush1.bf16.msra.mxu0 %v3314
      %3511 = vmatprep.subr.bf16.mxu0 0
      %3512 = vmatpush1.bf16.msra.mxu0 %v3313
      %3513 = vmatprep.subr.bf16.mxu0 0
      %3514 = vmatpush1.bf16.msra.mxu0 %v3312
      %3515 = vmatprep.subr.bf16.mxu0 0
      %3516 = vmatpush1.bf16.msra.mxu0 %v3311
      %3517 = vmatprep.subr.bf16.mxu0 0
      %3518 = vmatpush1.bf16.msra.mxu0 %v3310
      %3519 = vmatprep.subr.bf16.mxu0 0
      %3520 = vmatpush2.bf16.msra.mxu0 0
      %3521 = vmatprep.subr.bf16.mxu0 0
      %3522 = vmatpush2.bf16.msra.mxu0 0
      %3523 = vmatprep.subr.bf16.mxu0 0
      %3524 = vmatpush2.bf16.msra.mxu0 0
      %3525 = vmatprep.subr.bf16.mxu0 0
      %3526 = vmatpush2.bf16.msra.mxu0 0
      %3527 = vmatprep.subr.bf16.mxu0 0
      %3528 = vmatpush2.bf16.msra.mxu0 0
      %3529 = vmatprep.subr.bf16.mxu0 0
      %3530 = vmatpush2.bf16.msra.mxu0 0
      %3531 = vmatprep.subr.bf16.mxu0 0
      %3532 = vmatpush2.bf16.msra.mxu0 0
      %3533 = vmatprep.subr.bf16.mxu0 0
      %3534 = vmatpush2.bf16.msra.mxu0 0
      %3535 = vmatprep.mubr.bf16.mxu0 0
      %3536 = vmatmul.mubr.bf16.gmra.mxu0 %v3104
      %v3537 = vpop.f32.mrf.mxu0
      %v3538 = vadd.f32 %v3377, %v3537
      %v3539 = vpop.f32.mrf.mxu0
      %v3540 = vpop.f32.mrf.mxu0
      %v3541 = vadd.f32 %v3380, %v3540
      %v3542 = vpop.f32.mrf.mxu0
      %3543 = vmatprep.mubr.bf16.mxu0 0
      %3544 = vmatmul.mubr.bf16.gmra.mxu0 %v3107
      %v3545 = vpop.f32.mrf.mxu0
      %v3546 = vadd.f32 %v3385, %v3545
      %v3547 = vpop.f32.mrf.mxu0
      %v3548 = vpop.f32.mrf.mxu0
      %v3549 = vadd.f32 %v3388, %v3548
      %v3550 = vpop.f32.mrf.mxu0
      %3551 = vmatprep.mubr.bf16.mxu0 0
      %3552 = vmatmul.mubr.bf16.gmra.mxu0 %v3110
      %v3553 = vpop.f32.mrf.mxu0
      %v3554 = vadd.f32 %v3393, %v3553
      %v3555 = vpop.f32.mrf.mxu0
      %v3556 = vpop.f32.mrf.mxu0
      %v3557 = vadd.f32 %v3396, %v3556
      %v3558 = vpop.f32.mrf.mxu0
      %3559 = vmatprep.mubr.bf16.mxu0 0
      %3560 = vmatmul.mubr.bf16.gmra.mxu0 %v3113
      %v3561 = vpop.f32.mrf.mxu0
      %v3562 = vadd.f32 %v3401, %v3561
      %v3563 = vpop.f32.mrf.mxu0
      %v3564 = vpop.f32.mrf.mxu0
      %v3565 = vadd.f32 %v3404, %v3564
      %v3566 = vpop.f32.mrf.mxu0
      %3567 = vmatprep.mubr.bf16.mxu0 0
      %3568 = vmatmul.mubr.bf16.gmra.mxu0 %v3116
      %v3569 = vpop.f32.mrf.mxu0
      %v3570 = vadd.f32 %v3409, %v3569
      %v3571 = vpop.f32.mrf.mxu0
      %v3572 = vpop.f32.mrf.mxu0
      %v3573 = vadd.f32 %v3412, %v3572
      %v3574 = vpop.f32.mrf.mxu0
      %3575 = vmatprep.mubr.bf16.mxu0 0
      %3576 = vmatmul.mubr.bf16.gmra.mxu0 %v3119
      %v3577 = vpop.f32.mrf.mxu0
      %v3578 = vadd.f32 %v3417, %v3577
      %v3579 = vpop.f32.mrf.mxu0
      %v3580 = vpop.f32.mrf.mxu0
      %v3581 = vadd.f32 %v3420, %v3580
      %v3582 = vpop.f32.mrf.mxu0
      %3583 = vmatprep.mubr.bf16.mxu0 0
      %3584 = vmatmul.mubr.bf16.gmra.mxu0 %v3122
      %v3585 = vpop.f32.mrf.mxu0
      %v3586 = vadd.f32 %v3425, %v3585
      %v3587 = vpop.f32.mrf.mxu0
      %v3588 = vpop.f32.mrf.mxu0
      %v3589 = vadd.f32 %v3428, %v3588
      %v3590 = vpop.f32.mrf.mxu0
      %3591 = vmatprep.mubr.bf16.mxu0 0
      %3592 = vmatmul.mubr.bf16.gmra.mxu0 %v3125
      %v3593 = vpop.f32.mrf.mxu0
      %v3594 = vadd.f32 %v3433, %v3593
      %v3595 = vpop.f32.mrf.mxu0
      %v3596 = vpop.f32.mrf.mxu0
      %v3597 = vadd.f32 %v3436, %v3596
      %v3598 = vpop.f32.mrf.mxu0
      %3599 = vmatprep.mubr.bf16.mxu0 0
      %3600 = vmatmul.mubr.bf16.gmra.mxu0 %v3128
      %v3601 = vpop.f32.mrf.mxu0
      %v3602 = vadd.f32 %v3441, %v3601
      %v3603 = vpop.f32.mrf.mxu0
      %v3604 = vpop.f32.mrf.mxu0
      %v3605 = vadd.f32 %v3444, %v3604
      %v3606 = vpop.f32.mrf.mxu0
      %3607 = vmatprep.mubr.bf16.mxu0 0
      %3608 = vmatmul.mubr.bf16.gmra.mxu0 %v3131
      %v3609 = vpop.f32.mrf.mxu0
      %v3610 = vadd.f32 %v3449, %v3609
      %v3611 = vpop.f32.mrf.mxu0
      %v3612 = vpop.f32.mrf.mxu0
      %v3613 = vadd.f32 %v3452, %v3612
      %v3614 = vpop.f32.mrf.mxu0
      %3615 = vmatprep.mubr.bf16.mxu0 0
      %3616 = vmatmul.mubr.bf16.gmra.mxu0 %v3134
      %v3617 = vpop.f32.mrf.mxu0
      %v3618 = vadd.f32 %v3457, %v3617
      %v3619 = vpop.f32.mrf.mxu0
      %v3620 = vpop.f32.mrf.mxu0
      %v3621 = vadd.f32 %v3460, %v3620
      %v3622 = vpop.f32.mrf.mxu0
      %3623 = vmatprep.mubr.bf16.mxu0 0
      %3624 = vmatmul.mubr.bf16.gmra.mxu0 %v3137
      %v3625 = vpop.f32.mrf.mxu0
      %v3626 = vadd.f32 %v3465, %v3625
      %v3627 = vpop.f32.mrf.mxu0
      %v3628 = vpop.f32.mrf.mxu0
      %v3629 = vadd.f32 %v3468, %v3628
      %v3630 = vpop.f32.mrf.mxu0
      %3631 = vmatprep.mubr.bf16.mxu0 0
      %3632 = vmatmul.mubr.bf16.gmra.mxu0 %v3140
      %v3633 = vpop.f32.mrf.mxu0
      %v3634 = vadd.f32 %v3473, %v3633
      %v3635 = vpop.f32.mrf.mxu0
      %v3636 = vpop.f32.mrf.mxu0
      %v3637 = vadd.f32 %v3476, %v3636
      %v3638 = vpop.f32.mrf.mxu0
      %3639 = vmatprep.mubr.bf16.mxu0 0
      %3640 = vmatmul.mubr.bf16.gmra.mxu0 %v3143
      %v3641 = vpop.f32.mrf.mxu0
      %v3642 = vadd.f32 %v3481, %v3641
      %v3643 = vpop.f32.mrf.mxu0
      %v3644 = vpop.f32.mrf.mxu0
      %v3645 = vadd.f32 %v3484, %v3644
      %v3646 = vpop.f32.mrf.mxu0
      %3647 = vmatprep.mubr.bf16.mxu0 0
      %3648 = vmatmul.mubr.bf16.gmra.mxu0 %v3146
      %v3649 = vpop.f32.mrf.mxu0
      %v3650 = vadd.f32 %v3489, %v3649
      %v3651 = vpop.f32.mrf.mxu0
      %v3652 = vpop.f32.mrf.mxu0
      %v3653 = vadd.f32 %v3492, %v3652
      %v3654 = vpop.f32.mrf.mxu0
      %3655 = vmatprep.mubr.bf16.mxu0 0
      %3656 = vmatmul.mubr.bf16.gmra.mxu0 %v3149
      %v3657 = vpop.f32.mrf.mxu0
      %v3658 = vadd.f32 %v3497, %v3657
      %v3659 = vpop.f32.mrf.mxu0
      %v3660 = vpop.f32.mrf.mxu0
      %v3661 = vadd.f32 %v3500, %v3660
      %v3662 = vpop.f32.mrf.mxu0
      %3663 = vdwg.mxu0
      %v3664 = vadd.f32 %v2702, %v3538
      %v3665 = vadd.f32 %v2705, %v3541
      %v3666 = vadd.f32 %v2710, %v3546
      %v3667 = vadd.f32 %v2713, %v3549
      %v3668 = vadd.f32 %v2718, %v3554
      %v3669 = vadd.f32 %v2721, %v3557
      %v3670 = vadd.f32 %v2726, %v3562
      %v3671 = vadd.f32 %v2729, %v3565
      %v3672 = vadd.f32 %v2734, %v3570
      %v3673 = vadd.f32 %v2737, %v3573
      %v3674 = vadd.f32 %v2742, %v3578
      %v3675 = vadd.f32 %v2745, %v3581
      %v3676 = vadd.f32 %v2750, %v3586
      %v3677 = vadd.f32 %v2753, %v3589
      %v3678 = vadd.f32 %v2758, %v3594
      %v3679 = vadd.f32 %v2761, %v3597
      %v3680 = vadd.f32 %v2766, %v3602
      %v3681 = vadd.f32 %v2769, %v3605
      %v3682 = vadd.f32 %v2774, %v3610
      %v3683 = vadd.f32 %v2777, %v3613
      %v3684 = vadd.f32 %v2782, %v3618
      %v3685 = vadd.f32 %v2785, %v3621
      %v3686 = vadd.f32 %v2790, %v3626
      %v3687 = vadd.f32 %v2793, %v3629
      %v3688 = vadd.f32 %v2798, %v3634
      %v3689 = vadd.f32 %v2801, %v3637
      %v3690 = vadd.f32 %v2806, %v3642
      %v3691 = vadd.f32 %v2809, %v3645
      %v3692 = vadd.f32 %v2814, %v3650
      %v3693 = vadd.f32 %v2817, %v3653
      %v3694 = vadd.f32 %v2822, %v3658
      %v3695 = vadd.f32 %v2825, %v3661
      %p3696 = scmp.eq.s32.totalorder %s19, 0
      %p3697 = scmp.eq.s32.totalorder %s20, 0
      %p3698 = pnand %p3696, %p3697
      %p3699 = pneg %p3698
      // Predicated region
      $region37: #{double_conv_block.2} parent=35 // pred_check
        _
      $region38: #{double_conv_block.2} parent=35 // pred_check_branch
        %3701 = sbr.rel (%p3698) target = $region40
      $region39: #{double_conv_block.2} parent=35 // pred_region
        %3702 = vst [vmem:[#allocation3] sm:$0x1] 0.0
        %3703 = vst [vmem:[#allocation4] sm:$0x1] 0.0
      $region40: #{double_conv_block.2} parent=35 // pred_fallthru
        _
      // Predicated region
      $region41: #{double_conv_block.2} parent=35 // pred_check
        %p3704 = pneg %p3696
      $region42: #{double_conv_block.2} parent=35 // pred_check_branch
        %3706 = sbr.rel (%p3704) target = $region44
      $region43: #{double_conv_block.2} parent=35 // pred_region
        %v3707 = vld [vmem:[#allocation3] sm:$0x1]
        %v3708 = vadd.f32 %v3664, %v3665
        %v3709 = vadd.f32 %v3708, %v3666
        %v3710 = vadd.f32 %v3709, %v3667
        %v3711 = vadd.f32 %v3710, %v3668
        %v3712 = vadd.f32 %v3711, %v3669
        %v3713 = vadd.f32 %v3712, %v3670
        %v3714 = vadd.f32 %v3713, %v3671
        %v3715 = vadd.f32 %v3714, %v3672
        %v3716 = vadd.f32 %v3715, %v3673
        %v3717 = vadd.f32 %v3716, %v3674
        %v3718 = vadd.f32 %v3717, %v3675
        %v3719 = vadd.f32 %v3718, %v3676
        %v3720 = vadd.f32 %v3719, %v3677
        %v3721 = vadd.f32 %v3720, %v3678
        %v3722 = vadd.f32 %v3721, %v3679
        %v3723 = vadd.f32 %v3722, %v3680
        %v3724 = vadd.f32 %v3723, %v3681
        %v3725 = vadd.f32 %v3724, %v3682
        %v3726 = vadd.f32 %v3725, %v3683
        %v3727 = vadd.f32 %v3726, %v3684
        %v3728 = vadd.f32 %v3727, %v3685
        %v3729 = vadd.f32 %v3728, %v3686
        %v3730 = vadd.f32 %v3729, %v3687
        %v3731 = vadd.f32 %v3730, %v3688
        %v3732 = vadd.f32 %v3731, %v3689
        %v3733 = vadd.f32 %v3732, %v3690
        %v3734 = vadd.f32 %v3733, %v3691
        %v3735 = vadd.f32 %v3734, %v3692
        %v3736 = vadd.f32 %v3735, %v3693
        %v3737 = vadd.f32 %v3736, %v3694
        %v3738 = vadd.f32 %v3737, %v3695
        %v3739 = vrot.slane %v3738, 4
        %v3740 = vadd.f32 %v3738, %v3739
        %v3741 = vrot.slane %v3740, 2
        %v3742 = vadd.f32 %v3740, %v3741
        %v3743 = vrot.slane %v3742, 1
        %v3744 = vadd.f32 %v3742, %v3743
        %v3745 = vadd.f32 %v3707, %v3744
        %3746 = vst [vmem:[#allocation3] sm:$0x1] %v3745
        %v3747 = vld [vmem:[#allocation4] sm:$0x1]
        %v3748 = vmul.f32 %v3664, %v3664
        %v3749 = vmul.f32 %v3665, %v3665
        %v3750 = vmul.f32 %v3666, %v3666
        %v3751 = vmul.f32 %v3667, %v3667
        %v3752 = vmul.f32 %v3668, %v3668
        %v3753 = vmul.f32 %v3669, %v3669
        %v3754 = vmul.f32 %v3670, %v3670
        %v3755 = vmul.f32 %v3671, %v3671
        %v3756 = vmul.f32 %v3672, %v3672
        %v3757 = vmul.f32 %v3673, %v3673
        %v3758 = vmul.f32 %v3674, %v3674
        %v3759 = vmul.f32 %v3675, %v3675
        %v3760 = vmul.f32 %v3676, %v3676
        %v3761 = vmul.f32 %v3677, %v3677
        %v3762 = vmul.f32 %v3678, %v3678
        %v3763 = vmul.f32 %v3679, %v3679
        %v3764 = vmul.f32 %v3680, %v3680
        %v3765 = vmul.f32 %v3681, %v3681
        %v3766 = vmul.f32 %v3682, %v3682
        %v3767 = vmul.f32 %v3683, %v3683
        %v3768 = vmul.f32 %v3684, %v3684
        %v3769 = vmul.f32 %v3685, %v3685
        %v3770 = vmul.f32 %v3686, %v3686
        %v3771 = vmul.f32 %v3687, %v3687
        %v3772 = vmul.f32 %v3688, %v3688
        %v3773 = vmul.f32 %v3689, %v3689
        %v3774 = vmul.f32 %v3690, %v3690
        %v3775 = vmul.f32 %v3691, %v3691
        %v3776 = vmul.f32 %v3692, %v3692
        %v3777 = vmul.f32 %v3693, %v3693
        %v3778 = vmul.f32 %v3694, %v3694
        %v3779 = vmul.f32 %v3695, %v3695
        %v3780 = vadd.f32 %v3748, %v3749
        %v3781 = vadd.f32 %v3780, %v3750
        %v3782 = vadd.f32 %v3781, %v3751
        %v3783 = vadd.f32 %v3782, %v3752
        %v3784 = vadd.f32 %v3783, %v3753
        %v3785 = vadd.f32 %v3784, %v3754
        %v3786 = vadd.f32 %v3785, %v3755
        %v3787 = vadd.f32 %v3786, %v3756
        %v3788 = vadd.f32 %v3787, %v3757
        %v3789 = vadd.f32 %v3788, %v3758
        %v3790 = vadd.f32 %v3789, %v3759
        %v3791 = vadd.f32 %v3790, %v3760
        %v3792 = vadd.f32 %v3791, %v3761
        %v3793 = vadd.f32 %v3792, %v3762
        %v3794 = vadd.f32 %v3793, %v3763
        %v3795 = vadd.f32 %v3794, %v3764
        %v3796 = vadd.f32 %v3795, %v3765
        %v3797 = vadd.f32 %v3796, %v3766
        %v3798 = vadd.f32 %v3797, %v3767
        %v3799 = vadd.f32 %v3798, %v3768
        %v3800 = vadd.f32 %v3799, %v3769
        %v3801 = vadd.f32 %v3800, %v3770
        %v3802 = vadd.f32 %v3801, %v3771
        %v3803 = vadd.f32 %v3802, %v3772
        %v3804 = vadd.f32 %v3803, %v3773
        %v3805 = vadd.f32 %v3804, %v3774
        %v3806 = vadd.f32 %v3805, %v3775
        %v3807 = vadd.f32 %v3806, %v3776
        %v3808 = vadd.f32 %v3807, %v3777
        %v3809 = vadd.f32 %v3808, %v3778
        %v3810 = vadd.f32 %v3809, %v3779
        %v3811 = vrot.slane %v3810, 4
        %v3812 = vadd.f32 %v3810, %v3811
        %v3813 = vrot.slane %v3812, 2
        %v3814 = vadd.f32 %v3812, %v3813
        %v3815 = vrot.slane %v3814, 1
        %v3816 = vadd.f32 %v3814, %v3815
        %v3817 = vadd.f32 %v3747, %v3816
        %3818 = vst [vmem:[#allocation4] sm:$0x1] %v3817
      $region44: #{double_conv_block.2} parent=35 // pred_fallthru
        _
      %p3819 = scmp.eq.s32.totalorder %s19, 1
      %p3820 = pnand %p3819, %p3697
      %p3821 = pneg %p3820
      // Predicated region
      $region45: #{double_conv_block.2} parent=35 // pred_check
        _
      $region46: #{double_conv_block.2} parent=35 // pred_check_branch
        %3823 = sbr.rel (%p3820) target = $region48
      $region47: #{double_conv_block.2} parent=35 // pred_region
        %v3824 = vld [vmem:[#allocation3] sm:$0x1]
        %v3825 = vmul.f32 %v3824, 0.001953125
        %v3826 = vld [vmem:[#allocation4] sm:$0x1]
        %v3827 = vmul.f32 %v3826, 0.001953125
        %v3828 = vmul.f32 %v3825, %v3825
        %v3829 = vsub.f32 %v3827, %v3828
        %v3830 = vadd.f32 %v3829, 1e-05
        %v3831 = vrsqrt.pop %v3830
        %v3832 = vld [vmem:[%s2] sm:$0x1]
        %v3833 = vmul.f32 %v3832, %v3831
        %3834 = vst [vmem:[#allocation5] sm:$0x1] %v3833
        %v3835 = vld [vmem:[%s3] sm:$0x1]
        %v3836 = vmul.f32 %v3825, %v3833
        %v3837 = vsub.f32 %v3835, %v3836
        %3838 = vst [vmem:[#allocation6] sm:$0x1] %v3837
      $region48: #{double_conv_block.2} parent=35 // pred_fallthru
        _
      // Predicated region
      $region49: #{double_conv_block.2} parent=35 // pred_check
        %p3839 = pneg %p3819
      $region50: #{double_conv_block.2} parent=35 // pred_check_branch
        %3841 = sbr.rel (%p3839) target = $region52
      $region51: #{double_conv_block.2} parent=35 // pred_region
        %v3842 = vld [vmem:[#allocation5] sm:$0x1]
        %v3844 = vlaneseq
        %v3845 = vshrl.u32 %v3844, 7
        %v3846 = vsub.s32 0, %v3845
        %v3847 = vrot.slane %v3842, %v3846
        %v3849 = vmul.f32 %v3664, %v3847
        %v3850 = vmul.f32 %v3665, %v3847
        %v3851 = vmul.f32 %v3666, %v3847
        %v3852 = vmul.f32 %v3667, %v3847
        %v3853 = vmul.f32 %v3668, %v3847
        %v3854 = vmul.f32 %v3669, %v3847
        %v3855 = vmul.f32 %v3670, %v3847
        %v3856 = vmul.f32 %v3671, %v3847
        %v3857 = vmul.f32 %v3672, %v3847
        %v3858 = vmul.f32 %v3673, %v3847
        %v3859 = vmul.f32 %v3674, %v3847
        %v3860 = vmul.f32 %v3675, %v3847
        %v3861 = vmul.f32 %v3676, %v3847
        %v3862 = vmul.f32 %v3677, %v3847
        %v3863 = vmul.f32 %v3678, %v3847
        %v3864 = vmul.f32 %v3679, %v3847
        %v3865 = vmul.f32 %v3680, %v3847
        %v3866 = vmul.f32 %v3681, %v3847
        %v3867 = vmul.f32 %v3682, %v3847
        %v3868 = vmul.f32 %v3683, %v3847
        %v3869 = vmul.f32 %v3684, %v3847
        %v3870 = vmul.f32 %v3685, %v3847
        %v3871 = vmul.f32 %v3686, %v3847
        %v3872 = vmul.f32 %v3687, %v3847
        %v3873 = vmul.f32 %v3688, %v3847
        %v3874 = vmul.f32 %v3689, %v3847
        %v3875 = vmul.f32 %v3690, %v3847
        %v3876 = vmul.f32 %v3691, %v3847
        %v3877 = vmul.f32 %v3692, %v3847
        %v3878 = vmul.f32 %v3693, %v3847
        %v3879 = vmul.f32 %v3694, %v3847
        %v3880 = vmul.f32 %v3695, %v3847
        %v3881 = vld [vmem:[#allocation6] sm:$0x1]
        %v3883 = vlaneseq
        %v3884 = vshrl.u32 %v3883, 7
        %v3885 = vsub.s32 0, %v3884
        %v3886 = vrot.slane %v3881, %v3885
        %v3888 = vadd.f32 %v3849, %v3886
        %v3889 = vadd.f32 %v3850, %v3886
        %v3890 = vadd.f32 %v3851, %v3886
        %v3891 = vadd.f32 %v3852, %v3886
        %v3892 = vadd.f32 %v3853, %v3886
        %v3893 = vadd.f32 %v3854, %v3886
        %v3894 = vadd.f32 %v3855, %v3886
        %v3895 = vadd.f32 %v3856, %v3886
        %v3896 = vadd.f32 %v3857, %v3886
        %v3897 = vadd.f32 %v3858, %v3886
        %v3898 = vadd.f32 %v3859, %v3886
        %v3899 = vadd.f32 %v3860, %v3886
        %v3900 = vadd.f32 %v3861, %v3886
        %v3901 = vadd.f32 %v3862, %v3886
        %v3902 = vadd.f32 %v3863, %v3886
        %v3903 = vadd.f32 %v3864, %v3886
        %v3904 = vadd.f32 %v3865, %v3886
        %v3905 = vadd.f32 %v3866, %v3886
        %v3906 = vadd.f32 %v3867, %v3886
        %v3907 = vadd.f32 %v3868, %v3886
        %v3908 = vadd.f32 %v3869, %v3886
        %v3909 = vadd.f32 %v3870, %v3886
        %v3910 = vadd.f32 %v3871, %v3886
        %v3911 = vadd.f32 %v3872, %v3886
        %v3912 = vadd.f32 %v3873, %v3886
        %v3913 = vadd.f32 %v3874, %v3886
        %v3914 = vadd.f32 %v3875, %v3886
        %v3915 = vadd.f32 %v3876, %v3886
        %v3916 = vadd.f32 %v3877, %v3886
        %v3917 = vadd.f32 %v3878, %v3886
        %v3918 = vadd.f32 %v3879, %v3886
        %v3919 = vadd.f32 %v3880, %v3886
        %v3920 = vmax.f32 %v3888, 0.0
        %v3921 = vmax.f32 %v3889, 0.0
        %v3922 = vmax.f32 %v3890, 0.0
        %v3923 = vmax.f32 %v3891, 0.0
        %v3924 = vmax.f32 %v3892, 0.0
        %v3925 = vmax.f32 %v3893, 0.0
        %v3926 = vmax.f32 %v3894, 0.0
        %v3927 = vmax.f32 %v3895, 0.0
        %v3928 = vmax.f32 %v3896, 0.0
        %v3929 = vmax.f32 %v3897, 0.0
        %v3930 = vmax.f32 %v3898, 0.0
        %v3931 = vmax.f32 %v3899, 0.0
        %v3932 = vmax.f32 %v3900, 0.0
        %v3933 = vmax.f32 %v3901, 0.0
        %v3934 = vmax.f32 %v3902, 0.0
        %v3935 = vmax.f32 %v3903, 0.0
        %v3936 = vmax.f32 %v3904, 0.0
        %v3937 = vmax.f32 %v3905, 0.0
        %v3938 = vmax.f32 %v3906, 0.0
        %v3939 = vmax.f32 %v3907, 0.0
        %v3940 = vmax.f32 %v3908, 0.0
        %v3941 = vmax.f32 %v3909, 0.0
        %v3942 = vmax.f32 %v3910, 0.0
        %v3943 = vmax.f32 %v3911, 0.0
        %v3944 = vmax.f32 %v3912, 0.0
        %v3945 = vmax.f32 %v3913, 0.0
        %v3946 = vmax.f32 %v3914, 0.0
        %v3947 = vmax.f32 %v3915, 0.0
        %v3948 = vmax.f32 %v3916, 0.0
        %v3949 = vmax.f32 %v3917, 0.0
        %v3950 = vmax.f32 %v3918, 0.0
        %v3951 = vmax.f32 %v3919, 0.0
        %v3952 = vpack.c.bf16 %v3921, %v3920
        %v3953 = vpack.c.bf16 %v3923, %v3922
        %v3954 = vpack.c.bf16 %v3925, %v3924
        %v3955 = vpack.c.bf16 %v3927, %v3926
        %v3956 = vpack.c.bf16 %v3929, %v3928
        %v3957 = vpack.c.bf16 %v3931, %v3930
        %v3958 = vpack.c.bf16 %v3933, %v3932
        %v3959 = vpack.c.bf16 %v3935, %v3934
        %v3960 = vpack.c.bf16 %v3937, %v3936
        %v3961 = vpack.c.bf16 %v3939, %v3938
        %v3962 = vpack.c.bf16 %v3941, %v3940
        %v3963 = vpack.c.bf16 %v3943, %v3942
        %v3964 = vpack.c.bf16 %v3945, %v3944
        %v3965 = vpack.c.bf16 %v3947, %v3946
        %v3966 = vpack.c.bf16 %v3949, %v3948
        %v3967 = vpack.c.bf16 %v3951, %v3950
        %v3984 = vunpack.c.l.b16 %v3952
        %v3985 = vunpack.c.h.b16 %v3952
        %v3986 = vunpack.c.l.b16 %v3953
        %v3987 = vunpack.c.h.b16 %v3953
        %v3988 = vunpack.c.l.b16 %v3954
        %v3989 = vunpack.c.h.b16 %v3954
        %v3990 = vunpack.c.l.b16 %v3955
        %v3991 = vunpack.c.h.b16 %v3955
        %v3992 = vunpack.c.l.b16 %v3956
        %v3993 = vunpack.c.h.b16 %v3956
        %v3994 = vunpack.c.l.b16 %v3957
        %v3995 = vunpack.c.h.b16 %v3957
        %v3996 = vunpack.c.l.b16 %v3958
        %v3997 = vunpack.c.h.b16 %v3958
        %v3998 = vunpack.c.l.b16 %v3959
        %v3999 = vunpack.c.h.b16 %v3959
        %v4000 = vunpack.c.l.b16 %v3960
        %v4001 = vunpack.c.h.b16 %v3960
        %v4002 = vunpack.c.l.b16 %v3961
        %v4003 = vunpack.c.h.b16 %v3961
        %v4004 = vunpack.c.l.b16 %v3962
        %v4005 = vunpack.c.h.b16 %v3962
        %v4006 = vunpack.c.l.b16 %v3963
        %v4007 = vunpack.c.h.b16 %v3963
        %v4008 = vunpack.c.l.b16 %v3964
        %v4009 = vunpack.c.h.b16 %v3964
        %v4010 = vunpack.c.l.b16 %v3965
        %v4011 = vunpack.c.h.b16 %v3965
        %v4012 = vunpack.c.l.b16 %v3966
        %v4013 = vunpack.c.h.b16 %v3966
        %v4014 = vunpack.c.l.b16 %v3967
        %v4015 = vunpack.c.h.b16 %v3967
        %v4016 = vpack.c.b16 %v3984, %v3984
        %v4017 = vpack.c.b16 %v3985, %v3985
        %v4018 = vpack.c.b16 %v3986, %v3986
        %v4019 = vpack.c.b16 %v3987, %v3987
        %v4020 = vpack.c.b16 %v3988, %v3988
        %v4021 = vpack.c.b16 %v3989, %v3989
        %v4022 = vpack.c.b16 %v3990, %v3990
        %v4023 = vpack.c.b16 %v3991, %v3991
        %v4024 = vpack.c.b16 %v3992, %v3992
        %v4025 = vpack.c.b16 %v3993, %v3993
        %v4026 = vpack.c.b16 %v3994, %v3994
        %v4027 = vpack.c.b16 %v3995, %v3995
        %v4028 = vpack.c.b16 %v3996, %v3996
        %v4029 = vpack.c.b16 %v3997, %v3997
        %v4030 = vpack.c.b16 %v3998, %v3998
        %v4031 = vpack.c.b16 %v3999, %v3999
        %v4032 = vpack.c.b16 %v4000, %v4000
        %v4033 = vpack.c.b16 %v4001, %v4001
        %v4034 = vpack.c.b16 %v4002, %v4002
        %v4035 = vpack.c.b16 %v4003, %v4003
        %v4036 = vpack.c.b16 %v4004, %v4004
        %v4037 = vpack.c.b16 %v4005, %v4005
        %v4038 = vpack.c.b16 %v4006, %v4006
        %v4039 = vpack.c.b16 %v4007, %v4007
        %v4040 = vpack.c.b16 %v4008, %v4008
        %v4041 = vpack.c.b16 %v4009, %v4009
        %v4042 = vpack.c.b16 %v4010, %v4010
        %v4043 = vpack.c.b16 %v4011, %v4011
        %v4044 = vpack.c.b16 %v4012, %v4012
        %v4045 = vpack.c.b16 %v4013, %v4013
        %v4046 = vpack.c.b16 %v4014, %v4014
        %v4047 = vpack.c.b16 %v4015, %v4015
        %4080 = vst [vmem:[%s213] sm:$0xf] %v4016
        %4081 = vst [vmem:[%s213 + $0x4] sm:$0xf] %v4017
        %4082 = vst [vmem:[%s213 + $0x8] sm:$0xf] %v4018
        %4083 = vst [vmem:[%s213 + $0xc] sm:$0xf] %v4019
        %4084 = vst [vmem:[%s213 + $0x10] sm:$0xf] %v4020
        %4085 = vst [vmem:[%s213 + $0x14] sm:$0xf] %v4021
        %4086 = vst [vmem:[%s213 + $0x18] sm:$0xf] %v4022
        %4087 = vst [vmem:[%s213 + $0x1c] sm:$0xf] %v4023
        %4088 = vst [vmem:[%s213 + $0x20] sm:$0xf] %v4024
        %4089 = vst [vmem:[%s213 + $0x24] sm:$0xf] %v4025
        %4090 = vst [vmem:[%s213 + $0x28] sm:$0xf] %v4026
        %4091 = vst [vmem:[%s213 + $0x2c] sm:$0xf] %v4027
        %4092 = vst [vmem:[%s213 + $0x30] sm:$0xf] %v4028
        %4093 = vst [vmem:[%s213 + $0x34] sm:$0xf] %v4029
        %4094 = vst [vmem:[%s213 + $0x38] sm:$0xf] %v4030
        %4095 = vst [vmem:[%s213 + $0x3c] sm:$0xf] %v4031
        %4096 = vst [vmem:[%s213 + $0x40] sm:$0xf] %v4032
        %4097 = vst [vmem:[%s213 + $0x44] sm:$0xf] %v4033
        %4098 = vst [vmem:[%s213 + $0x48] sm:$0xf] %v4034
        %4099 = vst [vmem:[%s213 + $0x4c] sm:$0xf] %v4035
        %4100 = vst [vmem:[%s213 + $0x50] sm:$0xf] %v4036
        %4101 = vst [vmem:[%s213 + $0x54] sm:$0xf] %v4037
        %4102 = vst [vmem:[%s213 + $0x58] sm:$0xf] %v4038
        %4103 = vst [vmem:[%s213 + $0x5c] sm:$0xf] %v4039
        %4104 = vst [vmem:[%s213 + $0x60] sm:$0xf] %v4040
        %4105 = vst [vmem:[%s213 + $0x64] sm:$0xf] %v4041
        %4106 = vst [vmem:[%s213 + $0x68] sm:$0xf] %v4042
        %4107 = vst [vmem:[%s213 + $0x6c] sm:$0xf] %v4043
        %4108 = vst [vmem:[%s213 + $0x70] sm:$0xf] %v4044
        %4109 = vst [vmem:[%s213 + $0x74] sm:$0xf] %v4045
        %4110 = vst [vmem:[%s213 + $0x78] sm:$0xf] %v4046
        %4111 = vst [vmem:[%s213 + $0x7c] sm:$0xf] %v4047
      $region52: #{double_conv_block.2} parent=35 // pred_fallthru
        _
      %s4112 = smul.u32 %s20, %s19
      %p4113 = scmp.lt.s32.totalorder %s4112, 1
      %s4114 = scalar_select %p4113, %s4112, 1
      %s4115 = smul.addr %s4114, 32
      %s4116 = smul.addr %s4115, 4
      %s4117 = scalar_lea.vmem %s4, %s4116
      // Predicated region
      $region53: #{double_conv_block.2} parent=35 // pred_check
        %p4118 = pneg %p136
      $region54: #{double_conv_block.2} parent=35 // pred_check_branch
        %4120 = sbr.rel (%p4118) target = $region56
      $region55: #{double_conv_block.2} parent=35 // pred_region
        %s4121 = smul.u32 %s20, %s19
      $region56: #{double_conv_block.2} parent=35 // pred_fallthru
        _
    $region36: #{double_conv_block.2} parent=5 // pred_fallthru
      _
    %p4122 = scmp.le.s32.totalorder 2, %s10
    // Predicated region
    $region57: #{double_conv_block.2} parent=5 // pred_check
      %p4123 = pneg %p4122
    $region58: #{double_conv_block.2} parent=5 // pred_check_branch
      %4125 = sbr.rel (%p4123) target = $region60
    $region59: #{double_conv_block.2} parent=5 // pred_region
      %s4126 = ssub.s32 %s10, 2
      // Predicated region
      $region61: #{double_conv_block.2} parent=59 // pred_check
        %p4127 = pneg %p142
      $region62: #{double_conv_block.2} parent=59 // pred_check_branch
        %4129 = sbr.rel (%p4127) target = $region64
      $region63: #{double_conv_block.2} parent=59 // pred_region
        %s4130 = smul.u32 %s22, %s21
        %p4131 = scmp.lt.s32.totalorder %s4130, 1
        %s4132 = scalar_select %p4131, %s4130, 1
        %s4133 = smul.addr %s4132, 32
        %s4134 = smul.addr %s4133, 4
        %s4135 = scalar_lea.vmem %s4, %s4134
      $region64: #{double_conv_block.2} parent=59 // pred_fallthru
        _
    $region60: #{double_conv_block.2} parent=5 // pred_fallthru
      _
  $region6: #{double_conv_block.2} parent=0 // loop_footer
    %s14 = sadd.s32 1, %s10
  $region7: #{double_conv_block.2} parent=0 // loop_footer_branch
    %9 = sbr.rel target = $region3
  $region8: #{double_conv_block.2} parent=0 // loop_exit
    _

</llo_original>
